<compile_context>
chip_gen: v7x
topology: tpu7x:2x2x1
jax: 0.10.0
libtpu: 0.0.40
codegen_flags: <defaults>
</compile_context>

<pallas_src>
import functools

import jax
import jax.numpy as jnp
from jax.experimental import pallas as pl
from jax.experimental.pallas import tpu as pltpu


# --------------------------------------------------------------------------- #
# Model dimensions
# --------------------------------------------------------------------------- #
CIN, CC = 3, 16                   # conv in/out channels
FEAT = 128                        # per-branch feature dim
PS, DM, NH, DFF = 4, 64, 4, 128   # ViT: patch size, model dim, heads, mlp dim
LN_EPS = 1e-5                     # PyTorch nn.LayerNorm default


def _layer_norm(x, g, b):
    mu = jnp.mean(x, axis=-1, keepdims=True)
    var = jnp.mean((x - mu) ** 2, axis=-1, keepdims=True)
    return (x - mu) * jax.lax.rsqrt(var + LN_EPS) * g + b


# --------------------------------------------------------------------------- #
# Fused Pallas kernel (whole forward per batch block)
# --------------------------------------------------------------------------- #
def fused_forward_kernel(
    cnn_p_ref, vit_p_ref,                       # inputs
    conv_w_ref, conv_b_ref,                     # CNN conv
    patch_w_ref, pos_ref, dvec_ref,             # ViT patch embed + packed (1,DM) vecs
    wqkv_ref, bqkv_ref, wo_ref,                 # attention
    w1_ref, b1_ref, w2_ref,                     # MLP
    wc_ref, wv_ref, b_ref,                      # folded branch-heads + final fc
    o_ref,
    *, num_heads, bt, t, hw):
    f32 = jnp.float32
    d = wo_ref.shape[0]
    hd = d // num_heads

    # dvec rows: 0 patch_b | 1 ln1_g | 2 ln1_b | 3 attn out bias | 4 ln2_g
    #            5 ln2_b   | 6 mlp out bias
    # ---------------- CNN branch: conv (lane-dense im2col matmul) + ReLU + GAP --- #
    y = jnp.dot(cnn_p_ref[...], conv_w_ref[...],
                preferred_element_type=f32) + conv_b_ref[...]           # (Bt*HW, CC)
    y = jnp.maximum(y, 0.0)                                             # ReLU
    pooled = jnp.mean(y.reshape(bt, hw, y.shape[-1]), axis=1)           # (Bt, CC)  GAP
    cnn_out = jnp.dot(pooled, wc_ref[...], preferred_element_type=f32)  # (Bt, 1)

    # ---------------- ViT branch (tokens live only in VMEM) --------------------- #
    x = jnp.dot(vit_p_ref[...], patch_w_ref[...],
                preferred_element_type=f32) + dvec_ref[0:1, :]          # (Bt*T, D)
    x = (x.reshape(bt, t, d) + pos_ref[...]).reshape(bt * t, d)         # + pos (bcast)

    # --- pre-LN multi-head self-attention block (residual) ---
    xn = _layer_norm(x, dvec_ref[1:2, :], dvec_ref[2:3, :])
    qkv = jnp.dot(xn, wqkv_ref[...], preferred_element_type=f32) + bqkv_ref[...]
    qkv3 = qkv.reshape(bt, t, 3 * d)                                    # (Bt, T, 3D)
    scale = 1.0 / (hd ** 0.5)
    attn_proj = None
    for h in range(num_heads):                                          # static unroll
        qh = qkv3[:, :, h * hd:(h + 1) * hd]
        kh = qkv3[:, :, d + h * hd:d + (h + 1) * hd]
        vh = qkv3[:, :, 2 * d + h * hd:2 * d + (h + 1) * hd]
        s = jnp.einsum('bqd,bkd->bqk', qh, kh, preferred_element_type=f32) * scale
        s = s - jnp.max(s, axis=-1, keepdims=True)
        e = jnp.exp(s)
        p_attn = e * pl.reciprocal(jnp.sum(e, axis=-1, keepdims=True), approx=True)
        ah = jnp.einsum('bqk,bkd->bqd', p_attn, vh,
                        preferred_element_type=f32).reshape(bt * t, hd)
        # per-head output projection slice (replaces lane-dim concat + big matmul)
        term = jnp.dot(ah, wo_ref[h * hd:(h + 1) * hd, :], preferred_element_type=f32)
        attn_proj = term if attn_proj is None else attn_proj + term
    x = x + attn_proj + dvec_ref[3:4, :]

    # --- pre-LN MLP block (residual) ---
    xn = _layer_norm(x, dvec_ref[4:5, :], dvec_ref[5:6, :])
    # TODO(synk): PyTorch nn.GELU() default is exact erf; tanh approx used here.
    hmid = jax.nn.gelu(jnp.dot(xn, w1_ref[...], preferred_element_type=f32)
                       + b1_ref[...], approximate=True)
    x = x + jnp.dot(hmid, w2_ref[...], preferred_element_type=f32) + dvec_ref[6:7, :]

    # --- mean-pool tokens + folded head ---
    pooled_tok = jnp.mean(x.reshape(bt, t, d), axis=1)                  # (Bt, D)
    vit_out = jnp.dot(pooled_tok, wv_ref[...], preferred_element_type=f32)  # (Bt, 1)

    # ---------------- folded fc: cat((cnn, vit), 1) @ W + b ---------------------- #
    o_ref[...] = cnn_out + vit_out + b_ref[...]                         # (Bt, 1)


# --------------------------------------------------------------------------- #
# Parameters (deterministic synthetic init, "raw" PyTorch-style shapes)
# --------------------------------------------------------------------------- #
def init_params(key):
    ks = jax.random.split(key, 13)

    def w(k, shape, scale=0.02):
        return (scale * jax.random.normal(k, shape)).astype(jnp.float32)

    z = lambda *s: jnp.zeros(s, jnp.float32)
    return dict(
        conv_w=w(ks[0], (9 * CIN, CC)), conv_b=z(1, CC),
        cnn_fc_w=w(ks[1], (CC, FEAT)), cnn_fc_b=z(1, FEAT),
        patch_w=w(ks[2], (PS * PS * CIN, DM)), patch_b=z(1, DM),
        pos=w(ks[3], (16, DM)),
        ln1_g=jnp.ones((1, DM), jnp.float32), ln1_b=z(1, DM),
        wq=w(ks[4], (DM, DM)), bq=z(1, DM),
        wk=w(ks[5], (DM, DM)), bk=z(1, DM),
        wv=w(ks[6], (DM, DM)), bv=z(1, DM),
        wo=w(ks[7], (DM, DM)), bo=z(1, DM),
        ln2_g=jnp.ones((1, DM), jnp.float32), ln2_b=z(1, DM),
        mlp_w1=w(ks[8], (DM, DFF)), mlp_b1=z(1, DFF),
        mlp_w2=w(ks[9], (DFF, DM)), mlp_b2=z(1, DM),
        vit_head_w=w(ks[10], (DM, FEAT)), vit_head_b=z(1, FEAT),
        fc_w_cnn=w(ks[11], (FEAT, 1)), fc_w_vit=w(ks[12], (FEAT, 1)), fc_b=z(1, 1),
    )


# --------------------------------------------------------------------------- #
# Forward pass (single pallas_call)
# --------------------------------------------------------------------------- #
@jax.jit
def watermarking_forward(x_nchw, p):
    x = jnp.transpose(x_nchw, (0, 2, 3, 1)).astype(jnp.float32)         # NCHW -> NHWC
    B, H, W, C = x.shape
    HW = H * W
    T = (H // PS) * (W // PS)
    PDIM = PS * PS * C
    K = 9 * C
    KPAD = ((K + 127) // 128) * 128                                     # lane-dense K

    # ---- batch block: multiple of 8, capped at 32 (VMEM), >=2 grid steps when
    # the padded batch allows it so v7x's two TensorCores both get work. -------- #
    B_pad = ((B + 7) // 8) * 8
    Bt = min(32, B_pad)
    if B_pad // Bt < 2 and B_pad >= 16:
        Bt = max(8, ((B_pad // 2) // 8) * 8)
    nblocks = -(-B_pad // Bt)
    B_full = nblocks * Bt
    if B_full != B:
        x = jnp.pad(x, ((0, B_full - B), (0, 0), (0, 0), (0, 0)))       # zero-pad tail

    # im2col for the 3x3 / pad=1 conv, zero-padded K -> 128 lanes, bf16, flat.
    # TODO(synk): for large B/H/W do 9 shifted accumulating dots inside the
    # kernel instead of wrapper-side im2col; at these sizes it stays here.
    xp = jnp.pad(x, ((0, 0), (1, 1), (1, 1), (0, 0)))
    cols = [xp[:, dy:dy + H, dx:dx + W, :] for dy in range(3) for dx in range(3)]
    im2col = jnp.stack(cols, axis=3).reshape(B_full, HW, K)
    im2col = jnp.pad(im2col, ((0, 0), (0, 0), (0, KPAD - K)))
    im2col = im2col.reshape(B_full * HW, KPAD).astype(jnp.bfloat16)     # (B*HW, 128)

    # 4x4 non-overlapping patches, flattened, bf16.
    vit_patches = (x.reshape(B_full, H // PS, PS, W // PS, PS, C)
                    .transpose(0, 1, 3, 2, 4, 5)
                    .reshape(B_full * T, PDIM).astype(jnp.bfloat16))    # (B*T, 48)

    # ---- packed / folded weights (cheap, outside the kernel) ------------------ #
    conv_w = jnp.pad(p['conv_w'], ((0, KPAD - K), (0, 0))).astype(jnp.bfloat16)
    patch_w = p['patch_w'].astype(jnp.bfloat16)
    dvec = jnp.concatenate([p['patch_b'], p['ln1_g'], p['ln1_b'], p['bo'],
                            p['ln2_g'], p['ln2_b'], p['mlp_b2']], axis=0)  # (7, DM)
    wqkv = jnp.concatenate([p['wq'], p['wk'], p['wv']], axis=1)         # (DM, 3DM)
    bqkv = jnp.concatenate([p['bq'], p['bk'], p['bv']], axis=1)         # (1, 3DM)
    # fold branch heads into the final Linear(256,1): cat order is (cnn, vit).
    wc_fold = p['cnn_fc_w'] @ p['fc_w_cnn']                             # (CC, 1)
    wv_fold = p['vit_head_w'] @ p['fc_w_vit']                           # (DM, 1)
    b_fold = (p['fc_b'] + p['cnn_fc_b'] @ p['fc_w_cnn']
              + p['vit_head_b'] @ p['fc_w_vit'])                        # (1, 1)

    weights = [conv_w, p['conv_b'], patch_w, p['pos'], dvec,
               wqkv, bqkv, p['wo'], p['mlp_w1'], p['mlp_b1'], p['mlp_w2'],
               wc_fold, wv_fold, b_fold]
    weight_specs = [pl.BlockSpec(w.shape, lambda b: (0, 0)) for w in weights]

    out = pl.pallas_call(
        functools.partial(fused_forward_kernel, num_heads=NH, bt=Bt, t=T, hw=HW),
        out_shape=jax.ShapeDtypeStruct((B_full, 1), jnp.float32),
        grid=(nblocks,),
        in_specs=[pl.BlockSpec((Bt * HW, KPAD), lambda b: (b, 0)),
                  pl.BlockSpec((Bt * T, PDIM), lambda b: (b, 0))] + weight_specs,
        out_specs=pl.BlockSpec((Bt, 1), lambda b: (b, 0)),
        compiler_params=pltpu.CompilerParams(
            dimension_semantics=("parallel",),                          # shard over TCs
            vmem_limit_bytes=32 * 1024 * 1024),
    )(im2col, vit_patches, *weights)
    return out[:B]                                                      # (B, 1)


# --------------------------------------------------------------------------- #
if __name__ == "__main__":
    key = jax.random.PRNGKey(0)
    kx, kp = jax.random.split(key)
    x = jax.random.normal(kx, (2, 3, 16, 16), dtype=jnp.float32)        # NCHW like PyTorch
    params = init_params(kp)

    y = watermarking_forward(x, params)
    jax.block_until_ready(y)
    assert y.shape == (2, 1) and y.dtype == jnp.float32
    print("KERNEL_OK")
</pallas_src>

<mosaic_0001>
module attributes {stable_mosaic.version = 11 : i64} {
  func.func @fused_forward_kernel(%arg0: i32, %arg1: memref<2048x128xbf16, #tpu.memory_space<vmem>>, %arg2: memref<128x48xbf16, #tpu.memory_space<vmem>>, %arg3: memref<128x16xbf16, #tpu.memory_space<vmem>>, %arg4: memref<1x16xf32, #tpu.memory_space<vmem>>, %arg5: memref<48x64xbf16, #tpu.memory_space<vmem>>, %arg6: memref<16x64xf32, #tpu.memory_space<vmem>>, %arg7: memref<7x64xf32, #tpu.memory_space<vmem>>, %arg8: memref<64x192xf32, #tpu.memory_space<vmem>>, %arg9: memref<1x192xf32, #tpu.memory_space<vmem>>, %arg10: memref<64x64xf32, #tpu.memory_space<vmem>>, %arg11: memref<64x128xf32, #tpu.memory_space<vmem>>, %arg12: memref<1x128xf32, #tpu.memory_space<vmem>>, %arg13: memref<128x64xf32, #tpu.memory_space<vmem>>, %arg14: memref<16x1xf32, #tpu.memory_space<vmem>>, %arg15: memref<64x1xf32, #tpu.memory_space<vmem>>, %arg16: memref<1x1xf32, #tpu.memory_space<vmem>>, %arg17: memref<8x1xf32, #tpu.memory_space<vmem>>) attributes {dimension_semantics = [#tpu.dimension_semantics<parallel>], iteration_bounds = array<i64: 1>, scalar_prefetch = 0 : i64, scratch_operands = 0 : i64, tpu.core_type = #tpu.core_type<tc>, window_params = [{transform_indices = @transform_0, window_bounds = array<i64: 2048, 128>}, {transform_indices = @transform_1, window_bounds = array<i64: 128, 48>}, {pipeline_mode = #tpu.pipeline_mode<synchronous>, transform_indices = @transform_2, window_bounds = array<i64: 128, 16>}, {pipeline_mode = #tpu.pipeline_mode<synchronous>, transform_indices = @transform_3, window_bounds = array<i64: 1, 16>}, {pipeline_mode = #tpu.pipeline_mode<synchronous>, transform_indices = @transform_4, window_bounds = array<i64: 48, 64>}, {pipeline_mode = #tpu.pipeline_mode<synchronous>, transform_indices = @transform_5, window_bounds = array<i64: 16, 64>}, {pipeline_mode = #tpu.pipeline_mode<synchronous>, transform_indices = @transform_6, window_bounds = array<i64: 7, 64>}, {pipeline_mode = #tpu.pipeline_mode<synchronous>, transform_indices = @transform_7, window_bounds = array<i64: 64, 192>}, {pipeline_mode = #tpu.pipeline_mode<synchronous>, transform_indices = @transform_8, window_bounds = array<i64: 1, 192>}, {pipeline_mode = #tpu.pipeline_mode<synchronous>, transform_indices = @transform_9, window_bounds = array<i64: 64, 64>}, {pipeline_mode = #tpu.pipeline_mode<synchronous>, transform_indices = @transform_10, window_bounds = array<i64: 64, 128>}, {pipeline_mode = #tpu.pipeline_mode<synchronous>, transform_indices = @transform_11, window_bounds = array<i64: 1, 128>}, {pipeline_mode = #tpu.pipeline_mode<synchronous>, transform_indices = @transform_12, window_bounds = array<i64: 128, 64>}, {pipeline_mode = #tpu.pipeline_mode<synchronous>, transform_indices = @transform_13, window_bounds = array<i64: 16, 1>}, {pipeline_mode = #tpu.pipeline_mode<synchronous>, transform_indices = @transform_14, window_bounds = array<i64: 64, 1>}, {pipeline_mode = #tpu.pipeline_mode<synchronous>, transform_indices = @transform_15, window_bounds = array<i64: 1, 1>}, {transform_indices = @transform_16, window_bounds = array<i64: 8, 1>}]} {
    %c0 = arith.constant 0 : index
    %c0_0 = arith.constant 0 : index
    %0 = vector.load %arg1[%c0, %c0_0] : memref<2048x128xbf16, #tpu.memory_space<vmem>>, vector<2048x128xbf16>
    %c0_1 = arith.constant 0 : index
    %c0_2 = arith.constant 0 : index
    %1 = vector.load %arg3[%c0_1, %c0_2] : memref<128x16xbf16, #tpu.memory_space<vmem>>, vector<128x16xbf16>
    %cst = arith.constant dense<0.000000e+00> : vector<2048x16xf32>
    %2 = tpu.matmul %0, %1, %cst {dimension_numbers = #tpu.dot_dimension_numbers<[1], [0], [0], [1], [0, 0, 1, 1], [], []>} : vector<2048x128xbf16>, vector<128x16xbf16>, vector<2048x16xf32> -> vector<2048x16xf32>
    %c0_3 = arith.constant 0 : index
    %c0_4 = arith.constant 0 : index
    %3 = vector.load %arg4[%c0_3, %c0_4] : memref<1x16xf32, #tpu.memory_space<vmem>>, vector<1x16xf32>
    %4 = vector.broadcast %3 : vector<1x16xf32> to vector<2048x16xf32>
    %5 = arith.addf %2, %4 : vector<2048x16xf32>
    %cst_5 = arith.constant 0.000000e+00 : f32
    %6 = vector.broadcast %cst_5 : f32 to vector<2048x16xf32>
    %7 = arith.maximumf %5, %6 : vector<2048x16xf32>
    %8 = vector.shape_cast %7 : vector<2048x16xf32> to vector<8x256x16xf32>
    %cst_6 = arith.constant dense<0.000000e+00> : vector<8x16xf32>
    %9 = vector.multi_reduction <add>, %8, %cst_6 [1] : vector<8x256x16xf32> to vector<8x16xf32>
    %cst_7 = arith.constant 2.560000e+02 : f32
    %10 = vector.broadcast %cst_7 : f32 to vector<8x16xf32>
    %11 = arith.divf %9, %10 : vector<8x16xf32>
    %c0_8 = arith.constant 0 : index
    %c0_9 = arith.constant 0 : index
    %12 = vector.load %arg14[%c0_8, %c0_9] : memref<16x1xf32, #tpu.memory_space<vmem>>, vector<16x1xf32>
    %cst_10 = arith.constant dense<0.000000e+00> : vector<8x1xf32>
    %13 = tpu.matmul %11, %12, %cst_10 {dimension_numbers = #tpu.dot_dimension_numbers<[1], [0], [0], [1], [0, 0, 1, 1], [], []>} : vector<8x16xf32>, vector<16x1xf32>, vector<8x1xf32> -> vector<8x1xf32>
    %c0_11 = arith.constant 0 : index
    %c0_12 = arith.constant 0 : index
    %14 = vector.load %arg2[%c0_11, %c0_12] : memref<128x48xbf16, #tpu.memory_space<vmem>>, vector<128x48xbf16>
    %c0_13 = arith.constant 0 : index
    %c0_14 = arith.constant 0 : index
    %15 = vector.load %arg5[%c0_13, %c0_14] : memref<48x64xbf16, #tpu.memory_space<vmem>>, vector<48x64xbf16>
    %cst_15 = arith.constant dense<0.000000e+00> : vector<128x64xf32>
    %16 = tpu.matmul %14, %15, %cst_15 {dimension_numbers = #tpu.dot_dimension_numbers<[1], [0], [0], [1], [0, 0, 1, 1], [], []>} : vector<128x48xbf16>, vector<48x64xbf16>, vector<128x64xf32> -> vector<128x64xf32>
    %c0_16 = arith.constant 0 : index
    %c0_17 = arith.constant 0 : index
    %17 = vector.load %arg7[%c0_16, %c0_17] : memref<7x64xf32, #tpu.memory_space<vmem>>, vector<1x64xf32>
    %18 = vector.broadcast %17 : vector<1x64xf32> to vector<128x64xf32>
    %19 = arith.addf %16, %18 : vector<128x64xf32>
    %20 = vector.shape_cast %19 : vector<128x64xf32> to vector<8x16x64xf32>
    %c0_18 = arith.constant 0 : index
    %c0_19 = arith.constant 0 : index
    %21 = vector.load %arg6[%c0_18, %c0_19] : memref<16x64xf32, #tpu.memory_space<vmem>>, vector<16x64xf32>
    %22 = vector.shape_cast %21 : vector<16x64xf32> to vector<1x16x64xf32>
    %23 = vector.broadcast %22 : vector<1x16x64xf32> to vector<8x16x64xf32>
    %24 = arith.addf %20, %23 : vector<8x16x64xf32>
    %25 = vector.shape_cast %24 : vector<8x16x64xf32> to vector<128x64xf32>
    %c1 = arith.constant 1 : index
    %c0_20 = arith.constant 0 : index
    %26 = vector.load %arg7[%c1, %c0_20] : memref<7x64xf32, #tpu.memory_space<vmem>>, vector<1x64xf32>
    %c2 = arith.constant 2 : index
    %c0_21 = arith.constant 0 : index
    %27 = vector.load %arg7[%c2, %c0_21] : memref<7x64xf32, #tpu.memory_space<vmem>>, vector<1x64xf32>
    %cst_22 = arith.constant dense<0.000000e+00> : vector<128xf32>
    %28 = vector.multi_reduction <add>, %25, %cst_22 [1] : vector<128x64xf32> to vector<128xf32>
    %29 = vector.shape_cast %28 : vector<128xf32> to vector<128x1xf32>
    %cst_23 = arith.constant 6.400000e+01 : f32
    %30 = vector.broadcast %cst_23 : f32 to vector<128x1xf32>
    %31 = arith.divf %29, %30 : vector<128x1xf32>
    %32 = vector.broadcast %31 : vector<128x1xf32> to vector<128x64xf32>
    %33 = arith.subf %25, %32 : vector<128x64xf32>
    %34 = arith.mulf %33, %33 : vector<128x64xf32>
    %cst_24 = arith.constant dense<0.000000e+00> : vector<128xf32>
    %35 = vector.multi_reduction <add>, %34, %cst_24 [1] : vector<128x64xf32> to vector<128xf32>
    %36 = vector.shape_cast %35 : vector<128xf32> to vector<128x1xf32>
    %cst_25 = arith.constant 6.400000e+01 : f32
    %37 = vector.broadcast %cst_25 : f32 to vector<128x1xf32>
    %38 = arith.divf %36, %37 : vector<128x1xf32>
    %39 = vector.broadcast %31 : vector<128x1xf32> to vector<128x64xf32>
    %40 = arith.subf %25, %39 : vector<128x64xf32>
    %cst_26 = arith.constant 9.99999974E-6 : f32
    %41 = vector.broadcast %cst_26 : f32 to vector<128x1xf32>
    %42 = arith.addf %38, %41 : vector<128x1xf32>
    %43 = math.rsqrt %42 : vector<128x1xf32>
    %44 = vector.broadcast %43 : vector<128x1xf32> to vector<128x64xf32>
    %45 = arith.mulf %40, %44 : vector<128x64xf32>
    %46 = vector.broadcast %26 : vector<1x64xf32> to vector<128x64xf32>
    %47 = arith.mulf %45, %46 : vector<128x64xf32>
    %48 = vector.broadcast %27 : vector<1x64xf32> to vector<128x64xf32>
    %49 = arith.addf %47, %48 : vector<128x64xf32>
    %c0_27 = arith.constant 0 : index
    %c0_28 = arith.constant 0 : index
    %50 = vector.load %arg8[%c0_27, %c0_28] : memref<64x192xf32, #tpu.memory_space<vmem>>, vector<64x192xf32>
    %cst_29 = arith.constant dense<0.000000e+00> : vector<128x192xf32>
    %51 = tpu.matmul %49, %50, %cst_29 {dimension_numbers = #tpu.dot_dimension_numbers<[1], [0], [0], [1], [0, 0, 1, 1], [], []>} : vector<128x64xf32>, vector<64x192xf32>, vector<128x192xf32> -> vector<128x192xf32>
    %c0_30 = arith.constant 0 : index
    %c0_31 = arith.constant 0 : index
    %52 = vector.load %arg9[%c0_30, %c0_31] : memref<1x192xf32, #tpu.memory_space<vmem>>, vector<1x192xf32>
    %53 = vector.broadcast %52 : vector<1x192xf32> to vector<128x192xf32>
    %54 = arith.addf %51, %53 : vector<128x192xf32>
    %55 = vector.shape_cast %54 : vector<128x192xf32> to vector<8x16x192xf32>
    %56 = vector.extract_strided_slice %55 {offsets = [0, 0, 0], sizes = [8, 16, 16], strides = [1, 1, 1]} : vector<8x16x192xf32> to vector<8x16x16xf32>
    %57 = vector.extract_strided_slice %55 {offsets = [0, 0, 64], sizes = [8, 16, 16], strides = [1, 1, 1]} : vector<8x16x192xf32> to vector<8x16x16xf32>
    %58 = vector.extract_strided_slice %55 {offsets = [0, 0, 128], sizes = [8, 16, 16], strides = [1, 1, 1]} : vector<8x16x192xf32> to vector<8x16x16xf32>
    "tpu.trace_start"() <{level = 10 : i32, message = "bqd,bkd->bqk"}> : () -> ()
    %cst_32 = arith.constant dense<0.000000e+00> : vector<8x16x16xf32>
    %59 = tpu.matmul %56, %57, %cst_32 {dimension_numbers = #tpu.dot_dimension_numbers<[2], [2], [1], [1], [0, 0, 0, 1, 1, 1], [0], [0]>} : vector<8x16x16xf32>, vector<8x16x16xf32>, vector<8x16x16xf32> -> vector<8x16x16xf32>
    "tpu.trace_stop"() : () -> ()
    %cst_33 = arith.constant 2.500000e-01 : f32
    %60 = vector.broadcast %cst_33 : f32 to vector<8x16x16xf32>
    %61 = arith.mulf %59, %60 : vector<8x16x16xf32>
    %cst_34 = arith.constant dense<0xFF800000> : vector<8x16xf32>
    %62 = vector.multi_reduction <maximumf>, %61, %cst_34 [2] : vector<8x16x16xf32> to vector<8x16xf32>
    %63 = vector.shape_cast %62 : vector<8x16xf32> to vector<8x16x1xf32>
    %64 = vector.broadcast %63 : vector<8x16x1xf32> to vector<8x16x16xf32>
    %65 = arith.subf %61, %64 : vector<8x16x16xf32>
    %66 = math.exp %65 : vector<8x16x16xf32>
    %cst_35 = arith.constant dense<0.000000e+00> : vector<8x16xf32>
    %67 = vector.multi_reduction <add>, %66, %cst_35 [2] : vector<8x16x16xf32> to vector<8x16xf32>
    %68 = vector.shape_cast %67 : vector<8x16xf32> to vector<8x16x1xf32>
    %69 = tpu.reciprocal %68 {approx = true} : vector<8x16x1xf32> -> vector<8x16x1xf32>
    %70 = vector.broadcast %69 : vector<8x16x1xf32> to vector<8x16x16xf32>
    %71 = arith.mulf %66, %70 : vector<8x16x16xf32>
    "tpu.trace_start"() <{level = 10 : i32, message = "bqk,bkd->bqd"}> : () -> ()
    %cst_36 = arith.constant dense<0.000000e+00> : vector<8x16x16xf32>
    %72 = tpu.matmul %71, %58, %cst_36 {dimension_numbers = #tpu.dot_dimension_numbers<[2], [1], [1], [2], [0, 0, 0, 1, 1, 2], [0], [0]>} : vector<8x16x16xf32>, vector<8x16x16xf32>, vector<8x16x16xf32> -> vector<8x16x16xf32>
    "tpu.trace_stop"() : () -> ()
    %73 = vector.shape_cast %72 : vector<8x16x16xf32> to vector<128x16xf32>
    %c0_37 = arith.constant 0 : index
    %c0_38 = arith.constant 0 : index
    %74 = vector.load %arg10[%c0_37, %c0_38] : memref<64x64xf32, #tpu.memory_space<vmem>>, vector<16x64xf32>
    %cst_39 = arith.constant dense<0.000000e+00> : vector<128x64xf32>
    %75 = tpu.matmul %73, %74, %cst_39 {dimension_numbers = #tpu.dot_dimension_numbers<[1], [0], [0], [1], [0, 0, 1, 1], [], []>} : vector<128x16xf32>, vector<16x64xf32>, vector<128x64xf32> -> vector<128x64xf32>
    %76 = vector.extract_strided_slice %55 {offsets = [0, 0, 16], sizes = [8, 16, 16], strides = [1, 1, 1]} : vector<8x16x192xf32> to vector<8x16x16xf32>
    %77 = vector.extract_strided_slice %55 {offsets = [0, 0, 80], sizes = [8, 16, 16], strides = [1, 1, 1]} : vector<8x16x192xf32> to vector<8x16x16xf32>
    %78 = vector.extract_strided_slice %55 {offsets = [0, 0, 144], sizes = [8, 16, 16], strides = [1, 1, 1]} : vector<8x16x192xf32> to vector<8x16x16xf32>
    "tpu.trace_start"() <{level = 10 : i32, message = "bqd,bkd->bqk"}> : () -> ()
    %cst_40 = arith.constant dense<0.000000e+00> : vector<8x16x16xf32>
    %79 = tpu.matmul %76, %77, %cst_40 {dimension_numbers = #tpu.dot_dimension_numbers<[2], [2], [1], [1], [0, 0, 0, 1, 1, 1], [0], [0]>} : vector<8x16x16xf32>, vector<8x16x16xf32>, vector<8x16x16xf32> -> vector<8x16x16xf32>
    "tpu.trace_stop"() : () -> ()
    %cst_41 = arith.constant 2.500000e-01 : f32
    %80 = vector.broadcast %cst_41 : f32 to vector<8x16x16xf32>
    %81 = arith.mulf %79, %80 : vector<8x16x16xf32>
    %cst_42 = arith.constant dense<0xFF800000> : vector<8x16xf32>
    %82 = vector.multi_reduction <maximumf>, %81, %cst_42 [2] : vector<8x16x16xf32> to vector<8x16xf32>
    %83 = vector.shape_cast %82 : vector<8x16xf32> to vector<8x16x1xf32>
    %84 = vector.broadcast %83 : vector<8x16x1xf32> to vector<8x16x16xf32>
    %85 = arith.subf %81, %84 : vector<8x16x16xf32>
    %86 = math.exp %85 : vector<8x16x16xf32>
    %cst_43 = arith.constant dense<0.000000e+00> : vector<8x16xf32>
    %87 = vector.multi_reduction <add>, %86, %cst_43 [2] : vector<8x16x16xf32> to vector<8x16xf32>
    %88 = vector.shape_cast %87 : vector<8x16xf32> to vector<8x16x1xf32>
    %89 = tpu.reciprocal %88 {approx = true} : vector<8x16x1xf32> -> vector<8x16x1xf32>
    %90 = vector.broadcast %89 : vector<8x16x1xf32> to vector<8x16x16xf32>
    %91 = arith.mulf %86, %90 : vector<8x16x16xf32>
    "tpu.trace_start"() <{level = 10 : i32, message = "bqk,bkd->bqd"}> : () -> ()
    %cst_44 = arith.constant dense<0.000000e+00> : vector<8x16x16xf32>
    %92 = tpu.matmul %91, %78, %cst_44 {dimension_numbers = #tpu.dot_dimension_numbers<[2], [1], [1], [2], [0, 0, 0, 1, 1, 2], [0], [0]>} : vector<8x16x16xf32>, vector<8x16x16xf32>, vector<8x16x16xf32> -> vector<8x16x16xf32>
    "tpu.trace_stop"() : () -> ()
    %93 = vector.shape_cast %92 : vector<8x16x16xf32> to vector<128x16xf32>
    %c16 = arith.constant 16 : index
    %c0_45 = arith.constant 0 : index
    %94 = vector.load %arg10[%c16, %c0_45] : memref<64x64xf32, #tpu.memory_space<vmem>>, vector<16x64xf32>
    %cst_46 = arith.constant dense<0.000000e+00> : vector<128x64xf32>
    %95 = tpu.matmul %93, %94, %cst_46 {dimension_numbers = #tpu.dot_dimension_numbers<[1], [0], [0], [1], [0, 0, 1, 1], [], []>} : vector<128x16xf32>, vector<16x64xf32>, vector<128x64xf32> -> vector<128x64xf32>
    %96 = arith.addf %75, %95 : vector<128x64xf32>
    %97 = vector.extract_strided_slice %55 {offsets = [0, 0, 32], sizes = [8, 16, 16], strides = [1, 1, 1]} : vector<8x16x192xf32> to vector<8x16x16xf32>
    %98 = vector.extract_strided_slice %55 {offsets = [0, 0, 96], sizes = [8, 16, 16], strides = [1, 1, 1]} : vector<8x16x192xf32> to vector<8x16x16xf32>
    %99 = vector.extract_strided_slice %55 {offsets = [0, 0, 160], sizes = [8, 16, 16], strides = [1, 1, 1]} : vector<8x16x192xf32> to vector<8x16x16xf32>
    "tpu.trace_start"() <{level = 10 : i32, message = "bqd,bkd->bqk"}> : () -> ()
    %cst_47 = arith.constant dense<0.000000e+00> : vector<8x16x16xf32>
    %100 = tpu.matmul %97, %98, %cst_47 {dimension_numbers = #tpu.dot_dimension_numbers<[2], [2], [1], [1], [0, 0, 0, 1, 1, 1], [0], [0]>} : vector<8x16x16xf32>, vector<8x16x16xf32>, vector<8x16x16xf32> -> vector<8x16x16xf32>
    "tpu.trace_stop"() : () -> ()
    %cst_48 = arith.constant 2.500000e-01 : f32
    %101 = vector.broadcast %cst_48 : f32 to vector<8x16x16xf32>
    %102 = arith.mulf %100, %101 : vector<8x16x16xf32>
    %cst_49 = arith.constant dense<0xFF800000> : vector<8x16xf32>
    %103 = vector.multi_reduction <maximumf>, %102, %cst_49 [2] : vector<8x16x16xf32> to vector<8x16xf32>
    %104 = vector.shape_cast %103 : vector<8x16xf32> to vector<8x16x1xf32>
    %105 = vector.broadcast %104 : vector<8x16x1xf32> to vector<8x16x16xf32>
    %106 = arith.subf %102, %105 : vector<8x16x16xf32>
    %107 = math.exp %106 : vector<8x16x16xf32>
    %cst_50 = arith.constant dense<0.000000e+00> : vector<8x16xf32>
    %108 = vector.multi_reduction <add>, %107, %cst_50 [2] : vector<8x16x16xf32> to vector<8x16xf32>
    %109 = vector.shape_cast %108 : vector<8x16xf32> to vector<8x16x1xf32>
    %110 = tpu.reciprocal %109 {approx = true} : vector<8x16x1xf32> -> vector<8x16x1xf32>
    %111 = vector.broadcast %110 : vector<8x16x1xf32> to vector<8x16x16xf32>
    %112 = arith.mulf %107, %111 : vector<8x16x16xf32>
    "tpu.trace_start"() <{level = 10 : i32, message = "bqk,bkd->bqd"}> : () -> ()
    %cst_51 = arith.constant dense<0.000000e+00> : vector<8x16x16xf32>
    %113 = tpu.matmul %112, %99, %cst_51 {dimension_numbers = #tpu.dot_dimension_numbers<[2], [1], [1], [2], [0, 0, 0, 1, 1, 2], [0], [0]>} : vector<8x16x16xf32>, vector<8x16x16xf32>, vector<8x16x16xf32> -> vector<8x16x16xf32>
    "tpu.trace_stop"() : () -> ()
    %114 = vector.shape_cast %113 : vector<8x16x16xf32> to vector<128x16xf32>
    %c32 = arith.constant 32 : index
    %c0_52 = arith.constant 0 : index
    %115 = vector.load %arg10[%c32, %c0_52] : memref<64x64xf32, #tpu.memory_space<vmem>>, vector<16x64xf32>
    %cst_53 = arith.constant dense<0.000000e+00> : vector<128x64xf32>
    %116 = tpu.matmul %114, %115, %cst_53 {dimension_numbers = #tpu.dot_dimension_numbers<[1], [0], [0], [1], [0, 0, 1, 1], [], []>} : vector<128x16xf32>, vector<16x64xf32>, vector<128x64xf32> -> vector<128x64xf32>
    %117 = arith.addf %96, %116 : vector<128x64xf32>
    %118 = vector.extract_strided_slice %55 {offsets = [0, 0, 48], sizes = [8, 16, 16], strides = [1, 1, 1]} : vector<8x16x192xf32> to vector<8x16x16xf32>
    %119 = vector.extract_strided_slice %55 {offsets = [0, 0, 112], sizes = [8, 16, 16], strides = [1, 1, 1]} : vector<8x16x192xf32> to vector<8x16x16xf32>
    %120 = vector.extract_strided_slice %55 {offsets = [0, 0, 176], sizes = [8, 16, 16], strides = [1, 1, 1]} : vector<8x16x192xf32> to vector<8x16x16xf32>
    "tpu.trace_start"() <{level = 10 : i32, message = "bqd,bkd->bqk"}> : () -> ()
    %cst_54 = arith.constant dense<0.000000e+00> : vector<8x16x16xf32>
    %121 = tpu.matmul %118, %119, %cst_54 {dimension_numbers = #tpu.dot_dimension_numbers<[2], [2], [1], [1], [0, 0, 0, 1, 1, 1], [0], [0]>} : vector<8x16x16xf32>, vector<8x16x16xf32>, vector<8x16x16xf32> -> vector<8x16x16xf32>
    "tpu.trace_stop"() : () -> ()
    %cst_55 = arith.constant 2.500000e-01 : f32
    %122 = vector.broadcast %cst_55 : f32 to vector<8x16x16xf32>
    %123 = arith.mulf %121, %122 : vector<8x16x16xf32>
    %cst_56 = arith.constant dense<0xFF800000> : vector<8x16xf32>
    %124 = vector.multi_reduction <maximumf>, %123, %cst_56 [2] : vector<8x16x16xf32> to vector<8x16xf32>
    %125 = vector.shape_cast %124 : vector<8x16xf32> to vector<8x16x1xf32>
    %126 = vector.broadcast %125 : vector<8x16x1xf32> to vector<8x16x16xf32>
    %127 = arith.subf %123, %126 : vector<8x16x16xf32>
    %128 = math.exp %127 : vector<8x16x16xf32>
    %cst_57 = arith.constant dense<0.000000e+00> : vector<8x16xf32>
    %129 = vector.multi_reduction <add>, %128, %cst_57 [2] : vector<8x16x16xf32> to vector<8x16xf32>
    %130 = vector.shape_cast %129 : vector<8x16xf32> to vector<8x16x1xf32>
    %131 = tpu.reciprocal %130 {approx = true} : vector<8x16x1xf32> -> vector<8x16x1xf32>
    %132 = vector.broadcast %131 : vector<8x16x1xf32> to vector<8x16x16xf32>
    %133 = arith.mulf %128, %132 : vector<8x16x16xf32>
    "tpu.trace_start"() <{level = 10 : i32, message = "bqk,bkd->bqd"}> : () -> ()
    %cst_58 = arith.constant dense<0.000000e+00> : vector<8x16x16xf32>
    %134 = tpu.matmul %133, %120, %cst_58 {dimension_numbers = #tpu.dot_dimension_numbers<[2], [1], [1], [2], [0, 0, 0, 1, 1, 2], [0], [0]>} : vector<8x16x16xf32>, vector<8x16x16xf32>, vector<8x16x16xf32> -> vector<8x16x16xf32>
    "tpu.trace_stop"() : () -> ()
    %135 = vector.shape_cast %134 : vector<8x16x16xf32> to vector<128x16xf32>
    %c48 = arith.constant 48 : index
    %c0_59 = arith.constant 0 : index
    %136 = vector.load %arg10[%c48, %c0_59] : memref<64x64xf32, #tpu.memory_space<vmem>>, vector<16x64xf32>
    %cst_60 = arith.constant dense<0.000000e+00> : vector<128x64xf32>
    %137 = tpu.matmul %135, %136, %cst_60 {dimension_numbers = #tpu.dot_dimension_numbers<[1], [0], [0], [1], [0, 0, 1, 1], [], []>} : vector<128x16xf32>, vector<16x64xf32>, vector<128x64xf32> -> vector<128x64xf32>
    %138 = arith.addf %117, %137 : vector<128x64xf32>
    %139 = arith.addf %25, %138 : vector<128x64xf32>
    %c3 = arith.constant 3 : index
    %c0_61 = arith.constant 0 : index
    %140 = vector.load %arg7[%c3, %c0_61] : memref<7x64xf32, #tpu.memory_space<vmem>>, vector<1x64xf32>
    %141 = vector.broadcast %140 : vector<1x64xf32> to vector<128x64xf32>
    %142 = arith.addf %139, %141 : vector<128x64xf32>
    %c4 = arith.constant 4 : index
    %c0_62 = arith.constant 0 : index
    %143 = vector.load %arg7[%c4, %c0_62] : memref<7x64xf32, #tpu.memory_space<vmem>>, vector<1x64xf32>
    %c5 = arith.constant 5 : index
    %c0_63 = arith.constant 0 : index
    %144 = vector.load %arg7[%c5, %c0_63] : memref<7x64xf32, #tpu.memory_space<vmem>>, vector<1x64xf32>
    %cst_64 = arith.constant dense<0.000000e+00> : vector<128xf32>
    %145 = vector.multi_reduction <add>, %142, %cst_64 [1] : vector<128x64xf32> to vector<128xf32>
    %146 = vector.shape_cast %145 : vector<128xf32> to vector<128x1xf32>
    %cst_65 = arith.constant 6.400000e+01 : f32
    %147 = vector.broadcast %cst_65 : f32 to vector<128x1xf32>
    %148 = arith.divf %146, %147 : vector<128x1xf32>
    %149 = vector.broadcast %148 : vector<128x1xf32> to vector<128x64xf32>
    %150 = arith.subf %142, %149 : vector<128x64xf32>
    %151 = arith.mulf %150, %150 : vector<128x64xf32>
    %cst_66 = arith.constant dense<0.000000e+00> : vector<128xf32>
    %152 = vector.multi_reduction <add>, %151, %cst_66 [1] : vector<128x64xf32> to vector<128xf32>
    %153 = vector.shape_cast %152 : vector<128xf32> to vector<128x1xf32>
    %cst_67 = arith.constant 6.400000e+01 : f32
    %154 = vector.broadcast %cst_67 : f32 to vector<128x1xf32>
    %155 = arith.divf %153, %154 : vector<128x1xf32>
    %156 = vector.broadcast %148 : vector<128x1xf32> to vector<128x64xf32>
    %157 = arith.subf %142, %156 : vector<128x64xf32>
    %cst_68 = arith.constant 9.99999974E-6 : f32
    %158 = vector.broadcast %cst_68 : f32 to vector<128x1xf32>
    %159 = arith.addf %155, %158 : vector<128x1xf32>
    %160 = math.rsqrt %159 : vector<128x1xf32>
    %161 = vector.broadcast %160 : vector<128x1xf32> to vector<128x64xf32>
    %162 = arith.mulf %157, %161 : vector<128x64xf32>
    %163 = vector.broadcast %143 : vector<1x64xf32> to vector<128x64xf32>
    %164 = arith.mulf %162, %163 : vector<128x64xf32>
    %165 = vector.broadcast %144 : vector<1x64xf32> to vector<128x64xf32>
    %166 = arith.addf %164, %165 : vector<128x64xf32>
    %c0_69 = arith.constant 0 : index
    %c0_70 = arith.constant 0 : index
    %167 = vector.load %arg11[%c0_69, %c0_70] : memref<64x128xf32, #tpu.memory_space<vmem>>, vector<64x128xf32>
    %cst_71 = arith.constant dense<0.000000e+00> : vector<128x128xf32>
    %168 = tpu.matmul %166, %167, %cst_71 {dimension_numbers = #tpu.dot_dimension_numbers<[1], [0], [0], [1], [0, 0, 1, 1], [], []>} : vector<128x64xf32>, vector<64x128xf32>, vector<128x128xf32> -> vector<128x128xf32>
    %c0_72 = arith.constant 0 : index
    %c0_73 = arith.constant 0 : index
    %169 = vector.load %arg12[%c0_72, %c0_73] : memref<1x128xf32, #tpu.memory_space<vmem>>, vector<1x128xf32>
    %170 = vector.broadcast %169 : vector<1x128xf32> to vector<128x128xf32>
    %171 = arith.addf %168, %170 : vector<128x128xf32>
    %172 = arith.mulf %171, %171 : vector<128x128xf32>
    %173 = arith.mulf %171, %172 : vector<128x128xf32>
    %cst_74 = arith.constant 4.471500e-02 : f32
    %174 = vector.broadcast %cst_74 : f32 to vector<128x128xf32>
    %175 = arith.mulf %174, %173 : vector<128x128xf32>
    %176 = arith.addf %171, %175 : vector<128x128xf32>
    %cst_75 = arith.constant 0.797884583 : f32
    %177 = vector.broadcast %cst_75 : f32 to vector<128x128xf32>
    %178 = arith.mulf %177, %176 : vector<128x128xf32>
    %179 = math.tanh %178 : vector<128x128xf32>
    %cst_76 = arith.constant 1.000000e+00 : f32
    %180 = vector.broadcast %cst_76 : f32 to vector<128x128xf32>
    %181 = arith.addf %180, %179 : vector<128x128xf32>
    %cst_77 = arith.constant 5.000000e-01 : f32
    %182 = vector.broadcast %cst_77 : f32 to vector<128x128xf32>
    %183 = arith.mulf %182, %181 : vector<128x128xf32>
    %184 = arith.mulf %171, %183 : vector<128x128xf32>
    %c0_78 = arith.constant 0 : index
    %c0_79 = arith.constant 0 : index
    %185 = vector.load %arg13[%c0_78, %c0_79] : memref<128x64xf32, #tpu.memory_space<vmem>>, vector<128x64xf32>
    %cst_80 = arith.constant dense<0.000000e+00> : vector<128x64xf32>
    %186 = tpu.matmul %184, %185, %cst_80 {dimension_numbers = #tpu.dot_dimension_numbers<[1], [0], [0], [1], [0, 0, 1, 1], [], []>} : vector<128x128xf32>, vector<128x64xf32>, vector<128x64xf32> -> vector<128x64xf32>
    %187 = arith.addf %142, %186 : vector<128x64xf32>
    %c6 = arith.constant 6 : index
    %c0_81 = arith.constant 0 : index
    %188 = vector.load %arg7[%c6, %c0_81] : memref<7x64xf32, #tpu.memory_space<vmem>>, vector<1x64xf32>
    %189 = vector.broadcast %188 : vector<1x64xf32> to vector<128x64xf32>
    %190 = arith.addf %187, %189 : vector<128x64xf32>
    %191 = vector.shape_cast %190 : vector<128x64xf32> to vector<8x16x64xf32>
    %cst_82 = arith.constant dense<0.000000e+00> : vector<8x64xf32>
    %192 = vector.multi_reduction <add>, %191, %cst_82 [1] : vector<8x16x64xf32> to vector<8x64xf32>
    %cst_83 = arith.constant 1.600000e+01 : f32
    %193 = vector.broadcast %cst_83 : f32 to vector<8x64xf32>
    %194 = arith.divf %192, %193 : vector<8x64xf32>
    %c0_84 = arith.constant 0 : index
    %c0_85 = arith.constant 0 : index
    %195 = vector.load %arg15[%c0_84, %c0_85] : memref<64x1xf32, #tpu.memory_space<vmem>>, vector<64x1xf32>
    %cst_86 = arith.constant dense<0.000000e+00> : vector<8x1xf32>
    %196 = tpu.matmul %194, %195, %cst_86 {dimension_numbers = #tpu.dot_dimension_numbers<[1], [0], [0], [1], [0, 0, 1, 1], [], []>} : vector<8x64xf32>, vector<64x1xf32>, vector<8x1xf32> -> vector<8x1xf32>
    %197 = arith.addf %13, %196 : vector<8x1xf32>
    %c0_87 = arith.constant 0 : index
    %c0_88 = arith.constant 0 : index
    %198 = vector.load %arg16[%c0_87, %c0_88] : memref<1x1xf32, #tpu.memory_space<vmem>>, vector<1x1xf32>
    %199 = vector.broadcast %198 : vector<1x1xf32> to vector<8x1xf32>
    %200 = arith.addf %197, %199 : vector<8x1xf32>
    %c0_89 = arith.constant 0 : index
    %c0_90 = arith.constant 0 : index
    %201 = vector.load %arg17[%c0_89, %c0_90] : memref<8x1xf32, #tpu.memory_space<vmem>>, vector<8x1xf32>
    tpu.vector_store %arg17[%c0_89, %c0_90], %200 {strides = array<i32>} : memref<8x1xf32, #tpu.memory_space<vmem>>, vector<8x1xf32>,
    return
  }
  func.func @transform_0(%arg0: i32) -> (i32, i32) {
    %c0_i32 = arith.constant 0 : i32
    %c0_i32_0 = arith.constant 0 : i32
    return %arg0, %c0_i32 : i32, i32
  }
  func.func @transform_1(%arg0: i32) -> (i32, i32) {
    %c0_i32 = arith.constant 0 : i32
    %c0_i32_0 = arith.constant 0 : i32
    return %arg0, %c0_i32 : i32, i32
  }
  func.func @transform_2(%arg0: i32) -> (i32, i32) {
    %c0_i32 = arith.constant 0 : i32
    %c0_i32_0 = arith.constant 0 : i32
    %c0_i32_1 = arith.constant 0 : i32
    return %c0_i32, %c0_i32_0 : i32, i32
  }
  func.func @transform_3(%arg0: i32) -> (i32, i32) {
    %c0_i32 = arith.constant 0 : i32
    %c0_i32_0 = arith.constant 0 : i32
    %c0_i32_1 = arith.constant 0 : i32
    return %c0_i32, %c0_i32_0 : i32, i32
  }
  func.func @transform_4(%arg0: i32) -> (i32, i32) {
    %c0_i32 = arith.constant 0 : i32
    %c0_i32_0 = arith.constant 0 : i32
    %c0_i32_1 = arith.constant 0 : i32
    return %c0_i32, %c0_i32_0 : i32, i32
  }
  func.func @transform_5(%arg0: i32) -> (i32, i32) {
    %c0_i32 = arith.constant 0 : i32
    %c0_i32_0 = arith.constant 0 : i32
    %c0_i32_1 = arith.constant 0 : i32
    return %c0_i32, %c0_i32_0 : i32, i32
  }
  func.func @transform_6(%arg0: i32) -> (i32, i32) {
    %c0_i32 = arith.constant 0 : i32
    %c0_i32_0 = arith.constant 0 : i32
    %c0_i32_1 = arith.constant 0 : i32
    return %c0_i32, %c0_i32_0 : i32, i32
  }
  func.func @transform_7(%arg0: i32) -> (i32, i32) {
    %c0_i32 = arith.constant 0 : i32
    %c0_i32_0 = arith.constant 0 : i32
    %c0_i32_1 = arith.constant 0 : i32
    return %c0_i32, %c0_i32_0 : i32, i32
  }
  func.func @transform_8(%arg0: i32) -> (i32, i32) {
    %c0_i32 = arith.constant 0 : i32
    %c0_i32_0 = arith.constant 0 : i32
    %c0_i32_1 = arith.constant 0 : i32
    return %c0_i32, %c0_i32_0 : i32, i32
  }
  func.func @transform_9(%arg0: i32) -> (i32, i32) {
    %c0_i32 = arith.constant 0 : i32
    %c0_i32_0 = arith.constant 0 : i32
    %c0_i32_1 = arith.constant 0 : i32
    return %c0_i32, %c0_i32_0 : i32, i32
  }
  func.func @transform_10(%arg0: i32) -> (i32, i32) {
    %c0_i32 = arith.constant 0 : i32
    %c0_i32_0 = arith.constant 0 : i32
    %c0_i32_1 = arith.constant 0 : i32
    return %c0_i32, %c0_i32_0 : i32, i32
  }
  func.func @transform_11(%arg0: i32) -> (i32, i32) {
    %c0_i32 = arith.constant 0 : i32
    %c0_i32_0 = arith.constant 0 : i32
    %c0_i32_1 = arith.constant 0 : i32
    return %c0_i32, %c0_i32_0 : i32, i32
  }
  func.func @transform_12(%arg0: i32) -> (i32, i32) {
    %c0_i32 = arith.constant 0 : i32
    %c0_i32_0 = arith.constant 0 : i32
    %c0_i32_1 = arith.constant 0 : i32
    return %c0_i32, %c0_i32_0 : i32, i32
  }
  func.func @transform_13(%arg0: i32) -> (i32, i32) {
    %c0_i32 = arith.constant 0 : i32
    %c0_i32_0 = arith.constant 0 : i32
    %c0_i32_1 = arith.constant 0 : i32
    return %c0_i32, %c0_i32_0 : i32, i32
  }
  func.func @transform_14(%arg0: i32) -> (i32, i32) {
    %c0_i32 = arith.constant 0 : i32
    %c0_i32_0 = arith.constant 0 : i32
    %c0_i32_1 = arith.constant 0 : i32
    return %c0_i32, %c0_i32_0 : i32, i32
  }
  func.func @transform_15(%arg0: i32) -> (i32, i32) {
    %c0_i32 = arith.constant 0 : i32
    %c0_i32_0 = arith.constant 0 : i32
    %c0_i32_1 = arith.constant 0 : i32
    return %c0_i32, %c0_i32_0 : i32, i32
  }
  func.func @transform_16(%arg0: i32) -> (i32, i32) {
    %c0_i32 = arith.constant 0 : i32
    %c0_i32_0 = arith.constant 0 : i32
    return %arg0, %c0_i32 : i32, i32
  }
}

</mosaic_0001>

<llo_original>
// kernel: watermarking_forward.1
$region0: #{watermarking_forward.1}
  #allocation0 [shape = 'u32[]', space=smem, size = 0x4, offset = 0x4, fixed_abs, tag = 'smem constant byte address 0x4 - core index']
  #allocation1 [shape = 'u32[144,128]{1,0:T(1,128)}', space=vmem, size = 0x12000, scoped, tag = 'internal scratch']
  #allocation2 [shape = 'f32[1,1]{1,0:T(1,128)S(1)}', space=vmem, size = 0x200, scoped, tag = 'scoped memory for watermarking_forward.1']
  %s0 = inlined_call_operand.vmem [shape: bf16[2048,128], index: 0, kind: input, shape index: {}]
  %s1 = inlined_call_operand.vmem [shape: bf16[128,48], index: 1, kind: input, shape index: {}]
  %s2 = inlined_call_operand.vmem [shape: bf16[128,16], index: 2, kind: input, shape index: {}]
  %s3 = inlined_call_operand.vmem [shape: f32[1,16], index: 3, kind: input, shape index: {}]
  %s4 = inlined_call_operand.vmem [shape: bf16[48,64], index: 4, kind: input, shape index: {}]
  %s5 = inlined_call_operand.vmem [shape: f32[16,64], index: 5, kind: input, shape index: {}]
  %s6 = inlined_call_operand.vmem [shape: f32[7,64], index: 6, kind: input, shape index: {}]
  %s7 = inlined_call_operand.vmem [shape: f32[64,192], index: 7, kind: input, shape index: {}]
  %s8 = inlined_call_operand.vmem [shape: f32[1,192], index: 8, kind: input, shape index: {}]
  %s9 = inlined_call_operand.vmem [shape: f32[64,64], index: 9, kind: input, shape index: {}]
  %s10 = inlined_call_operand.vmem [shape: f32[64,128], index: 10, kind: input, shape index: {}]
  %s11 = inlined_call_operand.vmem [shape: f32[1,128], index: 11, kind: input, shape index: {}]
  %s12 = inlined_call_operand.vmem [shape: f32[128,64], index: 12, kind: input, shape index: {}]
  %s13 = inlined_call_operand.vmem [shape: f32[16,1], index: 13, kind: input, shape index: {}]
  %s14 = inlined_call_operand.vmem [shape: f32[64,1], index: 14, kind: input, shape index: {}]
  %s15 = inlined_call_operand.<no memory space> [shape: f32[1,1], index: 15, kind: input, shape index: {}]
  %s16 = inlined_call_operand.vmem [shape: f32[8,1], index: 16, kind: output, shape index: {}]
  %s17 = sld [smem:[#allocation0]]
  $region74: #{watermarking_forward.1} parent=0
    _
  %s19 = ssub.s32 1, %s17
  %s20 = scalar_select 0, %s19, %s17
  %v21 = vstv %s15
  %22 = vst [vmem:[#allocation2] sm:$0x1] %v21
  // Predicated region
  $region2: #{watermarking_forward.1} parent=0 // pred_check
    _
  $region3: #{watermarking_forward.1} parent=0 // pred_check_branch
    %24 = sbr.rel (0) target = $region5
  $region4: #{watermarking_forward.1} parent=0 // pred_region
    _
  $region5: #{watermarking_forward.1} parent=0 // pred_fallthru
    _
  // Predicated region
  $region6: #{watermarking_forward.1} parent=0 // pred_check
    _
  $region7: #{watermarking_forward.1} parent=0 // pred_check_branch
    %26 = sbr.rel (0) target = $region9
  $region8: #{watermarking_forward.1} parent=0 // pred_region
    _
  $region9: #{watermarking_forward.1} parent=0 // pred_fallthru
    _
  // Predicated region
  $region10: #{watermarking_forward.1} parent=0 // pred_check
    _
  $region11: #{watermarking_forward.1} parent=0 // pred_check_branch
    %28 = sbr.rel (0) target = $region13
  $region12: #{watermarking_forward.1} parent=0 // pred_region
    _
  $region13: #{watermarking_forward.1} parent=0 // pred_fallthru
    _
  // Predicated region
  $region14: #{watermarking_forward.1} parent=0 // pred_check
    _
  $region15: #{watermarking_forward.1} parent=0 // pred_check_branch
    %30 = sbr.rel (0) target = $region17
  $region16: #{watermarking_forward.1} parent=0 // pred_region
    _
  $region17: #{watermarking_forward.1} parent=0 // pred_fallthru
    _
  // Predicated region
  $region18: #{watermarking_forward.1} parent=0 // pred_check
    _
  $region19: #{watermarking_forward.1} parent=0 // pred_check_branch
    %32 = sbr.rel (0) target = $region21
  $region20: #{watermarking_forward.1} parent=0 // pred_region
    _
  $region21: #{watermarking_forward.1} parent=0 // pred_fallthru
    _
  // Predicated region
  $region22: #{watermarking_forward.1} parent=0 // pred_check
    _
  $region23: #{watermarking_forward.1} parent=0 // pred_check_branch
    %34 = sbr.rel (0) target = $region25
  $region24: #{watermarking_forward.1} parent=0 // pred_region
    _
  $region25: #{watermarking_forward.1} parent=0 // pred_fallthru
    _
  // Predicated region
  $region26: #{watermarking_forward.1} parent=0 // pred_check
    _
  $region27: #{watermarking_forward.1} parent=0 // pred_check_branch
    %36 = sbr.rel (0) target = $region29
  $region28: #{watermarking_forward.1} parent=0 // pred_region
    _
  $region29: #{watermarking_forward.1} parent=0 // pred_fallthru
    _
  // Predicated region
  $region30: #{watermarking_forward.1} parent=0 // pred_check
    _
  $region31: #{watermarking_forward.1} parent=0 // pred_check_branch
    %38 = sbr.rel (0) target = $region33
  $region32: #{watermarking_forward.1} parent=0 // pred_region
    _
  $region33: #{watermarking_forward.1} parent=0 // pred_fallthru
    _
  // Predicated region
  $region34: #{watermarking_forward.1} parent=0 // pred_check
    _
  $region35: #{watermarking_forward.1} parent=0 // pred_check_branch
    %40 = sbr.rel (0) target = $region37
  $region36: #{watermarking_forward.1} parent=0 // pred_region
    _
  $region37: #{watermarking_forward.1} parent=0 // pred_fallthru
    _
  // Predicated region
  $region38: #{watermarking_forward.1} parent=0 // pred_check
    _
  $region39: #{watermarking_forward.1} parent=0 // pred_check_branch
    %42 = sbr.rel (0) target = $region41
  $region40: #{watermarking_forward.1} parent=0 // pred_region
    _
  $region41: #{watermarking_forward.1} parent=0 // pred_fallthru
    _
  // Predicated region
  $region42: #{watermarking_forward.1} parent=0 // pred_check
    _
  $region43: #{watermarking_forward.1} parent=0 // pred_check_branch
    %44 = sbr.rel (0) target = $region45
  $region44: #{watermarking_forward.1} parent=0 // pred_region
    _
  $region45: #{watermarking_forward.1} parent=0 // pred_fallthru
    _
  // Predicated region
  $region46: #{watermarking_forward.1} parent=0 // pred_check
    _
  $region47: #{watermarking_forward.1} parent=0 // pred_check_branch
    %46 = sbr.rel (0) target = $region49
  $region48: #{watermarking_forward.1} parent=0 // pred_region
    _
  $region49: #{watermarking_forward.1} parent=0 // pred_fallthru
    _
  // Predicated region
  $region50: #{watermarking_forward.1} parent=0 // pred_check
    _
  $region51: #{watermarking_forward.1} parent=0 // pred_check_branch
    %48 = sbr.rel (0) target = $region53
  $region52: #{watermarking_forward.1} parent=0 // pred_region
    _
  $region53: #{watermarking_forward.1} parent=0 // pred_fallthru
    _
  // Predicated region
  $region54: #{watermarking_forward.1} parent=0 // pred_check
    _
  $region55: #{watermarking_forward.1} parent=0 // pred_check_branch
    %50 = sbr.rel (0) target = $region57
  $region56: #{watermarking_forward.1} parent=0 // pred_region
    _
  $region57: #{watermarking_forward.1} parent=0 // pred_fallthru
    _
  // Predicated region
  $region58: #{watermarking_forward.1} parent=0 // pred_check
    _
  $region59: #{watermarking_forward.1} parent=0 // pred_check_branch
    %52 = sbr.rel (0) target = $region61
  $region60: #{watermarking_forward.1} parent=0 // pred_region
    _
  $region61: #{watermarking_forward.1} parent=0 // pred_fallthru
    _
  // Predicated region
  $region62: #{watermarking_forward.1} parent=0 // pred_check
    _
  $region63: #{watermarking_forward.1} parent=0 // pred_check_branch
    %54 = sbr.rel (0) target = $region65
  $region64: #{watermarking_forward.1} parent=0 // pred_region
    _
  $region65: #{watermarking_forward.1} parent=0 // pred_fallthru
    _
  %v56 = vld [vmem:[%s0] sm:$0xf]
  %v57 = vld [vmem:[%s0 + $0x4] sm:$0xf]
  %v58 = vld [vmem:[%s0 + $0x8] sm:$0xf]
  %v59 = vld [vmem:[%s0 + $0xc] sm:$0xf]
  %v60 = vld [vmem:[%s0 + $0x10] sm:$0xf]
  %v61 = vld [vmem:[%s0 + $0x14] sm:$0xf]
  %v62 = vld [vmem:[%s0 + $0x18] sm:$0xf]
  %v63 = vld [vmem:[%s0 + $0x1c] sm:$0xf]
  %v64 = vld [vmem:[%s0 + $0x20] sm:$0xf]
  %v65 = vld [vmem:[%s0 + $0x24] sm:$0xf]
  %v66 = vld [vmem:[%s0 + $0x28] sm:$0xf]
  %v67 = vld [vmem:[%s0 + $0x2c] sm:$0xf]
  %v68 = vld [vmem:[%s0 + $0x30] sm:$0xf]
  %v69 = vld [vmem:[%s0 + $0x34] sm:$0xf]
  %v70 = vld [vmem:[%s0 + $0x38] sm:$0xf]
  %v71 = vld [vmem:[%s0 + $0x3c] sm:$0xf]
  %v72 = vld [vmem:[%s0 + $0x40] sm:$0xf]
  %v73 = vld [vmem:[%s0 + $0x44] sm:$0xf]
  %v74 = vld [vmem:[%s0 + $0x48] sm:$0xf]
  %v75 = vld [vmem:[%s0 + $0x4c] sm:$0xf]
  %v76 = vld [vmem:[%s0 + $0x50] sm:$0xf]
  %v77 = vld [vmem:[%s0 + $0x54] sm:$0xf]
  %v78 = vld [vmem:[%s0 + $0x58] sm:$0xf]
  %v79 = vld [vmem:[%s0 + $0x5c] sm:$0xf]
  %v80 = vld [vmem:[%s0 + $0x60] sm:$0xf]
  %v81 = vld [vmem:[%s0 + $0x64] sm:$0xf]
  %v82 = vld [vmem:[%s0 + $0x68] sm:$0xf]
  %v83 = vld [vmem:[%s0 + $0x6c] sm:$0xf]
  %v84 = vld [vmem:[%s0 + $0x70] sm:$0xf]
  %v85 = vld [vmem:[%s0 + $0x74] sm:$0xf]
  %v86 = vld [vmem:[%s0 + $0x78] sm:$0xf]
  %v87 = vld [vmem:[%s0 + $0x7c] sm:$0xf]
  %v88 = vld [vmem:[%s0 + $0x80] sm:$0xf]
  %v89 = vld [vmem:[%s0 + $0x84] sm:$0xf]
  %v90 = vld [vmem:[%s0 + $0x88] sm:$0xf]
  %v91 = vld [vmem:[%s0 + $0x8c] sm:$0xf]
  %v92 = vld [vmem:[%s0 + $0x90] sm:$0xf]
  %v93 = vld [vmem:[%s0 + $0x94] sm:$0xf]
  %v94 = vld [vmem:[%s0 + $0x98] sm:$0xf]
  %v95 = vld [vmem:[%s0 + $0x9c] sm:$0xf]
  %v96 = vld [vmem:[%s0 + $0xa0] sm:$0xf]
  %v97 = vld [vmem:[%s0 + $0xa4] sm:$0xf]
  %v98 = vld [vmem:[%s0 + $0xa8] sm:$0xf]
  %v99 = vld [vmem:[%s0 + $0xac] sm:$0xf]
  %v100 = vld [vmem:[%s0 + $0xb0] sm:$0xf]
  %v101 = vld [vmem:[%s0 + $0xb4] sm:$0xf]
  %v102 = vld [vmem:[%s0 + $0xb8] sm:$0xf]
  %v103 = vld [vmem:[%s0 + $0xbc] sm:$0xf]
  %v104 = vld [vmem:[%s0 + $0xc0] sm:$0xf]
  %v105 = vld [vmem:[%s0 + $0xc4] sm:$0xf]
  %v106 = vld [vmem:[%s0 + $0xc8] sm:$0xf]
  %v107 = vld [vmem:[%s0 + $0xcc] sm:$0xf]
  %v108 = vld [vmem:[%s0 + $0xd0] sm:$0xf]
  %v109 = vld [vmem:[%s0 + $0xd4] sm:$0xf]
  %v110 = vld [vmem:[%s0 + $0xd8] sm:$0xf]
  %v111 = vld [vmem:[%s0 + $0xdc] sm:$0xf]
  %v112 = vld [vmem:[%s0 + $0xe0] sm:$0xf]
  %v113 = vld [vmem:[%s0 + $0xe4] sm:$0xf]
  %v114 = vld [vmem:[%s0 + $0xe8] sm:$0xf]
  %v115 = vld [vmem:[%s0 + $0xec] sm:$0xf]
  %v116 = vld [vmem:[%s0 + $0xf0] sm:$0xf]
  %v117 = vld [vmem:[%s0 + $0xf4] sm:$0xf]
  %v118 = vld [vmem:[%s0 + $0xf8] sm:$0xf]
  %v119 = vld [vmem:[%s0 + $0xfc] sm:$0xf]
  %v120 = vld [vmem:[%s0 + $0x100] sm:$0xf]
  %v121 = vld [vmem:[%s0 + $0x104] sm:$0xf]
  %v122 = vld [vmem:[%s0 + $0x108] sm:$0xf]
  %v123 = vld [vmem:[%s0 + $0x10c] sm:$0xf]
  %v124 = vld [vmem:[%s0 + $0x110] sm:$0xf]
  %v125 = vld [vmem:[%s0 + $0x114] sm:$0xf]
  %v126 = vld [vmem:[%s0 + $0x118] sm:$0xf]
  %v127 = vld [vmem:[%s0 + $0x11c] sm:$0xf]
  %v128 = vld [vmem:[%s0 + $0x120] sm:$0xf]
  %v129 = vld [vmem:[%s0 + $0x124] sm:$0xf]
  %v130 = vld [vmem:[%s0 + $0x128] sm:$0xf]
  %v131 = vld [vmem:[%s0 + $0x12c] sm:$0xf]
  %v132 = vld [vmem:[%s0 + $0x130] sm:$0xf]
  %v133 = vld [vmem:[%s0 + $0x134] sm:$0xf]
  %v134 = vld [vmem:[%s0 + $0x138] sm:$0xf]
  %v135 = vld [vmem:[%s0 + $0x13c] sm:$0xf]
  %v136 = vld [vmem:[%s0 + $0x140] sm:$0xf]
  %v137 = vld [vmem:[%s0 + $0x144] sm:$0xf]
  %v138 = vld [vmem:[%s0 + $0x148] sm:$0xf]
  %v139 = vld [vmem:[%s0 + $0x14c] sm:$0xf]
  %v140 = vld [vmem:[%s0 + $0x150] sm:$0xf]
  %v141 = vld [vmem:[%s0 + $0x154] sm:$0xf]
  %v142 = vld [vmem:[%s0 + $0x158] sm:$0xf]
  %v143 = vld [vmem:[%s0 + $0x15c] sm:$0xf]
  %v144 = vld [vmem:[%s0 + $0x160] sm:$0xf]
  %v145 = vld [vmem:[%s0 + $0x164] sm:$0xf]
  %v146 = vld [vmem:[%s0 + $0x168] sm:$0xf]
  %v147 = vld [vmem:[%s0 + $0x16c] sm:$0xf]
  %v148 = vld [vmem:[%s0 + $0x170] sm:$0xf]
  %v149 = vld [vmem:[%s0 + $0x174] sm:$0xf]
  %v150 = vld [vmem:[%s0 + $0x178] sm:$0xf]
  %v151 = vld [vmem:[%s0 + $0x17c] sm:$0xf]
  %v152 = vld [vmem:[%s0 + $0x180] sm:$0xf]
  %v153 = vld [vmem:[%s0 + $0x184] sm:$0xf]
  %v154 = vld [vmem:[%s0 + $0x188] sm:$0xf]
  %v155 = vld [vmem:[%s0 + $0x18c] sm:$0xf]
  %v156 = vld [vmem:[%s0 + $0x190] sm:$0xf]
  %v157 = vld [vmem:[%s0 + $0x194] sm:$0xf]
  %v158 = vld [vmem:[%s0 + $0x198] sm:$0xf]
  %v159 = vld [vmem:[%s0 + $0x19c] sm:$0xf]
  %v160 = vld [vmem:[%s0 + $0x1a0] sm:$0xf]
  %v161 = vld [vmem:[%s0 + $0x1a4] sm:$0xf]
  %v162 = vld [vmem:[%s0 + $0x1a8] sm:$0xf]
  %v163 = vld [vmem:[%s0 + $0x1ac] sm:$0xf]
  %v164 = vld [vmem:[%s0 + $0x1b0] sm:$0xf]
  %v165 = vld [vmem:[%s0 + $0x1b4] sm:$0xf]
  %v166 = vld [vmem:[%s0 + $0x1b8] sm:$0xf]
  %v167 = vld [vmem:[%s0 + $0x1bc] sm:$0xf]
  %v168 = vld [vmem:[%s0 + $0x1c0] sm:$0xf]
  %v169 = vld [vmem:[%s0 + $0x1c4] sm:$0xf]
  %v170 = vld [vmem:[%s0 + $0x1c8] sm:$0xf]
  %v171 = vld [vmem:[%s0 + $0x1cc] sm:$0xf]
  %v172 = vld [vmem:[%s0 + $0x1d0] sm:$0xf]
  %v173 = vld [vmem:[%s0 + $0x1d4] sm:$0xf]
  %v174 = vld [vmem:[%s0 + $0x1d8] sm:$0xf]
  %v175 = vld [vmem:[%s0 + $0x1dc] sm:$0xf]
  %v176 = vld [vmem:[%s0 + $0x1e0] sm:$0xf]
  %v177 = vld [vmem:[%s0 + $0x1e4] sm:$0xf]
  %v178 = vld [vmem:[%s0 + $0x1e8] sm:$0xf]
  %v179 = vld [vmem:[%s0 + $0x1ec] sm:$0xf]
  %v180 = vld [vmem:[%s0 + $0x1f0] sm:$0xf]
  %v181 = vld [vmem:[%s0 + $0x1f4] sm:$0xf]
  %v182 = vld [vmem:[%s0 + $0x1f8] sm:$0xf]
  %v183 = vld [vmem:[%s0 + $0x1fc] sm:$0xf]
  %v184 = vld [vmem:[%s0 + $0x200] sm:$0xf]
  %v185 = vld [vmem:[%s0 + $0x204] sm:$0xf]
  %v186 = vld [vmem:[%s0 + $0x208] sm:$0xf]
  %v187 = vld [vmem:[%s0 + $0x20c] sm:$0xf]
  %v188 = vld [vmem:[%s0 + $0x210] sm:$0xf]
  %v189 = vld [vmem:[%s0 + $0x214] sm:$0xf]
  %v190 = vld [vmem:[%s0 + $0x218] sm:$0xf]
  %v191 = vld [vmem:[%s0 + $0x21c] sm:$0xf]
  %v192 = vld [vmem:[%s0 + $0x220] sm:$0xf]
  %v193 = vld [vmem:[%s0 + $0x224] sm:$0xf]
  %v194 = vld [vmem:[%s0 + $0x228] sm:$0xf]
  %v195 = vld [vmem:[%s0 + $0x22c] sm:$0xf]
  %v196 = vld [vmem:[%s0 + $0x230] sm:$0xf]
  %v197 = vld [vmem:[%s0 + $0x234] sm:$0xf]
  %v198 = vld [vmem:[%s0 + $0x238] sm:$0xf]
  %v199 = vld [vmem:[%s0 + $0x23c] sm:$0xf]
  %v200 = vld [vmem:[%s0 + $0x240] sm:$0xf]
  %v201 = vld [vmem:[%s0 + $0x244] sm:$0xf]
  %v202 = vld [vmem:[%s0 + $0x248] sm:$0xf]
  %v203 = vld [vmem:[%s0 + $0x24c] sm:$0xf]
  %v204 = vld [vmem:[%s0 + $0x250] sm:$0xf]
  %v205 = vld [vmem:[%s0 + $0x254] sm:$0xf]
  %v206 = vld [vmem:[%s0 + $0x258] sm:$0xf]
  %v207 = vld [vmem:[%s0 + $0x25c] sm:$0xf]
  %v208 = vld [vmem:[%s0 + $0x260] sm:$0xf]
  %v209 = vld [vmem:[%s0 + $0x264] sm:$0xf]
  %v210 = vld [vmem:[%s0 + $0x268] sm:$0xf]
  %v211 = vld [vmem:[%s0 + $0x26c] sm:$0xf]
  %v212 = vld [vmem:[%s0 + $0x270] sm:$0xf]
  %v213 = vld [vmem:[%s0 + $0x274] sm:$0xf]
  %v214 = vld [vmem:[%s0 + $0x278] sm:$0xf]
  %v215 = vld [vmem:[%s0 + $0x27c] sm:$0xf]
  %v216 = vld [vmem:[%s0 + $0x280] sm:$0xf]
  %v217 = vld [vmem:[%s0 + $0x284] sm:$0xf]
  %v218 = vld [vmem:[%s0 + $0x288] sm:$0xf]
  %v219 = vld [vmem:[%s0 + $0x28c] sm:$0xf]
  %v220 = vld [vmem:[%s0 + $0x290] sm:$0xf]
  %v221 = vld [vmem:[%s0 + $0x294] sm:$0xf]
  %v222 = vld [vmem:[%s0 + $0x298] sm:$0xf]
  %v223 = vld [vmem:[%s0 + $0x29c] sm:$0xf]
  %v224 = vld [vmem:[%s0 + $0x2a0] sm:$0xf]
  %v225 = vld [vmem:[%s0 + $0x2a4] sm:$0xf]
  %v226 = vld [vmem:[%s0 + $0x2a8] sm:$0xf]
  %v227 = vld [vmem:[%s0 + $0x2ac] sm:$0xf]
  %v228 = vld [vmem:[%s0 + $0x2b0] sm:$0xf]
  %v229 = vld [vmem:[%s0 + $0x2b4] sm:$0xf]
  %v230 = vld [vmem:[%s0 + $0x2b8] sm:$0xf]
  %v231 = vld [vmem:[%s0 + $0x2bc] sm:$0xf]
  %v232 = vld [vmem:[%s0 + $0x2c0] sm:$0xf]
  %v233 = vld [vmem:[%s0 + $0x2c4] sm:$0xf]
  %v234 = vld [vmem:[%s0 + $0x2c8] sm:$0xf]
  %v235 = vld [vmem:[%s0 + $0x2cc] sm:$0xf]
  %v236 = vld [vmem:[%s0 + $0x2d0] sm:$0xf]
  %v237 = vld [vmem:[%s0 + $0x2d4] sm:$0xf]
  %v238 = vld [vmem:[%s0 + $0x2d8] sm:$0xf]
  %v239 = vld [vmem:[%s0 + $0x2dc] sm:$0xf]
  %v240 = vld [vmem:[%s0 + $0x2e0] sm:$0xf]
  %v241 = vld [vmem:[%s0 + $0x2e4] sm:$0xf]
  %v242 = vld [vmem:[%s0 + $0x2e8] sm:$0xf]
  %v243 = vld [vmem:[%s0 + $0x2ec] sm:$0xf]
  %v244 = vld [vmem:[%s0 + $0x2f0] sm:$0xf]
  %v245 = vld [vmem:[%s0 + $0x2f4] sm:$0xf]
  %v246 = vld [vmem:[%s0 + $0x2f8] sm:$0xf]
  %v247 = vld [vmem:[%s0 + $0x2fc] sm:$0xf]
  %v248 = vld [vmem:[%s0 + $0x300] sm:$0xf]
  %v249 = vld [vmem:[%s0 + $0x304] sm:$0xf]
  %v250 = vld [vmem:[%s0 + $0x308] sm:$0xf]
  %v251 = vld [vmem:[%s0 + $0x30c] sm:$0xf]
  %v252 = vld [vmem:[%s0 + $0x310] sm:$0xf]
  %v253 = vld [vmem:[%s0 + $0x314] sm:$0xf]
  %v254 = vld [vmem:[%s0 + $0x318] sm:$0xf]
  %v255 = vld [vmem:[%s0 + $0x31c] sm:$0xf]
  %v256 = vld [vmem:[%s0 + $0x320] sm:$0xf]
  %v257 = vld [vmem:[%s0 + $0x324] sm:$0xf]
  %v258 = vld [vmem:[%s0 + $0x328] sm:$0xf]
  %v259 = vld [vmem:[%s0 + $0x32c] sm:$0xf]
  %v260 = vld [vmem:[%s0 + $0x330] sm:$0xf]
  %v261 = vld [vmem:[%s0 + $0x334] sm:$0xf]
  %v262 = vld [vmem:[%s0 + $0x338] sm:$0xf]
  %v263 = vld [vmem:[%s0 + $0x33c] sm:$0xf]
  %v264 = vld [vmem:[%s0 + $0x340] sm:$0xf]
  %v265 = vld [vmem:[%s0 + $0x344] sm:$0xf]
  %v266 = vld [vmem:[%s0 + $0x348] sm:$0xf]
  %v267 = vld [vmem:[%s0 + $0x34c] sm:$0xf]
  %v268 = vld [vmem:[%s0 + $0x350] sm:$0xf]
  %v269 = vld [vmem:[%s0 + $0x354] sm:$0xf]
  %v270 = vld [vmem:[%s0 + $0x358] sm:$0xf]
  %v271 = vld [vmem:[%s0 + $0x35c] sm:$0xf]
  %v272 = vld [vmem:[%s0 + $0x360] sm:$0xf]
  %v273 = vld [vmem:[%s0 + $0x364] sm:$0xf]
  %v274 = vld [vmem:[%s0 + $0x368] sm:$0xf]
  %v275 = vld [vmem:[%s0 + $0x36c] sm:$0xf]
  %v276 = vld [vmem:[%s0 + $0x370] sm:$0xf]
  %v277 = vld [vmem:[%s0 + $0x374] sm:$0xf]
  %v278 = vld [vmem:[%s0 + $0x378] sm:$0xf]
  %v279 = vld [vmem:[%s0 + $0x37c] sm:$0xf]
  %v280 = vld [vmem:[%s0 + $0x380] sm:$0xf]
  %v281 = vld [vmem:[%s0 + $0x384] sm:$0xf]
  %v282 = vld [vmem:[%s0 + $0x388] sm:$0xf]
  %v283 = vld [vmem:[%s0 + $0x38c] sm:$0xf]
  %v284 = vld [vmem:[%s0 + $0x390] sm:$0xf]
  %v285 = vld [vmem:[%s0 + $0x394] sm:$0xf]
  %v286 = vld [vmem:[%s0 + $0x398] sm:$0xf]
  %v287 = vld [vmem:[%s0 + $0x39c] sm:$0xf]
  %v288 = vld [vmem:[%s0 + $0x3a0] sm:$0xf]
  %v289 = vld [vmem:[%s0 + $0x3a4] sm:$0xf]
  %v290 = vld [vmem:[%s0 + $0x3a8] sm:$0xf]
  %v291 = vld [vmem:[%s0 + $0x3ac] sm:$0xf]
  %v292 = vld [vmem:[%s0 + $0x3b0] sm:$0xf]
  %v293 = vld [vmem:[%s0 + $0x3b4] sm:$0xf]
  %v294 = vld [vmem:[%s0 + $0x3b8] sm:$0xf]
  %v295 = vld [vmem:[%s0 + $0x3bc] sm:$0xf]
  %v296 = vld [vmem:[%s0 + $0x3c0] sm:$0xf]
  %v297 = vld [vmem:[%s0 + $0x3c4] sm:$0xf]
  %v298 = vld [vmem:[%s0 + $0x3c8] sm:$0xf]
  %v299 = vld [vmem:[%s0 + $0x3cc] sm:$0xf]
  %v300 = vld [vmem:[%s0 + $0x3d0] sm:$0xf]
  %v301 = vld [vmem:[%s0 + $0x3d4] sm:$0xf]
  %v302 = vld [vmem:[%s0 + $0x3d8] sm:$0xf]
  %v303 = vld [vmem:[%s0 + $0x3dc] sm:$0xf]
  %v304 = vld [vmem:[%s0 + $0x3e0] sm:$0xf]
  %v305 = vld [vmem:[%s0 + $0x3e4] sm:$0xf]
  %v306 = vld [vmem:[%s0 + $0x3e8] sm:$0xf]
  %v307 = vld [vmem:[%s0 + $0x3ec] sm:$0xf]
  %v308 = vld [vmem:[%s0 + $0x3f0] sm:$0xf]
  %v309 = vld [vmem:[%s0 + $0x3f4] sm:$0xf]
  %v310 = vld [vmem:[%s0 + $0x3f8] sm:$0xf]
  %v311 = vld [vmem:[%s0 + $0x3fc] sm:$0xf]
  %v312 = vld [vmem:[%s2] sm:$0xf]
  %v313 = vld [vmem:[%s2 + $0x4] sm:$0xf]
  %v314 = vld [vmem:[%s2 + $0x8] sm:$0xf]
  %v315 = vld [vmem:[%s2 + $0xc] sm:$0xf]
  %v316 = vld [vmem:[%s2 + $0x10] sm:$0xf]
  %v317 = vld [vmem:[%s2 + $0x14] sm:$0xf]
  %v318 = vld [vmem:[%s2 + $0x18] sm:$0xf]
  %v319 = vld [vmem:[%s2 + $0x1c] sm:$0xf]
  %v320 = vld [vmem:[%s2 + $0x20] sm:$0xf]
  %v321 = vld [vmem:[%s2 + $0x24] sm:$0xf]
  %v322 = vld [vmem:[%s2 + $0x28] sm:$0xf]
  %v323 = vld [vmem:[%s2 + $0x2c] sm:$0xf]
  %v324 = vld [vmem:[%s2 + $0x30] sm:$0xf]
  %v325 = vld [vmem:[%s2 + $0x34] sm:$0xf]
  %v326 = vld [vmem:[%s2 + $0x38] sm:$0xf]
  %v327 = vld [vmem:[%s2 + $0x3c] sm:$0xf]
  %v328 = vld [vmem:[%s3] sm:$0x1]
  %v330 = vlaneseq
  %v331 = vshrl.u32 %v330, 7
  %v332 = vsub.s32 0, %v331
  %v333 = vrot.slane %v328, %v332
  %v591 = vunpack.c.l.b16 %v56
  %v592 = vunpack.c.l.b16 %v57
  %v593 = vunpack.c.l.b16 %v58
  %v594 = vunpack.c.l.b16 %v59
  %v595 = vunpack.c.l.b16 %v60
  %v596 = vunpack.c.l.b16 %v61
  %v597 = vunpack.c.l.b16 %v62
  %v598 = vunpack.c.l.b16 %v63
  %v599 = vunpack.c.l.b16 %v64
  %v600 = vunpack.c.l.b16 %v65
  %v601 = vunpack.c.l.b16 %v66
  %v602 = vunpack.c.l.b16 %v67
  %v603 = vunpack.c.l.b16 %v68
  %v604 = vunpack.c.l.b16 %v69
  %v605 = vunpack.c.l.b16 %v70
  %v606 = vunpack.c.l.b16 %v71
  %v607 = vunpack.c.l.b16 %v72
  %v608 = vunpack.c.l.b16 %v73
  %v609 = vunpack.c.l.b16 %v74
  %v610 = vunpack.c.l.b16 %v75
  %v611 = vunpack.c.l.b16 %v76
  %v612 = vunpack.c.l.b16 %v77
  %v613 = vunpack.c.l.b16 %v78
  %v614 = vunpack.c.l.b16 %v79
  %v615 = vunpack.c.l.b16 %v80
  %v616 = vunpack.c.l.b16 %v81
  %v617 = vunpack.c.l.b16 %v82
  %v618 = vunpack.c.l.b16 %v83
  %v619 = vunpack.c.l.b16 %v84
  %v620 = vunpack.c.l.b16 %v85
  %v621 = vunpack.c.l.b16 %v86
  %v622 = vunpack.c.l.b16 %v87
  %v623 = vunpack.c.l.b16 %v88
  %v624 = vunpack.c.l.b16 %v89
  %v625 = vunpack.c.l.b16 %v90
  %v626 = vunpack.c.l.b16 %v91
  %v627 = vunpack.c.l.b16 %v92
  %v628 = vunpack.c.l.b16 %v93
  %v629 = vunpack.c.l.b16 %v94
  %v630 = vunpack.c.l.b16 %v95
  %v631 = vunpack.c.l.b16 %v96
  %v632 = vunpack.c.l.b16 %v97
  %v633 = vunpack.c.l.b16 %v98
  %v634 = vunpack.c.l.b16 %v99
  %v635 = vunpack.c.l.b16 %v100
  %v636 = vunpack.c.l.b16 %v101
  %v637 = vunpack.c.l.b16 %v102
  %v638 = vunpack.c.l.b16 %v103
  %v639 = vunpack.c.l.b16 %v104
  %v640 = vunpack.c.l.b16 %v105
  %v641 = vunpack.c.l.b16 %v106
  %v642 = vunpack.c.l.b16 %v107
  %v643 = vunpack.c.l.b16 %v108
  %v644 = vunpack.c.l.b16 %v109
  %v645 = vunpack.c.l.b16 %v110
  %v646 = vunpack.c.l.b16 %v111
  %v647 = vunpack.c.l.b16 %v112
  %v648 = vunpack.c.l.b16 %v113
  %v649 = vunpack.c.l.b16 %v114
  %v650 = vunpack.c.l.b16 %v115
  %v651 = vunpack.c.l.b16 %v116
  %v652 = vunpack.c.l.b16 %v117
  %v653 = vunpack.c.l.b16 %v118
  %v654 = vunpack.c.l.b16 %v119
  %v655 = vunpack.c.l.b16 %v120
  %v656 = vunpack.c.l.b16 %v121
  %v657 = vunpack.c.l.b16 %v122
  %v658 = vunpack.c.l.b16 %v123
  %v659 = vunpack.c.l.b16 %v124
  %v660 = vunpack.c.l.b16 %v125
  %v661 = vunpack.c.l.b16 %v126
  %v662 = vunpack.c.l.b16 %v127
  %v663 = vunpack.c.l.b16 %v128
  %v664 = vunpack.c.l.b16 %v129
  %v665 = vunpack.c.l.b16 %v130
  %v666 = vunpack.c.l.b16 %v131
  %v667 = vunpack.c.l.b16 %v132
  %v668 = vunpack.c.l.b16 %v133
  %v669 = vunpack.c.l.b16 %v134
  %v670 = vunpack.c.l.b16 %v135
  %v671 = vunpack.c.l.b16 %v136
  %v672 = vunpack.c.l.b16 %v137
  %v673 = vunpack.c.l.b16 %v138
  %v674 = vunpack.c.l.b16 %v139
  %v675 = vunpack.c.l.b16 %v140
  %v676 = vunpack.c.l.b16 %v141
  %v677 = vunpack.c.l.b16 %v142
  %v678 = vunpack.c.l.b16 %v143
  %v679 = vunpack.c.l.b16 %v144
  %v680 = vunpack.c.l.b16 %v145
  %v681 = vunpack.c.l.b16 %v146
  %v682 = vunpack.c.l.b16 %v147
  %v683 = vunpack.c.l.b16 %v148
  %v684 = vunpack.c.l.b16 %v149
  %v685 = vunpack.c.l.b16 %v150
  %v686 = vunpack.c.l.b16 %v151
  %v687 = vunpack.c.l.b16 %v152
  %v688 = vunpack.c.l.b16 %v153
  %v689 = vunpack.c.l.b16 %v154
  %v690 = vunpack.c.l.b16 %v155
  %v691 = vunpack.c.l.b16 %v156
  %v692 = vunpack.c.l.b16 %v157
  %v693 = vunpack.c.l.b16 %v158
  %v694 = vunpack.c.l.b16 %v159
  %v695 = vunpack.c.l.b16 %v160
  %v696 = vunpack.c.l.b16 %v161
  %v697 = vunpack.c.l.b16 %v162
  %v698 = vunpack.c.l.b16 %v163
  %v699 = vunpack.c.l.b16 %v164
  %v700 = vunpack.c.l.b16 %v165
  %v701 = vunpack.c.l.b16 %v166
  %v702 = vunpack.c.l.b16 %v167
  %v703 = vunpack.c.l.b16 %v168
  %v704 = vunpack.c.l.b16 %v169
  %v705 = vunpack.c.l.b16 %v170
  %v706 = vunpack.c.l.b16 %v171
  %v707 = vunpack.c.l.b16 %v172
  %v708 = vunpack.c.l.b16 %v173
  %v709 = vunpack.c.l.b16 %v174
  %v710 = vunpack.c.l.b16 %v175
  %v711 = vunpack.c.l.b16 %v176
  %v712 = vunpack.c.l.b16 %v177
  %v713 = vunpack.c.l.b16 %v178
  %v714 = vunpack.c.l.b16 %v179
  %v715 = vunpack.c.l.b16 %v180
  %v716 = vunpack.c.l.b16 %v181
  %v717 = vunpack.c.l.b16 %v182
  %v718 = vunpack.c.l.b16 %v183
  %v719 = vunpack.c.l.b16 %v184
  %v720 = vunpack.c.l.b16 %v185
  %v721 = vunpack.c.l.b16 %v186
  %v722 = vunpack.c.l.b16 %v187
  %v723 = vunpack.c.l.b16 %v188
  %v724 = vunpack.c.l.b16 %v189
  %v725 = vunpack.c.l.b16 %v190
  %v726 = vunpack.c.l.b16 %v191
  %v727 = vunpack.c.l.b16 %v192
  %v728 = vunpack.c.l.b16 %v193
  %v729 = vunpack.c.l.b16 %v194
  %v730 = vunpack.c.l.b16 %v195
  %v731 = vunpack.c.l.b16 %v196
  %v732 = vunpack.c.l.b16 %v197
  %v733 = vunpack.c.l.b16 %v198
  %v734 = vunpack.c.l.b16 %v199
  %v735 = vunpack.c.l.b16 %v200
  %v736 = vunpack.c.l.b16 %v201
  %v737 = vunpack.c.l.b16 %v202
  %v738 = vunpack.c.l.b16 %v203
  %v739 = vunpack.c.l.b16 %v204
  %v740 = vunpack.c.l.b16 %v205
  %v741 = vunpack.c.l.b16 %v206
  %v742 = vunpack.c.l.b16 %v207
  %v743 = vunpack.c.l.b16 %v208
  %v744 = vunpack.c.l.b16 %v209
  %v745 = vunpack.c.l.b16 %v210
  %v746 = vunpack.c.l.b16 %v211
  %v747 = vunpack.c.l.b16 %v212
  %v748 = vunpack.c.l.b16 %v213
  %v749 = vunpack.c.l.b16 %v214
  %v750 = vunpack.c.l.b16 %v215
  %v751 = vunpack.c.l.b16 %v216
  %v752 = vunpack.c.l.b16 %v217
  %v753 = vunpack.c.l.b16 %v218
  %v754 = vunpack.c.l.b16 %v219
  %v755 = vunpack.c.l.b16 %v220
  %v756 = vunpack.c.l.b16 %v221
  %v757 = vunpack.c.l.b16 %v222
  %v758 = vunpack.c.l.b16 %v223
  %v759 = vunpack.c.l.b16 %v224
  %v760 = vunpack.c.l.b16 %v225
  %v761 = vunpack.c.l.b16 %v226
  %v762 = vunpack.c.l.b16 %v227
  %v763 = vunpack.c.l.b16 %v228
  %v764 = vunpack.c.l.b16 %v229
  %v765 = vunpack.c.l.b16 %v230
  %v766 = vunpack.c.l.b16 %v231
  %v767 = vunpack.c.l.b16 %v232
  %v768 = vunpack.c.l.b16 %v233
  %v769 = vunpack.c.l.b16 %v234
  %v770 = vunpack.c.l.b16 %v235
  %v771 = vunpack.c.l.b16 %v236
  %v772 = vunpack.c.l.b16 %v237
  %v773 = vunpack.c.l.b16 %v238
  %v774 = vunpack.c.l.b16 %v239
  %v775 = vunpack.c.l.b16 %v240
  %v776 = vunpack.c.l.b16 %v241
  %v777 = vunpack.c.l.b16 %v242
  %v778 = vunpack.c.l.b16 %v243
  %v779 = vunpack.c.l.b16 %v244
  %v780 = vunpack.c.l.b16 %v245
  %v781 = vunpack.c.l.b16 %v246
  %v782 = vunpack.c.l.b16 %v247
  %v783 = vunpack.c.l.b16 %v248
  %v784 = vunpack.c.l.b16 %v249
  %v785 = vunpack.c.l.b16 %v250
  %v786 = vunpack.c.l.b16 %v251
  %v787 = vunpack.c.l.b16 %v252
  %v788 = vunpack.c.l.b16 %v253
  %v789 = vunpack.c.l.b16 %v254
  %v790 = vunpack.c.l.b16 %v255
  %v791 = vunpack.c.l.b16 %v256
  %v792 = vunpack.c.l.b16 %v257
  %v793 = vunpack.c.l.b16 %v258
  %v794 = vunpack.c.l.b16 %v259
  %v795 = vunpack.c.l.b16 %v260
  %v796 = vunpack.c.l.b16 %v261
  %v797 = vunpack.c.l.b16 %v262
  %v798 = vunpack.c.l.b16 %v263
  %v799 = vunpack.c.l.b16 %v264
  %v800 = vunpack.c.l.b16 %v265
  %v801 = vunpack.c.l.b16 %v266
  %v802 = vunpack.c.l.b16 %v267
  %v803 = vunpack.c.l.b16 %v268
  %v804 = vunpack.c.l.b16 %v269
  %v805 = vunpack.c.l.b16 %v270
  %v806 = vunpack.c.l.b16 %v271
  %v807 = vunpack.c.l.b16 %v272
  %v808 = vunpack.c.l.b16 %v273
  %v809 = vunpack.c.l.b16 %v274
  %v810 = vunpack.c.l.b16 %v275
  %v811 = vunpack.c.l.b16 %v276
  %v812 = vunpack.c.l.b16 %v277
  %v813 = vunpack.c.l.b16 %v278
  %v814 = vunpack.c.l.b16 %v279
  %v815 = vunpack.c.l.b16 %v280
  %v816 = vunpack.c.l.b16 %v281
  %v817 = vunpack.c.l.b16 %v282
  %v818 = vunpack.c.l.b16 %v283
  %v819 = vunpack.c.l.b16 %v284
  %v820 = vunpack.c.l.b16 %v285
  %v821 = vunpack.c.l.b16 %v286
  %v822 = vunpack.c.l.b16 %v287
  %v823 = vunpack.c.l.b16 %v288
  %v824 = vunpack.c.l.b16 %v289
  %v825 = vunpack.c.l.b16 %v290
  %v826 = vunpack.c.l.b16 %v291
  %v827 = vunpack.c.l.b16 %v292
  %v828 = vunpack.c.l.b16 %v293
  %v829 = vunpack.c.l.b16 %v294
  %v830 = vunpack.c.l.b16 %v295
  %v831 = vunpack.c.l.b16 %v296
  %v832 = vunpack.c.l.b16 %v297
  %v833 = vunpack.c.l.b16 %v298
  %v834 = vunpack.c.l.b16 %v299
  %v835 = vunpack.c.l.b16 %v300
  %v836 = vunpack.c.l.b16 %v301
  %v837 = vunpack.c.l.b16 %v302
  %v838 = vunpack.c.l.b16 %v303
  %v839 = vunpack.c.l.b16 %v304
  %v840 = vunpack.c.l.b16 %v305
  %v841 = vunpack.c.l.b16 %v306
  %v842 = vunpack.c.l.b16 %v307
  %v843 = vunpack.c.l.b16 %v308
  %v844 = vunpack.c.l.b16 %v309
  %v845 = vunpack.c.l.b16 %v310
  %v846 = vunpack.c.l.b16 %v311
  %v847 = vpack.c.b16 %v592, %v591
  %v848 = vpack.c.b16 %v594, %v593
  %v849 = vpack.c.b16 %v596, %v595
  %v850 = vpack.c.b16 %v598, %v597
  %v851 = vpack.c.b16 %v600, %v599
  %v852 = vpack.c.b16 %v602, %v601
  %v853 = vpack.c.b16 %v604, %v603
  %v854 = vpack.c.b16 %v606, %v605
  %v855 = vpack.c.b16 %v608, %v607
  %v856 = vpack.c.b16 %v610, %v609
  %v857 = vpack.c.b16 %v612, %v611
  %v858 = vpack.c.b16 %v614, %v613
  %v859 = vpack.c.b16 %v616, %v615
  %v860 = vpack.c.b16 %v618, %v617
  %v861 = vpack.c.b16 %v620, %v619
  %v862 = vpack.c.b16 %v622, %v621
  %v863 = vpack.c.b16 %v624, %v623
  %v864 = vpack.c.b16 %v626, %v625
  %v865 = vpack.c.b16 %v628, %v627
  %v866 = vpack.c.b16 %v630, %v629
  %v867 = vpack.c.b16 %v632, %v631
  %v868 = vpack.c.b16 %v634, %v633
  %v869 = vpack.c.b16 %v636, %v635
  %v870 = vpack.c.b16 %v638, %v637
  %v871 = vpack.c.b16 %v640, %v639
  %v872 = vpack.c.b16 %v642, %v641
  %v873 = vpack.c.b16 %v644, %v643
  %v874 = vpack.c.b16 %v646, %v645
  %v875 = vpack.c.b16 %v648, %v647
  %v876 = vpack.c.b16 %v650, %v649
  %v877 = vpack.c.b16 %v652, %v651
  %v878 = vpack.c.b16 %v654, %v653
  %v879 = vpack.c.b16 %v656, %v655
  %v880 = vpack.c.b16 %v658, %v657
  %v881 = vpack.c.b16 %v660, %v659
  %v882 = vpack.c.b16 %v662, %v661
  %v883 = vpack.c.b16 %v664, %v663
  %v884 = vpack.c.b16 %v666, %v665
  %v885 = vpack.c.b16 %v668, %v667
  %v886 = vpack.c.b16 %v670, %v669
  %v887 = vpack.c.b16 %v672, %v671
  %v888 = vpack.c.b16 %v674, %v673
  %v889 = vpack.c.b16 %v676, %v675
  %v890 = vpack.c.b16 %v678, %v677
  %v891 = vpack.c.b16 %v680, %v679
  %v892 = vpack.c.b16 %v682, %v681
  %v893 = vpack.c.b16 %v684, %v683
  %v894 = vpack.c.b16 %v686, %v685
  %v895 = vpack.c.b16 %v688, %v687
  %v896 = vpack.c.b16 %v690, %v689
  %v897 = vpack.c.b16 %v692, %v691
  %v898 = vpack.c.b16 %v694, %v693
  %v899 = vpack.c.b16 %v696, %v695
  %v900 = vpack.c.b16 %v698, %v697
  %v901 = vpack.c.b16 %v700, %v699
  %v902 = vpack.c.b16 %v702, %v701
  %v903 = vpack.c.b16 %v704, %v703
  %v904 = vpack.c.b16 %v706, %v705
  %v905 = vpack.c.b16 %v708, %v707
  %v906 = vpack.c.b16 %v710, %v709
  %v907 = vpack.c.b16 %v712, %v711
  %v908 = vpack.c.b16 %v714, %v713
  %v909 = vpack.c.b16 %v716, %v715
  %v910 = vpack.c.b16 %v718, %v717
  %v911 = vpack.c.b16 %v720, %v719
  %v912 = vpack.c.b16 %v722, %v721
  %v913 = vpack.c.b16 %v724, %v723
  %v914 = vpack.c.b16 %v726, %v725
  %v915 = vpack.c.b16 %v728, %v727
  %v916 = vpack.c.b16 %v730, %v729
  %v917 = vpack.c.b16 %v732, %v731
  %v918 = vpack.c.b16 %v734, %v733
  %v919 = vpack.c.b16 %v736, %v735
  %v920 = vpack.c.b16 %v738, %v737
  %v921 = vpack.c.b16 %v740, %v739
  %v922 = vpack.c.b16 %v742, %v741
  %v923 = vpack.c.b16 %v744, %v743
  %v924 = vpack.c.b16 %v746, %v745
  %v925 = vpack.c.b16 %v748, %v747
  %v926 = vpack.c.b16 %v750, %v749
  %v927 = vpack.c.b16 %v752, %v751
  %v928 = vpack.c.b16 %v754, %v753
  %v929 = vpack.c.b16 %v756, %v755
  %v930 = vpack.c.b16 %v758, %v757
  %v931 = vpack.c.b16 %v760, %v759
  %v932 = vpack.c.b16 %v762, %v761
  %v933 = vpack.c.b16 %v764, %v763
  %v934 = vpack.c.b16 %v766, %v765
  %v935 = vpack.c.b16 %v768, %v767
  %v936 = vpack.c.b16 %v770, %v769
  %v937 = vpack.c.b16 %v772, %v771
  %v938 = vpack.c.b16 %v774, %v773
  %v939 = vpack.c.b16 %v776, %v775
  %v940 = vpack.c.b16 %v778, %v777
  %v941 = vpack.c.b16 %v780, %v779
  %v942 = vpack.c.b16 %v782, %v781
  %v943 = vpack.c.b16 %v784, %v783
  %v944 = vpack.c.b16 %v786, %v785
  %v945 = vpack.c.b16 %v788, %v787
  %v946 = vpack.c.b16 %v790, %v789
  %v947 = vpack.c.b16 %v792, %v791
  %v948 = vpack.c.b16 %v794, %v793
  %v949 = vpack.c.b16 %v796, %v795
  %v950 = vpack.c.b16 %v798, %v797
  %v951 = vpack.c.b16 %v800, %v799
  %v952 = vpack.c.b16 %v802, %v801
  %v953 = vpack.c.b16 %v804, %v803
  %v954 = vpack.c.b16 %v806, %v805
  %v955 = vpack.c.b16 %v808, %v807
  %v956 = vpack.c.b16 %v810, %v809
  %v957 = vpack.c.b16 %v812, %v811
  %v958 = vpack.c.b16 %v814, %v813
  %v959 = vpack.c.b16 %v816, %v815
  %v960 = vpack.c.b16 %v818, %v817
  %v961 = vpack.c.b16 %v820, %v819
  %v962 = vpack.c.b16 %v822, %v821
  %v963 = vpack.c.b16 %v824, %v823
  %v964 = vpack.c.b16 %v826, %v825
  %v965 = vpack.c.b16 %v828, %v827
  %v966 = vpack.c.b16 %v830, %v829
  %v967 = vpack.c.b16 %v832, %v831
  %v968 = vpack.c.b16 %v834, %v833
  %v969 = vpack.c.b16 %v836, %v835
  %v970 = vpack.c.b16 %v838, %v837
  %v971 = vpack.c.b16 %v840, %v839
  %v972 = vpack.c.b16 %v842, %v841
  %v973 = vpack.c.b16 %v844, %v843
  %v974 = vpack.c.b16 %v846, %v845
  %v1119 = vunpack.c.l.b16 %v312
  %v1120 = vunpack.c.l.b16 %v313
  %v1121 = vunpack.c.l.b16 %v314
  %v1122 = vunpack.c.l.b16 %v315
  %v1123 = vunpack.c.l.b16 %v316
  %v1124 = vunpack.c.l.b16 %v317
  %v1125 = vunpack.c.l.b16 %v318
  %v1126 = vunpack.c.l.b16 %v319
  %v1127 = vunpack.c.l.b16 %v320
  %v1128 = vunpack.c.l.b16 %v321
  %v1129 = vunpack.c.l.b16 %v322
  %v1130 = vunpack.c.l.b16 %v323
  %v1131 = vunpack.c.l.b16 %v324
  %v1132 = vunpack.c.l.b16 %v325
  %v1133 = vunpack.c.l.b16 %v326
  %v1134 = vunpack.c.l.b16 %v327
  %v1135 = vpack.c.b16 %v1120, %v1119
  %v1136 = vpack.c.b16 %v1122, %v1121
  %v1137 = vpack.c.b16 %v1124, %v1123
  %v1138 = vpack.c.b16 %v1126, %v1125
  %v1139 = vpack.c.b16 %v1128, %v1127
  %v1140 = vpack.c.b16 %v1130, %v1129
  %v1141 = vpack.c.b16 %v1132, %v1131
  %v1142 = vpack.c.b16 %v1134, %v1133
  %1151 = vmatprep.subr.bf16.mxu0 0
  %1152 = vmatpush1.bf16.msra.mxu0 %v1135
  %1153 = vmatprep.subr.bf16.mxu0 0
  %1154 = vmatpush1.bf16.msra.mxu0 %v1136
  %1155 = vmatprep.subr.bf16.mxu0 0
  %1156 = vmatpush1.bf16.msra.mxu0 %v1137
  %1157 = vmatprep.subr.bf16.mxu0 0
  %1158 = vmatpush1.bf16.msra.mxu0 %v1138
  %1159 = vmatprep.subr.bf16.mxu0 0
  %1160 = vmatpush1.bf16.msra.mxu0 %v1139
  %1161 = vmatprep.subr.bf16.mxu0 0
  %1162 = vmatpush1.bf16.msra.mxu0 %v1140
  %1163 = vmatprep.subr.bf16.mxu0 0
  %1164 = vmatpush1.bf16.msra.mxu0 %v1141
  %1165 = vmatprep.subr.bf16.mxu0 0
  %1166 = vmatpush1.bf16.msra.mxu0 %v1142
  %1167 = vmatprep.subr.bf16.mxu0 0
  %1168 = vmatpush1.bf16.msra.mxu0 0
  %1169 = vmatprep.subr.bf16.mxu0 0
  %1170 = vmatpush1.bf16.msra.mxu0 0
  %1171 = vmatprep.subr.bf16.mxu0 0
  %1172 = vmatpush1.bf16.msra.mxu0 0
  %1173 = vmatprep.subr.bf16.mxu0 0
  %1174 = vmatpush1.bf16.msra.mxu0 0
  %1175 = vmatprep.subr.bf16.mxu0 0
  %1176 = vmatpush1.bf16.msra.mxu0 0
  %1177 = vmatprep.subr.bf16.mxu0 0
  %1178 = vmatpush1.bf16.msra.mxu0 0
  %1179 = vmatprep.subr.bf16.mxu0 0
  %1180 = vmatpush1.bf16.msra.mxu0 0
  %1181 = vmatprep.subr.bf16.mxu0 0
  %1182 = vmatpush1.bf16.msra.mxu0 0
  %1183 = vmatprep.mubr.bf16.mxu0 0
  %1184 = vmatmul.mubr.bf16.gmra.mrb[0].mxu0 %v847
  %v1185 = vpop.f32.mrb[0].mxu0
  %v1186 = vadd.f32 %v333, %v1185
  %v1187 = vpop.f32.mrb[0].mxu0
  %v1188 = vpop.f32.mrb[0].mxu0
  %v1189 = vadd.f32 %v333, %v1188
  %v1190 = vpop.f32.mrb[0].mxu0
  %1191 = vmatprep.mubr.bf16.mxu0 0
  %1192 = vmatmul.mubr.bf16.gmra.mrb[0].mxu0 %v848
  %v1193 = vpop.f32.mrb[0].mxu0
  %v1194 = vadd.f32 %v333, %v1193
  %v1195 = vpop.f32.mrb[0].mxu0
  %v1196 = vpop.f32.mrb[0].mxu0
  %v1197 = vadd.f32 %v333, %v1196
  %v1198 = vpop.f32.mrb[0].mxu0
  %1199 = vmatprep.mubr.bf16.mxu0 0
  %1200 = vmatmul.mubr.bf16.gmra.mrb[0].mxu0 %v849
  %v1201 = vpop.f32.mrb[0].mxu0
  %v1202 = vadd.f32 %v333, %v1201
  %v1203 = vpop.f32.mrb[0].mxu0
  %v1204 = vpop.f32.mrb[0].mxu0
  %v1205 = vadd.f32 %v333, %v1204
  %v1206 = vpop.f32.mrb[0].mxu0
  %1207 = vmatprep.mubr.bf16.mxu0 0
  %1208 = vmatmul.mubr.bf16.gmra.mrb[0].mxu0 %v850
  %v1209 = vpop.f32.mrb[0].mxu0
  %v1210 = vadd.f32 %v333, %v1209
  %v1211 = vpop.f32.mrb[0].mxu0
  %v1212 = vpop.f32.mrb[0].mxu0
  %v1213 = vadd.f32 %v333, %v1212
  %v1214 = vpop.f32.mrb[0].mxu0
  %1215 = vmatprep.mubr.bf16.mxu0 0
  %1216 = vmatmul.mubr.bf16.gmra.mrb[0].mxu0 %v851
  %v1217 = vpop.f32.mrb[0].mxu0
  %v1218 = vadd.f32 %v333, %v1217
  %v1219 = vpop.f32.mrb[0].mxu0
  %v1220 = vpop.f32.mrb[0].mxu0
  %v1221 = vadd.f32 %v333, %v1220
  %v1222 = vpop.f32.mrb[0].mxu0
  %1223 = vmatprep.mubr.bf16.mxu0 0
  %1224 = vmatmul.mubr.bf16.gmra.mrb[0].mxu0 %v852
  %v1225 = vpop.f32.mrb[0].mxu0
  %v1226 = vadd.f32 %v333, %v1225
  %v1227 = vpop.f32.mrb[0].mxu0
  %v1228 = vpop.f32.mrb[0].mxu0
  %v1229 = vadd.f32 %v333, %v1228
  %v1230 = vpop.f32.mrb[0].mxu0
  %1231 = vmatprep.mubr.bf16.mxu0 0
  %1232 = vmatmul.mubr.bf16.gmra.mrb[0].mxu0 %v853
  %v1233 = vpop.f32.mrb[0].mxu0
  %v1234 = vadd.f32 %v333, %v1233
  %v1235 = vpop.f32.mrb[0].mxu0
  %v1236 = vpop.f32.mrb[0].mxu0
  %v1237 = vadd.f32 %v333, %v1236
  %v1238 = vpop.f32.mrb[0].mxu0
  %1239 = vmatprep.mubr.bf16.mxu0 0
  %1240 = vmatmul.mubr.bf16.gmra.mrb[0].mxu0 %v854
  %v1241 = vpop.f32.mrb[0].mxu0
  %v1242 = vadd.f32 %v333, %v1241
  %v1243 = vpop.f32.mrb[0].mxu0
  %v1244 = vpop.f32.mrb[0].mxu0
  %v1245 = vadd.f32 %v333, %v1244
  %v1246 = vpop.f32.mrb[0].mxu0
  %1247 = vmatprep.mubr.bf16.mxu0 0
  %1248 = vmatmul.mubr.bf16.gmra.mrb[0].mxu0 %v855
  %v1249 = vpop.f32.mrb[0].mxu0
  %v1250 = vadd.f32 %v333, %v1249
  %v1251 = vpop.f32.mrb[0].mxu0
  %v1252 = vpop.f32.mrb[0].mxu0
  %v1253 = vadd.f32 %v333, %v1252
  %v1254 = vpop.f32.mrb[0].mxu0
  %1255 = vmatprep.mubr.bf16.mxu0 0
  %1256 = vmatmul.mubr.bf16.gmra.mrb[0].mxu0 %v856
  %v1257 = vpop.f32.mrb[0].mxu0
  %v1258 = vadd.f32 %v333, %v1257
  %v1259 = vpop.f32.mrb[0].mxu0
  %v1260 = vpop.f32.mrb[0].mxu0
  %v1261 = vadd.f32 %v333, %v1260
  %v1262 = vpop.f32.mrb[0].mxu0
  %1263 = vmatprep.mubr.bf16.mxu0 0
  %1264 = vmatmul.mubr.bf16.gmra.mrb[0].mxu0 %v857
  %v1265 = vpop.f32.mrb[0].mxu0
  %v1266 = vadd.f32 %v333, %v1265
  %v1267 = vpop.f32.mrb[0].mxu0
  %v1268 = vpop.f32.mrb[0].mxu0
  %v1269 = vadd.f32 %v333, %v1268
  %v1270 = vpop.f32.mrb[0].mxu0
  %1271 = vmatprep.mubr.bf16.mxu0 0
  %1272 = vmatmul.mubr.bf16.gmra.mrb[0].mxu0 %v858
  %v1273 = vpop.f32.mrb[0].mxu0
  %v1274 = vadd.f32 %v333, %v1273
  %v1275 = vpop.f32.mrb[0].mxu0
  %v1276 = vpop.f32.mrb[0].mxu0
  %v1277 = vadd.f32 %v333, %v1276
  %v1278 = vpop.f32.mrb[0].mxu0
  %1279 = vmatprep.mubr.bf16.mxu0 0
  %1280 = vmatmul.mubr.bf16.gmra.mrb[0].mxu0 %v859
  %v1281 = vpop.f32.mrb[0].mxu0
  %v1282 = vadd.f32 %v333, %v1281
  %v1283 = vpop.f32.mrb[0].mxu0
  %v1284 = vpop.f32.mrb[0].mxu0
  %v1285 = vadd.f32 %v333, %v1284
  %v1286 = vpop.f32.mrb[0].mxu0
  %1287 = vmatprep.mubr.bf16.mxu0 0
  %1288 = vmatmul.mubr.bf16.gmra.mrb[0].mxu0 %v860
  %v1289 = vpop.f32.mrb[0].mxu0
  %v1290 = vadd.f32 %v333, %v1289
  %v1291 = vpop.f32.mrb[0].mxu0
  %v1292 = vpop.f32.mrb[0].mxu0
  %v1293 = vadd.f32 %v333, %v1292
  %v1294 = vpop.f32.mrb[0].mxu0
  %1295 = vmatprep.mubr.bf16.mxu0 0
  %1296 = vmatmul.mubr.bf16.gmra.mrb[0].mxu0 %v861
  %v1297 = vpop.f32.mrb[0].mxu0
  %v1298 = vadd.f32 %v333, %v1297
  %v1299 = vpop.f32.mrb[0].mxu0
  %v1300 = vpop.f32.mrb[0].mxu0
  %v1301 = vadd.f32 %v333, %v1300
  %v1302 = vpop.f32.mrb[0].mxu0
  %1303 = vmatprep.mubr.bf16.mxu0 0
  %1304 = vmatmul.mubr.bf16.gmra.mrb[0].mxu0 %v862
  %v1305 = vpop.f32.mrb[0].mxu0
  %v1306 = vadd.f32 %v333, %v1305
  %v1307 = vpop.f32.mrb[0].mxu0
  %v1308 = vpop.f32.mrb[0].mxu0
  %v1309 = vadd.f32 %v333, %v1308
  %v1310 = vpop.f32.mrb[0].mxu0
  %1311 = vmatprep.mubr.bf16.mxu0 0
  %1312 = vmatmul.mubr.bf16.gmra.mrb[0].mxu0 %v863
  %v1313 = vpop.f32.mrb[0].mxu0
  %v1314 = vadd.f32 %v333, %v1313
  %v1315 = vpop.f32.mrb[0].mxu0
  %v1316 = vpop.f32.mrb[0].mxu0
  %v1317 = vadd.f32 %v333, %v1316
  %v1318 = vpop.f32.mrb[0].mxu0
  %1319 = vmatprep.mubr.bf16.mxu0 0
  %1320 = vmatmul.mubr.bf16.gmra.mrb[0].mxu0 %v864
  %v1321 = vpop.f32.mrb[0].mxu0
  %v1322 = vadd.f32 %v333, %v1321
  %v1323 = vpop.f32.mrb[0].mxu0
  %v1324 = vpop.f32.mrb[0].mxu0
  %v1325 = vadd.f32 %v333, %v1324
  %v1326 = vpop.f32.mrb[0].mxu0
  %1327 = vmatprep.mubr.bf16.mxu0 0
  %1328 = vmatmul.mubr.bf16.gmra.mrb[0].mxu0 %v865
  %v1329 = vpop.f32.mrb[0].mxu0
  %v1330 = vadd.f32 %v333, %v1329
  %v1331 = vpop.f32.mrb[0].mxu0
  %v1332 = vpop.f32.mrb[0].mxu0
  %v1333 = vadd.f32 %v333, %v1332
  %v1334 = vpop.f32.mrb[0].mxu0
  %1335 = vmatprep.mubr.bf16.mxu0 0
  %1336 = vmatmul.mubr.bf16.gmra.mrb[0].mxu0 %v866
  %v1337 = vpop.f32.mrb[0].mxu0
  %v1338 = vadd.f32 %v333, %v1337
  %v1339 = vpop.f32.mrb[0].mxu0
  %v1340 = vpop.f32.mrb[0].mxu0
  %v1341 = vadd.f32 %v333, %v1340
  %v1342 = vpop.f32.mrb[0].mxu0
  %1343 = vmatprep.mubr.bf16.mxu0 0
  %1344 = vmatmul.mubr.bf16.gmra.mrb[0].mxu0 %v867
  %v1345 = vpop.f32.mrb[0].mxu0
  %v1346 = vadd.f32 %v333, %v1345
  %v1347 = vpop.f32.mrb[0].mxu0
  %v1348 = vpop.f32.mrb[0].mxu0
  %v1349 = vadd.f32 %v333, %v1348
  %v1350 = vpop.f32.mrb[0].mxu0
  %1351 = vmatprep.mubr.bf16.mxu0 0
  %1352 = vmatmul.mubr.bf16.gmra.mrb[0].mxu0 %v868
  %v1353 = vpop.f32.mrb[0].mxu0
  %v1354 = vadd.f32 %v333, %v1353
  %v1355 = vpop.f32.mrb[0].mxu0
  %v1356 = vpop.f32.mrb[0].mxu0
  %v1357 = vadd.f32 %v333, %v1356
  %v1358 = vpop.f32.mrb[0].mxu0
  %1359 = vmatprep.mubr.bf16.mxu0 0
  %1360 = vmatmul.mubr.bf16.gmra.mrb[0].mxu0 %v869
  %v1361 = vpop.f32.mrb[0].mxu0
  %v1362 = vadd.f32 %v333, %v1361
  %v1363 = vpop.f32.mrb[0].mxu0
  %v1364 = vpop.f32.mrb[0].mxu0
  %v1365 = vadd.f32 %v333, %v1364
  %v1366 = vpop.f32.mrb[0].mxu0
  %1367 = vmatprep.mubr.bf16.mxu0 0
  %1368 = vmatmul.mubr.bf16.gmra.mrb[0].mxu0 %v870
  %v1369 = vpop.f32.mrb[0].mxu0
  %v1370 = vadd.f32 %v333, %v1369
  %v1371 = vpop.f32.mrb[0].mxu0
  %v1372 = vpop.f32.mrb[0].mxu0
  %v1373 = vadd.f32 %v333, %v1372
  %v1374 = vpop.f32.mrb[0].mxu0
  %1375 = vmatprep.mubr.bf16.mxu0 0
  %1376 = vmatmul.mubr.bf16.gmra.mrb[0].mxu0 %v871
  %v1377 = vpop.f32.mrb[0].mxu0
  %v1378 = vadd.f32 %v333, %v1377
  %v1379 = vpop.f32.mrb[0].mxu0
  %v1380 = vpop.f32.mrb[0].mxu0
  %v1381 = vadd.f32 %v333, %v1380
  %v1382 = vpop.f32.mrb[0].mxu0
  %1383 = vmatprep.mubr.bf16.mxu0 0
  %1384 = vmatmul.mubr.bf16.gmra.mrb[0].mxu0 %v872
  %v1385 = vpop.f32.mrb[0].mxu0
  %v1386 = vadd.f32 %v333, %v1385
  %v1387 = vpop.f32.mrb[0].mxu0
  %v1388 = vpop.f32.mrb[0].mxu0
  %v1389 = vadd.f32 %v333, %v1388
  %v1390 = vpop.f32.mrb[0].mxu0
  %1391 = vmatprep.mubr.bf16.mxu0 0
  %1392 = vmatmul.mubr.bf16.gmra.mrb[0].mxu0 %v873
  %v1393 = vpop.f32.mrb[0].mxu0
  %v1394 = vadd.f32 %v333, %v1393
  %v1395 = vpop.f32.mrb[0].mxu0
  %v1396 = vpop.f32.mrb[0].mxu0
  %v1397 = vadd.f32 %v333, %v1396
  %v1398 = vpop.f32.mrb[0].mxu0
  %1399 = vmatprep.mubr.bf16.mxu0 0
  %1400 = vmatmul.mubr.bf16.gmra.mrb[0].mxu0 %v874
  %v1401 = vpop.f32.mrb[0].mxu0
  %v1402 = vadd.f32 %v333, %v1401
  %v1403 = vpop.f32.mrb[0].mxu0
  %v1404 = vpop.f32.mrb[0].mxu0
  %v1405 = vadd.f32 %v333, %v1404
  %v1406 = vpop.f32.mrb[0].mxu0
  %1407 = vmatprep.mubr.bf16.mxu0 0
  %1408 = vmatmul.mubr.bf16.gmra.mrb[0].mxu0 %v875
  %v1409 = vpop.f32.mrb[0].mxu0
  %v1410 = vadd.f32 %v333, %v1409
  %v1411 = vpop.f32.mrb[0].mxu0
  %v1412 = vpop.f32.mrb[0].mxu0
  %v1413 = vadd.f32 %v333, %v1412
  %v1414 = vpop.f32.mrb[0].mxu0
  %1415 = vmatprep.mubr.bf16.mxu0 0
  %1416 = vmatmul.mubr.bf16.gmra.mrb[0].mxu0 %v876
  %v1417 = vpop.f32.mrb[0].mxu0
  %v1418 = vadd.f32 %v333, %v1417
  %v1419 = vpop.f32.mrb[0].mxu0
  %v1420 = vpop.f32.mrb[0].mxu0
  %v1421 = vadd.f32 %v333, %v1420
  %v1422 = vpop.f32.mrb[0].mxu0
  %1423 = vmatprep.mubr.bf16.mxu0 0
  %1424 = vmatmul.mubr.bf16.gmra.mrb[0].mxu0 %v877
  %v1425 = vpop.f32.mrb[0].mxu0
  %v1426 = vadd.f32 %v333, %v1425
  %v1427 = vpop.f32.mrb[0].mxu0
  %v1428 = vpop.f32.mrb[0].mxu0
  %v1429 = vadd.f32 %v333, %v1428
  %v1430 = vpop.f32.mrb[0].mxu0
  %1431 = vmatprep.mubr.bf16.mxu0 0
  %1432 = vmatmul.mubr.bf16.gmra.mrb[0].mxu0 %v878
  %v1433 = vpop.f32.mrb[0].mxu0
  %v1434 = vadd.f32 %v333, %v1433
  %v1435 = vpop.f32.mrb[0].mxu0
  %v1436 = vpop.f32.mrb[0].mxu0
  %v1437 = vadd.f32 %v333, %v1436
  %v1438 = vpop.f32.mrb[0].mxu0
  %1439 = vmatprep.mubr.bf16.mxu0 0
  %1440 = vmatmul.mubr.bf16.gmra.mrb[0].mxu0 %v879
  %v1441 = vpop.f32.mrb[0].mxu0
  %v1442 = vadd.f32 %v333, %v1441
  %v1443 = vpop.f32.mrb[0].mxu0
  %v1444 = vpop.f32.mrb[0].mxu0
  %v1445 = vadd.f32 %v333, %v1444
  %v1446 = vpop.f32.mrb[0].mxu0
  %1447 = vmatprep.mubr.bf16.mxu0 0
  %1448 = vmatmul.mubr.bf16.gmra.mrb[0].mxu0 %v880
  %v1449 = vpop.f32.mrb[0].mxu0
  %v1450 = vadd.f32 %v333, %v1449
  %v1451 = vpop.f32.mrb[0].mxu0
  %v1452 = vpop.f32.mrb[0].mxu0
  %v1453 = vadd.f32 %v333, %v1452
  %v1454 = vpop.f32.mrb[0].mxu0
  %1455 = vmatprep.mubr.bf16.mxu0 0
  %1456 = vmatmul.mubr.bf16.gmra.mrb[0].mxu0 %v881
  %v1457 = vpop.f32.mrb[0].mxu0
  %v1458 = vadd.f32 %v333, %v1457
  %v1459 = vpop.f32.mrb[0].mxu0
  %v1460 = vpop.f32.mrb[0].mxu0
  %v1461 = vadd.f32 %v333, %v1460
  %v1462 = vpop.f32.mrb[0].mxu0
  %1463 = vmatprep.mubr.bf16.mxu0 0
  %1464 = vmatmul.mubr.bf16.gmra.mrb[0].mxu0 %v882
  %v1465 = vpop.f32.mrb[0].mxu0
  %v1466 = vadd.f32 %v333, %v1465
  %v1467 = vpop.f32.mrb[0].mxu0
  %v1468 = vpop.f32.mrb[0].mxu0
  %v1469 = vadd.f32 %v333, %v1468
  %v1470 = vpop.f32.mrb[0].mxu0
  %1471 = vmatprep.mubr.bf16.mxu0 0
  %1472 = vmatmul.mubr.bf16.gmra.mrb[0].mxu0 %v883
  %v1473 = vpop.f32.mrb[0].mxu0
  %v1474 = vadd.f32 %v333, %v1473
  %v1475 = vpop.f32.mrb[0].mxu0
  %v1476 = vpop.f32.mrb[0].mxu0
  %v1477 = vadd.f32 %v333, %v1476
  %v1478 = vpop.f32.mrb[0].mxu0
  %1479 = vmatprep.mubr.bf16.mxu0 0
  %1480 = vmatmul.mubr.bf16.gmra.mrb[0].mxu0 %v884
  %v1481 = vpop.f32.mrb[0].mxu0
  %v1482 = vadd.f32 %v333, %v1481
  %v1483 = vpop.f32.mrb[0].mxu0
  %v1484 = vpop.f32.mrb[0].mxu0
  %v1485 = vadd.f32 %v333, %v1484
  %v1486 = vpop.f32.mrb[0].mxu0
  %1487 = vmatprep.mubr.bf16.mxu0 0
  %1488 = vmatmul.mubr.bf16.gmra.mrb[0].mxu0 %v885
  %v1489 = vpop.f32.mrb[0].mxu0
  %v1490 = vadd.f32 %v333, %v1489
  %v1491 = vpop.f32.mrb[0].mxu0
  %v1492 = vpop.f32.mrb[0].mxu0
  %v1493 = vadd.f32 %v333, %v1492
  %v1494 = vpop.f32.mrb[0].mxu0
  %1495 = vmatprep.mubr.bf16.mxu0 0
  %1496 = vmatmul.mubr.bf16.gmra.mrb[0].mxu0 %v886
  %v1497 = vpop.f32.mrb[0].mxu0
  %v1498 = vadd.f32 %v333, %v1497
  %v1499 = vpop.f32.mrb[0].mxu0
  %v1500 = vpop.f32.mrb[0].mxu0
  %v1501 = vadd.f32 %v333, %v1500
  %v1502 = vpop.f32.mrb[0].mxu0
  %1503 = vmatprep.mubr.bf16.mxu0 0
  %1504 = vmatmul.mubr.bf16.gmra.mrb[0].mxu0 %v887
  %v1505 = vpop.f32.mrb[0].mxu0
  %v1506 = vadd.f32 %v333, %v1505
  %v1507 = vpop.f32.mrb[0].mxu0
  %v1508 = vpop.f32.mrb[0].mxu0
  %v1509 = vadd.f32 %v333, %v1508
  %v1510 = vpop.f32.mrb[0].mxu0
  %1511 = vmatprep.mubr.bf16.mxu0 0
  %1512 = vmatmul.mubr.bf16.gmra.mrb[0].mxu0 %v888
  %v1513 = vpop.f32.mrb[0].mxu0
  %v1514 = vadd.f32 %v333, %v1513
  %v1515 = vpop.f32.mrb[0].mxu0
  %v1516 = vpop.f32.mrb[0].mxu0
  %v1517 = vadd.f32 %v333, %v1516
  %v1518 = vpop.f32.mrb[0].mxu0
  %1519 = vmatprep.mubr.bf16.mxu0 0
  %1520 = vmatmul.mubr.bf16.gmra.mrb[0].mxu0 %v889
  %v1521 = vpop.f32.mrb[0].mxu0
  %v1522 = vadd.f32 %v333, %v1521
  %v1523 = vpop.f32.mrb[0].mxu0
  %v1524 = vpop.f32.mrb[0].mxu0
  %v1525 = vadd.f32 %v333, %v1524
  %v1526 = vpop.f32.mrb[0].mxu0
  %1527 = vmatprep.mubr.bf16.mxu0 0
  %1528 = vmatmul.mubr.bf16.gmra.mrb[0].mxu0 %v890
  %v1529 = vpop.f32.mrb[0].mxu0
  %v1530 = vadd.f32 %v333, %v1529
  %v1531 = vpop.f32.mrb[0].mxu0
  %v1532 = vpop.f32.mrb[0].mxu0
  %v1533 = vadd.f32 %v333, %v1532
  %v1534 = vpop.f32.mrb[0].mxu0
  %1535 = vmatprep.mubr.bf16.mxu0 0
  %1536 = vmatmul.mubr.bf16.gmra.mrb[0].mxu0 %v891
  %v1537 = vpop.f32.mrb[0].mxu0
  %v1538 = vadd.f32 %v333, %v1537
  %v1539 = vpop.f32.mrb[0].mxu0
  %v1540 = vpop.f32.mrb[0].mxu0
  %v1541 = vadd.f32 %v333, %v1540
  %v1542 = vpop.f32.mrb[0].mxu0
  %1543 = vmatprep.mubr.bf16.mxu0 0
  %1544 = vmatmul.mubr.bf16.gmra.mrb[0].mxu0 %v892
  %v1545 = vpop.f32.mrb[0].mxu0
  %v1546 = vadd.f32 %v333, %v1545
  %v1547 = vpop.f32.mrb[0].mxu0
  %v1548 = vpop.f32.mrb[0].mxu0
  %v1549 = vadd.f32 %v333, %v1548
  %v1550 = vpop.f32.mrb[0].mxu0
  %1551 = vmatprep.mubr.bf16.mxu0 0
  %1552 = vmatmul.mubr.bf16.gmra.mrb[0].mxu0 %v893
  %v1553 = vpop.f32.mrb[0].mxu0
  %v1554 = vadd.f32 %v333, %v1553
  %v1555 = vpop.f32.mrb[0].mxu0
  %v1556 = vpop.f32.mrb[0].mxu0
  %v1557 = vadd.f32 %v333, %v1556
  %v1558 = vpop.f32.mrb[0].mxu0
  %1559 = vmatprep.mubr.bf16.mxu0 0
  %1560 = vmatmul.mubr.bf16.gmra.mrb[0].mxu0 %v894
  %v1561 = vpop.f32.mrb[0].mxu0
  %v1562 = vadd.f32 %v333, %v1561
  %v1563 = vpop.f32.mrb[0].mxu0
  %v1564 = vpop.f32.mrb[0].mxu0
  %v1565 = vadd.f32 %v333, %v1564
  %v1566 = vpop.f32.mrb[0].mxu0
  %1567 = vmatprep.mubr.bf16.mxu0 0
  %1568 = vmatmul.mubr.bf16.gmra.mrb[0].mxu0 %v895
  %v1569 = vpop.f32.mrb[0].mxu0
  %v1570 = vadd.f32 %v333, %v1569
  %v1571 = vpop.f32.mrb[0].mxu0
  %v1572 = vpop.f32.mrb[0].mxu0
  %v1573 = vadd.f32 %v333, %v1572
  %v1574 = vpop.f32.mrb[0].mxu0
  %1575 = vmatprep.mubr.bf16.mxu0 0
  %1576 = vmatmul.mubr.bf16.gmra.mrb[0].mxu0 %v896
  %v1577 = vpop.f32.mrb[0].mxu0
  %v1578 = vadd.f32 %v333, %v1577
  %v1579 = vpop.f32.mrb[0].mxu0
  %v1580 = vpop.f32.mrb[0].mxu0
  %v1581 = vadd.f32 %v333, %v1580
  %v1582 = vpop.f32.mrb[0].mxu0
  %1583 = vmatprep.mubr.bf16.mxu0 0
  %1584 = vmatmul.mubr.bf16.gmra.mrb[0].mxu0 %v897
  %v1585 = vpop.f32.mrb[0].mxu0
  %v1586 = vadd.f32 %v333, %v1585
  %v1587 = vpop.f32.mrb[0].mxu0
  %v1588 = vpop.f32.mrb[0].mxu0
  %v1589 = vadd.f32 %v333, %v1588
  %v1590 = vpop.f32.mrb[0].mxu0
  %1591 = vmatprep.mubr.bf16.mxu0 0
  %1592 = vmatmul.mubr.bf16.gmra.mrb[0].mxu0 %v898
  %v1593 = vpop.f32.mrb[0].mxu0
  %v1594 = vadd.f32 %v333, %v1593
  %v1595 = vpop.f32.mrb[0].mxu0
  %v1596 = vpop.f32.mrb[0].mxu0
  %v1597 = vadd.f32 %v333, %v1596
  %v1598 = vpop.f32.mrb[0].mxu0
  %1599 = vmatprep.mubr.bf16.mxu0 0
  %1600 = vmatmul.mubr.bf16.gmra.mrb[0].mxu0 %v899
  %v1601 = vpop.f32.mrb[0].mxu0
  %v1602 = vadd.f32 %v333, %v1601
  %v1603 = vpop.f32.mrb[0].mxu0
  %v1604 = vpop.f32.mrb[0].mxu0
  %v1605 = vadd.f32 %v333, %v1604
  %v1606 = vpop.f32.mrb[0].mxu0
  %1607 = vmatprep.mubr.bf16.mxu0 0
  %1608 = vmatmul.mubr.bf16.gmra.mrb[0].mxu0 %v900
  %v1609 = vpop.f32.mrb[0].mxu0
  %v1610 = vadd.f32 %v333, %v1609
  %v1611 = vpop.f32.mrb[0].mxu0
  %v1612 = vpop.f32.mrb[0].mxu0
  %v1613 = vadd.f32 %v333, %v1612
  %v1614 = vpop.f32.mrb[0].mxu0
  %1615 = vmatprep.mubr.bf16.mxu0 0
  %1616 = vmatmul.mubr.bf16.gmra.mrb[0].mxu0 %v901
  %v1617 = vpop.f32.mrb[0].mxu0
  %v1618 = vadd.f32 %v333, %v1617
  %v1619 = vpop.f32.mrb[0].mxu0
  %v1620 = vpop.f32.mrb[0].mxu0
  %v1621 = vadd.f32 %v333, %v1620
  %v1622 = vpop.f32.mrb[0].mxu0
  %1623 = vmatprep.mubr.bf16.mxu0 0
  %1624 = vmatmul.mubr.bf16.gmra.mrb[0].mxu0 %v902
  %v1625 = vpop.f32.mrb[0].mxu0
  %v1626 = vadd.f32 %v333, %v1625
  %v1627 = vpop.f32.mrb[0].mxu0
  %v1628 = vpop.f32.mrb[0].mxu0
  %v1629 = vadd.f32 %v333, %v1628
  %v1630 = vpop.f32.mrb[0].mxu0
  %1631 = vmatprep.mubr.bf16.mxu0 0
  %1632 = vmatmul.mubr.bf16.gmra.mrb[0].mxu0 %v903
  %v1633 = vpop.f32.mrb[0].mxu0
  %v1634 = vadd.f32 %v333, %v1633
  %v1635 = vpop.f32.mrb[0].mxu0
  %v1636 = vpop.f32.mrb[0].mxu0
  %v1637 = vadd.f32 %v333, %v1636
  %v1638 = vpop.f32.mrb[0].mxu0
  %1639 = vmatprep.mubr.bf16.mxu0 0
  %1640 = vmatmul.mubr.bf16.gmra.mrb[0].mxu0 %v904
  %v1641 = vpop.f32.mrb[0].mxu0
  %v1642 = vadd.f32 %v333, %v1641
  %v1643 = vpop.f32.mrb[0].mxu0
  %v1644 = vpop.f32.mrb[0].mxu0
  %v1645 = vadd.f32 %v333, %v1644
  %v1646 = vpop.f32.mrb[0].mxu0
  %1647 = vmatprep.mubr.bf16.mxu0 0
  %1648 = vmatmul.mubr.bf16.gmra.mrb[0].mxu0 %v905
  %v1649 = vpop.f32.mrb[0].mxu0
  %v1650 = vadd.f32 %v333, %v1649
  %v1651 = vpop.f32.mrb[0].mxu0
  %v1652 = vpop.f32.mrb[0].mxu0
  %v1653 = vadd.f32 %v333, %v1652
  %v1654 = vpop.f32.mrb[0].mxu0
  %1655 = vmatprep.mubr.bf16.mxu0 0
  %1656 = vmatmul.mubr.bf16.gmra.mrb[0].mxu0 %v906
  %v1657 = vpop.f32.mrb[0].mxu0
  %v1658 = vadd.f32 %v333, %v1657
  %v1659 = vpop.f32.mrb[0].mxu0
  %v1660 = vpop.f32.mrb[0].mxu0
  %v1661 = vadd.f32 %v333, %v1660
  %v1662 = vpop.f32.mrb[0].mxu0
  %1663 = vmatprep.mubr.bf16.mxu0 0
  %1664 = vmatmul.mubr.bf16.gmra.mrb[0].mxu0 %v907
  %v1665 = vpop.f32.mrb[0].mxu0
  %v1666 = vadd.f32 %v333, %v1665
  %v1667 = vpop.f32.mrb[0].mxu0
  %v1668 = vpop.f32.mrb[0].mxu0
  %v1669 = vadd.f32 %v333, %v1668
  %v1670 = vpop.f32.mrb[0].mxu0
  %1671 = vmatprep.mubr.bf16.mxu0 0
  %1672 = vmatmul.mubr.bf16.gmra.mrb[0].mxu0 %v908
  %v1673 = vpop.f32.mrb[0].mxu0
  %v1674 = vadd.f32 %v333, %v1673
  %v1675 = vpop.f32.mrb[0].mxu0
  %v1676 = vpop.f32.mrb[0].mxu0
  %v1677 = vadd.f32 %v333, %v1676
  %v1678 = vpop.f32.mrb[0].mxu0
  %1679 = vmatprep.mubr.bf16.mxu0 0
  %1680 = vmatmul.mubr.bf16.gmra.mrb[0].mxu0 %v909
  %v1681 = vpop.f32.mrb[0].mxu0
  %v1682 = vadd.f32 %v333, %v1681
  %v1683 = vpop.f32.mrb[0].mxu0
  %v1684 = vpop.f32.mrb[0].mxu0
  %v1685 = vadd.f32 %v333, %v1684
  %v1686 = vpop.f32.mrb[0].mxu0
  %1687 = vmatprep.mubr.bf16.mxu0 0
  %1688 = vmatmul.mubr.bf16.gmra.mrb[0].mxu0 %v910
  %v1689 = vpop.f32.mrb[0].mxu0
  %v1690 = vadd.f32 %v333, %v1689
  %v1691 = vpop.f32.mrb[0].mxu0
  %v1692 = vpop.f32.mrb[0].mxu0
  %v1693 = vadd.f32 %v333, %v1692
  %v1694 = vpop.f32.mrb[0].mxu0
  %1695 = vmatprep.mubr.bf16.mxu0 0
  %1696 = vmatmul.mubr.bf16.gmra.mrb[0].mxu0 %v911
  %v1697 = vpop.f32.mrb[0].mxu0
  %v1698 = vadd.f32 %v333, %v1697
  %v1699 = vpop.f32.mrb[0].mxu0
  %v1700 = vpop.f32.mrb[0].mxu0
  %v1701 = vadd.f32 %v333, %v1700
  %v1702 = vpop.f32.mrb[0].mxu0
  %1703 = vmatprep.mubr.bf16.mxu0 0
  %1704 = vmatmul.mubr.bf16.gmra.mrb[0].mxu0 %v912
  %v1705 = vpop.f32.mrb[0].mxu0
  %v1706 = vadd.f32 %v333, %v1705
  %v1707 = vpop.f32.mrb[0].mxu0
  %v1708 = vpop.f32.mrb[0].mxu0
  %v1709 = vadd.f32 %v333, %v1708
  %v1710 = vpop.f32.mrb[0].mxu0
  %1711 = vmatprep.mubr.bf16.mxu0 0
  %1712 = vmatmul.mubr.bf16.gmra.mrb[0].mxu0 %v913
  %v1713 = vpop.f32.mrb[0].mxu0
  %v1714 = vadd.f32 %v333, %v1713
  %v1715 = vpop.f32.mrb[0].mxu0
  %v1716 = vpop.f32.mrb[0].mxu0
  %v1717 = vadd.f32 %v333, %v1716
  %v1718 = vpop.f32.mrb[0].mxu0
  %1719 = vmatprep.mubr.bf16.mxu0 0
  %1720 = vmatmul.mubr.bf16.gmra.mrb[0].mxu0 %v914
  %v1721 = vpop.f32.mrb[0].mxu0
  %v1722 = vadd.f32 %v333, %v1721
  %v1723 = vpop.f32.mrb[0].mxu0
  %v1724 = vpop.f32.mrb[0].mxu0
  %v1725 = vadd.f32 %v333, %v1724
  %v1726 = vpop.f32.mrb[0].mxu0
  %1727 = vmatprep.mubr.bf16.mxu0 0
  %1728 = vmatmul.mubr.bf16.gmra.mrb[0].mxu0 %v915
  %v1729 = vpop.f32.mrb[0].mxu0
  %v1730 = vadd.f32 %v333, %v1729
  %v1731 = vpop.f32.mrb[0].mxu0
  %v1732 = vpop.f32.mrb[0].mxu0
  %v1733 = vadd.f32 %v333, %v1732
  %v1734 = vpop.f32.mrb[0].mxu0
  %1735 = vmatprep.mubr.bf16.mxu0 0
  %1736 = vmatmul.mubr.bf16.gmra.mrb[0].mxu0 %v916
  %v1737 = vpop.f32.mrb[0].mxu0
  %v1738 = vadd.f32 %v333, %v1737
  %v1739 = vpop.f32.mrb[0].mxu0
  %v1740 = vpop.f32.mrb[0].mxu0
  %v1741 = vadd.f32 %v333, %v1740
  %v1742 = vpop.f32.mrb[0].mxu0
  %1743 = vmatprep.mubr.bf16.mxu0 0
  %1744 = vmatmul.mubr.bf16.gmra.mrb[0].mxu0 %v917
  %v1745 = vpop.f32.mrb[0].mxu0
  %v1746 = vadd.f32 %v333, %v1745
  %v1747 = vpop.f32.mrb[0].mxu0
  %v1748 = vpop.f32.mrb[0].mxu0
  %v1749 = vadd.f32 %v333, %v1748
  %v1750 = vpop.f32.mrb[0].mxu0
  %1751 = vmatprep.mubr.bf16.mxu0 0
  %1752 = vmatmul.mubr.bf16.gmra.mrb[0].mxu0 %v918
  %v1753 = vpop.f32.mrb[0].mxu0
  %v1754 = vadd.f32 %v333, %v1753
  %v1755 = vpop.f32.mrb[0].mxu0
  %v1756 = vpop.f32.mrb[0].mxu0
  %v1757 = vadd.f32 %v333, %v1756
  %v1758 = vpop.f32.mrb[0].mxu0
  %1759 = vmatprep.mubr.bf16.mxu0 0
  %1760 = vmatmul.mubr.bf16.gmra.mrb[0].mxu0 %v919
  %v1761 = vpop.f32.mrb[0].mxu0
  %v1762 = vadd.f32 %v333, %v1761
  %v1763 = vpop.f32.mrb[0].mxu0
  %v1764 = vpop.f32.mrb[0].mxu0
  %v1765 = vadd.f32 %v333, %v1764
  %v1766 = vpop.f32.mrb[0].mxu0
  %1767 = vmatprep.mubr.bf16.mxu0 0
  %1768 = vmatmul.mubr.bf16.gmra.mrb[0].mxu0 %v920
  %v1769 = vpop.f32.mrb[0].mxu0
  %v1770 = vadd.f32 %v333, %v1769
  %v1771 = vpop.f32.mrb[0].mxu0
  %v1772 = vpop.f32.mrb[0].mxu0
  %v1773 = vadd.f32 %v333, %v1772
  %v1774 = vpop.f32.mrb[0].mxu0
  %1775 = vmatprep.mubr.bf16.mxu0 0
  %1776 = vmatmul.mubr.bf16.gmra.mrb[0].mxu0 %v921
  %v1777 = vpop.f32.mrb[0].mxu0
  %v1778 = vadd.f32 %v333, %v1777
  %v1779 = vpop.f32.mrb[0].mxu0
  %v1780 = vpop.f32.mrb[0].mxu0
  %v1781 = vadd.f32 %v333, %v1780
  %v1782 = vpop.f32.mrb[0].mxu0
  %1783 = vmatprep.mubr.bf16.mxu0 0
  %1784 = vmatmul.mubr.bf16.gmra.mrb[0].mxu0 %v922
  %v1785 = vpop.f32.mrb[0].mxu0
  %v1786 = vadd.f32 %v333, %v1785
  %v1787 = vpop.f32.mrb[0].mxu0
  %v1788 = vpop.f32.mrb[0].mxu0
  %v1789 = vadd.f32 %v333, %v1788
  %v1790 = vpop.f32.mrb[0].mxu0
  %1791 = vmatprep.mubr.bf16.mxu0 0
  %1792 = vmatmul.mubr.bf16.gmra.mrb[0].mxu0 %v923
  %v1793 = vpop.f32.mrb[0].mxu0
  %v1794 = vadd.f32 %v333, %v1793
  %v1795 = vpop.f32.mrb[0].mxu0
  %v1796 = vpop.f32.mrb[0].mxu0
  %v1797 = vadd.f32 %v333, %v1796
  %v1798 = vpop.f32.mrb[0].mxu0
  %1799 = vmatprep.mubr.bf16.mxu0 0
  %1800 = vmatmul.mubr.bf16.gmra.mrb[0].mxu0 %v924
  %v1801 = vpop.f32.mrb[0].mxu0
  %v1802 = vadd.f32 %v333, %v1801
  %v1803 = vpop.f32.mrb[0].mxu0
  %v1804 = vpop.f32.mrb[0].mxu0
  %v1805 = vadd.f32 %v333, %v1804
  %v1806 = vpop.f32.mrb[0].mxu0
  %1807 = vmatprep.mubr.bf16.mxu0 0
  %1808 = vmatmul.mubr.bf16.gmra.mrb[0].mxu0 %v925
  %v1809 = vpop.f32.mrb[0].mxu0
  %v1810 = vadd.f32 %v333, %v1809
  %v1811 = vpop.f32.mrb[0].mxu0
  %v1812 = vpop.f32.mrb[0].mxu0
  %v1813 = vadd.f32 %v333, %v1812
  %v1814 = vpop.f32.mrb[0].mxu0
  %1815 = vmatprep.mubr.bf16.mxu0 0
  %1816 = vmatmul.mubr.bf16.gmra.mrb[0].mxu0 %v926
  %v1817 = vpop.f32.mrb[0].mxu0
  %v1818 = vadd.f32 %v333, %v1817
  %v1819 = vpop.f32.mrb[0].mxu0
  %v1820 = vpop.f32.mrb[0].mxu0
  %v1821 = vadd.f32 %v333, %v1820
  %v1822 = vpop.f32.mrb[0].mxu0
  %1823 = vmatprep.mubr.bf16.mxu0 0
  %1824 = vmatmul.mubr.bf16.gmra.mrb[0].mxu0 %v927
  %v1825 = vpop.f32.mrb[0].mxu0
  %v1826 = vadd.f32 %v333, %v1825
  %v1827 = vpop.f32.mrb[0].mxu0
  %v1828 = vpop.f32.mrb[0].mxu0
  %v1829 = vadd.f32 %v333, %v1828
  %v1830 = vpop.f32.mrb[0].mxu0
  %1831 = vmatprep.mubr.bf16.mxu0 0
  %1832 = vmatmul.mubr.bf16.gmra.mrb[0].mxu0 %v928
  %v1833 = vpop.f32.mrb[0].mxu0
  %v1834 = vadd.f32 %v333, %v1833
  %v1835 = vpop.f32.mrb[0].mxu0
  %v1836 = vpop.f32.mrb[0].mxu0
  %v1837 = vadd.f32 %v333, %v1836
  %v1838 = vpop.f32.mrb[0].mxu0
  %1839 = vmatprep.mubr.bf16.mxu0 0
  %1840 = vmatmul.mubr.bf16.gmra.mrb[0].mxu0 %v929
  %v1841 = vpop.f32.mrb[0].mxu0
  %v1842 = vadd.f32 %v333, %v1841
  %v1843 = vpop.f32.mrb[0].mxu0
  %v1844 = vpop.f32.mrb[0].mxu0
  %v1845 = vadd.f32 %v333, %v1844
  %v1846 = vpop.f32.mrb[0].mxu0
  %1847 = vmatprep.mubr.bf16.mxu0 0
  %1848 = vmatmul.mubr.bf16.gmra.mrb[0].mxu0 %v930
  %v1849 = vpop.f32.mrb[0].mxu0
  %v1850 = vadd.f32 %v333, %v1849
  %v1851 = vpop.f32.mrb[0].mxu0
  %v1852 = vpop.f32.mrb[0].mxu0
  %v1853 = vadd.f32 %v333, %v1852
  %v1854 = vpop.f32.mrb[0].mxu0
  %1855 = vmatprep.mubr.bf16.mxu0 0
  %1856 = vmatmul.mubr.bf16.gmra.mrb[0].mxu0 %v931
  %v1857 = vpop.f32.mrb[0].mxu0
  %v1858 = vadd.f32 %v333, %v1857
  %v1859 = vpop.f32.mrb[0].mxu0
  %v1860 = vpop.f32.mrb[0].mxu0
  %v1861 = vadd.f32 %v333, %v1860
  %v1862 = vpop.f32.mrb[0].mxu0
  %1863 = vmatprep.mubr.bf16.mxu0 0
  %1864 = vmatmul.mubr.bf16.gmra.mrb[0].mxu0 %v932
  %v1865 = vpop.f32.mrb[0].mxu0
  %v1866 = vadd.f32 %v333, %v1865
  %v1867 = vpop.f32.mrb[0].mxu0
  %v1868 = vpop.f32.mrb[0].mxu0
  %v1869 = vadd.f32 %v333, %v1868
  %v1870 = vpop.f32.mrb[0].mxu0
  %1871 = vmatprep.mubr.bf16.mxu0 0
  %1872 = vmatmul.mubr.bf16.gmra.mrb[0].mxu0 %v933
  %v1873 = vpop.f32.mrb[0].mxu0
  %v1874 = vadd.f32 %v333, %v1873
  %v1875 = vpop.f32.mrb[0].mxu0
  %v1876 = vpop.f32.mrb[0].mxu0
  %v1877 = vadd.f32 %v333, %v1876
  %v1878 = vpop.f32.mrb[0].mxu0
  %1879 = vmatprep.mubr.bf16.mxu0 0
  %1880 = vmatmul.mubr.bf16.gmra.mrb[0].mxu0 %v934
  %v1881 = vpop.f32.mrb[0].mxu0
  %v1882 = vadd.f32 %v333, %v1881
  %v1883 = vpop.f32.mrb[0].mxu0
  %v1884 = vpop.f32.mrb[0].mxu0
  %v1885 = vadd.f32 %v333, %v1884
  %v1886 = vpop.f32.mrb[0].mxu0
  %1887 = vmatprep.mubr.bf16.mxu0 0
  %1888 = vmatmul.mubr.bf16.gmra.mrb[0].mxu0 %v935
  %v1889 = vpop.f32.mrb[0].mxu0
  %v1890 = vadd.f32 %v333, %v1889
  %v1891 = vpop.f32.mrb[0].mxu0
  %v1892 = vpop.f32.mrb[0].mxu0
  %v1893 = vadd.f32 %v333, %v1892
  %v1894 = vpop.f32.mrb[0].mxu0
  %1895 = vmatprep.mubr.bf16.mxu0 0
  %1896 = vmatmul.mubr.bf16.gmra.mrb[0].mxu0 %v936
  %v1897 = vpop.f32.mrb[0].mxu0
  %v1898 = vadd.f32 %v333, %v1897
  %v1899 = vpop.f32.mrb[0].mxu0
  %v1900 = vpop.f32.mrb[0].mxu0
  %v1901 = vadd.f32 %v333, %v1900
  %v1902 = vpop.f32.mrb[0].mxu0
  %1903 = vmatprep.mubr.bf16.mxu0 0
  %1904 = vmatmul.mubr.bf16.gmra.mrb[0].mxu0 %v937
  %v1905 = vpop.f32.mrb[0].mxu0
  %v1906 = vadd.f32 %v333, %v1905
  %v1907 = vpop.f32.mrb[0].mxu0
  %v1908 = vpop.f32.mrb[0].mxu0
  %v1909 = vadd.f32 %v333, %v1908
  %v1910 = vpop.f32.mrb[0].mxu0
  %1911 = vmatprep.mubr.bf16.mxu0 0
  %1912 = vmatmul.mubr.bf16.gmra.mrb[0].mxu0 %v938
  %v1913 = vpop.f32.mrb[0].mxu0
  %v1914 = vadd.f32 %v333, %v1913
  %v1915 = vpop.f32.mrb[0].mxu0
  %v1916 = vpop.f32.mrb[0].mxu0
  %v1917 = vadd.f32 %v333, %v1916
  %v1918 = vpop.f32.mrb[0].mxu0
  %1919 = vmatprep.mubr.bf16.mxu0 0
  %1920 = vmatmul.mubr.bf16.gmra.mrb[0].mxu0 %v939
  %v1921 = vpop.f32.mrb[0].mxu0
  %v1922 = vadd.f32 %v333, %v1921
  %v1923 = vpop.f32.mrb[0].mxu0
  %v1924 = vpop.f32.mrb[0].mxu0
  %v1925 = vadd.f32 %v333, %v1924
  %v1926 = vpop.f32.mrb[0].mxu0
  %1927 = vmatprep.mubr.bf16.mxu0 0
  %1928 = vmatmul.mubr.bf16.gmra.mrb[0].mxu0 %v940
  %v1929 = vpop.f32.mrb[0].mxu0
  %v1930 = vadd.f32 %v333, %v1929
  %v1931 = vpop.f32.mrb[0].mxu0
  %v1932 = vpop.f32.mrb[0].mxu0
  %v1933 = vadd.f32 %v333, %v1932
  %v1934 = vpop.f32.mrb[0].mxu0
  %1935 = vmatprep.mubr.bf16.mxu0 0
  %1936 = vmatmul.mubr.bf16.gmra.mrb[0].mxu0 %v941
  %v1937 = vpop.f32.mrb[0].mxu0
  %v1938 = vadd.f32 %v333, %v1937
  %v1939 = vpop.f32.mrb[0].mxu0
  %v1940 = vpop.f32.mrb[0].mxu0
  %v1941 = vadd.f32 %v333, %v1940
  %v1942 = vpop.f32.mrb[0].mxu0
  %1943 = vmatprep.mubr.bf16.mxu0 0
  %1944 = vmatmul.mubr.bf16.gmra.mrb[0].mxu0 %v942
  %v1945 = vpop.f32.mrb[0].mxu0
  %v1946 = vadd.f32 %v333, %v1945
  %v1947 = vpop.f32.mrb[0].mxu0
  %v1948 = vpop.f32.mrb[0].mxu0
  %v1949 = vadd.f32 %v333, %v1948
  %v1950 = vpop.f32.mrb[0].mxu0
  %1951 = vmatprep.mubr.bf16.mxu0 0
  %1952 = vmatmul.mubr.bf16.gmra.mrb[0].mxu0 %v943
  %v1953 = vpop.f32.mrb[0].mxu0
  %v1954 = vadd.f32 %v333, %v1953
  %v1955 = vpop.f32.mrb[0].mxu0
  %v1956 = vpop.f32.mrb[0].mxu0
  %v1957 = vadd.f32 %v333, %v1956
  %v1958 = vpop.f32.mrb[0].mxu0
  %1959 = vmatprep.mubr.bf16.mxu0 0
  %1960 = vmatmul.mubr.bf16.gmra.mrb[0].mxu0 %v944
  %v1961 = vpop.f32.mrb[0].mxu0
  %v1962 = vadd.f32 %v333, %v1961
  %v1963 = vpop.f32.mrb[0].mxu0
  %v1964 = vpop.f32.mrb[0].mxu0
  %v1965 = vadd.f32 %v333, %v1964
  %v1966 = vpop.f32.mrb[0].mxu0
  %1967 = vmatprep.mubr.bf16.mxu0 0
  %1968 = vmatmul.mubr.bf16.gmra.mrb[0].mxu0 %v945
  %v1969 = vpop.f32.mrb[0].mxu0
  %v1970 = vadd.f32 %v333, %v1969
  %v1971 = vpop.f32.mrb[0].mxu0
  %v1972 = vpop.f32.mrb[0].mxu0
  %v1973 = vadd.f32 %v333, %v1972
  %v1974 = vpop.f32.mrb[0].mxu0
  %1975 = vmatprep.mubr.bf16.mxu0 0
  %1976 = vmatmul.mubr.bf16.gmra.mrb[0].mxu0 %v946
  %v1977 = vpop.f32.mrb[0].mxu0
  %v1978 = vadd.f32 %v333, %v1977
  %v1979 = vpop.f32.mrb[0].mxu0
  %v1980 = vpop.f32.mrb[0].mxu0
  %v1981 = vadd.f32 %v333, %v1980
  %v1982 = vpop.f32.mrb[0].mxu0
  %1983 = vmatprep.mubr.bf16.mxu0 0
  %1984 = vmatmul.mubr.bf16.gmra.mrb[0].mxu0 %v947
  %v1985 = vpop.f32.mrb[0].mxu0
  %v1986 = vadd.f32 %v333, %v1985
  %v1987 = vpop.f32.mrb[0].mxu0
  %v1988 = vpop.f32.mrb[0].mxu0
  %v1989 = vadd.f32 %v333, %v1988
  %v1990 = vpop.f32.mrb[0].mxu0
  %1991 = vmatprep.mubr.bf16.mxu0 0
  %1992 = vmatmul.mubr.bf16.gmra.mrb[0].mxu0 %v948
  %v1993 = vpop.f32.mrb[0].mxu0
  %v1994 = vadd.f32 %v333, %v1993
  %v1995 = vpop.f32.mrb[0].mxu0
  %v1996 = vpop.f32.mrb[0].mxu0
  %v1997 = vadd.f32 %v333, %v1996
  %v1998 = vpop.f32.mrb[0].mxu0
  %1999 = vmatprep.mubr.bf16.mxu0 0
  %2000 = vmatmul.mubr.bf16.gmra.mrb[0].mxu0 %v949
  %v2001 = vpop.f32.mrb[0].mxu0
  %v2002 = vadd.f32 %v333, %v2001
  %v2003 = vpop.f32.mrb[0].mxu0
  %v2004 = vpop.f32.mrb[0].mxu0
  %v2005 = vadd.f32 %v333, %v2004
  %v2006 = vpop.f32.mrb[0].mxu0
  %2007 = vmatprep.mubr.bf16.mxu0 0
  %2008 = vmatmul.mubr.bf16.gmra.mrb[0].mxu0 %v950
  %v2009 = vpop.f32.mrb[0].mxu0
  %v2010 = vadd.f32 %v333, %v2009
  %v2011 = vpop.f32.mrb[0].mxu0
  %v2012 = vpop.f32.mrb[0].mxu0
  %v2013 = vadd.f32 %v333, %v2012
  %v2014 = vpop.f32.mrb[0].mxu0
  %2015 = vmatprep.mubr.bf16.mxu0 0
  %2016 = vmatmul.mubr.bf16.gmra.mrb[0].mxu0 %v951
  %v2017 = vpop.f32.mrb[0].mxu0
  %v2018 = vadd.f32 %v333, %v2017
  %v2019 = vpop.f32.mrb[0].mxu0
  %v2020 = vpop.f32.mrb[0].mxu0
  %v2021 = vadd.f32 %v333, %v2020
  %v2022 = vpop.f32.mrb[0].mxu0
  %2023 = vmatprep.mubr.bf16.mxu0 0
  %2024 = vmatmul.mubr.bf16.gmra.mrb[0].mxu0 %v952
  %v2025 = vpop.f32.mrb[0].mxu0
  %v2026 = vadd.f32 %v333, %v2025
  %v2027 = vpop.f32.mrb[0].mxu0
  %v2028 = vpop.f32.mrb[0].mxu0
  %v2029 = vadd.f32 %v333, %v2028
  %v2030 = vpop.f32.mrb[0].mxu0
  %2031 = vmatprep.mubr.bf16.mxu0 0
  %2032 = vmatmul.mubr.bf16.gmra.mrb[0].mxu0 %v953
  %v2033 = vpop.f32.mrb[0].mxu0
  %v2034 = vadd.f32 %v333, %v2033
  %v2035 = vpop.f32.mrb[0].mxu0
  %v2036 = vpop.f32.mrb[0].mxu0
  %v2037 = vadd.f32 %v333, %v2036
  %v2038 = vpop.f32.mrb[0].mxu0
  %2039 = vmatprep.mubr.bf16.mxu0 0
  %2040 = vmatmul.mubr.bf16.gmra.mrb[0].mxu0 %v954
  %v2041 = vpop.f32.mrb[0].mxu0
  %v2042 = vadd.f32 %v333, %v2041
  %v2043 = vpop.f32.mrb[0].mxu0
  %v2044 = vpop.f32.mrb[0].mxu0
  %v2045 = vadd.f32 %v333, %v2044
  %v2046 = vpop.f32.mrb[0].mxu0
  %2047 = vmatprep.mubr.bf16.mxu0 0
  %2048 = vmatmul.mubr.bf16.gmra.mrb[0].mxu0 %v955
  %v2049 = vpop.f32.mrb[0].mxu0
  %v2050 = vadd.f32 %v333, %v2049
  %v2051 = vpop.f32.mrb[0].mxu0
  %v2052 = vpop.f32.mrb[0].mxu0
  %v2053 = vadd.f32 %v333, %v2052
  %v2054 = vpop.f32.mrb[0].mxu0
  %2055 = vmatprep.mubr.bf16.mxu0 0
  %2056 = vmatmul.mubr.bf16.gmra.mrb[0].mxu0 %v956
  %v2057 = vpop.f32.mrb[0].mxu0
  %v2058 = vadd.f32 %v333, %v2057
  %v2059 = vpop.f32.mrb[0].mxu0
  %v2060 = vpop.f32.mrb[0].mxu0
  %v2061 = vadd.f32 %v333, %v2060
  %v2062 = vpop.f32.mrb[0].mxu0
  %2063 = vmatprep.mubr.bf16.mxu0 0
  %2064 = vmatmul.mubr.bf16.gmra.mrb[0].mxu0 %v957
  %v2065 = vpop.f32.mrb[0].mxu0
  %v2066 = vadd.f32 %v333, %v2065
  %v2067 = vpop.f32.mrb[0].mxu0
  %v2068 = vpop.f32.mrb[0].mxu0
  %v2069 = vadd.f32 %v333, %v2068
  %v2070 = vpop.f32.mrb[0].mxu0
  %2071 = vmatprep.mubr.bf16.mxu0 0
  %2072 = vmatmul.mubr.bf16.gmra.mrb[0].mxu0 %v958
  %v2073 = vpop.f32.mrb[0].mxu0
  %v2074 = vadd.f32 %v333, %v2073
  %v2075 = vpop.f32.mrb[0].mxu0
  %v2076 = vpop.f32.mrb[0].mxu0
  %v2077 = vadd.f32 %v333, %v2076
  %v2078 = vpop.f32.mrb[0].mxu0
  %2079 = vmatprep.mubr.bf16.mxu0 0
  %2080 = vmatmul.mubr.bf16.gmra.mrb[0].mxu0 %v959
  %v2081 = vpop.f32.mrb[0].mxu0
  %v2082 = vadd.f32 %v333, %v2081
  %v2083 = vpop.f32.mrb[0].mxu0
  %v2084 = vpop.f32.mrb[0].mxu0
  %v2085 = vadd.f32 %v333, %v2084
  %v2086 = vpop.f32.mrb[0].mxu0
  %2087 = vmatprep.mubr.bf16.mxu0 0
  %2088 = vmatmul.mubr.bf16.gmra.mrb[0].mxu0 %v960
  %v2089 = vpop.f32.mrb[0].mxu0
  %v2090 = vadd.f32 %v333, %v2089
  %v2091 = vpop.f32.mrb[0].mxu0
  %v2092 = vpop.f32.mrb[0].mxu0
  %v2093 = vadd.f32 %v333, %v2092
  %v2094 = vpop.f32.mrb[0].mxu0
  %2095 = vmatprep.mubr.bf16.mxu0 0
  %2096 = vmatmul.mubr.bf16.gmra.mrb[0].mxu0 %v961
  %v2097 = vpop.f32.mrb[0].mxu0
  %v2098 = vadd.f32 %v333, %v2097
  %v2099 = vpop.f32.mrb[0].mxu0
  %v2100 = vpop.f32.mrb[0].mxu0
  %v2101 = vadd.f32 %v333, %v2100
  %v2102 = vpop.f32.mrb[0].mxu0
  %2103 = vmatprep.mubr.bf16.mxu0 0
  %2104 = vmatmul.mubr.bf16.gmra.mrb[0].mxu0 %v962
  %v2105 = vpop.f32.mrb[0].mxu0
  %v2106 = vadd.f32 %v333, %v2105
  %v2107 = vpop.f32.mrb[0].mxu0
  %v2108 = vpop.f32.mrb[0].mxu0
  %v2109 = vadd.f32 %v333, %v2108
  %v2110 = vpop.f32.mrb[0].mxu0
  %2111 = vmatprep.mubr.bf16.mxu0 0
  %2112 = vmatmul.mubr.bf16.gmra.mrb[0].mxu0 %v963
  %v2113 = vpop.f32.mrb[0].mxu0
  %v2114 = vadd.f32 %v333, %v2113
  %v2115 = vpop.f32.mrb[0].mxu0
  %v2116 = vpop.f32.mrb[0].mxu0
  %v2117 = vadd.f32 %v333, %v2116
  %v2118 = vpop.f32.mrb[0].mxu0
  %2119 = vmatprep.mubr.bf16.mxu0 0
  %2120 = vmatmul.mubr.bf16.gmra.mrb[0].mxu0 %v964
  %v2121 = vpop.f32.mrb[0].mxu0
  %v2122 = vadd.f32 %v333, %v2121
  %v2123 = vpop.f32.mrb[0].mxu0
  %v2124 = vpop.f32.mrb[0].mxu0
  %v2125 = vadd.f32 %v333, %v2124
  %v2126 = vpop.f32.mrb[0].mxu0
  %2127 = vmatprep.mubr.bf16.mxu0 0
  %2128 = vmatmul.mubr.bf16.gmra.mrb[0].mxu0 %v965
  %v2129 = vpop.f32.mrb[0].mxu0
  %v2130 = vadd.f32 %v333, %v2129
  %v2131 = vpop.f32.mrb[0].mxu0
  %v2132 = vpop.f32.mrb[0].mxu0
  %v2133 = vadd.f32 %v333, %v2132
  %v2134 = vpop.f32.mrb[0].mxu0
  %2135 = vmatprep.mubr.bf16.mxu0 0
  %2136 = vmatmul.mubr.bf16.gmra.mrb[0].mxu0 %v966
  %v2137 = vpop.f32.mrb[0].mxu0
  %v2138 = vadd.f32 %v333, %v2137
  %v2139 = vpop.f32.mrb[0].mxu0
  %v2140 = vpop.f32.mrb[0].mxu0
  %v2141 = vadd.f32 %v333, %v2140
  %v2142 = vpop.f32.mrb[0].mxu0
  %2143 = vmatprep.mubr.bf16.mxu0 0
  %2144 = vmatmul.mubr.bf16.gmra.mrb[0].mxu0 %v967
  %v2145 = vpop.f32.mrb[0].mxu0
  %v2146 = vadd.f32 %v333, %v2145
  %v2147 = vpop.f32.mrb[0].mxu0
  %v2148 = vpop.f32.mrb[0].mxu0
  %v2149 = vadd.f32 %v333, %v2148
  %v2150 = vpop.f32.mrb[0].mxu0
  %2151 = vmatprep.mubr.bf16.mxu0 0
  %2152 = vmatmul.mubr.bf16.gmra.mrb[0].mxu0 %v968
  %v2153 = vpop.f32.mrb[0].mxu0
  %v2154 = vadd.f32 %v333, %v2153
  %v2155 = vpop.f32.mrb[0].mxu0
  %v2156 = vpop.f32.mrb[0].mxu0
  %v2157 = vadd.f32 %v333, %v2156
  %v2158 = vpop.f32.mrb[0].mxu0
  %2159 = vmatprep.mubr.bf16.mxu0 0
  %2160 = vmatmul.mubr.bf16.gmra.mrb[0].mxu0 %v969
  %v2161 = vpop.f32.mrb[0].mxu0
  %v2162 = vadd.f32 %v333, %v2161
  %v2163 = vpop.f32.mrb[0].mxu0
  %v2164 = vpop.f32.mrb[0].mxu0
  %v2165 = vadd.f32 %v333, %v2164
  %v2166 = vpop.f32.mrb[0].mxu0
  %2167 = vmatprep.mubr.bf16.mxu0 0
  %2168 = vmatmul.mubr.bf16.gmra.mrb[0].mxu0 %v970
  %v2169 = vpop.f32.mrb[0].mxu0
  %v2170 = vadd.f32 %v333, %v2169
  %v2171 = vpop.f32.mrb[0].mxu0
  %v2172 = vpop.f32.mrb[0].mxu0
  %v2173 = vadd.f32 %v333, %v2172
  %v2174 = vpop.f32.mrb[0].mxu0
  %2175 = vmatprep.mubr.bf16.mxu0 0
  %2176 = vmatmul.mubr.bf16.gmra.mrb[0].mxu0 %v971
  %v2177 = vpop.f32.mrb[0].mxu0
  %v2178 = vadd.f32 %v333, %v2177
  %v2179 = vpop.f32.mrb[0].mxu0
  %v2180 = vpop.f32.mrb[0].mxu0
  %v2181 = vadd.f32 %v333, %v2180
  %v2182 = vpop.f32.mrb[0].mxu0
  %2183 = vmatprep.mubr.bf16.mxu0 0
  %2184 = vmatmul.mubr.bf16.gmra.mrb[0].mxu0 %v972
  %v2185 = vpop.f32.mrb[0].mxu0
  %v2186 = vadd.f32 %v333, %v2185
  %v2187 = vpop.f32.mrb[0].mxu0
  %v2188 = vpop.f32.mrb[0].mxu0
  %v2189 = vadd.f32 %v333, %v2188
  %v2190 = vpop.f32.mrb[0].mxu0
  %2191 = vmatprep.mubr.bf16.mxu0 0
  %2192 = vmatmul.mubr.bf16.gmra.mrb[0].mxu0 %v973
  %v2193 = vpop.f32.mrb[0].mxu0
  %v2194 = vadd.f32 %v333, %v2193
  %v2195 = vpop.f32.mrb[0].mxu0
  %v2196 = vpop.f32.mrb[0].mxu0
  %v2197 = vadd.f32 %v333, %v2196
  %v2198 = vpop.f32.mrb[0].mxu0
  %2199 = vmatprep.mubr.bf16.mxu0 0
  %2200 = vmatmul.mubr.bf16.gmra.mrb[0].mxu0 %v974
  %v2201 = vpop.f32.mrb[0].mxu0
  %v2202 = vadd.f32 %v333, %v2201
  %v2203 = vpop.f32.mrb[0].mxu0
  %v2204 = vpop.f32.mrb[0].mxu0
  %v2205 = vadd.f32 %v333, %v2204
  %v2206 = vpop.f32.mrb[0].mxu0
  %2207 = vdwg.mxu0
  %v2208 = vmax.f32 %v1186, 0.0
  %v2209 = vmax.f32 %v1189, 0.0
  %v2210 = vmax.f32 %v1194, 0.0
  %v2211 = vmax.f32 %v1197, 0.0
  %v2212 = vmax.f32 %v1202, 0.0
  %v2213 = vmax.f32 %v1205, 0.0
  %v2214 = vmax.f32 %v1210, 0.0
  %v2215 = vmax.f32 %v1213, 0.0
  %v2216 = vmax.f32 %v1218, 0.0
  %v2217 = vmax.f32 %v1221, 0.0
  %v2218 = vmax.f32 %v1226, 0.0
  %v2219 = vmax.f32 %v1229, 0.0
  %v2220 = vmax.f32 %v1234, 0.0
  %v2221 = vmax.f32 %v1237, 0.0
  %v2222 = vmax.f32 %v1242, 0.0
  %v2223 = vmax.f32 %v1245, 0.0
  %v2224 = vmax.f32 %v1250, 0.0
  %v2225 = vmax.f32 %v1253, 0.0
  %v2226 = vmax.f32 %v1258, 0.0
  %v2227 = vmax.f32 %v1261, 0.0
  %v2228 = vmax.f32 %v1266, 0.0
  %v2229 = vmax.f32 %v1269, 0.0
  %v2230 = vmax.f32 %v1274, 0.0
  %v2231 = vmax.f32 %v1277, 0.0
  %v2232 = vmax.f32 %v1282, 0.0
  %v2233 = vmax.f32 %v1285, 0.0
  %v2234 = vmax.f32 %v1290, 0.0
  %v2235 = vmax.f32 %v1293, 0.0
  %v2236 = vmax.f32 %v1298, 0.0
  %v2237 = vmax.f32 %v1301, 0.0
  %v2238 = vmax.f32 %v1306, 0.0
  %v2239 = vmax.f32 %v1309, 0.0
  %v2240 = vmax.f32 %v1314, 0.0
  %v2241 = vmax.f32 %v1317, 0.0
  %v2242 = vmax.f32 %v1322, 0.0
  %v2243 = vmax.f32 %v1325, 0.0
  %v2244 = vmax.f32 %v1330, 0.0
  %v2245 = vmax.f32 %v1333, 0.0
  %v2246 = vmax.f32 %v1338, 0.0
  %v2247 = vmax.f32 %v1341, 0.0
  %v2248 = vmax.f32 %v1346, 0.0
  %v2249 = vmax.f32 %v1349, 0.0
  %v2250 = vmax.f32 %v1354, 0.0
  %v2251 = vmax.f32 %v1357, 0.0
  %v2252 = vmax.f32 %v1362, 0.0
  %v2253 = vmax.f32 %v1365, 0.0
  %v2254 = vmax.f32 %v1370, 0.0
  %v2255 = vmax.f32 %v1373, 0.0
  %v2256 = vmax.f32 %v1378, 0.0
  %v2257 = vmax.f32 %v1381, 0.0
  %v2258 = vmax.f32 %v1386, 0.0
  %v2259 = vmax.f32 %v1389, 0.0
  %v2260 = vmax.f32 %v1394, 0.0
  %v2261 = vmax.f32 %v1397, 0.0
  %v2262 = vmax.f32 %v1402, 0.0
  %v2263 = vmax.f32 %v1405, 0.0
  %v2264 = vmax.f32 %v1410, 0.0
  %v2265 = vmax.f32 %v1413, 0.0
  %v2266 = vmax.f32 %v1418, 0.0
  %v2267 = vmax.f32 %v1421, 0.0
  %v2268 = vmax.f32 %v1426, 0.0
  %v2269 = vmax.f32 %v1429, 0.0
  %v2270 = vmax.f32 %v1434, 0.0
  %v2271 = vmax.f32 %v1437, 0.0
  %v2272 = vmax.f32 %v1442, 0.0
  %v2273 = vmax.f32 %v1445, 0.0
  %v2274 = vmax.f32 %v1450, 0.0
  %v2275 = vmax.f32 %v1453, 0.0
  %v2276 = vmax.f32 %v1458, 0.0
  %v2277 = vmax.f32 %v1461, 0.0
  %v2278 = vmax.f32 %v1466, 0.0
  %v2279 = vmax.f32 %v1469, 0.0
  %v2280 = vmax.f32 %v1474, 0.0
  %v2281 = vmax.f32 %v1477, 0.0
  %v2282 = vmax.f32 %v1482, 0.0
  %v2283 = vmax.f32 %v1485, 0.0
  %v2284 = vmax.f32 %v1490, 0.0
  %v2285 = vmax.f32 %v1493, 0.0
  %v2286 = vmax.f32 %v1498, 0.0
  %v2287 = vmax.f32 %v1501, 0.0
  %v2288 = vmax.f32 %v1506, 0.0
  %v2289 = vmax.f32 %v1509, 0.0
  %v2290 = vmax.f32 %v1514, 0.0
  %v2291 = vmax.f32 %v1517, 0.0
  %v2292 = vmax.f32 %v1522, 0.0
  %v2293 = vmax.f32 %v1525, 0.0
  %v2294 = vmax.f32 %v1530, 0.0
  %v2295 = vmax.f32 %v1533, 0.0
  %v2296 = vmax.f32 %v1538, 0.0
  %v2297 = vmax.f32 %v1541, 0.0
  %v2298 = vmax.f32 %v1546, 0.0
  %v2299 = vmax.f32 %v1549, 0.0
  %v2300 = vmax.f32 %v1554, 0.0
  %v2301 = vmax.f32 %v1557, 0.0
  %v2302 = vmax.f32 %v1562, 0.0
  %v2303 = vmax.f32 %v1565, 0.0
  %v2304 = vmax.f32 %v1570, 0.0
  %v2305 = vmax.f32 %v1573, 0.0
  %v2306 = vmax.f32 %v1578, 0.0
  %v2307 = vmax.f32 %v1581, 0.0
  %v2308 = vmax.f32 %v1586, 0.0
  %v2309 = vmax.f32 %v1589, 0.0
  %v2310 = vmax.f32 %v1594, 0.0
  %v2311 = vmax.f32 %v1597, 0.0
  %v2312 = vmax.f32 %v1602, 0.0
  %v2313 = vmax.f32 %v1605, 0.0
  %v2314 = vmax.f32 %v1610, 0.0
  %v2315 = vmax.f32 %v1613, 0.0
  %v2316 = vmax.f32 %v1618, 0.0
  %v2317 = vmax.f32 %v1621, 0.0
  %v2318 = vmax.f32 %v1626, 0.0
  %v2319 = vmax.f32 %v1629, 0.0
  %v2320 = vmax.f32 %v1634, 0.0
  %v2321 = vmax.f32 %v1637, 0.0
  %v2322 = vmax.f32 %v1642, 0.0
  %v2323 = vmax.f32 %v1645, 0.0
  %v2324 = vmax.f32 %v1650, 0.0
  %v2325 = vmax.f32 %v1653, 0.0
  %v2326 = vmax.f32 %v1658, 0.0
  %v2327 = vmax.f32 %v1661, 0.0
  %v2328 = vmax.f32 %v1666, 0.0
  %v2329 = vmax.f32 %v1669, 0.0
  %v2330 = vmax.f32 %v1674, 0.0
  %v2331 = vmax.f32 %v1677, 0.0
  %v2332 = vmax.f32 %v1682, 0.0
  %v2333 = vmax.f32 %v1685, 0.0
  %v2334 = vmax.f32 %v1690, 0.0
  %v2335 = vmax.f32 %v1693, 0.0
  %v2336 = vmax.f32 %v1698, 0.0
  %v2337 = vmax.f32 %v1701, 0.0
  %v2338 = vmax.f32 %v1706, 0.0
  %v2339 = vmax.f32 %v1709, 0.0
  %v2340 = vmax.f32 %v1714, 0.0
  %v2341 = vmax.f32 %v1717, 0.0
  %v2342 = vmax.f32 %v1722, 0.0
  %v2343 = vmax.f32 %v1725, 0.0
  %v2344 = vmax.f32 %v1730, 0.0
  %v2345 = vmax.f32 %v1733, 0.0
  %v2346 = vmax.f32 %v1738, 0.0
  %v2347 = vmax.f32 %v1741, 0.0
  %v2348 = vmax.f32 %v1746, 0.0
  %v2349 = vmax.f32 %v1749, 0.0
  %v2350 = vmax.f32 %v1754, 0.0
  %v2351 = vmax.f32 %v1757, 0.0
  %v2352 = vmax.f32 %v1762, 0.0
  %v2353 = vmax.f32 %v1765, 0.0
  %v2354 = vmax.f32 %v1770, 0.0
  %v2355 = vmax.f32 %v1773, 0.0
  %v2356 = vmax.f32 %v1778, 0.0
  %v2357 = vmax.f32 %v1781, 0.0
  %v2358 = vmax.f32 %v1786, 0.0
  %v2359 = vmax.f32 %v1789, 0.0
  %v2360 = vmax.f32 %v1794, 0.0
  %v2361 = vmax.f32 %v1797, 0.0
  %v2362 = vmax.f32 %v1802, 0.0
  %v2363 = vmax.f32 %v1805, 0.0
  %v2364 = vmax.f32 %v1810, 0.0
  %v2365 = vmax.f32 %v1813, 0.0
  %v2366 = vmax.f32 %v1818, 0.0
  %v2367 = vmax.f32 %v1821, 0.0
  %v2368 = vmax.f32 %v1826, 0.0
  %v2369 = vmax.f32 %v1829, 0.0
  %v2370 = vmax.f32 %v1834, 0.0
  %v2371 = vmax.f32 %v1837, 0.0
  %v2372 = vmax.f32 %v1842, 0.0
  %v2373 = vmax.f32 %v1845, 0.0
  %v2374 = vmax.f32 %v1850, 0.0
  %v2375 = vmax.f32 %v1853, 0.0
  %v2376 = vmax.f32 %v1858, 0.0
  %v2377 = vmax.f32 %v1861, 0.0
  %v2378 = vmax.f32 %v1866, 0.0
  %v2379 = vmax.f32 %v1869, 0.0
  %v2380 = vmax.f32 %v1874, 0.0
  %v2381 = vmax.f32 %v1877, 0.0
  %v2382 = vmax.f32 %v1882, 0.0
  %v2383 = vmax.f32 %v1885, 0.0
  %v2384 = vmax.f32 %v1890, 0.0
  %v2385 = vmax.f32 %v1893, 0.0
  %v2386 = vmax.f32 %v1898, 0.0
  %v2387 = vmax.f32 %v1901, 0.0
  %v2388 = vmax.f32 %v1906, 0.0
  %v2389 = vmax.f32 %v1909, 0.0
  %v2390 = vmax.f32 %v1914, 0.0
  %v2391 = vmax.f32 %v1917, 0.0
  %v2392 = vmax.f32 %v1922, 0.0
  %v2393 = vmax.f32 %v1925, 0.0
  %v2394 = vmax.f32 %v1930, 0.0
  %v2395 = vmax.f32 %v1933, 0.0
  %v2396 = vmax.f32 %v1938, 0.0
  %v2397 = vmax.f32 %v1941, 0.0
  %v2398 = vmax.f32 %v1946, 0.0
  %v2399 = vmax.f32 %v1949, 0.0
  %v2400 = vmax.f32 %v1954, 0.0
  %v2401 = vmax.f32 %v1957, 0.0
  %v2402 = vmax.f32 %v1962, 0.0
  %v2403 = vmax.f32 %v1965, 0.0
  %v2404 = vmax.f32 %v1970, 0.0
  %v2405 = vmax.f32 %v1973, 0.0
  %v2406 = vmax.f32 %v1978, 0.0
  %v2407 = vmax.f32 %v1981, 0.0
  %v2408 = vmax.f32 %v1986, 0.0
  %v2409 = vmax.f32 %v1989, 0.0
  %v2410 = vmax.f32 %v1994, 0.0
  %v2411 = vmax.f32 %v1997, 0.0
  %v2412 = vmax.f32 %v2002, 0.0
  %v2413 = vmax.f32 %v2005, 0.0
  %v2414 = vmax.f32 %v2010, 0.0
  %v2415 = vmax.f32 %v2013, 0.0
  %v2416 = vmax.f32 %v2018, 0.0
  %v2417 = vmax.f32 %v2021, 0.0
  %v2418 = vmax.f32 %v2026, 0.0
  %v2419 = vmax.f32 %v2029, 0.0
  %v2420 = vmax.f32 %v2034, 0.0
  %v2421 = vmax.f32 %v2037, 0.0
  %v2422 = vmax.f32 %v2042, 0.0
  %v2423 = vmax.f32 %v2045, 0.0
  %v2424 = vmax.f32 %v2050, 0.0
  %v2425 = vmax.f32 %v2053, 0.0
  %v2426 = vmax.f32 %v2058, 0.0
  %v2427 = vmax.f32 %v2061, 0.0
  %v2428 = vmax.f32 %v2066, 0.0
  %v2429 = vmax.f32 %v2069, 0.0
  %v2430 = vmax.f32 %v2074, 0.0
  %v2431 = vmax.f32 %v2077, 0.0
  %v2432 = vmax.f32 %v2082, 0.0
  %v2433 = vmax.f32 %v2085, 0.0
  %v2434 = vmax.f32 %v2090, 0.0
  %v2435 = vmax.f32 %v2093, 0.0
  %v2436 = vmax.f32 %v2098, 0.0
  %v2437 = vmax.f32 %v2101, 0.0
  %v2438 = vmax.f32 %v2106, 0.0
  %v2439 = vmax.f32 %v2109, 0.0
  %v2440 = vmax.f32 %v2114, 0.0
  %v2441 = vmax.f32 %v2117, 0.0
  %v2442 = vmax.f32 %v2122, 0.0
  %v2443 = vmax.f32 %v2125, 0.0
  %v2444 = vmax.f32 %v2130, 0.0
  %v2445 = vmax.f32 %v2133, 0.0
  %v2446 = vmax.f32 %v2138, 0.0
  %v2447 = vmax.f32 %v2141, 0.0
  %v2448 = vmax.f32 %v2146, 0.0
  %v2449 = vmax.f32 %v2149, 0.0
  %v2450 = vmax.f32 %v2154, 0.0
  %v2451 = vmax.f32 %v2157, 0.0
  %v2452 = vmax.f32 %v2162, 0.0
  %v2453 = vmax.f32 %v2165, 0.0
  %v2454 = vmax.f32 %v2170, 0.0
  %v2455 = vmax.f32 %v2173, 0.0
  %v2456 = vmax.f32 %v2178, 0.0
  %v2457 = vmax.f32 %v2181, 0.0
  %v2458 = vmax.f32 %v2186, 0.0
  %v2459 = vmax.f32 %v2189, 0.0
  %v2460 = vmax.f32 %v2194, 0.0
  %v2461 = vmax.f32 %v2197, 0.0
  %v2462 = vmax.f32 %v2202, 0.0
  %v2463 = vmax.f32 %v2205, 0.0
  %vm2464 = vcmask 130048
  %v2465 = vsel %vm2464, %v2208, 0.0
  %v2466 = vsel %vm2464, %v2209, 0.0
  %v2467 = vadd.f32 %v2465, %v2466
  %v2468 = vsel %vm2464, %v2210, 0.0
  %v2469 = vadd.f32 %v2467, %v2468
  %v2470 = vsel %vm2464, %v2211, 0.0
  %v2471 = vadd.f32 %v2469, %v2470
  %v2472 = vsel %vm2464, %v2212, 0.0
  %v2473 = vadd.f32 %v2471, %v2472
  %v2474 = vsel %vm2464, %v2213, 0.0
  %v2475 = vadd.f32 %v2473, %v2474
  %v2476 = vsel %vm2464, %v2214, 0.0
  %v2477 = vadd.f32 %v2475, %v2476
  %v2478 = vsel %vm2464, %v2215, 0.0
  %v2479 = vadd.f32 %v2477, %v2478
  %v2480 = vsel %vm2464, %v2216, 0.0
  %v2481 = vadd.f32 %v2479, %v2480
  %v2482 = vsel %vm2464, %v2217, 0.0
  %v2483 = vadd.f32 %v2481, %v2482
  %v2484 = vsel %vm2464, %v2218, 0.0
  %v2485 = vadd.f32 %v2483, %v2484
  %v2486 = vsel %vm2464, %v2219, 0.0
  %v2487 = vadd.f32 %v2485, %v2486
  %v2488 = vsel %vm2464, %v2220, 0.0
  %v2489 = vadd.f32 %v2487, %v2488
  %v2490 = vsel %vm2464, %v2221, 0.0
  %v2491 = vadd.f32 %v2489, %v2490
  %v2492 = vsel %vm2464, %v2222, 0.0
  %v2493 = vadd.f32 %v2491, %v2492
  %v2494 = vsel %vm2464, %v2223, 0.0
  %v2495 = vadd.f32 %v2493, %v2494
  %v2496 = vsel %vm2464, %v2224, 0.0
  %v2497 = vadd.f32 %v2495, %v2496
  %v2498 = vsel %vm2464, %v2225, 0.0
  %v2499 = vadd.f32 %v2497, %v2498
  %v2500 = vsel %vm2464, %v2226, 0.0
  %v2501 = vadd.f32 %v2499, %v2500
  %v2502 = vsel %vm2464, %v2227, 0.0
  %v2503 = vadd.f32 %v2501, %v2502
  %v2504 = vsel %vm2464, %v2228, 0.0
  %v2505 = vadd.f32 %v2503, %v2504
  %v2506 = vsel %vm2464, %v2229, 0.0
  %v2507 = vadd.f32 %v2505, %v2506
  %v2508 = vsel %vm2464, %v2230, 0.0
  %v2509 = vadd.f32 %v2507, %v2508
  %v2510 = vsel %vm2464, %v2231, 0.0
  %v2511 = vadd.f32 %v2509, %v2510
  %v2512 = vsel %vm2464, %v2232, 0.0
  %v2513 = vadd.f32 %v2511, %v2512
  %v2514 = vsel %vm2464, %v2233, 0.0
  %v2515 = vadd.f32 %v2513, %v2514
  %v2516 = vsel %vm2464, %v2234, 0.0
  %v2517 = vadd.f32 %v2515, %v2516
  %v2518 = vsel %vm2464, %v2235, 0.0
  %v2519 = vadd.f32 %v2517, %v2518
  %v2520 = vsel %vm2464, %v2236, 0.0
  %v2521 = vadd.f32 %v2519, %v2520
  %v2522 = vsel %vm2464, %v2237, 0.0
  %v2523 = vadd.f32 %v2521, %v2522
  %v2524 = vsel %vm2464, %v2238, 0.0
  %v2525 = vadd.f32 %v2523, %v2524
  %v2526 = vsel %vm2464, %v2239, 0.0
  %v2527 = vadd.f32 %v2525, %v2526
  %v2528 = vrot.slane %v2527, 4
  %v2529 = vadd.f32 %v2527, %v2528
  %v2530 = vrot.slane %v2529, 2
  %v2531 = vadd.f32 %v2529, %v2530
  %v2532 = vrot.slane %v2531, 1
  %v2533 = vadd.f32 %v2531, %v2532
  %v2534 = vsel %vm2464, %v2240, 0.0
  %v2535 = vsel %vm2464, %v2241, 0.0
  %v2536 = vadd.f32 %v2534, %v2535
  %v2537 = vsel %vm2464, %v2242, 0.0
  %v2538 = vadd.f32 %v2536, %v2537
  %v2539 = vsel %vm2464, %v2243, 0.0
  %v2540 = vadd.f32 %v2538, %v2539
  %v2541 = vsel %vm2464, %v2244, 0.0
  %v2542 = vadd.f32 %v2540, %v2541
  %v2543 = vsel %vm2464, %v2245, 0.0
  %v2544 = vadd.f32 %v2542, %v2543
  %v2545 = vsel %vm2464, %v2246, 0.0
  %v2546 = vadd.f32 %v2544, %v2545
  %v2547 = vsel %vm2464, %v2247, 0.0
  %v2548 = vadd.f32 %v2546, %v2547
  %v2549 = vsel %vm2464, %v2248, 0.0
  %v2550 = vadd.f32 %v2548, %v2549
  %v2551 = vsel %vm2464, %v2249, 0.0
  %v2552 = vadd.f32 %v2550, %v2551
  %v2553 = vsel %vm2464, %v2250, 0.0
  %v2554 = vadd.f32 %v2552, %v2553
  %v2555 = vsel %vm2464, %v2251, 0.0
  %v2556 = vadd.f32 %v2554, %v2555
  %v2557 = vsel %vm2464, %v2252, 0.0
  %v2558 = vadd.f32 %v2556, %v2557
  %v2559 = vsel %vm2464, %v2253, 0.0
  %v2560 = vadd.f32 %v2558, %v2559
  %v2561 = vsel %vm2464, %v2254, 0.0
  %v2562 = vadd.f32 %v2560, %v2561
  %v2563 = vsel %vm2464, %v2255, 0.0
  %v2564 = vadd.f32 %v2562, %v2563
  %v2565 = vsel %vm2464, %v2256, 0.0
  %v2566 = vadd.f32 %v2564, %v2565
  %v2567 = vsel %vm2464, %v2257, 0.0
  %v2568 = vadd.f32 %v2566, %v2567
  %v2569 = vsel %vm2464, %v2258, 0.0
  %v2570 = vadd.f32 %v2568, %v2569
  %v2571 = vsel %vm2464, %v2259, 0.0
  %v2572 = vadd.f32 %v2570, %v2571
  %v2573 = vsel %vm2464, %v2260, 0.0
  %v2574 = vadd.f32 %v2572, %v2573
  %v2575 = vsel %vm2464, %v2261, 0.0
  %v2576 = vadd.f32 %v2574, %v2575
  %v2577 = vsel %vm2464, %v2262, 0.0
  %v2578 = vadd.f32 %v2576, %v2577
  %v2579 = vsel %vm2464, %v2263, 0.0
  %v2580 = vadd.f32 %v2578, %v2579
  %v2581 = vsel %vm2464, %v2264, 0.0
  %v2582 = vadd.f32 %v2580, %v2581
  %v2583 = vsel %vm2464, %v2265, 0.0
  %v2584 = vadd.f32 %v2582, %v2583
  %v2585 = vsel %vm2464, %v2266, 0.0
  %v2586 = vadd.f32 %v2584, %v2585
  %v2587 = vsel %vm2464, %v2267, 0.0
  %v2588 = vadd.f32 %v2586, %v2587
  %v2589 = vsel %vm2464, %v2268, 0.0
  %v2590 = vadd.f32 %v2588, %v2589
  %v2591 = vsel %vm2464, %v2269, 0.0
  %v2592 = vadd.f32 %v2590, %v2591
  %v2593 = vsel %vm2464, %v2270, 0.0
  %v2594 = vadd.f32 %v2592, %v2593
  %v2595 = vsel %vm2464, %v2271, 0.0
  %v2596 = vadd.f32 %v2594, %v2595
  %v2597 = vrot.slane %v2596, 4
  %v2598 = vadd.f32 %v2596, %v2597
  %v2599 = vrot.slane %v2598, 2
  %v2600 = vadd.f32 %v2598, %v2599
  %v2601 = vrot.slane %v2600, 1
  %v2602 = vadd.f32 %v2600, %v2601
  %v2603 = vsel %vm2464, %v2272, 0.0
  %v2604 = vsel %vm2464, %v2273, 0.0
  %v2605 = vadd.f32 %v2603, %v2604
  %v2606 = vsel %vm2464, %v2274, 0.0
  %v2607 = vadd.f32 %v2605, %v2606
  %v2608 = vsel %vm2464, %v2275, 0.0
  %v2609 = vadd.f32 %v2607, %v2608
  %v2610 = vsel %vm2464, %v2276, 0.0
  %v2611 = vadd.f32 %v2609, %v2610
  %v2612 = vsel %vm2464, %v2277, 0.0
  %v2613 = vadd.f32 %v2611, %v2612
  %v2614 = vsel %vm2464, %v2278, 0.0
  %v2615 = vadd.f32 %v2613, %v2614
  %v2616 = vsel %vm2464, %v2279, 0.0
  %v2617 = vadd.f32 %v2615, %v2616
  %v2618 = vsel %vm2464, %v2280, 0.0
  %v2619 = vadd.f32 %v2617, %v2618
  %v2620 = vsel %vm2464, %v2281, 0.0
  %v2621 = vadd.f32 %v2619, %v2620
  %v2622 = vsel %vm2464, %v2282, 0.0
  %v2623 = vadd.f32 %v2621, %v2622
  %v2624 = vsel %vm2464, %v2283, 0.0
  %v2625 = vadd.f32 %v2623, %v2624
  %v2626 = vsel %vm2464, %v2284, 0.0
  %v2627 = vadd.f32 %v2625, %v2626
  %v2628 = vsel %vm2464, %v2285, 0.0
  %v2629 = vadd.f32 %v2627, %v2628
  %v2630 = vsel %vm2464, %v2286, 0.0
  %v2631 = vadd.f32 %v2629, %v2630
  %v2632 = vsel %vm2464, %v2287, 0.0
  %v2633 = vadd.f32 %v2631, %v2632
  %v2634 = vsel %vm2464, %v2288, 0.0
  %v2635 = vadd.f32 %v2633, %v2634
  %v2636 = vsel %vm2464, %v2289, 0.0
  %v2637 = vadd.f32 %v2635, %v2636
  %v2638 = vsel %vm2464, %v2290, 0.0
  %v2639 = vadd.f32 %v2637, %v2638
  %v2640 = vsel %vm2464, %v2291, 0.0
  %v2641 = vadd.f32 %v2639, %v2640
  %v2642 = vsel %vm2464, %v2292, 0.0
  %v2643 = vadd.f32 %v2641, %v2642
  %v2644 = vsel %vm2464, %v2293, 0.0
  %v2645 = vadd.f32 %v2643, %v2644
  %v2646 = vsel %vm2464, %v2294, 0.0
  %v2647 = vadd.f32 %v2645, %v2646
  %v2648 = vsel %vm2464, %v2295, 0.0
  %v2649 = vadd.f32 %v2647, %v2648
  %v2650 = vsel %vm2464, %v2296, 0.0
  %v2651 = vadd.f32 %v2649, %v2650
  %v2652 = vsel %vm2464, %v2297, 0.0
  %v2653 = vadd.f32 %v2651, %v2652
  %v2654 = vsel %vm2464, %v2298, 0.0
  %v2655 = vadd.f32 %v2653, %v2654
  %v2656 = vsel %vm2464, %v2299, 0.0
  %v2657 = vadd.f32 %v2655, %v2656
  %v2658 = vsel %vm2464, %v2300, 0.0
  %v2659 = vadd.f32 %v2657, %v2658
  %v2660 = vsel %vm2464, %v2301, 0.0
  %v2661 = vadd.f32 %v2659, %v2660
  %v2662 = vsel %vm2464, %v2302, 0.0
  %v2663 = vadd.f32 %v2661, %v2662
  %v2664 = vsel %vm2464, %v2303, 0.0
  %v2665 = vadd.f32 %v2663, %v2664
  %v2666 = vrot.slane %v2665, 4
  %v2667 = vadd.f32 %v2665, %v2666
  %v2668 = vrot.slane %v2667, 2
  %v2669 = vadd.f32 %v2667, %v2668
  %v2670 = vrot.slane %v2669, 1
  %v2671 = vadd.f32 %v2669, %v2670
  %v2672 = vsel %vm2464, %v2304, 0.0
  %v2673 = vsel %vm2464, %v2305, 0.0
  %v2674 = vadd.f32 %v2672, %v2673
  %v2675 = vsel %vm2464, %v2306, 0.0
  %v2676 = vadd.f32 %v2674, %v2675
  %v2677 = vsel %vm2464, %v2307, 0.0
  %v2678 = vadd.f32 %v2676, %v2677
  %v2679 = vsel %vm2464, %v2308, 0.0
  %v2680 = vadd.f32 %v2678, %v2679
  %v2681 = vsel %vm2464, %v2309, 0.0
  %v2682 = vadd.f32 %v2680, %v2681
  %v2683 = vsel %vm2464, %v2310, 0.0
  %v2684 = vadd.f32 %v2682, %v2683
  %v2685 = vsel %vm2464, %v2311, 0.0
  %v2686 = vadd.f32 %v2684, %v2685
  %v2687 = vsel %vm2464, %v2312, 0.0
  %v2688 = vadd.f32 %v2686, %v2687
  %v2689 = vsel %vm2464, %v2313, 0.0
  %v2690 = vadd.f32 %v2688, %v2689
  %v2691 = vsel %vm2464, %v2314, 0.0
  %v2692 = vadd.f32 %v2690, %v2691
  %v2693 = vsel %vm2464, %v2315, 0.0
  %v2694 = vadd.f32 %v2692, %v2693
  %v2695 = vsel %vm2464, %v2316, 0.0
  %v2696 = vadd.f32 %v2694, %v2695
  %v2697 = vsel %vm2464, %v2317, 0.0
  %v2698 = vadd.f32 %v2696, %v2697
  %v2699 = vsel %vm2464, %v2318, 0.0
  %v2700 = vadd.f32 %v2698, %v2699
  %v2701 = vsel %vm2464, %v2319, 0.0
  %v2702 = vadd.f32 %v2700, %v2701
  %v2703 = vsel %vm2464, %v2320, 0.0
  %v2704 = vadd.f32 %v2702, %v2703
  %v2705 = vsel %vm2464, %v2321, 0.0
  %v2706 = vadd.f32 %v2704, %v2705
  %v2707 = vsel %vm2464, %v2322, 0.0
  %v2708 = vadd.f32 %v2706, %v2707
  %v2709 = vsel %vm2464, %v2323, 0.0
  %v2710 = vadd.f32 %v2708, %v2709
  %v2711 = vsel %vm2464, %v2324, 0.0
  %v2712 = vadd.f32 %v2710, %v2711
  %v2713 = vsel %vm2464, %v2325, 0.0
  %v2714 = vadd.f32 %v2712, %v2713
  %v2715 = vsel %vm2464, %v2326, 0.0
  %v2716 = vadd.f32 %v2714, %v2715
  %v2717 = vsel %vm2464, %v2327, 0.0
  %v2718 = vadd.f32 %v2716, %v2717
  %v2719 = vsel %vm2464, %v2328, 0.0
  %v2720 = vadd.f32 %v2718, %v2719
  %v2721 = vsel %vm2464, %v2329, 0.0
  %v2722 = vadd.f32 %v2720, %v2721
  %v2723 = vsel %vm2464, %v2330, 0.0
  %v2724 = vadd.f32 %v2722, %v2723
  %v2725 = vsel %vm2464, %v2331, 0.0
  %v2726 = vadd.f32 %v2724, %v2725
  %v2727 = vsel %vm2464, %v2332, 0.0
  %v2728 = vadd.f32 %v2726, %v2727
  %v2729 = vsel %vm2464, %v2333, 0.0
  %v2730 = vadd.f32 %v2728, %v2729
  %v2731 = vsel %vm2464, %v2334, 0.0
  %v2732 = vadd.f32 %v2730, %v2731
  %v2733 = vsel %vm2464, %v2335, 0.0
  %v2734 = vadd.f32 %v2732, %v2733
  %v2735 = vrot.slane %v2734, 4
  %v2736 = vadd.f32 %v2734, %v2735
  %v2737 = vrot.slane %v2736, 2
  %v2738 = vadd.f32 %v2736, %v2737
  %v2739 = vrot.slane %v2738, 1
  %v2740 = vadd.f32 %v2738, %v2739
  %v2741 = vsel %vm2464, %v2336, 0.0
  %v2742 = vsel %vm2464, %v2337, 0.0
  %v2743 = vadd.f32 %v2741, %v2742
  %v2744 = vsel %vm2464, %v2338, 0.0
  %v2745 = vadd.f32 %v2743, %v2744
  %v2746 = vsel %vm2464, %v2339, 0.0
  %v2747 = vadd.f32 %v2745, %v2746
  %v2748 = vsel %vm2464, %v2340, 0.0
  %v2749 = vadd.f32 %v2747, %v2748
  %v2750 = vsel %vm2464, %v2341, 0.0
  %v2751 = vadd.f32 %v2749, %v2750
  %v2752 = vsel %vm2464, %v2342, 0.0
  %v2753 = vadd.f32 %v2751, %v2752
  %v2754 = vsel %vm2464, %v2343, 0.0
  %v2755 = vadd.f32 %v2753, %v2754
  %v2756 = vsel %vm2464, %v2344, 0.0
  %v2757 = vadd.f32 %v2755, %v2756
  %v2758 = vsel %vm2464, %v2345, 0.0
  %v2759 = vadd.f32 %v2757, %v2758
  %v2760 = vsel %vm2464, %v2346, 0.0
  %v2761 = vadd.f32 %v2759, %v2760
  %v2762 = vsel %vm2464, %v2347, 0.0
  %v2763 = vadd.f32 %v2761, %v2762
  %v2764 = vsel %vm2464, %v2348, 0.0
  %v2765 = vadd.f32 %v2763, %v2764
  %v2766 = vsel %vm2464, %v2349, 0.0
  %v2767 = vadd.f32 %v2765, %v2766
  %v2768 = vsel %vm2464, %v2350, 0.0
  %v2769 = vadd.f32 %v2767, %v2768
  %v2770 = vsel %vm2464, %v2351, 0.0
  %v2771 = vadd.f32 %v2769, %v2770
  %v2772 = vsel %vm2464, %v2352, 0.0
  %v2773 = vadd.f32 %v2771, %v2772
  %v2774 = vsel %vm2464, %v2353, 0.0
  %v2775 = vadd.f32 %v2773, %v2774
  %v2776 = vsel %vm2464, %v2354, 0.0
  %v2777 = vadd.f32 %v2775, %v2776
  %v2778 = vsel %vm2464, %v2355, 0.0
  %v2779 = vadd.f32 %v2777, %v2778
  %v2780 = vsel %vm2464, %v2356, 0.0
  %v2781 = vadd.f32 %v2779, %v2780
  %v2782 = vsel %vm2464, %v2357, 0.0
  %v2783 = vadd.f32 %v2781, %v2782
  %v2784 = vsel %vm2464, %v2358, 0.0
  %v2785 = vadd.f32 %v2783, %v2784
  %v2786 = vsel %vm2464, %v2359, 0.0
  %v2787 = vadd.f32 %v2785, %v2786
  %v2788 = vsel %vm2464, %v2360, 0.0
  %v2789 = vadd.f32 %v2787, %v2788
  %v2790 = vsel %vm2464, %v2361, 0.0
  %v2791 = vadd.f32 %v2789, %v2790
  %v2792 = vsel %vm2464, %v2362, 0.0
  %v2793 = vadd.f32 %v2791, %v2792
  %v2794 = vsel %vm2464, %v2363, 0.0
  %v2795 = vadd.f32 %v2793, %v2794
  %v2796 = vsel %vm2464, %v2364, 0.0
  %v2797 = vadd.f32 %v2795, %v2796
  %v2798 = vsel %vm2464, %v2365, 0.0
  %v2799 = vadd.f32 %v2797, %v2798
  %v2800 = vsel %vm2464, %v2366, 0.0
  %v2801 = vadd.f32 %v2799, %v2800
  %v2802 = vsel %vm2464, %v2367, 0.0
  %v2803 = vadd.f32 %v2801, %v2802
  %v2804 = vrot.slane %v2803, 4
  %v2805 = vadd.f32 %v2803, %v2804
  %v2806 = vrot.slane %v2805, 2
  %v2807 = vadd.f32 %v2805, %v2806
  %v2808 = vrot.slane %v2807, 1
  %v2809 = vadd.f32 %v2807, %v2808
  %v2810 = vsel %vm2464, %v2368, 0.0
  %v2811 = vsel %vm2464, %v2369, 0.0
  %v2812 = vadd.f32 %v2810, %v2811
  %v2813 = vsel %vm2464, %v2370, 0.0
  %v2814 = vadd.f32 %v2812, %v2813
  %v2815 = vsel %vm2464, %v2371, 0.0
  %v2816 = vadd.f32 %v2814, %v2815
  %v2817 = vsel %vm2464, %v2372, 0.0
  %v2818 = vadd.f32 %v2816, %v2817
  %v2819 = vsel %vm2464, %v2373, 0.0
  %v2820 = vadd.f32 %v2818, %v2819
  %v2821 = vsel %vm2464, %v2374, 0.0
  %v2822 = vadd.f32 %v2820, %v2821
  %v2823 = vsel %vm2464, %v2375, 0.0
  %v2824 = vadd.f32 %v2822, %v2823
  %v2825 = vsel %vm2464, %v2376, 0.0
  %v2826 = vadd.f32 %v2824, %v2825
  %v2827 = vsel %vm2464, %v2377, 0.0
  %v2828 = vadd.f32 %v2826, %v2827
  %v2829 = vsel %vm2464, %v2378, 0.0
  %v2830 = vadd.f32 %v2828, %v2829
  %v2831 = vsel %vm2464, %v2379, 0.0
  %v2832 = vadd.f32 %v2830, %v2831
  %v2833 = vsel %vm2464, %v2380, 0.0
  %v2834 = vadd.f32 %v2832, %v2833
  %v2835 = vsel %vm2464, %v2381, 0.0
  %v2836 = vadd.f32 %v2834, %v2835
  %v2837 = vsel %vm2464, %v2382, 0.0
  %v2838 = vadd.f32 %v2836, %v2837
  %v2839 = vsel %vm2464, %v2383, 0.0
  %v2840 = vadd.f32 %v2838, %v2839
  %v2841 = vsel %vm2464, %v2384, 0.0
  %v2842 = vadd.f32 %v2840, %v2841
  %v2843 = vsel %vm2464, %v2385, 0.0
  %v2844 = vadd.f32 %v2842, %v2843
  %v2845 = vsel %vm2464, %v2386, 0.0
  %v2846 = vadd.f32 %v2844, %v2845
  %v2847 = vsel %vm2464, %v2387, 0.0
  %v2848 = vadd.f32 %v2846, %v2847
  %v2849 = vsel %vm2464, %v2388, 0.0
  %v2850 = vadd.f32 %v2848, %v2849
  %v2851 = vsel %vm2464, %v2389, 0.0
  %v2852 = vadd.f32 %v2850, %v2851
  %v2853 = vsel %vm2464, %v2390, 0.0
  %v2854 = vadd.f32 %v2852, %v2853
  %v2855 = vsel %vm2464, %v2391, 0.0
  %v2856 = vadd.f32 %v2854, %v2855
  %v2857 = vsel %vm2464, %v2392, 0.0
  %v2858 = vadd.f32 %v2856, %v2857
  %v2859 = vsel %vm2464, %v2393, 0.0
  %v2860 = vadd.f32 %v2858, %v2859
  %v2861 = vsel %vm2464, %v2394, 0.0
  %v2862 = vadd.f32 %v2860, %v2861
  %v2863 = vsel %vm2464, %v2395, 0.0
  %v2864 = vadd.f32 %v2862, %v2863
  %v2865 = vsel %vm2464, %v2396, 0.0
  %v2866 = vadd.f32 %v2864, %v2865
  %v2867 = vsel %vm2464, %v2397, 0.0
  %v2868 = vadd.f32 %v2866, %v2867
  %v2869 = vsel %vm2464, %v2398, 0.0
  %v2870 = vadd.f32 %v2868, %v2869
  %v2871 = vsel %vm2464, %v2399, 0.0
  %v2872 = vadd.f32 %v2870, %v2871
  %v2873 = vrot.slane %v2872, 4
  %v2874 = vadd.f32 %v2872, %v2873
  %v2875 = vrot.slane %v2874, 2
  %v2876 = vadd.f32 %v2874, %v2875
  %v2877 = vrot.slane %v2876, 1
  %v2878 = vadd.f32 %v2876, %v2877
  %v2879 = vsel %vm2464, %v2400, 0.0
  %v2880 = vsel %vm2464, %v2401, 0.0
  %v2881 = vadd.f32 %v2879, %v2880
  %v2882 = vsel %vm2464, %v2402, 0.0
  %v2883 = vadd.f32 %v2881, %v2882
  %v2884 = vsel %vm2464, %v2403, 0.0
  %v2885 = vadd.f32 %v2883, %v2884
  %v2886 = vsel %vm2464, %v2404, 0.0
  %v2887 = vadd.f32 %v2885, %v2886
  %v2888 = vsel %vm2464, %v2405, 0.0
  %v2889 = vadd.f32 %v2887, %v2888
  %v2890 = vsel %vm2464, %v2406, 0.0
  %v2891 = vadd.f32 %v2889, %v2890
  %v2892 = vsel %vm2464, %v2407, 0.0
  %v2893 = vadd.f32 %v2891, %v2892
  %v2894 = vsel %vm2464, %v2408, 0.0
  %v2895 = vadd.f32 %v2893, %v2894
  %v2896 = vsel %vm2464, %v2409, 0.0
  %v2897 = vadd.f32 %v2895, %v2896
  %v2898 = vsel %vm2464, %v2410, 0.0
  %v2899 = vadd.f32 %v2897, %v2898
  %v2900 = vsel %vm2464, %v2411, 0.0
  %v2901 = vadd.f32 %v2899, %v2900
  %v2902 = vsel %vm2464, %v2412, 0.0
  %v2903 = vadd.f32 %v2901, %v2902
  %v2904 = vsel %vm2464, %v2413, 0.0
  %v2905 = vadd.f32 %v2903, %v2904
  %v2906 = vsel %vm2464, %v2414, 0.0
  %v2907 = vadd.f32 %v2905, %v2906
  %v2908 = vsel %vm2464, %v2415, 0.0
  %v2909 = vadd.f32 %v2907, %v2908
  %v2910 = vsel %vm2464, %v2416, 0.0
  %v2911 = vadd.f32 %v2909, %v2910
  %v2912 = vsel %vm2464, %v2417, 0.0
  %v2913 = vadd.f32 %v2911, %v2912
  %v2914 = vsel %vm2464, %v2418, 0.0
  %v2915 = vadd.f32 %v2913, %v2914
  %v2916 = vsel %vm2464, %v2419, 0.0
  %v2917 = vadd.f32 %v2915, %v2916
  %v2918 = vsel %vm2464, %v2420, 0.0
  %v2919 = vadd.f32 %v2917, %v2918
  %v2920 = vsel %vm2464, %v2421, 0.0
  %v2921 = vadd.f32 %v2919, %v2920
  %v2922 = vsel %vm2464, %v2422, 0.0
  %v2923 = vadd.f32 %v2921, %v2922
  %v2924 = vsel %vm2464, %v2423, 0.0
  %v2925 = vadd.f32 %v2923, %v2924
  %v2926 = vsel %vm2464, %v2424, 0.0
  %v2927 = vadd.f32 %v2925, %v2926
  %v2928 = vsel %vm2464, %v2425, 0.0
  %v2929 = vadd.f32 %v2927, %v2928
  %v2930 = vsel %vm2464, %v2426, 0.0
  %v2931 = vadd.f32 %v2929, %v2930
  %v2932 = vsel %vm2464, %v2427, 0.0
  %v2933 = vadd.f32 %v2931, %v2932
  %v2934 = vsel %vm2464, %v2428, 0.0
  %v2935 = vadd.f32 %v2933, %v2934
  %v2936 = vsel %vm2464, %v2429, 0.0
  %v2937 = vadd.f32 %v2935, %v2936
  %v2938 = vsel %vm2464, %v2430, 0.0
  %v2939 = vadd.f32 %v2937, %v2938
  %v2940 = vsel %vm2464, %v2431, 0.0
  %v2941 = vadd.f32 %v2939, %v2940
  %v2942 = vrot.slane %v2941, 4
  %v2943 = vadd.f32 %v2941, %v2942
  %v2944 = vrot.slane %v2943, 2
  %v2945 = vadd.f32 %v2943, %v2944
  %v2946 = vrot.slane %v2945, 1
  %v2947 = vadd.f32 %v2945, %v2946
  %v2948 = vsel %vm2464, %v2432, 0.0
  %v2949 = vsel %vm2464, %v2433, 0.0
  %v2950 = vadd.f32 %v2948, %v2949
  %v2951 = vsel %vm2464, %v2434, 0.0
  %v2952 = vadd.f32 %v2950, %v2951
  %v2953 = vsel %vm2464, %v2435, 0.0
  %v2954 = vadd.f32 %v2952, %v2953
  %v2955 = vsel %vm2464, %v2436, 0.0
  %v2956 = vadd.f32 %v2954, %v2955
  %v2957 = vsel %vm2464, %v2437, 0.0
  %v2958 = vadd.f32 %v2956, %v2957
  %v2959 = vsel %vm2464, %v2438, 0.0
  %v2960 = vadd.f32 %v2958, %v2959
  %v2961 = vsel %vm2464, %v2439, 0.0
  %v2962 = vadd.f32 %v2960, %v2961
  %v2963 = vsel %vm2464, %v2440, 0.0
  %v2964 = vadd.f32 %v2962, %v2963
  %v2965 = vsel %vm2464, %v2441, 0.0
  %v2966 = vadd.f32 %v2964, %v2965
  %v2967 = vsel %vm2464, %v2442, 0.0
  %v2968 = vadd.f32 %v2966, %v2967
  %v2969 = vsel %vm2464, %v2443, 0.0
  %v2970 = vadd.f32 %v2968, %v2969
  %v2971 = vsel %vm2464, %v2444, 0.0
  %v2972 = vadd.f32 %v2970, %v2971
  %v2973 = vsel %vm2464, %v2445, 0.0
  %v2974 = vadd.f32 %v2972, %v2973
  %v2975 = vsel %vm2464, %v2446, 0.0
  %v2976 = vadd.f32 %v2974, %v2975
  %v2977 = vsel %vm2464, %v2447, 0.0
  %v2978 = vadd.f32 %v2976, %v2977
  %v2979 = vsel %vm2464, %v2448, 0.0
  %v2980 = vadd.f32 %v2978, %v2979
  %v2981 = vsel %vm2464, %v2449, 0.0
  %v2982 = vadd.f32 %v2980, %v2981
  %v2983 = vsel %vm2464, %v2450, 0.0
  %v2984 = vadd.f32 %v2982, %v2983
  %v2985 = vsel %vm2464, %v2451, 0.0
  %v2986 = vadd.f32 %v2984, %v2985
  %v2987 = vsel %vm2464, %v2452, 0.0
  %v2988 = vadd.f32 %v2986, %v2987
  %v2989 = vsel %vm2464, %v2453, 0.0
  %v2990 = vadd.f32 %v2988, %v2989
  %v2991 = vsel %vm2464, %v2454, 0.0
  %v2992 = vadd.f32 %v2990, %v2991
  %v2993 = vsel %vm2464, %v2455, 0.0
  %v2994 = vadd.f32 %v2992, %v2993
  %v2995 = vsel %vm2464, %v2456, 0.0
  %v2996 = vadd.f32 %v2994, %v2995
  %v2997 = vsel %vm2464, %v2457, 0.0
  %v2998 = vadd.f32 %v2996, %v2997
  %v2999 = vsel %vm2464, %v2458, 0.0
  %v3000 = vadd.f32 %v2998, %v2999
  %v3001 = vsel %vm2464, %v2459, 0.0
  %v3002 = vadd.f32 %v3000, %v3001
  %v3003 = vsel %vm2464, %v2460, 0.0
  %v3004 = vadd.f32 %v3002, %v3003
  %v3005 = vsel %vm2464, %v2461, 0.0
  %v3006 = vadd.f32 %v3004, %v3005
  %v3007 = vsel %vm2464, %v2462, 0.0
  %v3008 = vadd.f32 %v3006, %v3007
  %v3009 = vsel %vm2464, %v2463, 0.0
  %v3010 = vadd.f32 %v3008, %v3009
  %v3011 = vrot.slane %v3010, 4
  %v3012 = vadd.f32 %v3010, %v3011
  %v3013 = vrot.slane %v3012, 2
  %v3014 = vadd.f32 %v3012, %v3013
  %v3015 = vrot.slane %v3014, 1
  %v3016 = vadd.f32 %v3014, %v3015
  %v3017 = vrcp.pop 256.0
  %v3018 = vmul.f32 %v2533, %v3017
  %v3019 = vmul.f32 %v2602, %v3017
  %v3020 = vmul.f32 %v2671, %v3017
  %v3021 = vmul.f32 %v2740, %v3017
  %v3022 = vmul.f32 %v2809, %v3017
  %v3023 = vmul.f32 %v2878, %v3017
  %v3024 = vmul.f32 %v2947, %v3017
  %v3025 = vmul.f32 %v3016, %v3017
  %v3026 = vld [vmem:[%s13] sm:$0xff]
  %v3027 = vld [vmem:[%s13 + $0x8] sm:$0xff]
  %v3028 = vld [vmem:[%s1] sm:$0xf]
  %v3029 = vld [vmem:[%s1 + $0x4] sm:$0xf]
  %v3030 = vld [vmem:[%s1 + $0x8] sm:$0xf]
  %v3031 = vld [vmem:[%s1 + $0xc] sm:$0xf]
  %v3032 = vld [vmem:[%s1 + $0x10] sm:$0xf]
  %v3033 = vld [vmem:[%s1 + $0x14] sm:$0xf]
  %v3034 = vld [vmem:[%s1 + $0x18] sm:$0xf]
  %v3035 = vld [vmem:[%s1 + $0x1c] sm:$0xf]
  %v3036 = vld [vmem:[%s1 + $0x20] sm:$0xf]
  %v3037 = vld [vmem:[%s1 + $0x24] sm:$0xf]
  %v3038 = vld [vmem:[%s1 + $0x28] sm:$0xf]
  %v3039 = vld [vmem:[%s1 + $0x2c] sm:$0xf]
  %v3040 = vld [vmem:[%s1 + $0x30] sm:$0xf]
  %v3041 = vld [vmem:[%s1 + $0x34] sm:$0xf]
  %v3042 = vld [vmem:[%s1 + $0x38] sm:$0xf]
  %v3043 = vld [vmem:[%s1 + $0x3c] sm:$0xf]
  %v3044 = vld [vmem:[%s4] sm:$0xf]
  %v3045 = vld [vmem:[%s4 + $0x4] sm:$0xf]
  %v3046 = vld [vmem:[%s4 + $0x8] sm:$0xf]
  %v3047 = vld [vmem:[%s4 + $0xc] sm:$0xf]
  %v3048 = vld [vmem:[%s4 + $0x10] sm:$0xf]
  %v3049 = vld [vmem:[%s4 + $0x14] sm:$0xf]
  %v3050 = vld [vmem:[%s6] sm:$0x1]
  %v3051 = vlaneseq
  %v3052 = vshrl.u32 %v3051, 7
  %v3053 = vsub.s32 0, %v3052
  %v3054 = vrot.slane %v3050, %v3053
  %v3071 = vunpack.c.l.b16 %v3028
  %v3072 = vunpack.c.l.b16 %v3029
  %v3073 = vunpack.c.l.b16 %v3030
  %v3074 = vunpack.c.l.b16 %v3031
  %v3075 = vunpack.c.l.b16 %v3032
  %v3076 = vunpack.c.l.b16 %v3033
  %v3077 = vunpack.c.l.b16 %v3034
  %v3078 = vunpack.c.l.b16 %v3035
  %v3079 = vunpack.c.l.b16 %v3036
  %v3080 = vunpack.c.l.b16 %v3037
  %v3081 = vunpack.c.l.b16 %v3038
  %v3082 = vunpack.c.l.b16 %v3039
  %v3083 = vunpack.c.l.b16 %v3040
  %v3084 = vunpack.c.l.b16 %v3041
  %v3085 = vunpack.c.l.b16 %v3042
  %v3086 = vunpack.c.l.b16 %v3043
  %v3087 = vpack.c.b16 %v3072, %v3071
  %v3088 = vpack.c.b16 %v3074, %v3073
  %v3089 = vpack.c.b16 %v3076, %v3075
  %v3090 = vpack.c.b16 %v3078, %v3077
  %v3091 = vpack.c.b16 %v3080, %v3079
  %v3092 = vpack.c.b16 %v3082, %v3081
  %v3093 = vpack.c.b16 %v3084, %v3083
  %v3094 = vpack.c.b16 %v3086, %v3085
  %v3101 = vunpack.c.l.b16 %v3044
  %v3102 = vunpack.c.l.b16 %v3045
  %v3103 = vunpack.c.l.b16 %v3046
  %v3104 = vunpack.c.l.b16 %v3047
  %v3105 = vunpack.c.l.b16 %v3048
  %v3106 = vunpack.c.l.b16 %v3049
  %v3107 = vpack.c.b16 %v3102, %v3101
  %v3108 = vpack.c.b16 %v3104, %v3103
  %v3109 = vpack.c.b16 %v3106, %v3105
  %vm3113 = vcmask 392192
  %v3115 = vsel %vm3113, %v3087, 0
  %v3118 = vsel %vm3113, %v3088, 0
  %v3121 = vsel %vm3113, %v3089, 0
  %v3124 = vsel %vm3113, %v3090, 0
  %v3127 = vsel %vm3113, %v3091, 0
  %v3130 = vsel %vm3113, %v3092, 0
  %v3133 = vsel %vm3113, %v3093, 0
  %v3136 = vsel %vm3113, %v3094, 0
  %3138 = vmatprep.subr.bf16.mxu0 0
  %3139 = vmatpush1.bf16.msra.mxu0 %v3107
  %3140 = vmatprep.subr.bf16.mxu0 0
  %3141 = vmatpush1.bf16.msra.mxu0 %v3108
  %3142 = vmatprep.subr.bf16.mxu0 0
  %3143 = vmatpush1.bf16.msra.mxu0 %v3109
  %3144 = vmatprep.subr.bf16.mxu0 0
  %3145 = vmatpush1.bf16.msra.mxu0 0
  %3146 = vmatprep.subr.bf16.mxu0 0
  %3147 = vmatpush1.bf16.msra.mxu0 0
  %3148 = vmatprep.subr.bf16.mxu0 0
  %3149 = vmatpush1.bf16.msra.mxu0 0
  %3150 = vmatprep.subr.bf16.mxu0 0
  %3151 = vmatpush1.bf16.msra.mxu0 0
  %3152 = vmatprep.subr.bf16.mxu0 0
  %3153 = vmatpush1.bf16.msra.mxu0 0
  %3154 = vmatprep.subr.bf16.mxu0 0
  %3155 = vmatpush1.bf16.msra.mxu0 0
  %3156 = vmatprep.subr.bf16.mxu0 0
  %3157 = vmatpush1.bf16.msra.mxu0 0
  %3158 = vmatprep.subr.bf16.mxu0 0
  %3159 = vmatpush1.bf16.msra.mxu0 0
  %3160 = vmatprep.subr.bf16.mxu0 0
  %3161 = vmatpush1.bf16.msra.mxu0 0
  %3162 = vmatprep.subr.bf16.mxu0 0
  %3163 = vmatpush1.bf16.msra.mxu0 0
  %3164 = vmatprep.subr.bf16.mxu0 0
  %3165 = vmatpush1.bf16.msra.mxu0 0
  %3166 = vmatprep.subr.bf16.mxu0 0
  %3167 = vmatpush1.bf16.msra.mxu0 0
  %3168 = vmatprep.subr.bf16.mxu0 0
  %3169 = vmatpush1.bf16.msra.mxu0 0
  %3170 = vmatprep.mubr.bf16.mxu0 0
  %3171 = vmatmul.mubr.bf16.gmra.mrb[0].mxu0 %v3115
  %v3172 = vpop.f32.mrb[0].mxu0
  %v3173 = vadd.f32 %v3054, %v3172
  %v3174 = vpop.f32.mrb[0].mxu0
  %v3175 = vpop.f32.mrb[0].mxu0
  %v3176 = vadd.f32 %v3054, %v3175
  %v3177 = vpop.f32.mrb[0].mxu0
  %3178 = vmatprep.mubr.bf16.mxu0 0
  %3179 = vmatmul.mubr.bf16.gmra.mrb[0].mxu0 %v3118
  %v3180 = vpop.f32.mrb[0].mxu0
  %v3181 = vadd.f32 %v3054, %v3180
  %v3182 = vpop.f32.mrb[0].mxu0
  %v3183 = vpop.f32.mrb[0].mxu0
  %v3184 = vadd.f32 %v3054, %v3183
  %v3185 = vpop.f32.mrb[0].mxu0
  %3186 = vmatprep.mubr.bf16.mxu0 0
  %3187 = vmatmul.mubr.bf16.gmra.mrb[0].mxu0 %v3121
  %v3188 = vpop.f32.mrb[0].mxu0
  %v3189 = vadd.f32 %v3054, %v3188
  %v3190 = vpop.f32.mrb[0].mxu0
  %v3191 = vpop.f32.mrb[0].mxu0
  %v3192 = vadd.f32 %v3054, %v3191
  %v3193 = vpop.f32.mrb[0].mxu0
  %3194 = vmatprep.mubr.bf16.mxu0 0
  %3195 = vmatmul.mubr.bf16.gmra.mrb[0].mxu0 %v3124
  %v3196 = vpop.f32.mrb[0].mxu0
  %v3197 = vadd.f32 %v3054, %v3196
  %v3198 = vpop.f32.mrb[0].mxu0
  %v3199 = vpop.f32.mrb[0].mxu0
  %v3200 = vadd.f32 %v3054, %v3199
  %v3201 = vpop.f32.mrb[0].mxu0
  %3202 = vmatprep.mubr.bf16.mxu0 0
  %3203 = vmatmul.mubr.bf16.gmra.mrb[0].mxu0 %v3127
  %v3204 = vpop.f32.mrb[0].mxu0
  %v3205 = vadd.f32 %v3054, %v3204
  %v3206 = vpop.f32.mrb[0].mxu0
  %v3207 = vpop.f32.mrb[0].mxu0
  %v3208 = vadd.f32 %v3054, %v3207
  %v3209 = vpop.f32.mrb[0].mxu0
  %3210 = vmatprep.mubr.bf16.mxu0 0
  %3211 = vmatmul.mubr.bf16.gmra.mrb[0].mxu0 %v3130
  %v3212 = vpop.f32.mrb[0].mxu0
  %v3213 = vadd.f32 %v3054, %v3212
  %v3214 = vpop.f32.mrb[0].mxu0
  %v3215 = vpop.f32.mrb[0].mxu0
  %v3216 = vadd.f32 %v3054, %v3215
  %v3217 = vpop.f32.mrb[0].mxu0
  %3218 = vmatprep.mubr.bf16.mxu0 0
  %3219 = vmatmul.mubr.bf16.gmra.mrb[0].mxu0 %v3133
  %v3220 = vpop.f32.mrb[0].mxu0
  %v3221 = vadd.f32 %v3054, %v3220
  %v3222 = vpop.f32.mrb[0].mxu0
  %v3223 = vpop.f32.mrb[0].mxu0
  %v3224 = vadd.f32 %v3054, %v3223
  %v3225 = vpop.f32.mrb[0].mxu0
  %3226 = vmatprep.mubr.bf16.mxu0 0
  %3227 = vmatmul.mubr.bf16.gmra.mrb[0].mxu0 %v3136
  %v3228 = vpop.f32.mrb[0].mxu0
  %v3229 = vadd.f32 %v3054, %v3228
  %v3230 = vpop.f32.mrb[0].mxu0
  %v3231 = vpop.f32.mrb[0].mxu0
  %v3232 = vadd.f32 %v3054, %v3231
  %v3233 = vpop.f32.mrb[0].mxu0
  %3234 = vdwg.mxu0
  %v3235 = vld [vmem:[%s5] sm:$0xff]
  %v3236 = vld [vmem:[%s5 + $0x8] sm:$0xff]
  %v3237 = vadd.f32 %v3173, %v3235
  %v3238 = vadd.f32 %v3176, %v3236
  %v3239 = vadd.f32 %v3181, %v3235
  %v3240 = vadd.f32 %v3184, %v3236
  %v3241 = vadd.f32 %v3189, %v3235
  %v3242 = vadd.f32 %v3192, %v3236
  %v3243 = vadd.f32 %v3197, %v3235
  %v3244 = vadd.f32 %v3200, %v3236
  %v3245 = vadd.f32 %v3205, %v3235
  %v3246 = vadd.f32 %v3208, %v3236
  %v3247 = vadd.f32 %v3213, %v3235
  %v3248 = vadd.f32 %v3216, %v3236
  %v3249 = vadd.f32 %v3221, %v3235
  %v3250 = vadd.f32 %v3224, %v3236
  %v3251 = vadd.f32 %v3229, %v3235
  %v3252 = vadd.f32 %v3232, %v3236
  %v3253 = vld [vmem:[%s6 + $0x1] sm:$0x1]
  %v3254 = vld [vmem:[%s6 + $0x2] sm:$0x1]
  %vm3255 = vcmask 523264
  %v3256 = vsel %vm3255, %v3237, 0.0
  %3257 = vadd.xlane.f32.xlu0 %v3256
  %v3258 = vpop.xlane.xlu0 %3257
  %v3259 = vsel %vm3255, %v3238, 0.0
  %3260 = vadd.xlane.f32.xlu0 %v3259
  %v3261 = vpop.xlane.xlu0 %3260
  %v3262 = vsel %vm3255, %v3239, 0.0
  %3263 = vadd.xlane.f32.xlu0 %v3262
  %v3264 = vpop.xlane.xlu0 %3263
  %v3265 = vsel %vm3255, %v3240, 0.0
  %3266 = vadd.xlane.f32.xlu0 %v3265
  %v3267 = vpop.xlane.xlu0 %3266
  %v3268 = vsel %vm3255, %v3241, 0.0
  %3269 = vadd.xlane.f32.xlu0 %v3268
  %v3270 = vpop.xlane.xlu0 %3269
  %v3271 = vsel %vm3255, %v3242, 0.0
  %3272 = vadd.xlane.f32.xlu0 %v3271
  %v3273 = vpop.xlane.xlu0 %3272
  %v3274 = vsel %vm3255, %v3243, 0.0
  %3275 = vadd.xlane.f32.xlu0 %v3274
  %v3276 = vpop.xlane.xlu0 %3275
  %v3277 = vsel %vm3255, %v3244, 0.0
  %3278 = vadd.xlane.f32.xlu0 %v3277
  %v3279 = vpop.xlane.xlu0 %3278
  %v3280 = vsel %vm3255, %v3245, 0.0
  %3281 = vadd.xlane.f32.xlu0 %v3280
  %v3282 = vpop.xlane.xlu0 %3281
  %v3283 = vsel %vm3255, %v3246, 0.0
  %3284 = vadd.xlane.f32.xlu0 %v3283
  %v3285 = vpop.xlane.xlu0 %3284
  %v3286 = vsel %vm3255, %v3247, 0.0
  %3287 = vadd.xlane.f32.xlu0 %v3286
  %v3288 = vpop.xlane.xlu0 %3287
  %v3289 = vsel %vm3255, %v3248, 0.0
  %3290 = vadd.xlane.f32.xlu0 %v3289
  %v3291 = vpop.xlane.xlu0 %3290
  %v3292 = vsel %vm3255, %v3249, 0.0
  %3293 = vadd.xlane.f32.xlu0 %v3292
  %v3294 = vpop.xlane.xlu0 %3293
  %v3295 = vsel %vm3255, %v3250, 0.0
  %3296 = vadd.xlane.f32.xlu0 %v3295
  %v3297 = vpop.xlane.xlu0 %3296
  %v3298 = vsel %vm3255, %v3251, 0.0
  %3299 = vadd.xlane.f32.xlu0 %v3298
  %v3300 = vpop.xlane.xlu0 %3299
  %v3301 = vsel %vm3255, %v3252, 0.0
  %3302 = vadd.xlane.f32.xlu0 %v3301
  %v3303 = vpop.xlane.xlu0 %3302
  %v3304 = vrcp.pop 64.0
  %v3305 = vmul.f32 %v3258, %v3304
  %v3306 = vmul.f32 %v3261, %v3304
  %v3307 = vmul.f32 %v3264, %v3304
  %v3308 = vmul.f32 %v3267, %v3304
  %v3309 = vmul.f32 %v3270, %v3304
  %v3310 = vmul.f32 %v3273, %v3304
  %v3311 = vmul.f32 %v3276, %v3304
  %v3312 = vmul.f32 %v3279, %v3304
  %v3313 = vmul.f32 %v3282, %v3304
  %v3314 = vmul.f32 %v3285, %v3304
  %v3315 = vmul.f32 %v3288, %v3304
  %v3316 = vmul.f32 %v3291, %v3304
  %v3317 = vmul.f32 %v3294, %v3304
  %v3318 = vmul.f32 %v3297, %v3304
  %v3319 = vmul.f32 %v3300, %v3304
  %v3320 = vmul.f32 %v3303, %v3304
  %v3321 = vsub.f32 %v3237, %v3305
  %v3322 = vsub.f32 %v3238, %v3306
  %v3323 = vsub.f32 %v3239, %v3307
  %v3324 = vsub.f32 %v3240, %v3308
  %v3325 = vsub.f32 %v3241, %v3309
  %v3326 = vsub.f32 %v3242, %v3310
  %v3327 = vsub.f32 %v3243, %v3311
  %v3328 = vsub.f32 %v3244, %v3312
  %v3329 = vsub.f32 %v3245, %v3313
  %v3330 = vsub.f32 %v3246, %v3314
  %v3331 = vsub.f32 %v3247, %v3315
  %v3332 = vsub.f32 %v3248, %v3316
  %v3333 = vsub.f32 %v3249, %v3317
  %v3334 = vsub.f32 %v3250, %v3318
  %v3335 = vsub.f32 %v3251, %v3319
  %v3336 = vsub.f32 %v3252, %v3320
  %v3337 = vmul.f32 %v3321, %v3321
  %v3338 = vmul.f32 %v3322, %v3322
  %v3339 = vmul.f32 %v3323, %v3323
  %v3340 = vmul.f32 %v3324, %v3324
  %v3341 = vmul.f32 %v3325, %v3325
  %v3342 = vmul.f32 %v3326, %v3326
  %v3343 = vmul.f32 %v3327, %v3327
  %v3344 = vmul.f32 %v3328, %v3328
  %v3345 = vmul.f32 %v3329, %v3329
  %v3346 = vmul.f32 %v3330, %v3330
  %v3347 = vmul.f32 %v3331, %v3331
  %v3348 = vmul.f32 %v3332, %v3332
  %v3349 = vmul.f32 %v3333, %v3333
  %v3350 = vmul.f32 %v3334, %v3334
  %v3351 = vmul.f32 %v3335, %v3335
  %v3352 = vmul.f32 %v3336, %v3336
  %v3353 = vsel %vm3255, %v3337, 0.0
  %3354 = vadd.xlane.f32.xlu0 %v3353
  %v3355 = vpop.xlane.xlu0 %3354
  %v3356 = vsel %vm3255, %v3338, 0.0
  %3357 = vadd.xlane.f32.xlu0 %v3356
  %v3358 = vpop.xlane.xlu0 %3357
  %v3359 = vsel %vm3255, %v3339, 0.0
  %3360 = vadd.xlane.f32.xlu0 %v3359
  %v3361 = vpop.xlane.xlu0 %3360
  %v3362 = vsel %vm3255, %v3340, 0.0
  %3363 = vadd.xlane.f32.xlu0 %v3362
  %v3364 = vpop.xlane.xlu0 %3363
  %v3365 = vsel %vm3255, %v3341, 0.0
  %3366 = vadd.xlane.f32.xlu0 %v3365
  %v3367 = vpop.xlane.xlu0 %3366
  %v3368 = vsel %vm3255, %v3342, 0.0
  %3369 = vadd.xlane.f32.xlu0 %v3368
  %v3370 = vpop.xlane.xlu0 %3369
  %v3371 = vsel %vm3255, %v3343, 0.0
  %3372 = vadd.xlane.f32.xlu0 %v3371
  %v3373 = vpop.xlane.xlu0 %3372
  %v3374 = vsel %vm3255, %v3344, 0.0
  %3375 = vadd.xlane.f32.xlu0 %v3374
  %v3376 = vpop.xlane.xlu0 %3375
  %v3377 = vsel %vm3255, %v3345, 0.0
  %3378 = vadd.xlane.f32.xlu0 %v3377
  %v3379 = vpop.xlane.xlu0 %3378
  %v3380 = vsel %vm3255, %v3346, 0.0
  %3381 = vadd.xlane.f32.xlu0 %v3380
  %v3382 = vpop.xlane.xlu0 %3381
  %v3383 = vsel %vm3255, %v3347, 0.0
  %3384 = vadd.xlane.f32.xlu0 %v3383
  %v3385 = vpop.xlane.xlu0 %3384
  %v3386 = vsel %vm3255, %v3348, 0.0
  %3387 = vadd.xlane.f32.xlu0 %v3386
  %v3388 = vpop.xlane.xlu0 %3387
  %v3389 = vsel %vm3255, %v3349, 0.0
  %3390 = vadd.xlane.f32.xlu0 %v3389
  %v3391 = vpop.xlane.xlu0 %3390
  %v3392 = vsel %vm3255, %v3350, 0.0
  %3393 = vadd.xlane.f32.xlu0 %v3392
  %v3394 = vpop.xlane.xlu0 %3393
  %v3395 = vsel %vm3255, %v3351, 0.0
  %3396 = vadd.xlane.f32.xlu0 %v3395
  %v3397 = vpop.xlane.xlu0 %3396
  %v3398 = vsel %vm3255, %v3352, 0.0
  %3399 = vadd.xlane.f32.xlu0 %v3398
  %v3400 = vpop.xlane.xlu0 %3399
  %v3401 = vmul.f32 %v3355, %v3304
  %v3402 = vmul.f32 %v3358, %v3304
  %v3403 = vmul.f32 %v3361, %v3304
  %v3404 = vmul.f32 %v3364, %v3304
  %v3405 = vmul.f32 %v3367, %v3304
  %v3406 = vmul.f32 %v3370, %v3304
  %v3407 = vmul.f32 %v3373, %v3304
  %v3408 = vmul.f32 %v3376, %v3304
  %v3409 = vmul.f32 %v3379, %v3304
  %v3410 = vmul.f32 %v3382, %v3304
  %v3411 = vmul.f32 %v3385, %v3304
  %v3412 = vmul.f32 %v3388, %v3304
  %v3413 = vmul.f32 %v3391, %v3304
  %v3414 = vmul.f32 %v3394, %v3304
  %v3415 = vmul.f32 %v3397, %v3304
  %v3416 = vmul.f32 %v3400, %v3304
  %v3417 = vadd.f32 %v3401, 1e-05
  %v3418 = vadd.f32 %v3402, 1e-05
  %v3419 = vadd.f32 %v3403, 1e-05
  %v3420 = vadd.f32 %v3404, 1e-05
  %v3421 = vadd.f32 %v3405, 1e-05
  %v3422 = vadd.f32 %v3406, 1e-05
  %v3423 = vadd.f32 %v3407, 1e-05
  %v3424 = vadd.f32 %v3408, 1e-05
  %v3425 = vadd.f32 %v3409, 1e-05
  %v3426 = vadd.f32 %v3410, 1e-05
  %v3427 = vadd.f32 %v3411, 1e-05
  %v3428 = vadd.f32 %v3412, 1e-05
  %v3429 = vadd.f32 %v3413, 1e-05
  %v3430 = vadd.f32 %v3414, 1e-05
  %v3431 = vadd.f32 %v3415, 1e-05
  %v3432 = vadd.f32 %v3416, 1e-05
  %v3433 = vrsqrt.pop %v3417
  %v3434 = vrsqrt.pop %v3418
  %v3435 = vrsqrt.pop %v3419
  %v3436 = vrsqrt.pop %v3420
  %v3437 = vrsqrt.pop %v3421
  %v3438 = vrsqrt.pop %v3422
  %v3439 = vrsqrt.pop %v3423
  %v3440 = vrsqrt.pop %v3424
  %v3441 = vrsqrt.pop %v3425
  %v3442 = vrsqrt.pop %v3426
  %v3443 = vrsqrt.pop %v3427
  %v3444 = vrsqrt.pop %v3428
  %v3445 = vrsqrt.pop %v3429
  %v3446 = vrsqrt.pop %v3430
  %v3447 = vrsqrt.pop %v3431
  %v3448 = vrsqrt.pop %v3432
  %v3449 = vmul.f32 %v3321, %v3433
  %v3450 = vmul.f32 %v3322, %v3434
  %v3451 = vmul.f32 %v3323, %v3435
  %v3452 = vmul.f32 %v3324, %v3436
  %v3453 = vmul.f32 %v3325, %v3437
  %v3454 = vmul.f32 %v3326, %v3438
  %v3455 = vmul.f32 %v3327, %v3439
  %v3456 = vmul.f32 %v3328, %v3440
  %v3457 = vmul.f32 %v3329, %v3441
  %v3458 = vmul.f32 %v3330, %v3442
  %v3459 = vmul.f32 %v3331, %v3443
  %v3460 = vmul.f32 %v3332, %v3444
  %v3461 = vmul.f32 %v3333, %v3445
  %v3462 = vmul.f32 %v3334, %v3446
  %v3463 = vmul.f32 %v3335, %v3447
  %v3464 = vmul.f32 %v3336, %v3448
  %v3465 = vlaneseq
  %v3466 = vshrl.u32 %v3465, 7
  %v3467 = vsub.s32 0, %v3466
  %v3468 = vrot.slane %v3253, %v3467
  %v3469 = vmul.f32 %v3449, %v3468
  %v3470 = vmul.f32 %v3450, %v3468
  %v3471 = vmul.f32 %v3451, %v3468
  %v3472 = vmul.f32 %v3452, %v3468
  %v3473 = vmul.f32 %v3453, %v3468
  %v3474 = vmul.f32 %v3454, %v3468
  %v3475 = vmul.f32 %v3455, %v3468
  %v3476 = vmul.f32 %v3456, %v3468
  %v3477 = vmul.f32 %v3457, %v3468
  %v3478 = vmul.f32 %v3458, %v3468
  %v3479 = vmul.f32 %v3459, %v3468
  %v3480 = vmul.f32 %v3460, %v3468
  %v3481 = vmul.f32 %v3461, %v3468
  %v3482 = vmul.f32 %v3462, %v3468
  %v3483 = vmul.f32 %v3463, %v3468
  %v3484 = vmul.f32 %v3464, %v3468
  %v3485 = vlaneseq
  %v3486 = vshrl.u32 %v3485, 7
  %v3487 = vsub.s32 0, %v3486
  %v3488 = vrot.slane %v3254, %v3487
  %v3489 = vadd.f32 %v3469, %v3488
  %v3490 = vadd.f32 %v3470, %v3488
  %v3491 = vadd.f32 %v3471, %v3488
  %v3492 = vadd.f32 %v3472, %v3488
  %v3493 = vadd.f32 %v3473, %v3488
  %v3494 = vadd.f32 %v3474, %v3488
  %v3495 = vadd.f32 %v3475, %v3488
  %v3496 = vadd.f32 %v3476, %v3488
  %v3497 = vadd.f32 %v3477, %v3488
  %v3498 = vadd.f32 %v3478, %v3488
  %v3499 = vadd.f32 %v3479, %v3488
  %v3500 = vadd.f32 %v3480, %v3488
  %v3501 = vadd.f32 %v3481, %v3488
  %v3502 = vadd.f32 %v3482, %v3488
  %v3503 = vadd.f32 %v3483, %v3488
  %v3504 = vadd.f32 %v3484, %v3488
  %v3505 = vld [vmem:[%s7] sm:$0xff]
  %v3506 = vld [vmem:[%s7 + $0x8] sm:$0xff]
  %v3507 = vld [vmem:[%s7 + $0x10] sm:$0xff]
  %v3508 = vld [vmem:[%s7 + $0x18] sm:$0xff]
  %v3509 = vld [vmem:[%s7 + $0x20] sm:$0xff]
  %v3510 = vld [vmem:[%s7 + $0x28] sm:$0xff]
  %v3511 = vld [vmem:[%s7 + $0x30] sm:$0xff]
  %v3512 = vld [vmem:[%s7 + $0x38] sm:$0xff]
  %v3513 = vld [vmem:[%s7 + $0x40] sm:$0xff]
  %v3514 = vld [vmem:[%s7 + $0x48] sm:$0xff]
  %v3515 = vld [vmem:[%s7 + $0x50] sm:$0xff]
  %v3516 = vld [vmem:[%s7 + $0x58] sm:$0xff]
  %v3517 = vld [vmem:[%s7 + $0x60] sm:$0xff]
  %v3518 = vld [vmem:[%s7 + $0x68] sm:$0xff]
  %v3519 = vld [vmem:[%s7 + $0x70] sm:$0xff]
  %v3520 = vld [vmem:[%s7 + $0x78] sm:$0xff]
  %v3521 = vld [vmem:[%s8] sm:$0x3]
  %v3523 = vlaneseq
  %v3524 = vshrl.u32 %v3523, 7
  %v3525 = vsub.s32 0, %v3524
  %v3526 = vrot.slane %v3521, %v3525
  %v3527 = vlaneseq
  %v3528 = vshrl.u32 %v3527, 7
  %v3529 = vsub.s32 1, %v3528
  %v3530 = vrot.slane %v3521, %v3529
  %v3534 = vsel %vm3255, %v3489, 0
  %v3537 = vsel %vm3255, %v3490, 0
  %v3540 = vsel %vm3255, %v3491, 0
  %v3543 = vsel %vm3255, %v3492, 0
  %v3546 = vsel %vm3255, %v3493, 0
  %v3549 = vsel %vm3255, %v3494, 0
  %v3552 = vsel %vm3255, %v3495, 0
  %v3555 = vsel %vm3255, %v3496, 0
  %v3558 = vsel %vm3255, %v3497, 0
  %v3561 = vsel %vm3255, %v3498, 0
  %v3564 = vsel %vm3255, %v3499, 0
  %v3567 = vsel %vm3255, %v3500, 0
  %v3570 = vsel %vm3255, %v3501, 0
  %v3573 = vsel %vm3255, %v3502, 0
  %v3576 = vsel %vm3255, %v3503, 0
  %v3579 = vsel %vm3255, %v3504, 0
  %3581 = vmatprep.subr.mxu0 %v3506
  %3582 = vmatpush1.msra.mxu0 %v3505
  %3583 = vmatprep.subr.mxu0 %v3508
  %3584 = vmatpush1.msra.mxu0 %v3507
  %3585 = vmatprep.subr.mxu0 %v3510
  %3586 = vmatpush1.msra.mxu0 %v3509
  %3587 = vmatprep.subr.mxu0 %v3512
  %3588 = vmatpush1.msra.mxu0 %v3511
  %3589 = vmatprep.subr.mxu0 %v3514
  %3590 = vmatpush1.msra.mxu0 %v3513
  %3591 = vmatprep.subr.mxu0 %v3516
  %3592 = vmatpush1.msra.mxu0 %v3515
  %3593 = vmatprep.subr.mxu0 %v3518
  %3594 = vmatpush1.msra.mxu0 %v3517
  %3595 = vmatprep.subr.mxu0 %v3520
  %3596 = vmatpush1.msra.mxu0 %v3519
  %3597 = vmatprep.subr.mxu0 0.0
  %3598 = vmatpush1.msra.mxu0 0.0
  %3599 = vmatprep.subr.mxu0 0.0
  %3600 = vmatpush1.msra.mxu0 0.0
  %3601 = vmatprep.subr.mxu0 0.0
  %3602 = vmatpush1.msra.mxu0 0.0
  %3603 = vmatprep.subr.mxu0 0.0
  %3604 = vmatpush1.msra.mxu0 0.0
  %3605 = vmatprep.subr.mxu0 0.0
  %3606 = vmatpush1.msra.mxu0 0.0
  %3607 = vmatprep.subr.mxu0 0.0
  %3608 = vmatpush1.msra.mxu0 0.0
  %3609 = vmatprep.subr.mxu0 0.0
  %3610 = vmatpush1.msra.mxu0 0.0
  %3611 = vmatprep.subr.mxu0 0.0
  %3612 = vmatpush1.msra.mxu0 0.0
  %3613 = vmatprep.subr.mxu0 0.0
  %3614 = vmatpush1.msra.mxu0 0.0
  %3615 = vmatprep.subr.mxu0 0.0
  %3616 = vmatpush1.msra.mxu0 0.0
  %3617 = vmatprep.subr.mxu0 0.0
  %3618 = vmatpush1.msra.mxu0 0.0
  %3619 = vmatprep.subr.mxu0 0.0
  %3620 = vmatpush1.msra.mxu0 0.0
  %3621 = vmatprep.subr.mxu0 0.0
  %3622 = vmatpush1.msra.mxu0 0.0
  %3623 = vmatprep.subr.mxu0 0.0
  %3624 = vmatpush1.msra.mxu0 0.0
  %3625 = vmatprep.subr.mxu0 0.0
  %3626 = vmatpush1.msra.mxu0 0.0
  %3627 = vmatprep.subr.mxu0 0.0
  %3628 = vmatpush1.msra.mxu0 0.0
  %3629 = vmatprep.subr.mxu0 0.0
  %3630 = vmatpush1.msra.mxu0 0.0
  %3631 = vmatprep.subr.mxu0 0.0
  %3632 = vmatpush1.msra.mxu0 0.0
  %3633 = vmatprep.subr.mxu0 0.0
  %3634 = vmatpush1.msra.mxu0 0.0
  %3635 = vmatprep.subr.mxu0 0.0
  %3636 = vmatpush1.msra.mxu0 0.0
  %3637 = vmatprep.subr.mxu0 0.0
  %3638 = vmatpush1.msra.mxu0 0.0
  %3639 = vmatprep.subr.mxu0 0.0
  %3640 = vmatpush1.msra.mxu0 0.0
  %3641 = vmatprep.subr.mxu0 0.0
  %3642 = vmatpush1.msra.mxu0 0.0
  %3643 = vmatprep.subr.mxu0 0.0
  %3644 = vmatpush1.msra.mxu0 0.0
  %3645 = vmatprep.mubr.f32.mxu0 0.0
  %3646 = vmatmul.mubr.f32.gmra.mrb[0].mxu0 %v3534
  %v3647 = vpop.f32.mrb[0].mxu0
  %v3648 = vadd.f32 %v3526, %v3647
  %v3649 = vpop.f32.mrb[0].mxu0
  %v3650 = vadd.f32 %v3530, %v3649
  %3651 = vmatprep.mubr.f32.mxu0 0.0
  %3652 = vmatmul.mubr.f32.gmra.mrb[0].mxu0 %v3537
  %v3653 = vpop.f32.mrb[0].mxu0
  %v3654 = vadd.f32 %v3526, %v3653
  %v3655 = vpop.f32.mrb[0].mxu0
  %v3656 = vadd.f32 %v3530, %v3655
  %3657 = vmatprep.mubr.f32.mxu0 0.0
  %3658 = vmatmul.mubr.f32.gmra.mrb[0].mxu0 %v3540
  %v3659 = vpop.f32.mrb[0].mxu0
  %v3660 = vadd.f32 %v3526, %v3659
  %v3661 = vpop.f32.mrb[0].mxu0
  %v3662 = vadd.f32 %v3530, %v3661
  %3663 = vmatprep.mubr.f32.mxu0 0.0
  %3664 = vmatmul.mubr.f32.gmra.mrb[0].mxu0 %v3543
  %v3665 = vpop.f32.mrb[0].mxu0
  %v3666 = vadd.f32 %v3526, %v3665
  %v3667 = vpop.f32.mrb[0].mxu0
  %v3668 = vadd.f32 %v3530, %v3667
  %3669 = vmatprep.mubr.f32.mxu0 0.0
  %3670 = vmatmul.mubr.f32.gmra.mrb[0].mxu0 %v3546
  %v3671 = vpop.f32.mrb[0].mxu0
  %v3672 = vadd.f32 %v3526, %v3671
  %v3673 = vpop.f32.mrb[0].mxu0
  %v3674 = vadd.f32 %v3530, %v3673
  %3675 = vmatprep.mubr.f32.mxu0 0.0
  %3676 = vmatmul.mubr.f32.gmra.mrb[0].mxu0 %v3549
  %v3677 = vpop.f32.mrb[0].mxu0
  %v3678 = vadd.f32 %v3526, %v3677
  %v3679 = vpop.f32.mrb[0].mxu0
  %v3680 = vadd.f32 %v3530, %v3679
  %3681 = vmatprep.mubr.f32.mxu0 0.0
  %3682 = vmatmul.mubr.f32.gmra.mrb[0].mxu0 %v3552
  %v3683 = vpop.f32.mrb[0].mxu0
  %v3684 = vadd.f32 %v3526, %v3683
  %v3685 = vpop.f32.mrb[0].mxu0
  %v3686 = vadd.f32 %v3530, %v3685
  %3687 = vmatprep.mubr.f32.mxu0 0.0
  %3688 = vmatmul.mubr.f32.gmra.mrb[0].mxu0 %v3555
  %v3689 = vpop.f32.mrb[0].mxu0
  %v3690 = vadd.f32 %v3526, %v3689
  %v3691 = vpop.f32.mrb[0].mxu0
  %v3692 = vadd.f32 %v3530, %v3691
  %3693 = vmatprep.mubr.f32.mxu0 0.0
  %3694 = vmatmul.mubr.f32.gmra.mrb[0].mxu0 %v3558
  %v3695 = vpop.f32.mrb[0].mxu0
  %v3696 = vadd.f32 %v3526, %v3695
  %v3697 = vpop.f32.mrb[0].mxu0
  %v3698 = vadd.f32 %v3530, %v3697
  %3699 = vmatprep.mubr.f32.mxu0 0.0
  %3700 = vmatmul.mubr.f32.gmra.mrb[0].mxu0 %v3561
  %v3701 = vpop.f32.mrb[0].mxu0
  %v3702 = vadd.f32 %v3526, %v3701
  %v3703 = vpop.f32.mrb[0].mxu0
  %v3704 = vadd.f32 %v3530, %v3703
  %3705 = vmatprep.mubr.f32.mxu0 0.0
  %3706 = vmatmul.mubr.f32.gmra.mrb[0].mxu0 %v3564
  %v3707 = vpop.f32.mrb[0].mxu0
  %v3708 = vadd.f32 %v3526, %v3707
  %v3709 = vpop.f32.mrb[0].mxu0
  %v3710 = vadd.f32 %v3530, %v3709
  %3711 = vmatprep.mubr.f32.mxu0 0.0
  %3712 = vmatmul.mubr.f32.gmra.mrb[0].mxu0 %v3567
  %v3713 = vpop.f32.mrb[0].mxu0
  %v3714 = vadd.f32 %v3526, %v3713
  %v3715 = vpop.f32.mrb[0].mxu0
  %v3716 = vadd.f32 %v3530, %v3715
  %3717 = vmatprep.mubr.f32.mxu0 0.0
  %3718 = vmatmul.mubr.f32.gmra.mrb[0].mxu0 %v3570
  %v3719 = vpop.f32.mrb[0].mxu0
  %v3720 = vadd.f32 %v3526, %v3719
  %v3721 = vpop.f32.mrb[0].mxu0
  %v3722 = vadd.f32 %v3530, %v3721
  %3723 = vmatprep.mubr.f32.mxu0 0.0
  %3724 = vmatmul.mubr.f32.gmra.mrb[0].mxu0 %v3573
  %v3725 = vpop.f32.mrb[0].mxu0
  %v3726 = vadd.f32 %v3526, %v3725
  %v3727 = vpop.f32.mrb[0].mxu0
  %v3728 = vadd.f32 %v3530, %v3727
  %3729 = vmatprep.mubr.f32.mxu0 0.0
  %3730 = vmatmul.mubr.f32.gmra.mrb[0].mxu0 %v3576
  %v3731 = vpop.f32.mrb[0].mxu0
  %v3732 = vadd.f32 %v3526, %v3731
  %v3733 = vpop.f32.mrb[0].mxu0
  %v3734 = vadd.f32 %v3530, %v3733
  %3735 = vmatprep.mubr.f32.mxu0 0.0
  %3736 = vmatmul.mubr.f32.gmra.mrb[0].mxu0 %v3579
  %v3737 = vpop.f32.mrb[0].mxu0
  %v3738 = vadd.f32 %v3526, %v3737
  %v3739 = vpop.f32.mrb[0].mxu0
  %v3740 = vadd.f32 %v3530, %v3739
  %3741 = vdwg.mxu0
  %3744 = vrot.lane.b32.xlu0 %v3648, 64
  %v3745 = vpop.permute.xlu0 %3744
  %3746 = vrot.lane.b32.xlu0 %v3654, 64
  %v3747 = vpop.permute.xlu0 %3746
  %v3748 = vsel %vm2464, %v3648, 0
  %v3750 = vsel %vm2464, %v3654, 0
  %v3752 = vsel %vm2464, %v3745, 0
  %v3754 = vsel %vm2464, %v3747, 0
  %3756 = vmatprep.subr.mxu0 0.0
  %3757 = vmatpush1.xpose.msra.mxu0 %v3752
  %3758 = vmatprep.subr.mxu0 0.0
  %3759 = vmatpush1.xpose.msra.mxu0 %v3754
  %3760 = vmatprep.subr.mxu0 0.0
  %3761 = vmatpush1.xpose.msra.mxu0 0.0
  %3762 = vmatprep.subr.mxu0 0.0
  %3763 = vmatpush1.xpose.msra.mxu0 0.0
  %3764 = vmatprep.subr.mxu0 0.0
  %3765 = vmatpush1.xpose.msra.mxu0 0.0
  %3766 = vmatprep.subr.mxu0 0.0
  %3767 = vmatpush1.xpose.msra.mxu0 0.0
  %3768 = vmatprep.subr.mxu0 0.0
  %3769 = vmatpush1.xpose.msra.mxu0 0.0
  %3770 = vmatprep.subr.mxu0 0.0
  %3771 = vmatpush1.xpose.msra.mxu0 0.0
  %3772 = vmatprep.subr.mxu0 0.0
  %3773 = vmatpush1.xpose.msra.mxu0 0.0
  %3774 = vmatprep.subr.mxu0 0.0
  %3775 = vmatpush1.xpose.msra.mxu0 0.0
  %3776 = vmatprep.subr.mxu0 0.0
  %3777 = vmatpush1.xpose.msra.mxu0 0.0
  %3778 = vmatprep.subr.mxu0 0.0
  %3779 = vmatpush1.xpose.msra.mxu0 0.0
  %3780 = vmatprep.subr.mxu0 0.0
  %3781 = vmatpush1.xpose.msra.mxu0 0.0
  %3782 = vmatprep.subr.mxu0 0.0
  %3783 = vmatpush1.xpose.msra.mxu0 0.0
  %3784 = vmatprep.subr.mxu0 0.0
  %3785 = vmatpush1.xpose.msra.mxu0 0.0
  %3786 = vmatprep.subr.mxu0 0.0
  %3787 = vmatpush1.xpose.msra.mxu0 0.0
  %3788 = vmatprep.subr.mxu0 0.0
  %3789 = vmatpush1.xpose.msra.mxu0 0.0
  %3790 = vmatprep.subr.mxu0 0.0
  %3791 = vmatpush1.xpose.msra.mxu0 0.0
  %3792 = vmatprep.subr.mxu0 0.0
  %3793 = vmatpush1.xpose.msra.mxu0 0.0
  %3794 = vmatprep.subr.mxu0 0.0
  %3795 = vmatpush1.xpose.msra.mxu0 0.0
  %3796 = vmatprep.subr.mxu0 0.0
  %3797 = vmatpush1.xpose.msra.mxu0 0.0
  %3798 = vmatprep.subr.mxu0 0.0
  %3799 = vmatpush1.xpose.msra.mxu0 0.0
  %3800 = vmatprep.subr.mxu0 0.0
  %3801 = vmatpush1.xpose.msra.mxu0 0.0
  %3802 = vmatprep.subr.mxu0 0.0
  %3803 = vmatpush1.xpose.msra.mxu0 0.0
  %3804 = vmatprep.subr.mxu0 0.0
  %3805 = vmatpush1.xpose.msra.mxu0 0.0
  %3806 = vmatprep.subr.mxu0 0.0
  %3807 = vmatpush1.xpose.msra.mxu0 0.0
  %3808 = vmatprep.subr.mxu0 0.0
  %3809 = vmatpush1.xpose.msra.mxu0 0.0
  %3810 = vmatprep.subr.mxu0 0.0
  %3811 = vmatpush1.xpose.msra.mxu0 0.0
  %3812 = vmatprep.subr.mxu0 0.0
  %3813 = vmatpush1.xpose.msra.mxu0 0.0
  %3814 = vmatprep.subr.mxu0 0.0
  %3815 = vmatpush1.xpose.msra.mxu0 0.0
  %3816 = vmatprep.subr.mxu0 0.0
  %3817 = vmatpush1.xpose.msra.mxu0 0.0
  %3818 = vmatprep.subr.mxu0 0.0
  %3819 = vmatpush1.xpose.msra.mxu0 0.0
  %3820 = vmatprep.mubr.f32.mxu0 0.0
  %3821 = vmatmul.mubr.f32.gmra.mrb[0].mxu0 %v3748
  %v3822 = vpop.f32.mrb[0].mxu0
  %v3823 = vadd.f32 0.0, %v3822
  %v3824 = vpop.f32.mrb[0].mxu0
  %3825 = vmatprep.mubr.f32.mxu0 0.0
  %3826 = vmatmul.mubr.f32.gmra.mrb[0].mxu0 %v3750
  %v3827 = vpop.f32.mrb[0].mxu0
  %v3828 = vadd.f32 0.0, %v3827
  %v3829 = vpop.f32.mrb[0].mxu0
  %3830 = vdwg.mxu0
  %3833 = vrot.lane.b32.xlu0 %v3660, 64
  %v3834 = vpop.permute.xlu0 %3833
  %3835 = vrot.lane.b32.xlu0 %v3666, 64
  %v3836 = vpop.permute.xlu0 %3835
  %v3837 = vsel %vm2464, %v3660, 0
  %v3839 = vsel %vm2464, %v3666, 0
  %v3841 = vsel %vm2464, %v3834, 0
  %v3843 = vsel %vm2464, %v3836, 0
  %3845 = vmatprep.subr.mxu0 0.0
  %3846 = vmatpush1.xpose.msra.mxu0 %v3841
  %3847 = vmatprep.subr.mxu0 0.0
  %3848 = vmatpush1.xpose.msra.mxu0 %v3843
  %3849 = vmatprep.subr.mxu0 0.0
  %3850 = vmatpush1.xpose.msra.mxu0 0.0
  %3851 = vmatprep.subr.mxu0 0.0
  %3852 = vmatpush1.xpose.msra.mxu0 0.0
  %3853 = vmatprep.subr.mxu0 0.0
  %3854 = vmatpush1.xpose.msra.mxu0 0.0
  %3855 = vmatprep.subr.mxu0 0.0
  %3856 = vmatpush1.xpose.msra.mxu0 0.0
  %3857 = vmatprep.subr.mxu0 0.0
  %3858 = vmatpush1.xpose.msra.mxu0 0.0
  %3859 = vmatprep.subr.mxu0 0.0
  %3860 = vmatpush1.xpose.msra.mxu0 0.0
  %3861 = vmatprep.subr.mxu0 0.0
  %3862 = vmatpush1.xpose.msra.mxu0 0.0
  %3863 = vmatprep.subr.mxu0 0.0
  %3864 = vmatpush1.xpose.msra.mxu0 0.0
  %3865 = vmatprep.subr.mxu0 0.0
  %3866 = vmatpush1.xpose.msra.mxu0 0.0
  %3867 = vmatprep.subr.mxu0 0.0
  %3868 = vmatpush1.xpose.msra.mxu0 0.0
  %3869 = vmatprep.subr.mxu0 0.0
  %3870 = vmatpush1.xpose.msra.mxu0 0.0
  %3871 = vmatprep.subr.mxu0 0.0
  %3872 = vmatpush1.xpose.msra.mxu0 0.0
  %3873 = vmatprep.subr.mxu0 0.0
  %3874 = vmatpush1.xpose.msra.mxu0 0.0
  %3875 = vmatprep.subr.mxu0 0.0
  %3876 = vmatpush1.xpose.msra.mxu0 0.0
  %3877 = vmatprep.subr.mxu0 0.0
  %3878 = vmatpush1.xpose.msra.mxu0 0.0
  %3879 = vmatprep.subr.mxu0 0.0
  %3880 = vmatpush1.xpose.msra.mxu0 0.0
  %3881 = vmatprep.subr.mxu0 0.0
  %3882 = vmatpush1.xpose.msra.mxu0 0.0
  %3883 = vmatprep.subr.mxu0 0.0
  %3884 = vmatpush1.xpose.msra.mxu0 0.0
  %3885 = vmatprep.subr.mxu0 0.0
  %3886 = vmatpush1.xpose.msra.mxu0 0.0
  %3887 = vmatprep.subr.mxu0 0.0
  %3888 = vmatpush1.xpose.msra.mxu0 0.0
  %3889 = vmatprep.subr.mxu0 0.0
  %3890 = vmatpush1.xpose.msra.mxu0 0.0
  %3891 = vmatprep.subr.mxu0 0.0
  %3892 = vmatpush1.xpose.msra.mxu0 0.0
  %3893 = vmatprep.subr.mxu0 0.0
  %3894 = vmatpush1.xpose.msra.mxu0 0.0
  %3895 = vmatprep.subr.mxu0 0.0
  %3896 = vmatpush1.xpose.msra.mxu0 0.0
  %3897 = vmatprep.subr.mxu0 0.0
  %3898 = vmatpush1.xpose.msra.mxu0 0.0
  %3899 = vmatprep.subr.mxu0 0.0
  %3900 = vmatpush1.xpose.msra.mxu0 0.0
  %3901 = vmatprep.subr.mxu0 0.0
  %3902 = vmatpush1.xpose.msra.mxu0 0.0
  %3903 = vmatprep.subr.mxu0 0.0
  %3904 = vmatpush1.xpose.msra.mxu0 0.0
  %3905 = vmatprep.subr.mxu0 0.0
  %3906 = vmatpush1.xpose.msra.mxu0 0.0
  %3907 = vmatprep.subr.mxu0 0.0
  %3908 = vmatpush1.xpose.msra.mxu0 0.0
  %3909 = vmatprep.mubr.f32.mxu0 0.0
  %3910 = vmatmul.mubr.f32.gmra.mrb[0].mxu0 %v3837
  %v3911 = vpop.f32.mrb[0].mxu0
  %v3912 = vadd.f32 0.0, %v3911
  %v3913 = vpop.f32.mrb[0].mxu0
  %3914 = vmatprep.mubr.f32.mxu0 0.0
  %3915 = vmatmul.mubr.f32.gmra.mrb[0].mxu0 %v3839
  %v3916 = vpop.f32.mrb[0].mxu0
  %v3917 = vadd.f32 0.0, %v3916
  %v3918 = vpop.f32.mrb[0].mxu0
  %3919 = vdwg.mxu0
  %3922 = vrot.lane.b32.xlu0 %v3672, 64
  %v3923 = vpop.permute.xlu0 %3922
  %3924 = vrot.lane.b32.xlu0 %v3678, 64
  %v3925 = vpop.permute.xlu0 %3924
  %v3926 = vsel %vm2464, %v3672, 0
  %v3928 = vsel %vm2464, %v3678, 0
  %v3930 = vsel %vm2464, %v3923, 0
  %v3932 = vsel %vm2464, %v3925, 0
  %3934 = vmatprep.subr.mxu0 0.0
  %3935 = vmatpush1.xpose.msra.mxu0 %v3930
  %3936 = vmatprep.subr.mxu0 0.0
  %3937 = vmatpush1.xpose.msra.mxu0 %v3932
  %3938 = vmatprep.subr.mxu0 0.0
  %3939 = vmatpush1.xpose.msra.mxu0 0.0
  %3940 = vmatprep.subr.mxu0 0.0
  %3941 = vmatpush1.xpose.msra.mxu0 0.0
  %3942 = vmatprep.subr.mxu0 0.0
  %3943 = vmatpush1.xpose.msra.mxu0 0.0
  %3944 = vmatprep.subr.mxu0 0.0
  %3945 = vmatpush1.xpose.msra.mxu0 0.0
  %3946 = vmatprep.subr.mxu0 0.0
  %3947 = vmatpush1.xpose.msra.mxu0 0.0
  %3948 = vmatprep.subr.mxu0 0.0
  %3949 = vmatpush1.xpose.msra.mxu0 0.0
  %3950 = vmatprep.subr.mxu0 0.0
  %3951 = vmatpush1.xpose.msra.mxu0 0.0
  %3952 = vmatprep.subr.mxu0 0.0
  %3953 = vmatpush1.xpose.msra.mxu0 0.0
  %3954 = vmatprep.subr.mxu0 0.0
  %3955 = vmatpush1.xpose.msra.mxu0 0.0
  %3956 = vmatprep.subr.mxu0 0.0
  %3957 = vmatpush1.xpose.msra.mxu0 0.0
  %3958 = vmatprep.subr.mxu0 0.0
  %3959 = vmatpush1.xpose.msra.mxu0 0.0
  %3960 = vmatprep.subr.mxu0 0.0
  %3961 = vmatpush1.xpose.msra.mxu0 0.0
  %3962 = vmatprep.subr.mxu0 0.0
  %3963 = vmatpush1.xpose.msra.mxu0 0.0
  %3964 = vmatprep.subr.mxu0 0.0
  %3965 = vmatpush1.xpose.msra.mxu0 0.0
  %3966 = vmatprep.subr.mxu0 0.0
  %3967 = vmatpush1.xpose.msra.mxu0 0.0
  %3968 = vmatprep.subr.mxu0 0.0
  %3969 = vmatpush1.xpose.msra.mxu0 0.0
  %3970 = vmatprep.subr.mxu0 0.0
  %3971 = vmatpush1.xpose.msra.mxu0 0.0
  %3972 = vmatprep.subr.mxu0 0.0
  %3973 = vmatpush1.xpose.msra.mxu0 0.0
  %3974 = vmatprep.subr.mxu0 0.0
  %3975 = vmatpush1.xpose.msra.mxu0 0.0
  %3976 = vmatprep.subr.mxu0 0.0
  %3977 = vmatpush1.xpose.msra.mxu0 0.0
  %3978 = vmatprep.subr.mxu0 0.0
  %3979 = vmatpush1.xpose.msra.mxu0 0.0
  %3980 = vmatprep.subr.mxu0 0.0
  %3981 = vmatpush1.xpose.msra.mxu0 0.0
  %3982 = vmatprep.subr.mxu0 0.0
  %3983 = vmatpush1.xpose.msra.mxu0 0.0
  %3984 = vmatprep.subr.mxu0 0.0
  %3985 = vmatpush1.xpose.msra.mxu0 0.0
  %3986 = vmatprep.subr.mxu0 0.0
  %3987 = vmatpush1.xpose.msra.mxu0 0.0
  %3988 = vmatprep.subr.mxu0 0.0
  %3989 = vmatpush1.xpose.msra.mxu0 0.0
  %3990 = vmatprep.subr.mxu0 0.0
  %3991 = vmatpush1.xpose.msra.mxu0 0.0
  %3992 = vmatprep.subr.mxu0 0.0
  %3993 = vmatpush1.xpose.msra.mxu0 0.0
  %3994 = vmatprep.subr.mxu0 0.0
  %3995 = vmatpush1.xpose.msra.mxu0 0.0
  %3996 = vmatprep.subr.mxu0 0.0
  %3997 = vmatpush1.xpose.msra.mxu0 0.0
  %3998 = vmatprep.mubr.f32.mxu0 0.0
  %3999 = vmatmul.mubr.f32.gmra.mrb[0].mxu0 %v3926
  %v4000 = vpop.f32.mrb[0].mxu0
  %v4001 = vadd.f32 0.0, %v4000
  %v4002 = vpop.f32.mrb[0].mxu0
  %4003 = vmatprep.mubr.f32.mxu0 0.0
  %4004 = vmatmul.mubr.f32.gmra.mrb[0].mxu0 %v3928
  %v4005 = vpop.f32.mrb[0].mxu0
  %v4006 = vadd.f32 0.0, %v4005
  %v4007 = vpop.f32.mrb[0].mxu0
  %4008 = vdwg.mxu0
  %4011 = vrot.lane.b32.xlu0 %v3684, 64
  %v4012 = vpop.permute.xlu0 %4011
  %4013 = vrot.lane.b32.xlu0 %v3690, 64
  %v4014 = vpop.permute.xlu0 %4013
  %v4015 = vsel %vm2464, %v3684, 0
  %v4017 = vsel %vm2464, %v3690, 0
  %v4019 = vsel %vm2464, %v4012, 0
  %v4021 = vsel %vm2464, %v4014, 0
  %4023 = vmatprep.subr.mxu0 0.0
  %4024 = vmatpush1.xpose.msra.mxu0 %v4019
  %4025 = vmatprep.subr.mxu0 0.0
  %4026 = vmatpush1.xpose.msra.mxu0 %v4021
  %4027 = vmatprep.subr.mxu0 0.0
  %4028 = vmatpush1.xpose.msra.mxu0 0.0
  %4029 = vmatprep.subr.mxu0 0.0
  %4030 = vmatpush1.xpose.msra.mxu0 0.0
  %4031 = vmatprep.subr.mxu0 0.0
  %4032 = vmatpush1.xpose.msra.mxu0 0.0
  %4033 = vmatprep.subr.mxu0 0.0
  %4034 = vmatpush1.xpose.msra.mxu0 0.0
  %4035 = vmatprep.subr.mxu0 0.0
  %4036 = vmatpush1.xpose.msra.mxu0 0.0
  %4037 = vmatprep.subr.mxu0 0.0
  %4038 = vmatpush1.xpose.msra.mxu0 0.0
  %4039 = vmatprep.subr.mxu0 0.0
  %4040 = vmatpush1.xpose.msra.mxu0 0.0
  %4041 = vmatprep.subr.mxu0 0.0
  %4042 = vmatpush1.xpose.msra.mxu0 0.0
  %4043 = vmatprep.subr.mxu0 0.0
  %4044 = vmatpush1.xpose.msra.mxu0 0.0
  %4045 = vmatprep.subr.mxu0 0.0
  %4046 = vmatpush1.xpose.msra.mxu0 0.0
  %4047 = vmatprep.subr.mxu0 0.0
  %4048 = vmatpush1.xpose.msra.mxu0 0.0
  %4049 = vmatprep.subr.mxu0 0.0
  %4050 = vmatpush1.xpose.msra.mxu0 0.0
  %4051 = vmatprep.subr.mxu0 0.0
  %4052 = vmatpush1.xpose.msra.mxu0 0.0
  %4053 = vmatprep.subr.mxu0 0.0
  %4054 = vmatpush1.xpose.msra.mxu0 0.0
  %4055 = vmatprep.subr.mxu0 0.0
  %4056 = vmatpush1.xpose.msra.mxu0 0.0
  %4057 = vmatprep.subr.mxu0 0.0
  %4058 = vmatpush1.xpose.msra.mxu0 0.0
  %4059 = vmatprep.subr.mxu0 0.0
  %4060 = vmatpush1.xpose.msra.mxu0 0.0
  %4061 = vmatprep.subr.mxu0 0.0
  %4062 = vmatpush1.xpose.msra.mxu0 0.0
  %4063 = vmatprep.subr.mxu0 0.0
  %4064 = vmatpush1.xpose.msra.mxu0 0.0
  %4065 = vmatprep.subr.mxu0 0.0
  %4066 = vmatpush1.xpose.msra.mxu0 0.0
  %4067 = vmatprep.subr.mxu0 0.0
  %4068 = vmatpush1.xpose.msra.mxu0 0.0
  %4069 = vmatprep.subr.mxu0 0.0
  %4070 = vmatpush1.xpose.msra.mxu0 0.0
  %4071 = vmatprep.subr.mxu0 0.0
  %4072 = vmatpush1.xpose.msra.mxu0 0.0
  %4073 = vmatprep.subr.mxu0 0.0
  %4074 = vmatpush1.xpose.msra.mxu0 0.0
  %4075 = vmatprep.subr.mxu0 0.0
  %4076 = vmatpush1.xpose.msra.mxu0 0.0
  %4077 = vmatprep.subr.mxu0 0.0
  %4078 = vmatpush1.xpose.msra.mxu0 0.0
  %4079 = vmatprep.subr.mxu0 0.0
  %4080 = vmatpush1.xpose.msra.mxu0 0.0
  %4081 = vmatprep.subr.mxu0 0.0
  %4082 = vmatpush1.xpose.msra.mxu0 0.0
  %4083 = vmatprep.subr.mxu0 0.0
  %4084 = vmatpush1.xpose.msra.mxu0 0.0
  %4085 = vmatprep.subr.mxu0 0.0
  %4086 = vmatpush1.xpose.msra.mxu0 0.0
  %4087 = vmatprep.mubr.f32.mxu0 0.0
  %4088 = vmatmul.mubr.f32.gmra.mrb[0].mxu0 %v4015
  %v4089 = vpop.f32.mrb[0].mxu0
  %v4090 = vadd.f32 0.0, %v4089
  %v4091 = vpop.f32.mrb[0].mxu0
  %4092 = vmatprep.mubr.f32.mxu0 0.0
  %4093 = vmatmul.mubr.f32.gmra.mrb[0].mxu0 %v4017
  %v4094 = vpop.f32.mrb[0].mxu0
  %v4095 = vadd.f32 0.0, %v4094
  %v4096 = vpop.f32.mrb[0].mxu0
  %4097 = vdwg.mxu0
  %4100 = vrot.lane.b32.xlu0 %v3696, 64
  %v4101 = vpop.permute.xlu0 %4100
  %4102 = vrot.lane.b32.xlu0 %v3702, 64
  %v4103 = vpop.permute.xlu0 %4102
  %v4104 = vsel %vm2464, %v3696, 0
  %v4106 = vsel %vm2464, %v3702, 0
  %v4108 = vsel %vm2464, %v4101, 0
  %v4110 = vsel %vm2464, %v4103, 0
  %4112 = vmatprep.subr.mxu0 0.0
  %4113 = vmatpush1.xpose.msra.mxu0 %v4108
  %4114 = vmatprep.subr.mxu0 0.0
  %4115 = vmatpush1.xpose.msra.mxu0 %v4110
  %4116 = vmatprep.subr.mxu0 0.0
  %4117 = vmatpush1.xpose.msra.mxu0 0.0
  %4118 = vmatprep.subr.mxu0 0.0
  %4119 = vmatpush1.xpose.msra.mxu0 0.0
  %4120 = vmatprep.subr.mxu0 0.0
  %4121 = vmatpush1.xpose.msra.mxu0 0.0
  %4122 = vmatprep.subr.mxu0 0.0
  %4123 = vmatpush1.xpose.msra.mxu0 0.0
  %4124 = vmatprep.subr.mxu0 0.0
  %4125 = vmatpush1.xpose.msra.mxu0 0.0
  %4126 = vmatprep.subr.mxu0 0.0
  %4127 = vmatpush1.xpose.msra.mxu0 0.0
  %4128 = vmatprep.subr.mxu0 0.0
  %4129 = vmatpush1.xpose.msra.mxu0 0.0
  %4130 = vmatprep.subr.mxu0 0.0
  %4131 = vmatpush1.xpose.msra.mxu0 0.0
  %4132 = vmatprep.subr.mxu0 0.0
  %4133 = vmatpush1.xpose.msra.mxu0 0.0
  %4134 = vmatprep.subr.mxu0 0.0
  %4135 = vmatpush1.xpose.msra.mxu0 0.0
  %4136 = vmatprep.subr.mxu0 0.0
  %4137 = vmatpush1.xpose.msra.mxu0 0.0
  %4138 = vmatprep.subr.mxu0 0.0
  %4139 = vmatpush1.xpose.msra.mxu0 0.0
  %4140 = vmatprep.subr.mxu0 0.0
  %4141 = vmatpush1.xpose.msra.mxu0 0.0
  %4142 = vmatprep.subr.mxu0 0.0
  %4143 = vmatpush1.xpose.msra.mxu0 0.0
  %4144 = vmatprep.subr.mxu0 0.0
  %4145 = vmatpush1.xpose.msra.mxu0 0.0
  %4146 = vmatprep.subr.mxu0 0.0
  %4147 = vmatpush1.xpose.msra.mxu0 0.0
  %4148 = vmatprep.subr.mxu0 0.0
  %4149 = vmatpush1.xpose.msra.mxu0 0.0
  %4150 = vmatprep.subr.mxu0 0.0
  %4151 = vmatpush1.xpose.msra.mxu0 0.0
  %4152 = vmatprep.subr.mxu0 0.0
  %4153 = vmatpush1.xpose.msra.mxu0 0.0
  %4154 = vmatprep.subr.mxu0 0.0
  %4155 = vmatpush1.xpose.msra.mxu0 0.0
  %4156 = vmatprep.subr.mxu0 0.0
  %4157 = vmatpush1.xpose.msra.mxu0 0.0
  %4158 = vmatprep.subr.mxu0 0.0
  %4159 = vmatpush1.xpose.msra.mxu0 0.0
  %4160 = vmatprep.subr.mxu0 0.0
  %4161 = vmatpush1.xpose.msra.mxu0 0.0
  %4162 = vmatprep.subr.mxu0 0.0
  %4163 = vmatpush1.xpose.msra.mxu0 0.0
  %4164 = vmatprep.subr.mxu0 0.0
  %4165 = vmatpush1.xpose.msra.mxu0 0.0
  %4166 = vmatprep.subr.mxu0 0.0
  %4167 = vmatpush1.xpose.msra.mxu0 0.0
  %4168 = vmatprep.subr.mxu0 0.0
  %4169 = vmatpush1.xpose.msra.mxu0 0.0
  %4170 = vmatprep.subr.mxu0 0.0
  %4171 = vmatpush1.xpose.msra.mxu0 0.0
  %4172 = vmatprep.subr.mxu0 0.0
  %4173 = vmatpush1.xpose.msra.mxu0 0.0
  %4174 = vmatprep.subr.mxu0 0.0
  %4175 = vmatpush1.xpose.msra.mxu0 0.0
  %4176 = vmatprep.mubr.f32.mxu0 0.0
  %4177 = vmatmul.mubr.f32.gmra.mrb[0].mxu0 %v4104
  %v4178 = vpop.f32.mrb[0].mxu0
  %v4179 = vadd.f32 0.0, %v4178
  %v4180 = vpop.f32.mrb[0].mxu0
  %4181 = vmatprep.mubr.f32.mxu0 0.0
  %4182 = vmatmul.mubr.f32.gmra.mrb[0].mxu0 %v4106
  %v4183 = vpop.f32.mrb[0].mxu0
  %v4184 = vadd.f32 0.0, %v4183
  %v4185 = vpop.f32.mrb[0].mxu0
  %4186 = vdwg.mxu0
  %4189 = vrot.lane.b32.xlu0 %v3708, 64
  %v4190 = vpop.permute.xlu0 %4189
  %4191 = vrot.lane.b32.xlu0 %v3714, 64
  %v4192 = vpop.permute.xlu0 %4191
  %v4193 = vsel %vm2464, %v3708, 0
  %v4195 = vsel %vm2464, %v3714, 0
  %v4197 = vsel %vm2464, %v4190, 0
  %v4199 = vsel %vm2464, %v4192, 0
  %4201 = vmatprep.subr.mxu0 0.0
  %4202 = vmatpush1.xpose.msra.mxu0 %v4197
  %4203 = vmatprep.subr.mxu0 0.0
  %4204 = vmatpush1.xpose.msra.mxu0 %v4199
  %4205 = vmatprep.subr.mxu0 0.0
  %4206 = vmatpush1.xpose.msra.mxu0 0.0
  %4207 = vmatprep.subr.mxu0 0.0
  %4208 = vmatpush1.xpose.msra.mxu0 0.0
  %4209 = vmatprep.subr.mxu0 0.0
  %4210 = vmatpush1.xpose.msra.mxu0 0.0
  %4211 = vmatprep.subr.mxu0 0.0
  %4212 = vmatpush1.xpose.msra.mxu0 0.0
  %4213 = vmatprep.subr.mxu0 0.0
  %4214 = vmatpush1.xpose.msra.mxu0 0.0
  %4215 = vmatprep.subr.mxu0 0.0
  %4216 = vmatpush1.xpose.msra.mxu0 0.0
  %4217 = vmatprep.subr.mxu0 0.0
  %4218 = vmatpush1.xpose.msra.mxu0 0.0
  %4219 = vmatprep.subr.mxu0 0.0
  %4220 = vmatpush1.xpose.msra.mxu0 0.0
  %4221 = vmatprep.subr.mxu0 0.0
  %4222 = vmatpush1.xpose.msra.mxu0 0.0
  %4223 = vmatprep.subr.mxu0 0.0
  %4224 = vmatpush1.xpose.msra.mxu0 0.0
  %4225 = vmatprep.subr.mxu0 0.0
  %4226 = vmatpush1.xpose.msra.mxu0 0.0
  %4227 = vmatprep.subr.mxu0 0.0
  %4228 = vmatpush1.xpose.msra.mxu0 0.0
  %4229 = vmatprep.subr.mxu0 0.0
  %4230 = vmatpush1.xpose.msra.mxu0 0.0
  %4231 = vmatprep.subr.mxu0 0.0
  %4232 = vmatpush1.xpose.msra.mxu0 0.0
  %4233 = vmatprep.subr.mxu0 0.0
  %4234 = vmatpush1.xpose.msra.mxu0 0.0
  %4235 = vmatprep.subr.mxu0 0.0
  %4236 = vmatpush1.xpose.msra.mxu0 0.0
  %4237 = vmatprep.subr.mxu0 0.0
  %4238 = vmatpush1.xpose.msra.mxu0 0.0
  %4239 = vmatprep.subr.mxu0 0.0
  %4240 = vmatpush1.xpose.msra.mxu0 0.0
  %4241 = vmatprep.subr.mxu0 0.0
  %4242 = vmatpush1.xpose.msra.mxu0 0.0
  %4243 = vmatprep.subr.mxu0 0.0
  %4244 = vmatpush1.xpose.msra.mxu0 0.0
  %4245 = vmatprep.subr.mxu0 0.0
  %4246 = vmatpush1.xpose.msra.mxu0 0.0
  %4247 = vmatprep.subr.mxu0 0.0
  %4248 = vmatpush1.xpose.msra.mxu0 0.0
  %4249 = vmatprep.subr.mxu0 0.0
  %4250 = vmatpush1.xpose.msra.mxu0 0.0
  %4251 = vmatprep.subr.mxu0 0.0
  %4252 = vmatpush1.xpose.msra.mxu0 0.0
  %4253 = vmatprep.subr.mxu0 0.0
  %4254 = vmatpush1.xpose.msra.mxu0 0.0
  %4255 = vmatprep.subr.mxu0 0.0
  %4256 = vmatpush1.xpose.msra.mxu0 0.0
  %4257 = vmatprep.subr.mxu0 0.0
  %4258 = vmatpush1.xpose.msra.mxu0 0.0
  %4259 = vmatprep.subr.mxu0 0.0
  %4260 = vmatpush1.xpose.msra.mxu0 0.0
  %4261 = vmatprep.subr.mxu0 0.0
  %4262 = vmatpush1.xpose.msra.mxu0 0.0
  %4263 = vmatprep.subr.mxu0 0.0
  %4264 = vmatpush1.xpose.msra.mxu0 0.0
  %4265 = vmatprep.mubr.f32.mxu0 0.0
  %4266 = vmatmul.mubr.f32.gmra.mrb[0].mxu0 %v4193
  %v4267 = vpop.f32.mrb[0].mxu0
  %v4268 = vadd.f32 0.0, %v4267
  %v4269 = vpop.f32.mrb[0].mxu0
  %4270 = vmatprep.mubr.f32.mxu0 0.0
  %4271 = vmatmul.mubr.f32.gmra.mrb[0].mxu0 %v4195
  %v4272 = vpop.f32.mrb[0].mxu0
  %v4273 = vadd.f32 0.0, %v4272
  %v4274 = vpop.f32.mrb[0].mxu0
  %4275 = vdwg.mxu0
  %4278 = vrot.lane.b32.xlu0 %v3720, 64
  %v4279 = vpop.permute.xlu0 %4278
  %4280 = vrot.lane.b32.xlu0 %v3726, 64
  %v4281 = vpop.permute.xlu0 %4280
  %v4282 = vsel %vm2464, %v3720, 0
  %v4284 = vsel %vm2464, %v3726, 0
  %v4286 = vsel %vm2464, %v4279, 0
  %v4288 = vsel %vm2464, %v4281, 0
  %4290 = vmatprep.subr.mxu0 0.0
  %4291 = vmatpush1.xpose.msra.mxu0 %v4286
  %4292 = vmatprep.subr.mxu0 0.0
  %4293 = vmatpush1.xpose.msra.mxu0 %v4288
  %4294 = vmatprep.subr.mxu0 0.0
  %4295 = vmatpush1.xpose.msra.mxu0 0.0
  %4296 = vmatprep.subr.mxu0 0.0
  %4297 = vmatpush1.xpose.msra.mxu0 0.0
  %4298 = vmatprep.subr.mxu0 0.0
  %4299 = vmatpush1.xpose.msra.mxu0 0.0
  %4300 = vmatprep.subr.mxu0 0.0
  %4301 = vmatpush1.xpose.msra.mxu0 0.0
  %4302 = vmatprep.subr.mxu0 0.0
  %4303 = vmatpush1.xpose.msra.mxu0 0.0
  %4304 = vmatprep.subr.mxu0 0.0
  %4305 = vmatpush1.xpose.msra.mxu0 0.0
  %4306 = vmatprep.subr.mxu0 0.0
  %4307 = vmatpush1.xpose.msra.mxu0 0.0
  %4308 = vmatprep.subr.mxu0 0.0
  %4309 = vmatpush1.xpose.msra.mxu0 0.0
  %4310 = vmatprep.subr.mxu0 0.0
  %4311 = vmatpush1.xpose.msra.mxu0 0.0
  %4312 = vmatprep.subr.mxu0 0.0
  %4313 = vmatpush1.xpose.msra.mxu0 0.0
  %4314 = vmatprep.subr.mxu0 0.0
  %4315 = vmatpush1.xpose.msra.mxu0 0.0
  %4316 = vmatprep.subr.mxu0 0.0
  %4317 = vmatpush1.xpose.msra.mxu0 0.0
  %4318 = vmatprep.subr.mxu0 0.0
  %4319 = vmatpush1.xpose.msra.mxu0 0.0
  %4320 = vmatprep.subr.mxu0 0.0
  %4321 = vmatpush1.xpose.msra.mxu0 0.0
  %4322 = vmatprep.subr.mxu0 0.0
  %4323 = vmatpush1.xpose.msra.mxu0 0.0
  %4324 = vmatprep.subr.mxu0 0.0
  %4325 = vmatpush1.xpose.msra.mxu0 0.0
  %4326 = vmatprep.subr.mxu0 0.0
  %4327 = vmatpush1.xpose.msra.mxu0 0.0
  %4328 = vmatprep.subr.mxu0 0.0
  %4329 = vmatpush1.xpose.msra.mxu0 0.0
  %4330 = vmatprep.subr.mxu0 0.0
  %4331 = vmatpush1.xpose.msra.mxu0 0.0
  %4332 = vmatprep.subr.mxu0 0.0
  %4333 = vmatpush1.xpose.msra.mxu0 0.0
  %4334 = vmatprep.subr.mxu0 0.0
  %4335 = vmatpush1.xpose.msra.mxu0 0.0
  %4336 = vmatprep.subr.mxu0 0.0
  %4337 = vmatpush1.xpose.msra.mxu0 0.0
  %4338 = vmatprep.subr.mxu0 0.0
  %4339 = vmatpush1.xpose.msra.mxu0 0.0
  %4340 = vmatprep.subr.mxu0 0.0
  %4341 = vmatpush1.xpose.msra.mxu0 0.0
  %4342 = vmatprep.subr.mxu0 0.0
  %4343 = vmatpush1.xpose.msra.mxu0 0.0
  %4344 = vmatprep.subr.mxu0 0.0
  %4345 = vmatpush1.xpose.msra.mxu0 0.0
  %4346 = vmatprep.subr.mxu0 0.0
  %4347 = vmatpush1.xpose.msra.mxu0 0.0
  %4348 = vmatprep.subr.mxu0 0.0
  %4349 = vmatpush1.xpose.msra.mxu0 0.0
  %4350 = vmatprep.subr.mxu0 0.0
  %4351 = vmatpush1.xpose.msra.mxu0 0.0
  %4352 = vmatprep.subr.mxu0 0.0
  %4353 = vmatpush1.xpose.msra.mxu0 0.0
  %4354 = vmatprep.mubr.f32.mxu0 0.0
  %4355 = vmatmul.mubr.f32.gmra.mrb[0].mxu0 %v4282
  %v4356 = vpop.f32.mrb[0].mxu0
  %v4357 = vadd.f32 0.0, %v4356
  %v4358 = vpop.f32.mrb[0].mxu0
  %4359 = vmatprep.mubr.f32.mxu0 0.0
  %4360 = vmatmul.mubr.f32.gmra.mrb[0].mxu0 %v4284
  %v4361 = vpop.f32.mrb[0].mxu0
  %v4362 = vadd.f32 0.0, %v4361
  %v4363 = vpop.f32.mrb[0].mxu0
  %4364 = vdwg.mxu0
  %4367 = vrot.lane.b32.xlu0 %v3732, 64
  %v4368 = vpop.permute.xlu0 %4367
  %4369 = vrot.lane.b32.xlu0 %v3738, 64
  %v4370 = vpop.permute.xlu0 %4369
  %v4371 = vsel %vm2464, %v3732, 0
  %v4373 = vsel %vm2464, %v3738, 0
  %v4375 = vsel %vm2464, %v4368, 0
  %v4377 = vsel %vm2464, %v4370, 0
  %4379 = vmatprep.subr.mxu0 0.0
  %4380 = vmatpush1.xpose.msra.mxu0 %v4375
  %4381 = vmatprep.subr.mxu0 0.0
  %4382 = vmatpush1.xpose.msra.mxu0 %v4377
  %4383 = vmatprep.subr.mxu0 0.0
  %4384 = vmatpush1.xpose.msra.mxu0 0.0
  %4385 = vmatprep.subr.mxu0 0.0
  %4386 = vmatpush1.xpose.msra.mxu0 0.0
  %4387 = vmatprep.subr.mxu0 0.0
  %4388 = vmatpush1.xpose.msra.mxu0 0.0
  %4389 = vmatprep.subr.mxu0 0.0
  %4390 = vmatpush1.xpose.msra.mxu0 0.0
  %4391 = vmatprep.subr.mxu0 0.0
  %4392 = vmatpush1.xpose.msra.mxu0 0.0
  %4393 = vmatprep.subr.mxu0 0.0
  %4394 = vmatpush1.xpose.msra.mxu0 0.0
  %4395 = vmatprep.subr.mxu0 0.0
  %4396 = vmatpush1.xpose.msra.mxu0 0.0
  %4397 = vmatprep.subr.mxu0 0.0
  %4398 = vmatpush1.xpose.msra.mxu0 0.0
  %4399 = vmatprep.subr.mxu0 0.0
  %4400 = vmatpush1.xpose.msra.mxu0 0.0
  %4401 = vmatprep.subr.mxu0 0.0
  %4402 = vmatpush1.xpose.msra.mxu0 0.0
  %4403 = vmatprep.subr.mxu0 0.0
  %4404 = vmatpush1.xpose.msra.mxu0 0.0
  %4405 = vmatprep.subr.mxu0 0.0
  %4406 = vmatpush1.xpose.msra.mxu0 0.0
  %4407 = vmatprep.subr.mxu0 0.0
  %4408 = vmatpush1.xpose.msra.mxu0 0.0
  %4409 = vmatprep.subr.mxu0 0.0
  %4410 = vmatpush1.xpose.msra.mxu0 0.0
  %4411 = vmatprep.subr.mxu0 0.0
  %4412 = vmatpush1.xpose.msra.mxu0 0.0
  %4413 = vmatprep.subr.mxu0 0.0
  %4414 = vmatpush1.xpose.msra.mxu0 0.0
  %4415 = vmatprep.subr.mxu0 0.0
  %4416 = vmatpush1.xpose.msra.mxu0 0.0
  %4417 = vmatprep.subr.mxu0 0.0
  %4418 = vmatpush1.xpose.msra.mxu0 0.0
  %4419 = vmatprep.subr.mxu0 0.0
  %4420 = vmatpush1.xpose.msra.mxu0 0.0
  %4421 = vmatprep.subr.mxu0 0.0
  %4422 = vmatpush1.xpose.msra.mxu0 0.0
  %4423 = vmatprep.subr.mxu0 0.0
  %4424 = vmatpush1.xpose.msra.mxu0 0.0
  %4425 = vmatprep.subr.mxu0 0.0
  %4426 = vmatpush1.xpose.msra.mxu0 0.0
  %4427 = vmatprep.subr.mxu0 0.0
  %4428 = vmatpush1.xpose.msra.mxu0 0.0
  %4429 = vmatprep.subr.mxu0 0.0
  %4430 = vmatpush1.xpose.msra.mxu0 0.0
  %4431 = vmatprep.subr.mxu0 0.0
  %4432 = vmatpush1.xpose.msra.mxu0 0.0
  %4433 = vmatprep.subr.mxu0 0.0
  %4434 = vmatpush1.xpose.msra.mxu0 0.0
  %4435 = vmatprep.subr.mxu0 0.0
  %4436 = vmatpush1.xpose.msra.mxu0 0.0
  %4437 = vmatprep.subr.mxu0 0.0
  %4438 = vmatpush1.xpose.msra.mxu0 0.0
  %4439 = vmatprep.subr.mxu0 0.0
  %4440 = vmatpush1.xpose.msra.mxu0 0.0
  %4441 = vmatprep.subr.mxu0 0.0
  %4442 = vmatpush1.xpose.msra.mxu0 0.0
  %4443 = vmatprep.mubr.f32.mxu0 0.0
  %4444 = vmatmul.mubr.f32.gmra.mrb[0].mxu0 %v4371
  %v4445 = vpop.f32.mrb[0].mxu0
  %v4446 = vadd.f32 0.0, %v4445
  %v4447 = vpop.f32.mrb[0].mxu0
  %4448 = vmatprep.mubr.f32.mxu0 0.0
  %4449 = vmatmul.mubr.f32.gmra.mrb[0].mxu0 %v4373
  %v4450 = vpop.f32.mrb[0].mxu0
  %v4451 = vadd.f32 0.0, %v4450
  %v4452 = vpop.f32.mrb[0].mxu0
  %4453 = vdwg.mxu0
  %v4454 = vmul.f32 %v3823, 0.25
  %v4455 = vmul.f32 %v3828, 0.25
  %v4456 = vmul.f32 %v3912, 0.25
  %v4457 = vmul.f32 %v3917, 0.25
  %v4458 = vmul.f32 %v4001, 0.25
  %v4459 = vmul.f32 %v4006, 0.25
  %v4460 = vmul.f32 %v4090, 0.25
  %v4461 = vmul.f32 %v4095, 0.25
  %v4462 = vmul.f32 %v4179, 0.25
  %v4463 = vmul.f32 %v4184, 0.25
  %v4464 = vmul.f32 %v4268, 0.25
  %v4465 = vmul.f32 %v4273, 0.25
  %v4466 = vmul.f32 %v4357, 0.25
  %v4467 = vmul.f32 %v4362, 0.25
  %v4468 = vmul.f32 %v4446, 0.25
  %v4469 = vmul.f32 %v4451, 0.25
  %v4470 = vsel %vm2464, %v4454, -inf
  %4471 = vmax.xlane.f32.xlu0 %v4470
  %v4472 = vpop.xlane.xlu0 %4471
  %v4473 = vsel %vm2464, %v4455, -inf
  %4474 = vmax.xlane.f32.xlu0 %v4473
  %v4475 = vpop.xlane.xlu0 %4474
  %v4476 = vsel %vm2464, %v4456, -inf
  %4477 = vmax.xlane.f32.xlu0 %v4476
  %v4478 = vpop.xlane.xlu0 %4477
  %v4479 = vsel %vm2464, %v4457, -inf
  %4480 = vmax.xlane.f32.xlu0 %v4479
  %v4481 = vpop.xlane.xlu0 %4480
  %v4482 = vsel %vm2464, %v4458, -inf
  %4483 = vmax.xlane.f32.xlu0 %v4482
  %v4484 = vpop.xlane.xlu0 %4483
  %v4485 = vsel %vm2464, %v4459, -inf
  %4486 = vmax.xlane.f32.xlu0 %v4485
  %v4487 = vpop.xlane.xlu0 %4486
  %v4488 = vsel %vm2464, %v4460, -inf
  %4489 = vmax.xlane.f32.xlu0 %v4488
  %v4490 = vpop.xlane.xlu0 %4489
  %v4491 = vsel %vm2464, %v4461, -inf
  %4492 = vmax.xlane.f32.xlu0 %v4491
  %v4493 = vpop.xlane.xlu0 %4492
  %v4494 = vsel %vm2464, %v4462, -inf
  %4495 = vmax.xlane.f32.xlu0 %v4494
  %v4496 = vpop.xlane.xlu0 %4495
  %v4497 = vsel %vm2464, %v4463, -inf
  %4498 = vmax.xlane.f32.xlu0 %v4497
  %v4499 = vpop.xlane.xlu0 %4498
  %v4500 = vsel %vm2464, %v4464, -inf
  %4501 = vmax.xlane.f32.xlu0 %v4500
  %v4502 = vpop.xlane.xlu0 %4501
  %v4503 = vsel %vm2464, %v4465, -inf
  %4504 = vmax.xlane.f32.xlu0 %v4503
  %v4505 = vpop.xlane.xlu0 %4504
  %v4506 = vsel %vm2464, %v4466, -inf
  %4507 = vmax.xlane.f32.xlu0 %v4506
  %v4508 = vpop.xlane.xlu0 %4507
  %v4509 = vsel %vm2464, %v4467, -inf
  %4510 = vmax.xlane.f32.xlu0 %v4509
  %v4511 = vpop.xlane.xlu0 %4510
  %v4512 = vsel %vm2464, %v4468, -inf
  %4513 = vmax.xlane.f32.xlu0 %v4512
  %v4514 = vpop.xlane.xlu0 %4513
  %v4515 = vsel %vm2464, %v4469, -inf
  %4516 = vmax.xlane.f32.xlu0 %v4515
  %v4517 = vpop.xlane.xlu0 %4516
  %v4518 = vsub.f32 %v4454, %v4472
  %v4519 = vsub.f32 %v4455, %v4475
  %v4520 = vsub.f32 %v4456, %v4478
  %v4521 = vsub.f32 %v4457, %v4481
  %v4522 = vsub.f32 %v4458, %v4484
  %v4523 = vsub.f32 %v4459, %v4487
  %v4524 = vsub.f32 %v4460, %v4490
  %v4525 = vsub.f32 %v4461, %v4493
  %v4526 = vsub.f32 %v4462, %v4496
  %v4527 = vsub.f32 %v4463, %v4499
  %v4528 = vsub.f32 %v4464, %v4502
  %v4529 = vsub.f32 %v4465, %v4505
  %v4530 = vsub.f32 %v4466, %v4508
  %v4531 = vsub.f32 %v4467, %v4511
  %v4532 = vsub.f32 %v4468, %v4514
  %v4533 = vsub.f32 %v4469, %v4517
  %v4534 = vmul.f32 %v4518, 1.442695
  %v4535 = vpow.pop %v4534
  %v4536 = vmul.f32 %v4519, 1.442695
  %v4537 = vpow.pop %v4536
  %v4538 = vmul.f32 %v4520, 1.442695
  %v4539 = vpow.pop %v4538
  %v4540 = vmul.f32 %v4521, 1.442695
  %v4541 = vpow.pop %v4540
  %v4542 = vmul.f32 %v4522, 1.442695
  %v4543 = vpow.pop %v4542
  %v4544 = vmul.f32 %v4523, 1.442695
  %v4545 = vpow.pop %v4544
  %v4546 = vmul.f32 %v4524, 1.442695
  %v4547 = vpow.pop %v4546
  %v4548 = vmul.f32 %v4525, 1.442695
  %v4549 = vpow.pop %v4548
  %v4550 = vmul.f32 %v4526, 1.442695
  %v4551 = vpow.pop %v4550
  %v4552 = vmul.f32 %v4527, 1.442695
  %v4553 = vpow.pop %v4552
  %v4554 = vmul.f32 %v4528, 1.442695
  %v4555 = vpow.pop %v4554
  %v4556 = vmul.f32 %v4529, 1.442695
  %v4557 = vpow.pop %v4556
  %v4558 = vmul.f32 %v4530, 1.442695
  %v4559 = vpow.pop %v4558
  %v4560 = vmul.f32 %v4531, 1.442695
  %v4561 = vpow.pop %v4560
  %v4562 = vmul.f32 %v4532, 1.442695
  %v4563 = vpow.pop %v4562
  %v4564 = vmul.f32 %v4533, 1.442695
  %v4565 = vpow.pop %v4564
  %v4566 = vsel %vm2464, %v4535, 0.0
  %4567 = vadd.xlane.f32.xlu0 %v4566
  %v4568 = vpop.xlane.xlu0 %4567
  %v4569 = vsel %vm2464, %v4537, 0.0
  %4570 = vadd.xlane.f32.xlu0 %v4569
  %v4571 = vpop.xlane.xlu0 %4570
  %v4572 = vsel %vm2464, %v4539, 0.0
  %4573 = vadd.xlane.f32.xlu0 %v4572
  %v4574 = vpop.xlane.xlu0 %4573
  %v4575 = vsel %vm2464, %v4541, 0.0
  %4576 = vadd.xlane.f32.xlu0 %v4575
  %v4577 = vpop.xlane.xlu0 %4576
  %v4578 = vsel %vm2464, %v4543, 0.0
  %4579 = vadd.xlane.f32.xlu0 %v4578
  %v4580 = vpop.xlane.xlu0 %4579
  %v4581 = vsel %vm2464, %v4545, 0.0
  %4582 = vadd.xlane.f32.xlu0 %v4581
  %v4583 = vpop.xlane.xlu0 %4582
  %v4584 = vsel %vm2464, %v4547, 0.0
  %4585 = vadd.xlane.f32.xlu0 %v4584
  %v4586 = vpop.xlane.xlu0 %4585
  %v4587 = vsel %vm2464, %v4549, 0.0
  %4588 = vadd.xlane.f32.xlu0 %v4587
  %v4589 = vpop.xlane.xlu0 %4588
  %v4590 = vsel %vm2464, %v4551, 0.0
  %4591 = vadd.xlane.f32.xlu0 %v4590
  %v4592 = vpop.xlane.xlu0 %4591
  %v4593 = vsel %vm2464, %v4553, 0.0
  %4594 = vadd.xlane.f32.xlu0 %v4593
  %v4595 = vpop.xlane.xlu0 %4594
  %v4596 = vsel %vm2464, %v4555, 0.0
  %4597 = vadd.xlane.f32.xlu0 %v4596
  %v4598 = vpop.xlane.xlu0 %4597
  %v4599 = vsel %vm2464, %v4557, 0.0
  %4600 = vadd.xlane.f32.xlu0 %v4599
  %v4601 = vpop.xlane.xlu0 %4600
  %v4602 = vsel %vm2464, %v4559, 0.0
  %4603 = vadd.xlane.f32.xlu0 %v4602
  %v4604 = vpop.xlane.xlu0 %4603
  %v4605 = vsel %vm2464, %v4561, 0.0
  %4606 = vadd.xlane.f32.xlu0 %v4605
  %v4607 = vpop.xlane.xlu0 %4606
  %v4608 = vsel %vm2464, %v4563, 0.0
  %4609 = vadd.xlane.f32.xlu0 %v4608
  %v4610 = vpop.xlane.xlu0 %4609
  %v4611 = vsel %vm2464, %v4565, 0.0
  %4612 = vadd.xlane.f32.xlu0 %v4611
  %v4613 = vpop.xlane.xlu0 %4612
  %v4614 = vrcp.pop %v4568
  %v4615 = vrcp.pop %v4571
  %v4616 = vrcp.pop %v4574
  %v4617 = vrcp.pop %v4577
  %v4618 = vrcp.pop %v4580
  %v4619 = vrcp.pop %v4583
  %v4620 = vrcp.pop %v4586
  %v4621 = vrcp.pop %v4589
  %v4622 = vrcp.pop %v4592
  %v4623 = vrcp.pop %v4595
  %v4624 = vrcp.pop %v4598
  %v4625 = vrcp.pop %v4601
  %v4626 = vrcp.pop %v4604
  %v4627 = vrcp.pop %v4607
  %v4628 = vrcp.pop %v4610
  %v4629 = vrcp.pop %v4613
  %v4630 = vmul.f32 %v4535, %v4614
  %v4631 = vmul.f32 %v4537, %v4615
  %v4632 = vmul.f32 %v4539, %v4616
  %v4633 = vmul.f32 %v4541, %v4617
  %v4634 = vmul.f32 %v4543, %v4618
  %v4635 = vmul.f32 %v4545, %v4619
  %v4636 = vmul.f32 %v4547, %v4620
  %v4637 = vmul.f32 %v4549, %v4621
  %v4638 = vmul.f32 %v4551, %v4622
  %v4639 = vmul.f32 %v4553, %v4623
  %v4640 = vmul.f32 %v4555, %v4624
  %v4641 = vmul.f32 %v4557, %v4625
  %v4642 = vmul.f32 %v4559, %v4626
  %v4643 = vmul.f32 %v4561, %v4627
  %v4644 = vmul.f32 %v4563, %v4628
  %v4645 = vmul.f32 %v4565, %v4629
  %v4647 = vsel %vm2464, %v4630, 0
  %v4650 = vsel %vm2464, %v4631, 0
  %4652 = vmatprep.subr.mxu0 0.0
  %4653 = vmatpush1.msra.mxu0 %v3650
  %4654 = vmatprep.subr.mxu0 0.0
  %4655 = vmatpush1.msra.mxu0 %v3656
  %4656 = vmatprep.subr.mxu0 0.0
  %4657 = vmatpush1.msra.mxu0 0.0
  %4658 = vmatprep.subr.mxu0 0.0
  %4659 = vmatpush1.msra.mxu0 0.0
  %4660 = vmatprep.subr.mxu0 0.0
  %4661 = vmatpush1.msra.mxu0 0.0
  %4662 = vmatprep.subr.mxu0 0.0
  %4663 = vmatpush1.msra.mxu0 0.0
  %4664 = vmatprep.subr.mxu0 0.0
  %4665 = vmatpush1.msra.mxu0 0.0
  %4666 = vmatprep.subr.mxu0 0.0
  %4667 = vmatpush1.msra.mxu0 0.0
  %4668 = vmatprep.subr.mxu0 0.0
  %4669 = vmatpush1.msra.mxu0 0.0
  %4670 = vmatprep.subr.mxu0 0.0
  %4671 = vmatpush1.msra.mxu0 0.0
  %4672 = vmatprep.subr.mxu0 0.0
  %4673 = vmatpush1.msra.mxu0 0.0
  %4674 = vmatprep.subr.mxu0 0.0
  %4675 = vmatpush1.msra.mxu0 0.0
  %4676 = vmatprep.subr.mxu0 0.0
  %4677 = vmatpush1.msra.mxu0 0.0
  %4678 = vmatprep.subr.mxu0 0.0
  %4679 = vmatpush1.msra.mxu0 0.0
  %4680 = vmatprep.subr.mxu0 0.0
  %4681 = vmatpush1.msra.mxu0 0.0
  %4682 = vmatprep.subr.mxu0 0.0
  %4683 = vmatpush1.msra.mxu0 0.0
  %4684 = vmatprep.subr.mxu0 0.0
  %4685 = vmatpush1.msra.mxu0 0.0
  %4686 = vmatprep.subr.mxu0 0.0
  %4687 = vmatpush1.msra.mxu0 0.0
  %4688 = vmatprep.subr.mxu0 0.0
  %4689 = vmatpush1.msra.mxu0 0.0
  %4690 = vmatprep.subr.mxu0 0.0
  %4691 = vmatpush1.msra.mxu0 0.0
  %4692 = vmatprep.subr.mxu0 0.0
  %4693 = vmatpush1.msra.mxu0 0.0
  %4694 = vmatprep.subr.mxu0 0.0
  %4695 = vmatpush1.msra.mxu0 0.0
  %4696 = vmatprep.subr.mxu0 0.0
  %4697 = vmatpush1.msra.mxu0 0.0
  %4698 = vmatprep.subr.mxu0 0.0
  %4699 = vmatpush1.msra.mxu0 0.0
  %4700 = vmatprep.subr.mxu0 0.0
  %4701 = vmatpush1.msra.mxu0 0.0
  %4702 = vmatprep.subr.mxu0 0.0
  %4703 = vmatpush1.msra.mxu0 0.0
  %4704 = vmatprep.subr.mxu0 0.0
  %4705 = vmatpush1.msra.mxu0 0.0
  %4706 = vmatprep.subr.mxu0 0.0
  %4707 = vmatpush1.msra.mxu0 0.0
  %4708 = vmatprep.subr.mxu0 0.0
  %4709 = vmatpush1.msra.mxu0 0.0
  %4710 = vmatprep.subr.mxu0 0.0
  %4711 = vmatpush1.msra.mxu0 0.0
  %4712 = vmatprep.subr.mxu0 0.0
  %4713 = vmatpush1.msra.mxu0 0.0
  %4714 = vmatprep.subr.mxu0 0.0
  %4715 = vmatpush1.msra.mxu0 0.0
  %4716 = vmatprep.mubr.f32.mxu0 0.0
  %4717 = vmatmul.mubr.f32.gmra.mrb[0].mxu0 %v4647
  %v4718 = vpop.f32.mrb[0].mxu0
  %v4719 = vadd.f32 0.0, %v4718
  %v4720 = vpop.f32.mrb[0].mxu0
  %4721 = vmatprep.mubr.f32.mxu0 0.0
  %4722 = vmatmul.mubr.f32.gmra.mrb[0].mxu0 %v4650
  %v4723 = vpop.f32.mrb[0].mxu0
  %v4724 = vadd.f32 0.0, %v4723
  %v4725 = vpop.f32.mrb[0].mxu0
  %4726 = vdwg.mxu0
  %v4728 = vsel %vm2464, %v4632, 0
  %v4731 = vsel %vm2464, %v4633, 0
  %4733 = vmatprep.subr.mxu0 0.0
  %4734 = vmatpush1.msra.mxu0 %v3662
  %4735 = vmatprep.subr.mxu0 0.0
  %4736 = vmatpush1.msra.mxu0 %v3668
  %4737 = vmatprep.subr.mxu0 0.0
  %4738 = vmatpush1.msra.mxu0 0.0
  %4739 = vmatprep.subr.mxu0 0.0
  %4740 = vmatpush1.msra.mxu0 0.0
  %4741 = vmatprep.subr.mxu0 0.0
  %4742 = vmatpush1.msra.mxu0 0.0
  %4743 = vmatprep.subr.mxu0 0.0
  %4744 = vmatpush1.msra.mxu0 0.0
  %4745 = vmatprep.subr.mxu0 0.0
  %4746 = vmatpush1.msra.mxu0 0.0
  %4747 = vmatprep.subr.mxu0 0.0
  %4748 = vmatpush1.msra.mxu0 0.0
  %4749 = vmatprep.subr.mxu0 0.0
  %4750 = vmatpush1.msra.mxu0 0.0
  %4751 = vmatprep.subr.mxu0 0.0
  %4752 = vmatpush1.msra.mxu0 0.0
  %4753 = vmatprep.subr.mxu0 0.0
  %4754 = vmatpush1.msra.mxu0 0.0
  %4755 = vmatprep.subr.mxu0 0.0
  %4756 = vmatpush1.msra.mxu0 0.0
  %4757 = vmatprep.subr.mxu0 0.0
  %4758 = vmatpush1.msra.mxu0 0.0
  %4759 = vmatprep.subr.mxu0 0.0
  %4760 = vmatpush1.msra.mxu0 0.0
  %4761 = vmatprep.subr.mxu0 0.0
  %4762 = vmatpush1.msra.mxu0 0.0
  %4763 = vmatprep.subr.mxu0 0.0
  %4764 = vmatpush1.msra.mxu0 0.0
  %4765 = vmatprep.subr.mxu0 0.0
  %4766 = vmatpush1.msra.mxu0 0.0
  %4767 = vmatprep.subr.mxu0 0.0
  %4768 = vmatpush1.msra.mxu0 0.0
  %4769 = vmatprep.subr.mxu0 0.0
  %4770 = vmatpush1.msra.mxu0 0.0
  %4771 = vmatprep.subr.mxu0 0.0
  %4772 = vmatpush1.msra.mxu0 0.0
  %4773 = vmatprep.subr.mxu0 0.0
  %4774 = vmatpush1.msra.mxu0 0.0
  %4775 = vmatprep.subr.mxu0 0.0
  %4776 = vmatpush1.msra.mxu0 0.0
  %4777 = vmatprep.subr.mxu0 0.0
  %4778 = vmatpush1.msra.mxu0 0.0
  %4779 = vmatprep.subr.mxu0 0.0
  %4780 = vmatpush1.msra.mxu0 0.0
  %4781 = vmatprep.subr.mxu0 0.0
  %4782 = vmatpush1.msra.mxu0 0.0
  %4783 = vmatprep.subr.mxu0 0.0
  %4784 = vmatpush1.msra.mxu0 0.0
  %4785 = vmatprep.subr.mxu0 0.0
  %4786 = vmatpush1.msra.mxu0 0.0
  %4787 = vmatprep.subr.mxu0 0.0
  %4788 = vmatpush1.msra.mxu0 0.0
  %4789 = vmatprep.subr.mxu0 0.0
  %4790 = vmatpush1.msra.mxu0 0.0
  %4791 = vmatprep.subr.mxu0 0.0
  %4792 = vmatpush1.msra.mxu0 0.0
  %4793 = vmatprep.subr.mxu0 0.0
  %4794 = vmatpush1.msra.mxu0 0.0
  %4795 = vmatprep.subr.mxu0 0.0
  %4796 = vmatpush1.msra.mxu0 0.0
  %4797 = vmatprep.mubr.f32.mxu0 0.0
  %4798 = vmatmul.mubr.f32.gmra.mrb[0].mxu0 %v4728
  %v4799 = vpop.f32.mrb[0].mxu0
  %v4800 = vadd.f32 0.0, %v4799
  %v4801 = vpop.f32.mrb[0].mxu0
  %4802 = vmatprep.mubr.f32.mxu0 0.0
  %4803 = vmatmul.mubr.f32.gmra.mrb[0].mxu0 %v4731
  %v4804 = vpop.f32.mrb[0].mxu0
  %v4805 = vadd.f32 0.0, %v4804
  %v4806 = vpop.f32.mrb[0].mxu0
  %4807 = vdwg.mxu0
  %v4809 = vsel %vm2464, %v4634, 0
  %v4812 = vsel %vm2464, %v4635, 0
  %4814 = vmatprep.subr.mxu0 0.0
  %4815 = vmatpush1.msra.mxu0 %v3674
  %4816 = vmatprep.subr.mxu0 0.0
  %4817 = vmatpush1.msra.mxu0 %v3680
  %4818 = vmatprep.subr.mxu0 0.0
  %4819 = vmatpush1.msra.mxu0 0.0
  %4820 = vmatprep.subr.mxu0 0.0
  %4821 = vmatpush1.msra.mxu0 0.0
  %4822 = vmatprep.subr.mxu0 0.0
  %4823 = vmatpush1.msra.mxu0 0.0
  %4824 = vmatprep.subr.mxu0 0.0
  %4825 = vmatpush1.msra.mxu0 0.0
  %4826 = vmatprep.subr.mxu0 0.0
  %4827 = vmatpush1.msra.mxu0 0.0
  %4828 = vmatprep.subr.mxu0 0.0
  %4829 = vmatpush1.msra.mxu0 0.0
  %4830 = vmatprep.subr.mxu0 0.0
  %4831 = vmatpush1.msra.mxu0 0.0
  %4832 = vmatprep.subr.mxu0 0.0
  %4833 = vmatpush1.msra.mxu0 0.0
  %4834 = vmatprep.subr.mxu0 0.0
  %4835 = vmatpush1.msra.mxu0 0.0
  %4836 = vmatprep.subr.mxu0 0.0
  %4837 = vmatpush1.msra.mxu0 0.0
  %4838 = vmatprep.subr.mxu0 0.0
  %4839 = vmatpush1.msra.mxu0 0.0
  %4840 = vmatprep.subr.mxu0 0.0
  %4841 = vmatpush1.msra.mxu0 0.0
  %4842 = vmatprep.subr.mxu0 0.0
  %4843 = vmatpush1.msra.mxu0 0.0
  %4844 = vmatprep.subr.mxu0 0.0
  %4845 = vmatpush1.msra.mxu0 0.0
  %4846 = vmatprep.subr.mxu0 0.0
  %4847 = vmatpush1.msra.mxu0 0.0
  %4848 = vmatprep.subr.mxu0 0.0
  %4849 = vmatpush1.msra.mxu0 0.0
  %4850 = vmatprep.subr.mxu0 0.0
  %4851 = vmatpush1.msra.mxu0 0.0
  %4852 = vmatprep.subr.mxu0 0.0
  %4853 = vmatpush1.msra.mxu0 0.0
  %4854 = vmatprep.subr.mxu0 0.0
  %4855 = vmatpush1.msra.mxu0 0.0
  %4856 = vmatprep.subr.mxu0 0.0
  %4857 = vmatpush1.msra.mxu0 0.0
  %4858 = vmatprep.subr.mxu0 0.0
  %4859 = vmatpush1.msra.mxu0 0.0
  %4860 = vmatprep.subr.mxu0 0.0
  %4861 = vmatpush1.msra.mxu0 0.0
  %4862 = vmatprep.subr.mxu0 0.0
  %4863 = vmatpush1.msra.mxu0 0.0
  %4864 = vmatprep.subr.mxu0 0.0
  %4865 = vmatpush1.msra.mxu0 0.0
  %4866 = vmatprep.subr.mxu0 0.0
  %4867 = vmatpush1.msra.mxu0 0.0
  %4868 = vmatprep.subr.mxu0 0.0
  %4869 = vmatpush1.msra.mxu0 0.0
  %4870 = vmatprep.subr.mxu0 0.0
  %4871 = vmatpush1.msra.mxu0 0.0
  %4872 = vmatprep.subr.mxu0 0.0
  %4873 = vmatpush1.msra.mxu0 0.0
  %4874 = vmatprep.subr.mxu0 0.0
  %4875 = vmatpush1.msra.mxu0 0.0
  %4876 = vmatprep.subr.mxu0 0.0
  %4877 = vmatpush1.msra.mxu0 0.0
  %4878 = vmatprep.mubr.f32.mxu0 0.0
  %4879 = vmatmul.mubr.f32.gmra.mrb[0].mxu0 %v4809
  %v4880 = vpop.f32.mrb[0].mxu0
  %v4881 = vadd.f32 0.0, %v4880
  %v4882 = vpop.f32.mrb[0].mxu0
  %4883 = vmatprep.mubr.f32.mxu0 0.0
  %4884 = vmatmul.mubr.f32.gmra.mrb[0].mxu0 %v4812
  %v4885 = vpop.f32.mrb[0].mxu0
  %v4886 = vadd.f32 0.0, %v4885
  %v4887 = vpop.f32.mrb[0].mxu0
  %4888 = vdwg.mxu0
  %v4890 = vsel %vm2464, %v4636, 0
  %v4893 = vsel %vm2464, %v4637, 0
  %4895 = vmatprep.subr.mxu0 0.0
  %4896 = vmatpush1.msra.mxu0 %v3686
  %4897 = vmatprep.subr.mxu0 0.0
  %4898 = vmatpush1.msra.mxu0 %v3692
  %4899 = vmatprep.subr.mxu0 0.0
  %4900 = vmatpush1.msra.mxu0 0.0
  %4901 = vmatprep.subr.mxu0 0.0
  %4902 = vmatpush1.msra.mxu0 0.0
  %4903 = vmatprep.subr.mxu0 0.0
  %4904 = vmatpush1.msra.mxu0 0.0
  %4905 = vmatprep.subr.mxu0 0.0
  %4906 = vmatpush1.msra.mxu0 0.0
  %4907 = vmatprep.subr.mxu0 0.0
  %4908 = vmatpush1.msra.mxu0 0.0
  %4909 = vmatprep.subr.mxu0 0.0
  %4910 = vmatpush1.msra.mxu0 0.0
  %4911 = vmatprep.subr.mxu0 0.0
  %4912 = vmatpush1.msra.mxu0 0.0
  %4913 = vmatprep.subr.mxu0 0.0
  %4914 = vmatpush1.msra.mxu0 0.0
  %4915 = vmatprep.subr.mxu0 0.0
  %4916 = vmatpush1.msra.mxu0 0.0
  %4917 = vmatprep.subr.mxu0 0.0
  %4918 = vmatpush1.msra.mxu0 0.0
  %4919 = vmatprep.subr.mxu0 0.0
  %4920 = vmatpush1.msra.mxu0 0.0
  %4921 = vmatprep.subr.mxu0 0.0
  %4922 = vmatpush1.msra.mxu0 0.0
  %4923 = vmatprep.subr.mxu0 0.0
  %4924 = vmatpush1.msra.mxu0 0.0
  %4925 = vmatprep.subr.mxu0 0.0
  %4926 = vmatpush1.msra.mxu0 0.0
  %4927 = vmatprep.subr.mxu0 0.0
  %4928 = vmatpush1.msra.mxu0 0.0
  %4929 = vmatprep.subr.mxu0 0.0
  %4930 = vmatpush1.msra.mxu0 0.0
  %4931 = vmatprep.subr.mxu0 0.0
  %4932 = vmatpush1.msra.mxu0 0.0
  %4933 = vmatprep.subr.mxu0 0.0
  %4934 = vmatpush1.msra.mxu0 0.0
  %4935 = vmatprep.subr.mxu0 0.0
  %4936 = vmatpush1.msra.mxu0 0.0
  %4937 = vmatprep.subr.mxu0 0.0
  %4938 = vmatpush1.msra.mxu0 0.0
  %4939 = vmatprep.subr.mxu0 0.0
  %4940 = vmatpush1.msra.mxu0 0.0
  %4941 = vmatprep.subr.mxu0 0.0
  %4942 = vmatpush1.msra.mxu0 0.0
  %4943 = vmatprep.subr.mxu0 0.0
  %4944 = vmatpush1.msra.mxu0 0.0
  %4945 = vmatprep.subr.mxu0 0.0
  %4946 = vmatpush1.msra.mxu0 0.0
  %4947 = vmatprep.subr.mxu0 0.0
  %4948 = vmatpush1.msra.mxu0 0.0
  %4949 = vmatprep.subr.mxu0 0.0
  %4950 = vmatpush1.msra.mxu0 0.0
  %4951 = vmatprep.subr.mxu0 0.0
  %4952 = vmatpush1.msra.mxu0 0.0
  %4953 = vmatprep.subr.mxu0 0.0
  %4954 = vmatpush1.msra.mxu0 0.0
  %4955 = vmatprep.subr.mxu0 0.0
  %4956 = vmatpush1.msra.mxu0 0.0
  %4957 = vmatprep.subr.mxu0 0.0
  %4958 = vmatpush1.msra.mxu0 0.0
  %4959 = vmatprep.mubr.f32.mxu0 0.0
  %4960 = vmatmul.mubr.f32.gmra.mrb[0].mxu0 %v4890
  %v4961 = vpop.f32.mrb[0].mxu0
  %v4962 = vadd.f32 0.0, %v4961
  %v4963 = vpop.f32.mrb[0].mxu0
  %4964 = vmatprep.mubr.f32.mxu0 0.0
  %4965 = vmatmul.mubr.f32.gmra.mrb[0].mxu0 %v4893
  %v4966 = vpop.f32.mrb[0].mxu0
  %v4967 = vadd.f32 0.0, %v4966
  %v4968 = vpop.f32.mrb[0].mxu0
  %4969 = vdwg.mxu0
  %v4971 = vsel %vm2464, %v4638, 0
  %v4974 = vsel %vm2464, %v4639, 0
  %4976 = vmatprep.subr.mxu0 0.0
  %4977 = vmatpush1.msra.mxu0 %v3698
  %4978 = vmatprep.subr.mxu0 0.0
  %4979 = vmatpush1.msra.mxu0 %v3704
  %4980 = vmatprep.subr.mxu0 0.0
  %4981 = vmatpush1.msra.mxu0 0.0
  %4982 = vmatprep.subr.mxu0 0.0
  %4983 = vmatpush1.msra.mxu0 0.0
  %4984 = vmatprep.subr.mxu0 0.0
  %4985 = vmatpush1.msra.mxu0 0.0
  %4986 = vmatprep.subr.mxu0 0.0
  %4987 = vmatpush1.msra.mxu0 0.0
  %4988 = vmatprep.subr.mxu0 0.0
  %4989 = vmatpush1.msra.mxu0 0.0
  %4990 = vmatprep.subr.mxu0 0.0
  %4991 = vmatpush1.msra.mxu0 0.0
  %4992 = vmatprep.subr.mxu0 0.0
  %4993 = vmatpush1.msra.mxu0 0.0
  %4994 = vmatprep.subr.mxu0 0.0
  %4995 = vmatpush1.msra.mxu0 0.0
  %4996 = vmatprep.subr.mxu0 0.0
  %4997 = vmatpush1.msra.mxu0 0.0
  %4998 = vmatprep.subr.mxu0 0.0
  %4999 = vmatpush1.msra.mxu0 0.0
  %5000 = vmatprep.subr.mxu0 0.0
  %5001 = vmatpush1.msra.mxu0 0.0
  %5002 = vmatprep.subr.mxu0 0.0
  %5003 = vmatpush1.msra.mxu0 0.0
  %5004 = vmatprep.subr.mxu0 0.0
  %5005 = vmatpush1.msra.mxu0 0.0
  %5006 = vmatprep.subr.mxu0 0.0
  %5007 = vmatpush1.msra.mxu0 0.0
  %5008 = vmatprep.subr.mxu0 0.0
  %5009 = vmatpush1.msra.mxu0 0.0
  %5010 = vmatprep.subr.mxu0 0.0
  %5011 = vmatpush1.msra.mxu0 0.0
  %5012 = vmatprep.subr.mxu0 0.0
  %5013 = vmatpush1.msra.mxu0 0.0
  %5014 = vmatprep.subr.mxu0 0.0
  %5015 = vmatpush1.msra.mxu0 0.0
  %5016 = vmatprep.subr.mxu0 0.0
  %5017 = vmatpush1.msra.mxu0 0.0
  %5018 = vmatprep.subr.mxu0 0.0
  %5019 = vmatpush1.msra.mxu0 0.0
  %5020 = vmatprep.subr.mxu0 0.0
  %5021 = vmatpush1.msra.mxu0 0.0
  %5022 = vmatprep.subr.mxu0 0.0
  %5023 = vmatpush1.msra.mxu0 0.0
  %5024 = vmatprep.subr.mxu0 0.0
  %5025 = vmatpush1.msra.mxu0 0.0
  %5026 = vmatprep.subr.mxu0 0.0
  %5027 = vmatpush1.msra.mxu0 0.0
  %5028 = vmatprep.subr.mxu0 0.0
  %5029 = vmatpush1.msra.mxu0 0.0
  %5030 = vmatprep.subr.mxu0 0.0
  %5031 = vmatpush1.msra.mxu0 0.0
  %5032 = vmatprep.subr.mxu0 0.0
  %5033 = vmatpush1.msra.mxu0 0.0
  %5034 = vmatprep.subr.mxu0 0.0
  %5035 = vmatpush1.msra.mxu0 0.0
  %5036 = vmatprep.subr.mxu0 0.0
  %5037 = vmatpush1.msra.mxu0 0.0
  %5038 = vmatprep.subr.mxu0 0.0
  %5039 = vmatpush1.msra.mxu0 0.0
  %5040 = vmatprep.mubr.f32.mxu0 0.0
  %5041 = vmatmul.mubr.f32.gmra.mrb[0].mxu0 %v4971
  %v5042 = vpop.f32.mrb[0].mxu0
  %v5043 = vadd.f32 0.0, %v5042
  %v5044 = vpop.f32.mrb[0].mxu0
  %5045 = vmatprep.mubr.f32.mxu0 0.0
  %5046 = vmatmul.mubr.f32.gmra.mrb[0].mxu0 %v4974
  %v5047 = vpop.f32.mrb[0].mxu0
  %v5048 = vadd.f32 0.0, %v5047
  %v5049 = vpop.f32.mrb[0].mxu0
  %5050 = vdwg.mxu0
  %v5052 = vsel %vm2464, %v4640, 0
  %v5055 = vsel %vm2464, %v4641, 0
  %5057 = vmatprep.subr.mxu0 0.0
  %5058 = vmatpush1.msra.mxu0 %v3710
  %5059 = vmatprep.subr.mxu0 0.0
  %5060 = vmatpush1.msra.mxu0 %v3716
  %5061 = vmatprep.subr.mxu0 0.0
  %5062 = vmatpush1.msra.mxu0 0.0
  %5063 = vmatprep.subr.mxu0 0.0
  %5064 = vmatpush1.msra.mxu0 0.0
  %5065 = vmatprep.subr.mxu0 0.0
  %5066 = vmatpush1.msra.mxu0 0.0
  %5067 = vmatprep.subr.mxu0 0.0
  %5068 = vmatpush1.msra.mxu0 0.0
  %5069 = vmatprep.subr.mxu0 0.0
  %5070 = vmatpush1.msra.mxu0 0.0
  %5071 = vmatprep.subr.mxu0 0.0
  %5072 = vmatpush1.msra.mxu0 0.0
  %5073 = vmatprep.subr.mxu0 0.0
  %5074 = vmatpush1.msra.mxu0 0.0
  %5075 = vmatprep.subr.mxu0 0.0
  %5076 = vmatpush1.msra.mxu0 0.0
  %5077 = vmatprep.subr.mxu0 0.0
  %5078 = vmatpush1.msra.mxu0 0.0
  %5079 = vmatprep.subr.mxu0 0.0
  %5080 = vmatpush1.msra.mxu0 0.0
  %5081 = vmatprep.subr.mxu0 0.0
  %5082 = vmatpush1.msra.mxu0 0.0
  %5083 = vmatprep.subr.mxu0 0.0
  %5084 = vmatpush1.msra.mxu0 0.0
  %5085 = vmatprep.subr.mxu0 0.0
  %5086 = vmatpush1.msra.mxu0 0.0
  %5087 = vmatprep.subr.mxu0 0.0
  %5088 = vmatpush1.msra.mxu0 0.0
  %5089 = vmatprep.subr.mxu0 0.0
  %5090 = vmatpush1.msra.mxu0 0.0
  %5091 = vmatprep.subr.mxu0 0.0
  %5092 = vmatpush1.msra.mxu0 0.0
  %5093 = vmatprep.subr.mxu0 0.0
  %5094 = vmatpush1.msra.mxu0 0.0
  %5095 = vmatprep.subr.mxu0 0.0
  %5096 = vmatpush1.msra.mxu0 0.0
  %5097 = vmatprep.subr.mxu0 0.0
  %5098 = vmatpush1.msra.mxu0 0.0
  %5099 = vmatprep.subr.mxu0 0.0
  %5100 = vmatpush1.msra.mxu0 0.0
  %5101 = vmatprep.subr.mxu0 0.0
  %5102 = vmatpush1.msra.mxu0 0.0
  %5103 = vmatprep.subr.mxu0 0.0
  %5104 = vmatpush1.msra.mxu0 0.0
  %5105 = vmatprep.subr.mxu0 0.0
  %5106 = vmatpush1.msra.mxu0 0.0
  %5107 = vmatprep.subr.mxu0 0.0
  %5108 = vmatpush1.msra.mxu0 0.0
  %5109 = vmatprep.subr.mxu0 0.0
  %5110 = vmatpush1.msra.mxu0 0.0
  %5111 = vmatprep.subr.mxu0 0.0
  %5112 = vmatpush1.msra.mxu0 0.0
  %5113 = vmatprep.subr.mxu0 0.0
  %5114 = vmatpush1.msra.mxu0 0.0
  %5115 = vmatprep.subr.mxu0 0.0
  %5116 = vmatpush1.msra.mxu0 0.0
  %5117 = vmatprep.subr.mxu0 0.0
  %5118 = vmatpush1.msra.mxu0 0.0
  %5119 = vmatprep.subr.mxu0 0.0
  %5120 = vmatpush1.msra.mxu0 0.0
  %5121 = vmatprep.mubr.f32.mxu0 0.0
  %5122 = vmatmul.mubr.f32.gmra.mrb[0].mxu0 %v5052
  %v5123 = vpop.f32.mrb[0].mxu0
  %v5124 = vadd.f32 0.0, %v5123
  %v5125 = vpop.f32.mrb[0].mxu0
  %5126 = vmatprep.mubr.f32.mxu0 0.0
  %5127 = vmatmul.mubr.f32.gmra.mrb[0].mxu0 %v5055
  %v5128 = vpop.f32.mrb[0].mxu0
  %v5129 = vadd.f32 0.0, %v5128
  %v5130 = vpop.f32.mrb[0].mxu0
  %5131 = vdwg.mxu0
  %v5133 = vsel %vm2464, %v4642, 0
  %v5136 = vsel %vm2464, %v4643, 0
  %5138 = vmatprep.subr.mxu0 0.0
  %5139 = vmatpush1.msra.mxu0 %v3722
  %5140 = vmatprep.subr.mxu0 0.0
  %5141 = vmatpush1.msra.mxu0 %v3728
  %5142 = vmatprep.subr.mxu0 0.0
  %5143 = vmatpush1.msra.mxu0 0.0
  %5144 = vmatprep.subr.mxu0 0.0
  %5145 = vmatpush1.msra.mxu0 0.0
  %5146 = vmatprep.subr.mxu0 0.0
  %5147 = vmatpush1.msra.mxu0 0.0
  %5148 = vmatprep.subr.mxu0 0.0
  %5149 = vmatpush1.msra.mxu0 0.0
  %5150 = vmatprep.subr.mxu0 0.0
  %5151 = vmatpush1.msra.mxu0 0.0
  %5152 = vmatprep.subr.mxu0 0.0
  %5153 = vmatpush1.msra.mxu0 0.0
  %5154 = vmatprep.subr.mxu0 0.0
  %5155 = vmatpush1.msra.mxu0 0.0
  %5156 = vmatprep.subr.mxu0 0.0
  %5157 = vmatpush1.msra.mxu0 0.0
  %5158 = vmatprep.subr.mxu0 0.0
  %5159 = vmatpush1.msra.mxu0 0.0
  %5160 = vmatprep.subr.mxu0 0.0
  %5161 = vmatpush1.msra.mxu0 0.0
  %5162 = vmatprep.subr.mxu0 0.0
  %5163 = vmatpush1.msra.mxu0 0.0
  %5164 = vmatprep.subr.mxu0 0.0
  %5165 = vmatpush1.msra.mxu0 0.0
  %5166 = vmatprep.subr.mxu0 0.0
  %5167 = vmatpush1.msra.mxu0 0.0
  %5168 = vmatprep.subr.mxu0 0.0
  %5169 = vmatpush1.msra.mxu0 0.0
  %5170 = vmatprep.subr.mxu0 0.0
  %5171 = vmatpush1.msra.mxu0 0.0
  %5172 = vmatprep.subr.mxu0 0.0
  %5173 = vmatpush1.msra.mxu0 0.0
  %5174 = vmatprep.subr.mxu0 0.0
  %5175 = vmatpush1.msra.mxu0 0.0
  %5176 = vmatprep.subr.mxu0 0.0
  %5177 = vmatpush1.msra.mxu0 0.0
  %5178 = vmatprep.subr.mxu0 0.0
  %5179 = vmatpush1.msra.mxu0 0.0
  %5180 = vmatprep.subr.mxu0 0.0
  %5181 = vmatpush1.msra.mxu0 0.0
  %5182 = vmatprep.subr.mxu0 0.0
  %5183 = vmatpush1.msra.mxu0 0.0
  %5184 = vmatprep.subr.mxu0 0.0
  %5185 = vmatpush1.msra.mxu0 0.0
  %5186 = vmatprep.subr.mxu0 0.0
  %5187 = vmatpush1.msra.mxu0 0.0
  %5188 = vmatprep.subr.mxu0 0.0
  %5189 = vmatpush1.msra.mxu0 0.0
  %5190 = vmatprep.subr.mxu0 0.0
  %5191 = vmatpush1.msra.mxu0 0.0
  %5192 = vmatprep.subr.mxu0 0.0
  %5193 = vmatpush1.msra.mxu0 0.0
  %5194 = vmatprep.subr.mxu0 0.0
  %5195 = vmatpush1.msra.mxu0 0.0
  %5196 = vmatprep.subr.mxu0 0.0
  %5197 = vmatpush1.msra.mxu0 0.0
  %5198 = vmatprep.subr.mxu0 0.0
  %5199 = vmatpush1.msra.mxu0 0.0
  %5200 = vmatprep.subr.mxu0 0.0
  %5201 = vmatpush1.msra.mxu0 0.0
  %5202 = vmatprep.mubr.f32.mxu0 0.0
  %5203 = vmatmul.mubr.f32.gmra.mrb[0].mxu0 %v5133
  %v5204 = vpop.f32.mrb[0].mxu0
  %v5205 = vadd.f32 0.0, %v5204
  %v5206 = vpop.f32.mrb[0].mxu0
  %5207 = vmatprep.mubr.f32.mxu0 0.0
  %5208 = vmatmul.mubr.f32.gmra.mrb[0].mxu0 %v5136
  %v5209 = vpop.f32.mrb[0].mxu0
  %v5210 = vadd.f32 0.0, %v5209
  %v5211 = vpop.f32.mrb[0].mxu0
  %5212 = vdwg.mxu0
  %v5214 = vsel %vm2464, %v4644, 0
  %v5217 = vsel %vm2464, %v4645, 0
  %5219 = vmatprep.subr.mxu0 0.0
  %5220 = vmatpush1.msra.mxu0 %v3734
  %5221 = vmatprep.subr.mxu0 0.0
  %5222 = vmatpush1.msra.mxu0 %v3740
  %5223 = vmatprep.subr.mxu0 0.0
  %5224 = vmatpush1.msra.mxu0 0.0
  %5225 = vmatprep.subr.mxu0 0.0
  %5226 = vmatpush1.msra.mxu0 0.0
  %5227 = vmatprep.subr.mxu0 0.0
  %5228 = vmatpush1.msra.mxu0 0.0
  %5229 = vmatprep.subr.mxu0 0.0
  %5230 = vmatpush1.msra.mxu0 0.0
  %5231 = vmatprep.subr.mxu0 0.0
  %5232 = vmatpush1.msra.mxu0 0.0
  %5233 = vmatprep.subr.mxu0 0.0
  %5234 = vmatpush1.msra.mxu0 0.0
  %5235 = vmatprep.subr.mxu0 0.0
  %5236 = vmatpush1.msra.mxu0 0.0
  %5237 = vmatprep.subr.mxu0 0.0
  %5238 = vmatpush1.msra.mxu0 0.0
  %5239 = vmatprep.subr.mxu0 0.0
  %5240 = vmatpush1.msra.mxu0 0.0
  %5241 = vmatprep.subr.mxu0 0.0
  %5242 = vmatpush1.msra.mxu0 0.0
  %5243 = vmatprep.subr.mxu0 0.0
  %5244 = vmatpush1.msra.mxu0 0.0
  %5245 = vmatprep.subr.mxu0 0.0
  %5246 = vmatpush1.msra.mxu0 0.0
  %5247 = vmatprep.subr.mxu0 0.0
  %5248 = vmatpush1.msra.mxu0 0.0
  %5249 = vmatprep.subr.mxu0 0.0
  %5250 = vmatpush1.msra.mxu0 0.0
  %5251 = vmatprep.subr.mxu0 0.0
  %5252 = vmatpush1.msra.mxu0 0.0
  %5253 = vmatprep.subr.mxu0 0.0
  %5254 = vmatpush1.msra.mxu0 0.0
  %5255 = vmatprep.subr.mxu0 0.0
  %5256 = vmatpush1.msra.mxu0 0.0
  %5257 = vmatprep.subr.mxu0 0.0
  %5258 = vmatpush1.msra.mxu0 0.0
  %5259 = vmatprep.subr.mxu0 0.0
  %5260 = vmatpush1.msra.mxu0 0.0
  %5261 = vmatprep.subr.mxu0 0.0
  %5262 = vmatpush1.msra.mxu0 0.0
  %5263 = vmatprep.subr.mxu0 0.0
  %5264 = vmatpush1.msra.mxu0 0.0
  %5265 = vmatprep.subr.mxu0 0.0
  %5266 = vmatpush1.msra.mxu0 0.0
  %5267 = vmatprep.subr.mxu0 0.0
  %5268 = vmatpush1.msra.mxu0 0.0
  %5269 = vmatprep.subr.mxu0 0.0
  %5270 = vmatpush1.msra.mxu0 0.0
  %5271 = vmatprep.subr.mxu0 0.0
  %5272 = vmatpush1.msra.mxu0 0.0
  %5273 = vmatprep.subr.mxu0 0.0
  %5274 = vmatpush1.msra.mxu0 0.0
  %5275 = vmatprep.subr.mxu0 0.0
  %5276 = vmatpush1.msra.mxu0 0.0
  %5277 = vmatprep.subr.mxu0 0.0
  %5278 = vmatpush1.msra.mxu0 0.0
  %5279 = vmatprep.subr.mxu0 0.0
  %5280 = vmatpush1.msra.mxu0 0.0
  %5281 = vmatprep.subr.mxu0 0.0
  %5282 = vmatpush1.msra.mxu0 0.0
  %5283 = vmatprep.mubr.f32.mxu0 0.0
  %5284 = vmatmul.mubr.f32.gmra.mrb[0].mxu0 %v5214
  %v5285 = vpop.f32.mrb[0].mxu0
  %v5286 = vadd.f32 0.0, %v5285
  %v5287 = vpop.f32.mrb[0].mxu0
  %5288 = vmatprep.mubr.f32.mxu0 0.0
  %5289 = vmatmul.mubr.f32.gmra.mrb[0].mxu0 %v5217
  %v5290 = vpop.f32.mrb[0].mxu0
  %v5291 = vadd.f32 0.0, %v5290
  %v5292 = vpop.f32.mrb[0].mxu0
  %5293 = vdwg.mxu0
  %v5294 = vld [vmem:[%s9] sm:$0xff]
  %v5295 = vld [vmem:[%s9 + $0x8] sm:$0xff]
  %5296 = vrot.lane.b32.xlu0 %v3648, 112
  %v5297 = vpop.permute.xlu0 %5296
  %5298 = vrot.lane.b32.xlu0 %v3654, 112
  %v5299 = vpop.permute.xlu0 %5298
  %5300 = vrot.lane.b32.xlu0 %v3648, 48
  %v5301 = vpop.permute.xlu0 %5300
  %5302 = vrot.lane.b32.xlu0 %v3654, 48
  %v5303 = vpop.permute.xlu0 %5302
  %v5304 = vsel %vm2464, %v5297, 0
  %v5306 = vsel %vm2464, %v5299, 0
  %v5308 = vsel %vm2464, %v5301, 0
  %v5310 = vsel %vm2464, %v5303, 0
  %5312 = vmatprep.subr.mxu0 0.0
  %5313 = vmatpush1.xpose.msra.mxu0 %v5308
  %5314 = vmatprep.subr.mxu0 0.0
  %5315 = vmatpush1.xpose.msra.mxu0 %v5310
  %5316 = vmatprep.subr.mxu0 0.0
  %5317 = vmatpush1.xpose.msra.mxu0 0.0
  %5318 = vmatprep.subr.mxu0 0.0
  %5319 = vmatpush1.xpose.msra.mxu0 0.0
  %5320 = vmatprep.subr.mxu0 0.0
  %5321 = vmatpush1.xpose.msra.mxu0 0.0
  %5322 = vmatprep.subr.mxu0 0.0
  %5323 = vmatpush1.xpose.msra.mxu0 0.0
  %5324 = vmatprep.subr.mxu0 0.0
  %5325 = vmatpush1.xpose.msra.mxu0 0.0
  %5326 = vmatprep.subr.mxu0 0.0
  %5327 = vmatpush1.xpose.msra.mxu0 0.0
  %5328 = vmatprep.subr.mxu0 0.0
  %5329 = vmatpush1.xpose.msra.mxu0 0.0
  %5330 = vmatprep.subr.mxu0 0.0
  %5331 = vmatpush1.xpose.msra.mxu0 0.0
  %5332 = vmatprep.subr.mxu0 0.0
  %5333 = vmatpush1.xpose.msra.mxu0 0.0
  %5334 = vmatprep.subr.mxu0 0.0
  %5335 = vmatpush1.xpose.msra.mxu0 0.0
  %5336 = vmatprep.subr.mxu0 0.0
  %5337 = vmatpush1.xpose.msra.mxu0 0.0
  %5338 = vmatprep.subr.mxu0 0.0
  %5339 = vmatpush1.xpose.msra.mxu0 0.0
  %5340 = vmatprep.subr.mxu0 0.0
  %5341 = vmatpush1.xpose.msra.mxu0 0.0
  %5342 = vmatprep.subr.mxu0 0.0
  %5343 = vmatpush1.xpose.msra.mxu0 0.0
  %5344 = vmatprep.subr.mxu0 0.0
  %5345 = vmatpush1.xpose.msra.mxu0 0.0
  %5346 = vmatprep.subr.mxu0 0.0
  %5347 = vmatpush1.xpose.msra.mxu0 0.0
  %5348 = vmatprep.subr.mxu0 0.0
  %5349 = vmatpush1.xpose.msra.mxu0 0.0
  %5350 = vmatprep.subr.mxu0 0.0
  %5351 = vmatpush1.xpose.msra.mxu0 0.0
  %5352 = vmatprep.subr.mxu0 0.0
  %5353 = vmatpush1.xpose.msra.mxu0 0.0
  %5354 = vmatprep.subr.mxu0 0.0
  %5355 = vmatpush1.xpose.msra.mxu0 0.0
  %5356 = vmatprep.subr.mxu0 0.0
  %5357 = vmatpush1.xpose.msra.mxu0 0.0
  %5358 = vmatprep.subr.mxu0 0.0
  %5359 = vmatpush1.xpose.msra.mxu0 0.0
  %5360 = vmatprep.subr.mxu0 0.0
  %5361 = vmatpush1.xpose.msra.mxu0 0.0
  %5362 = vmatprep.subr.mxu0 0.0
  %5363 = vmatpush1.xpose.msra.mxu0 0.0
  %5364 = vmatprep.subr.mxu0 0.0
  %5365 = vmatpush1.xpose.msra.mxu0 0.0
  %5366 = vmatprep.subr.mxu0 0.0
  %5367 = vmatpush1.xpose.msra.mxu0 0.0
  %5368 = vmatprep.subr.mxu0 0.0
  %5369 = vmatpush1.xpose.msra.mxu0 0.0
  %5370 = vmatprep.subr.mxu0 0.0
  %5371 = vmatpush1.xpose.msra.mxu0 0.0
  %5372 = vmatprep.subr.mxu0 0.0
  %5373 = vmatpush1.xpose.msra.mxu0 0.0
  %5374 = vmatprep.subr.mxu0 0.0
  %5375 = vmatpush1.xpose.msra.mxu0 0.0
  %5376 = vmatprep.mubr.f32.mxu0 0.0
  %5377 = vmatmul.mubr.f32.gmra.mrb[0].mxu0 %v5304
  %v5378 = vpop.f32.mrb[0].mxu0
  %v5379 = vadd.f32 0.0, %v5378
  %v5380 = vpop.f32.mrb[0].mxu0
  %5381 = vmatprep.mubr.f32.mxu0 0.0
  %5382 = vmatmul.mubr.f32.gmra.mrb[0].mxu0 %v5306
  %v5383 = vpop.f32.mrb[0].mxu0
  %v5384 = vadd.f32 0.0, %v5383
  %v5385 = vpop.f32.mrb[0].mxu0
  %5386 = vdwg.mxu0
  %5387 = vrot.lane.b32.xlu0 %v3660, 112
  %v5388 = vpop.permute.xlu0 %5387
  %5389 = vrot.lane.b32.xlu0 %v3666, 112
  %v5390 = vpop.permute.xlu0 %5389
  %5391 = vrot.lane.b32.xlu0 %v3660, 48
  %v5392 = vpop.permute.xlu0 %5391
  %5393 = vrot.lane.b32.xlu0 %v3666, 48
  %v5394 = vpop.permute.xlu0 %5393
  %v5395 = vsel %vm2464, %v5388, 0
  %v5397 = vsel %vm2464, %v5390, 0
  %v5399 = vsel %vm2464, %v5392, 0
  %v5401 = vsel %vm2464, %v5394, 0
  %5403 = vmatprep.subr.mxu0 0.0
  %5404 = vmatpush1.xpose.msra.mxu0 %v5399
  %5405 = vmatprep.subr.mxu0 0.0
  %5406 = vmatpush1.xpose.msra.mxu0 %v5401
  %5407 = vmatprep.subr.mxu0 0.0
  %5408 = vmatpush1.xpose.msra.mxu0 0.0
  %5409 = vmatprep.subr.mxu0 0.0
  %5410 = vmatpush1.xpose.msra.mxu0 0.0
  %5411 = vmatprep.subr.mxu0 0.0
  %5412 = vmatpush1.xpose.msra.mxu0 0.0
  %5413 = vmatprep.subr.mxu0 0.0
  %5414 = vmatpush1.xpose.msra.mxu0 0.0
  %5415 = vmatprep.subr.mxu0 0.0
  %5416 = vmatpush1.xpose.msra.mxu0 0.0
  %5417 = vmatprep.subr.mxu0 0.0
  %5418 = vmatpush1.xpose.msra.mxu0 0.0
  %5419 = vmatprep.subr.mxu0 0.0
  %5420 = vmatpush1.xpose.msra.mxu0 0.0
  %5421 = vmatprep.subr.mxu0 0.0
  %5422 = vmatpush1.xpose.msra.mxu0 0.0
  %5423 = vmatprep.subr.mxu0 0.0
  %5424 = vmatpush1.xpose.msra.mxu0 0.0
  %5425 = vmatprep.subr.mxu0 0.0
  %5426 = vmatpush1.xpose.msra.mxu0 0.0
  %5427 = vmatprep.subr.mxu0 0.0
  %5428 = vmatpush1.xpose.msra.mxu0 0.0
  %5429 = vmatprep.subr.mxu0 0.0
  %5430 = vmatpush1.xpose.msra.mxu0 0.0
  %5431 = vmatprep.subr.mxu0 0.0
  %5432 = vmatpush1.xpose.msra.mxu0 0.0
  %5433 = vmatprep.subr.mxu0 0.0
  %5434 = vmatpush1.xpose.msra.mxu0 0.0
  %5435 = vmatprep.subr.mxu0 0.0
  %5436 = vmatpush1.xpose.msra.mxu0 0.0
  %5437 = vmatprep.subr.mxu0 0.0
  %5438 = vmatpush1.xpose.msra.mxu0 0.0
  %5439 = vmatprep.subr.mxu0 0.0
  %5440 = vmatpush1.xpose.msra.mxu0 0.0
  %5441 = vmatprep.subr.mxu0 0.0
  %5442 = vmatpush1.xpose.msra.mxu0 0.0
  %5443 = vmatprep.subr.mxu0 0.0
  %5444 = vmatpush1.xpose.msra.mxu0 0.0
  %5445 = vmatprep.subr.mxu0 0.0
  %5446 = vmatpush1.xpose.msra.mxu0 0.0
  %5447 = vmatprep.subr.mxu0 0.0
  %5448 = vmatpush1.xpose.msra.mxu0 0.0
  %5449 = vmatprep.subr.mxu0 0.0
  %5450 = vmatpush1.xpose.msra.mxu0 0.0
  %5451 = vmatprep.subr.mxu0 0.0
  %5452 = vmatpush1.xpose.msra.mxu0 0.0
  %5453 = vmatprep.subr.mxu0 0.0
  %5454 = vmatpush1.xpose.msra.mxu0 0.0
  %5455 = vmatprep.subr.mxu0 0.0
  %5456 = vmatpush1.xpose.msra.mxu0 0.0
  %5457 = vmatprep.subr.mxu0 0.0
  %5458 = vmatpush1.xpose.msra.mxu0 0.0
  %5459 = vmatprep.subr.mxu0 0.0
  %5460 = vmatpush1.xpose.msra.mxu0 0.0
  %5461 = vmatprep.subr.mxu0 0.0
  %5462 = vmatpush1.xpose.msra.mxu0 0.0
  %5463 = vmatprep.subr.mxu0 0.0
  %5464 = vmatpush1.xpose.msra.mxu0 0.0
  %5465 = vmatprep.subr.mxu0 0.0
  %5466 = vmatpush1.xpose.msra.mxu0 0.0
  %5467 = vmatprep.mubr.f32.mxu0 0.0
  %5468 = vmatmul.mubr.f32.gmra.mrb[0].mxu0 %v5395
  %v5469 = vpop.f32.mrb[0].mxu0
  %v5470 = vadd.f32 0.0, %v5469
  %v5471 = vpop.f32.mrb[0].mxu0
  %5472 = vmatprep.mubr.f32.mxu0 0.0
  %5473 = vmatmul.mubr.f32.gmra.mrb[0].mxu0 %v5397
  %v5474 = vpop.f32.mrb[0].mxu0
  %v5475 = vadd.f32 0.0, %v5474
  %v5476 = vpop.f32.mrb[0].mxu0
  %5477 = vdwg.mxu0
  %5478 = vrot.lane.b32.xlu0 %v3672, 112
  %v5479 = vpop.permute.xlu0 %5478
  %5480 = vrot.lane.b32.xlu0 %v3678, 112
  %v5481 = vpop.permute.xlu0 %5480
  %5482 = vrot.lane.b32.xlu0 %v3672, 48
  %v5483 = vpop.permute.xlu0 %5482
  %5484 = vrot.lane.b32.xlu0 %v3678, 48
  %v5485 = vpop.permute.xlu0 %5484
  %v5486 = vsel %vm2464, %v5479, 0
  %v5488 = vsel %vm2464, %v5481, 0
  %v5490 = vsel %vm2464, %v5483, 0
  %v5492 = vsel %vm2464, %v5485, 0
  %5494 = vmatprep.subr.mxu0 0.0
  %5495 = vmatpush1.xpose.msra.mxu0 %v5490
  %5496 = vmatprep.subr.mxu0 0.0
  %5497 = vmatpush1.xpose.msra.mxu0 %v5492
  %5498 = vmatprep.subr.mxu0 0.0
  %5499 = vmatpush1.xpose.msra.mxu0 0.0
  %5500 = vmatprep.subr.mxu0 0.0
  %5501 = vmatpush1.xpose.msra.mxu0 0.0
  %5502 = vmatprep.subr.mxu0 0.0
  %5503 = vmatpush1.xpose.msra.mxu0 0.0
  %5504 = vmatprep.subr.mxu0 0.0
  %5505 = vmatpush1.xpose.msra.mxu0 0.0
  %5506 = vmatprep.subr.mxu0 0.0
  %5507 = vmatpush1.xpose.msra.mxu0 0.0
  %5508 = vmatprep.subr.mxu0 0.0
  %5509 = vmatpush1.xpose.msra.mxu0 0.0
  %5510 = vmatprep.subr.mxu0 0.0
  %5511 = vmatpush1.xpose.msra.mxu0 0.0
  %5512 = vmatprep.subr.mxu0 0.0
  %5513 = vmatpush1.xpose.msra.mxu0 0.0
  %5514 = vmatprep.subr.mxu0 0.0
  %5515 = vmatpush1.xpose.msra.mxu0 0.0
  %5516 = vmatprep.subr.mxu0 0.0
  %5517 = vmatpush1.xpose.msra.mxu0 0.0
  %5518 = vmatprep.subr.mxu0 0.0
  %5519 = vmatpush1.xpose.msra.mxu0 0.0
  %5520 = vmatprep.subr.mxu0 0.0
  %5521 = vmatpush1.xpose.msra.mxu0 0.0
  %5522 = vmatprep.subr.mxu0 0.0
  %5523 = vmatpush1.xpose.msra.mxu0 0.0
  %5524 = vmatprep.subr.mxu0 0.0
  %5525 = vmatpush1.xpose.msra.mxu0 0.0
  %5526 = vmatprep.subr.mxu0 0.0
  %5527 = vmatpush1.xpose.msra.mxu0 0.0
  %5528 = vmatprep.subr.mxu0 0.0
  %5529 = vmatpush1.xpose.msra.mxu0 0.0
  %5530 = vmatprep.subr.mxu0 0.0
  %5531 = vmatpush1.xpose.msra.mxu0 0.0
  %5532 = vmatprep.subr.mxu0 0.0
  %5533 = vmatpush1.xpose.msra.mxu0 0.0
  %5534 = vmatprep.subr.mxu0 0.0
  %5535 = vmatpush1.xpose.msra.mxu0 0.0
  %5536 = vmatprep.subr.mxu0 0.0
  %5537 = vmatpush1.xpose.msra.mxu0 0.0
  %5538 = vmatprep.subr.mxu0 0.0
  %5539 = vmatpush1.xpose.msra.mxu0 0.0
  %5540 = vmatprep.subr.mxu0 0.0
  %5541 = vmatpush1.xpose.msra.mxu0 0.0
  %5542 = vmatprep.subr.mxu0 0.0
  %5543 = vmatpush1.xpose.msra.mxu0 0.0
  %5544 = vmatprep.subr.mxu0 0.0
  %5545 = vmatpush1.xpose.msra.mxu0 0.0
  %5546 = vmatprep.subr.mxu0 0.0
  %5547 = vmatpush1.xpose.msra.mxu0 0.0
  %5548 = vmatprep.subr.mxu0 0.0
  %5549 = vmatpush1.xpose.msra.mxu0 0.0
  %5550 = vmatprep.subr.mxu0 0.0
  %5551 = vmatpush1.xpose.msra.mxu0 0.0
  %5552 = vmatprep.subr.mxu0 0.0
  %5553 = vmatpush1.xpose.msra.mxu0 0.0
  %5554 = vmatprep.subr.mxu0 0.0
  %5555 = vmatpush1.xpose.msra.mxu0 0.0
  %5556 = vmatprep.subr.mxu0 0.0
  %5557 = vmatpush1.xpose.msra.mxu0 0.0
  %5558 = vmatprep.mubr.f32.mxu0 0.0
  %5559 = vmatmul.mubr.f32.gmra.mrb[0].mxu0 %v5486
  %v5560 = vpop.f32.mrb[0].mxu0
  %v5561 = vadd.f32 0.0, %v5560
  %v5562 = vpop.f32.mrb[0].mxu0
  %5563 = vmatprep.mubr.f32.mxu0 0.0
  %5564 = vmatmul.mubr.f32.gmra.mrb[0].mxu0 %v5488
  %v5565 = vpop.f32.mrb[0].mxu0
  %v5566 = vadd.f32 0.0, %v5565
  %v5567 = vpop.f32.mrb[0].mxu0
  %5568 = vdwg.mxu0
  %5569 = vrot.lane.b32.xlu0 %v3684, 112
  %v5570 = vpop.permute.xlu0 %5569
  %5571 = vrot.lane.b32.xlu0 %v3690, 112
  %v5572 = vpop.permute.xlu0 %5571
  %5573 = vrot.lane.b32.xlu0 %v3684, 48
  %v5574 = vpop.permute.xlu0 %5573
  %5575 = vrot.lane.b32.xlu0 %v3690, 48
  %v5576 = vpop.permute.xlu0 %5575
  %v5577 = vsel %vm2464, %v5570, 0
  %v5579 = vsel %vm2464, %v5572, 0
  %v5581 = vsel %vm2464, %v5574, 0
  %v5583 = vsel %vm2464, %v5576, 0
  %5585 = vmatprep.subr.mxu0 0.0
  %5586 = vmatpush1.xpose.msra.mxu0 %v5581
  %5587 = vmatprep.subr.mxu0 0.0
  %5588 = vmatpush1.xpose.msra.mxu0 %v5583
  %5589 = vmatprep.subr.mxu0 0.0
  %5590 = vmatpush1.xpose.msra.mxu0 0.0
  %5591 = vmatprep.subr.mxu0 0.0
  %5592 = vmatpush1.xpose.msra.mxu0 0.0
  %5593 = vmatprep.subr.mxu0 0.0
  %5594 = vmatpush1.xpose.msra.mxu0 0.0
  %5595 = vmatprep.subr.mxu0 0.0
  %5596 = vmatpush1.xpose.msra.mxu0 0.0
  %5597 = vmatprep.subr.mxu0 0.0
  %5598 = vmatpush1.xpose.msra.mxu0 0.0
  %5599 = vmatprep.subr.mxu0 0.0
  %5600 = vmatpush1.xpose.msra.mxu0 0.0
  %5601 = vmatprep.subr.mxu0 0.0
  %5602 = vmatpush1.xpose.msra.mxu0 0.0
  %5603 = vmatprep.subr.mxu0 0.0
  %5604 = vmatpush1.xpose.msra.mxu0 0.0
  %5605 = vmatprep.subr.mxu0 0.0
  %5606 = vmatpush1.xpose.msra.mxu0 0.0
  %5607 = vmatprep.subr.mxu0 0.0
  %5608 = vmatpush1.xpose.msra.mxu0 0.0
  %5609 = vmatprep.subr.mxu0 0.0
  %5610 = vmatpush1.xpose.msra.mxu0 0.0
  %5611 = vmatprep.subr.mxu0 0.0
  %5612 = vmatpush1.xpose.msra.mxu0 0.0
  %5613 = vmatprep.subr.mxu0 0.0
  %5614 = vmatpush1.xpose.msra.mxu0 0.0
  %5615 = vmatprep.subr.mxu0 0.0
  %5616 = vmatpush1.xpose.msra.mxu0 0.0
  %5617 = vmatprep.subr.mxu0 0.0
  %5618 = vmatpush1.xpose.msra.mxu0 0.0
  %5619 = vmatprep.subr.mxu0 0.0
  %5620 = vmatpush1.xpose.msra.mxu0 0.0
  %5621 = vmatprep.subr.mxu0 0.0
  %5622 = vmatpush1.xpose.msra.mxu0 0.0
  %5623 = vmatprep.subr.mxu0 0.0
  %5624 = vmatpush1.xpose.msra.mxu0 0.0
  %5625 = vmatprep.subr.mxu0 0.0
  %5626 = vmatpush1.xpose.msra.mxu0 0.0
  %5627 = vmatprep.subr.mxu0 0.0
  %5628 = vmatpush1.xpose.msra.mxu0 0.0
  %5629 = vmatprep.subr.mxu0 0.0
  %5630 = vmatpush1.xpose.msra.mxu0 0.0
  %5631 = vmatprep.subr.mxu0 0.0
  %5632 = vmatpush1.xpose.msra.mxu0 0.0
  %5633 = vmatprep.subr.mxu0 0.0
  %5634 = vmatpush1.xpose.msra.mxu0 0.0
  %5635 = vmatprep.subr.mxu0 0.0
  %5636 = vmatpush1.xpose.msra.mxu0 0.0
  %5637 = vmatprep.subr.mxu0 0.0
  %5638 = vmatpush1.xpose.msra.mxu0 0.0
  %5639 = vmatprep.subr.mxu0 0.0
  %5640 = vmatpush1.xpose.msra.mxu0 0.0
  %5641 = vmatprep.subr.mxu0 0.0
  %5642 = vmatpush1.xpose.msra.mxu0 0.0
  %5643 = vmatprep.subr.mxu0 0.0
  %5644 = vmatpush1.xpose.msra.mxu0 0.0
  %5645 = vmatprep.subr.mxu0 0.0
  %5646 = vmatpush1.xpose.msra.mxu0 0.0
  %5647 = vmatprep.subr.mxu0 0.0
  %5648 = vmatpush1.xpose.msra.mxu0 0.0
  %5649 = vmatprep.mubr.f32.mxu0 0.0
  %5650 = vmatmul.mubr.f32.gmra.mrb[0].mxu0 %v5577
  %v5651 = vpop.f32.mrb[0].mxu0
  %v5652 = vadd.f32 0.0, %v5651
  %v5653 = vpop.f32.mrb[0].mxu0
  %5654 = vmatprep.mubr.f32.mxu0 0.0
  %5655 = vmatmul.mubr.f32.gmra.mrb[0].mxu0 %v5579
  %v5656 = vpop.f32.mrb[0].mxu0
  %v5657 = vadd.f32 0.0, %v5656
  %v5658 = vpop.f32.mrb[0].mxu0
  %5659 = vdwg.mxu0
  %5660 = vrot.lane.b32.xlu0 %v3696, 112
  %v5661 = vpop.permute.xlu0 %5660
  %5662 = vrot.lane.b32.xlu0 %v3702, 112
  %v5663 = vpop.permute.xlu0 %5662
  %5664 = vrot.lane.b32.xlu0 %v3696, 48
  %v5665 = vpop.permute.xlu0 %5664
  %5666 = vrot.lane.b32.xlu0 %v3702, 48
  %v5667 = vpop.permute.xlu0 %5666
  %v5668 = vsel %vm2464, %v5661, 0
  %v5670 = vsel %vm2464, %v5663, 0
  %v5672 = vsel %vm2464, %v5665, 0
  %v5674 = vsel %vm2464, %v5667, 0
  %5676 = vmatprep.subr.mxu0 0.0
  %5677 = vmatpush1.xpose.msra.mxu0 %v5672
  %5678 = vmatprep.subr.mxu0 0.0
  %5679 = vmatpush1.xpose.msra.mxu0 %v5674
  %5680 = vmatprep.subr.mxu0 0.0
  %5681 = vmatpush1.xpose.msra.mxu0 0.0
  %5682 = vmatprep.subr.mxu0 0.0
  %5683 = vmatpush1.xpose.msra.mxu0 0.0
  %5684 = vmatprep.subr.mxu0 0.0
  %5685 = vmatpush1.xpose.msra.mxu0 0.0
  %5686 = vmatprep.subr.mxu0 0.0
  %5687 = vmatpush1.xpose.msra.mxu0 0.0
  %5688 = vmatprep.subr.mxu0 0.0
  %5689 = vmatpush1.xpose.msra.mxu0 0.0
  %5690 = vmatprep.subr.mxu0 0.0
  %5691 = vmatpush1.xpose.msra.mxu0 0.0
  %5692 = vmatprep.subr.mxu0 0.0
  %5693 = vmatpush1.xpose.msra.mxu0 0.0
  %5694 = vmatprep.subr.mxu0 0.0
  %5695 = vmatpush1.xpose.msra.mxu0 0.0
  %5696 = vmatprep.subr.mxu0 0.0
  %5697 = vmatpush1.xpose.msra.mxu0 0.0
  %5698 = vmatprep.subr.mxu0 0.0
  %5699 = vmatpush1.xpose.msra.mxu0 0.0
  %5700 = vmatprep.subr.mxu0 0.0
  %5701 = vmatpush1.xpose.msra.mxu0 0.0
  %5702 = vmatprep.subr.mxu0 0.0
  %5703 = vmatpush1.xpose.msra.mxu0 0.0
  %5704 = vmatprep.subr.mxu0 0.0
  %5705 = vmatpush1.xpose.msra.mxu0 0.0
  %5706 = vmatprep.subr.mxu0 0.0
  %5707 = vmatpush1.xpose.msra.mxu0 0.0
  %5708 = vmatprep.subr.mxu0 0.0
  %5709 = vmatpush1.xpose.msra.mxu0 0.0
  %5710 = vmatprep.subr.mxu0 0.0
  %5711 = vmatpush1.xpose.msra.mxu0 0.0
  %5712 = vmatprep.subr.mxu0 0.0
  %5713 = vmatpush1.xpose.msra.mxu0 0.0
  %5714 = vmatprep.subr.mxu0 0.0
  %5715 = vmatpush1.xpose.msra.mxu0 0.0
  %5716 = vmatprep.subr.mxu0 0.0
  %5717 = vmatpush1.xpose.msra.mxu0 0.0
  %5718 = vmatprep.subr.mxu0 0.0
  %5719 = vmatpush1.xpose.msra.mxu0 0.0
  %5720 = vmatprep.subr.mxu0 0.0
  %5721 = vmatpush1.xpose.msra.mxu0 0.0
  %5722 = vmatprep.subr.mxu0 0.0
  %5723 = vmatpush1.xpose.msra.mxu0 0.0
  %5724 = vmatprep.subr.mxu0 0.0
  %5725 = vmatpush1.xpose.msra.mxu0 0.0
  %5726 = vmatprep.subr.mxu0 0.0
  %5727 = vmatpush1.xpose.msra.mxu0 0.0
  %5728 = vmatprep.subr.mxu0 0.0
  %5729 = vmatpush1.xpose.msra.mxu0 0.0
  %5730 = vmatprep.subr.mxu0 0.0
  %5731 = vmatpush1.xpose.msra.mxu0 0.0
  %5732 = vmatprep.subr.mxu0 0.0
  %5733 = vmatpush1.xpose.msra.mxu0 0.0
  %5734 = vmatprep.subr.mxu0 0.0
  %5735 = vmatpush1.xpose.msra.mxu0 0.0
  %5736 = vmatprep.subr.mxu0 0.0
  %5737 = vmatpush1.xpose.msra.mxu0 0.0
  %5738 = vmatprep.subr.mxu0 0.0
  %5739 = vmatpush1.xpose.msra.mxu0 0.0
  %5740 = vmatprep.mubr.f32.mxu0 0.0
  %5741 = vmatmul.mubr.f32.gmra.mrb[0].mxu0 %v5668
  %v5742 = vpop.f32.mrb[0].mxu0
  %v5743 = vadd.f32 0.0, %v5742
  %v5744 = vpop.f32.mrb[0].mxu0
  %5745 = vmatprep.mubr.f32.mxu0 0.0
  %5746 = vmatmul.mubr.f32.gmra.mrb[0].mxu0 %v5670
  %v5747 = vpop.f32.mrb[0].mxu0
  %v5748 = vadd.f32 0.0, %v5747
  %v5749 = vpop.f32.mrb[0].mxu0
  %5750 = vdwg.mxu0
  %5751 = vrot.lane.b32.xlu0 %v3708, 112
  %v5752 = vpop.permute.xlu0 %5751
  %5753 = vrot.lane.b32.xlu0 %v3714, 112
  %v5754 = vpop.permute.xlu0 %5753
  %5755 = vrot.lane.b32.xlu0 %v3708, 48
  %v5756 = vpop.permute.xlu0 %5755
  %5757 = vrot.lane.b32.xlu0 %v3714, 48
  %v5758 = vpop.permute.xlu0 %5757
  %v5759 = vsel %vm2464, %v5752, 0
  %v5761 = vsel %vm2464, %v5754, 0
  %v5763 = vsel %vm2464, %v5756, 0
  %v5765 = vsel %vm2464, %v5758, 0
  %5767 = vmatprep.subr.mxu0 0.0
  %5768 = vmatpush1.xpose.msra.mxu0 %v5763
  %5769 = vmatprep.subr.mxu0 0.0
  %5770 = vmatpush1.xpose.msra.mxu0 %v5765
  %5771 = vmatprep.subr.mxu0 0.0
  %5772 = vmatpush1.xpose.msra.mxu0 0.0
  %5773 = vmatprep.subr.mxu0 0.0
  %5774 = vmatpush1.xpose.msra.mxu0 0.0
  %5775 = vmatprep.subr.mxu0 0.0
  %5776 = vmatpush1.xpose.msra.mxu0 0.0
  %5777 = vmatprep.subr.mxu0 0.0
  %5778 = vmatpush1.xpose.msra.mxu0 0.0
  %5779 = vmatprep.subr.mxu0 0.0
  %5780 = vmatpush1.xpose.msra.mxu0 0.0
  %5781 = vmatprep.subr.mxu0 0.0
  %5782 = vmatpush1.xpose.msra.mxu0 0.0
  %5783 = vmatprep.subr.mxu0 0.0
  %5784 = vmatpush1.xpose.msra.mxu0 0.0
  %5785 = vmatprep.subr.mxu0 0.0
  %5786 = vmatpush1.xpose.msra.mxu0 0.0
  %5787 = vmatprep.subr.mxu0 0.0
  %5788 = vmatpush1.xpose.msra.mxu0 0.0
  %5789 = vmatprep.subr.mxu0 0.0
  %5790 = vmatpush1.xpose.msra.mxu0 0.0
  %5791 = vmatprep.subr.mxu0 0.0
  %5792 = vmatpush1.xpose.msra.mxu0 0.0
  %5793 = vmatprep.subr.mxu0 0.0
  %5794 = vmatpush1.xpose.msra.mxu0 0.0
  %5795 = vmatprep.subr.mxu0 0.0
  %5796 = vmatpush1.xpose.msra.mxu0 0.0
  %5797 = vmatprep.subr.mxu0 0.0
  %5798 = vmatpush1.xpose.msra.mxu0 0.0
  %5799 = vmatprep.subr.mxu0 0.0
  %5800 = vmatpush1.xpose.msra.mxu0 0.0
  %5801 = vmatprep.subr.mxu0 0.0
  %5802 = vmatpush1.xpose.msra.mxu0 0.0
  %5803 = vmatprep.subr.mxu0 0.0
  %5804 = vmatpush1.xpose.msra.mxu0 0.0
  %5805 = vmatprep.subr.mxu0 0.0
  %5806 = vmatpush1.xpose.msra.mxu0 0.0
  %5807 = vmatprep.subr.mxu0 0.0
  %5808 = vmatpush1.xpose.msra.mxu0 0.0
  %5809 = vmatprep.subr.mxu0 0.0
  %5810 = vmatpush1.xpose.msra.mxu0 0.0
  %5811 = vmatprep.subr.mxu0 0.0
  %5812 = vmatpush1.xpose.msra.mxu0 0.0
  %5813 = vmatprep.subr.mxu0 0.0
  %5814 = vmatpush1.xpose.msra.mxu0 0.0
  %5815 = vmatprep.subr.mxu0 0.0
  %5816 = vmatpush1.xpose.msra.mxu0 0.0
  %5817 = vmatprep.subr.mxu0 0.0
  %5818 = vmatpush1.xpose.msra.mxu0 0.0
  %5819 = vmatprep.subr.mxu0 0.0
  %5820 = vmatpush1.xpose.msra.mxu0 0.0
  %5821 = vmatprep.subr.mxu0 0.0
  %5822 = vmatpush1.xpose.msra.mxu0 0.0
  %5823 = vmatprep.subr.mxu0 0.0
  %5824 = vmatpush1.xpose.msra.mxu0 0.0
  %5825 = vmatprep.subr.mxu0 0.0
  %5826 = vmatpush1.xpose.msra.mxu0 0.0
  %5827 = vmatprep.subr.mxu0 0.0
  %5828 = vmatpush1.xpose.msra.mxu0 0.0
  %5829 = vmatprep.subr.mxu0 0.0
  %5830 = vmatpush1.xpose.msra.mxu0 0.0
  %5831 = vmatprep.mubr.f32.mxu0 0.0
  %5832 = vmatmul.mubr.f32.gmra.mrb[0].mxu0 %v5759
  %v5833 = vpop.f32.mrb[0].mxu0
  %v5834 = vadd.f32 0.0, %v5833
  %v5835 = vpop.f32.mrb[0].mxu0
  %5836 = vmatprep.mubr.f32.mxu0 0.0
  %5837 = vmatmul.mubr.f32.gmra.mrb[0].mxu0 %v5761
  %v5838 = vpop.f32.mrb[0].mxu0
  %v5839 = vadd.f32 0.0, %v5838
  %v5840 = vpop.f32.mrb[0].mxu0
  %5841 = vdwg.mxu0
  %5842 = vrot.lane.b32.xlu0 %v3720, 112
  %v5843 = vpop.permute.xlu0 %5842
  %5844 = vrot.lane.b32.xlu0 %v3726, 112
  %v5845 = vpop.permute.xlu0 %5844
  %5846 = vrot.lane.b32.xlu0 %v3720, 48
  %v5847 = vpop.permute.xlu0 %5846
  %5848 = vrot.lane.b32.xlu0 %v3726, 48
  %v5849 = vpop.permute.xlu0 %5848
  %v5850 = vsel %vm2464, %v5843, 0
  %v5852 = vsel %vm2464, %v5845, 0
  %v5854 = vsel %vm2464, %v5847, 0
  %v5856 = vsel %vm2464, %v5849, 0
  %5858 = vmatprep.subr.mxu0 0.0
  %5859 = vmatpush1.xpose.msra.mxu0 %v5854
  %5860 = vmatprep.subr.mxu0 0.0
  %5861 = vmatpush1.xpose.msra.mxu0 %v5856
  %5862 = vmatprep.subr.mxu0 0.0
  %5863 = vmatpush1.xpose.msra.mxu0 0.0
  %5864 = vmatprep.subr.mxu0 0.0
  %5865 = vmatpush1.xpose.msra.mxu0 0.0
  %5866 = vmatprep.subr.mxu0 0.0
  %5867 = vmatpush1.xpose.msra.mxu0 0.0
  %5868 = vmatprep.subr.mxu0 0.0
  %5869 = vmatpush1.xpose.msra.mxu0 0.0
  %5870 = vmatprep.subr.mxu0 0.0
  %5871 = vmatpush1.xpose.msra.mxu0 0.0
  %5872 = vmatprep.subr.mxu0 0.0
  %5873 = vmatpush1.xpose.msra.mxu0 0.0
  %5874 = vmatprep.subr.mxu0 0.0
  %5875 = vmatpush1.xpose.msra.mxu0 0.0
  %5876 = vmatprep.subr.mxu0 0.0
  %5877 = vmatpush1.xpose.msra.mxu0 0.0
  %5878 = vmatprep.subr.mxu0 0.0
  %5879 = vmatpush1.xpose.msra.mxu0 0.0
  %5880 = vmatprep.subr.mxu0 0.0
  %5881 = vmatpush1.xpose.msra.mxu0 0.0
  %5882 = vmatprep.subr.mxu0 0.0
  %5883 = vmatpush1.xpose.msra.mxu0 0.0
  %5884 = vmatprep.subr.mxu0 0.0
  %5885 = vmatpush1.xpose.msra.mxu0 0.0
  %5886 = vmatprep.subr.mxu0 0.0
  %5887 = vmatpush1.xpose.msra.mxu0 0.0
  %5888 = vmatprep.subr.mxu0 0.0
  %5889 = vmatpush1.xpose.msra.mxu0 0.0
  %5890 = vmatprep.subr.mxu0 0.0
  %5891 = vmatpush1.xpose.msra.mxu0 0.0
  %5892 = vmatprep.subr.mxu0 0.0
  %5893 = vmatpush1.xpose.msra.mxu0 0.0
  %5894 = vmatprep.subr.mxu0 0.0
  %5895 = vmatpush1.xpose.msra.mxu0 0.0
  %5896 = vmatprep.subr.mxu0 0.0
  %5897 = vmatpush1.xpose.msra.mxu0 0.0
  %5898 = vmatprep.subr.mxu0 0.0
  %5899 = vmatpush1.xpose.msra.mxu0 0.0
  %5900 = vmatprep.subr.mxu0 0.0
  %5901 = vmatpush1.xpose.msra.mxu0 0.0
  %5902 = vmatprep.subr.mxu0 0.0
  %5903 = vmatpush1.xpose.msra.mxu0 0.0
  %5904 = vmatprep.subr.mxu0 0.0
  %5905 = vmatpush1.xpose.msra.mxu0 0.0
  %5906 = vmatprep.subr.mxu0 0.0
  %5907 = vmatpush1.xpose.msra.mxu0 0.0
  %5908 = vmatprep.subr.mxu0 0.0
  %5909 = vmatpush1.xpose.msra.mxu0 0.0
  %5910 = vmatprep.subr.mxu0 0.0
  %5911 = vmatpush1.xpose.msra.mxu0 0.0
  %5912 = vmatprep.subr.mxu0 0.0
  %5913 = vmatpush1.xpose.msra.mxu0 0.0
  %5914 = vmatprep.subr.mxu0 0.0
  %5915 = vmatpush1.xpose.msra.mxu0 0.0
  %5916 = vmatprep.subr.mxu0 0.0
  %5917 = vmatpush1.xpose.msra.mxu0 0.0
  %5918 = vmatprep.subr.mxu0 0.0
  %5919 = vmatpush1.xpose.msra.mxu0 0.0
  %5920 = vmatprep.subr.mxu0 0.0
  %5921 = vmatpush1.xpose.msra.mxu0 0.0
  %5922 = vmatprep.mubr.f32.mxu0 0.0
  %5923 = vmatmul.mubr.f32.gmra.mrb[0].mxu0 %v5850
  %v5924 = vpop.f32.mrb[0].mxu0
  %v5925 = vadd.f32 0.0, %v5924
  %v5926 = vpop.f32.mrb[0].mxu0
  %5927 = vmatprep.mubr.f32.mxu0 0.0
  %5928 = vmatmul.mubr.f32.gmra.mrb[0].mxu0 %v5852
  %v5929 = vpop.f32.mrb[0].mxu0
  %v5930 = vadd.f32 0.0, %v5929
  %v5931 = vpop.f32.mrb[0].mxu0
  %5932 = vdwg.mxu0
  %5933 = vrot.lane.b32.xlu0 %v3732, 112
  %v5934 = vpop.permute.xlu0 %5933
  %5935 = vrot.lane.b32.xlu0 %v3738, 112
  %v5936 = vpop.permute.xlu0 %5935
  %5937 = vrot.lane.b32.xlu0 %v3732, 48
  %v5938 = vpop.permute.xlu0 %5937
  %5939 = vrot.lane.b32.xlu0 %v3738, 48
  %v5940 = vpop.permute.xlu0 %5939
  %v5941 = vsel %vm2464, %v5934, 0
  %v5943 = vsel %vm2464, %v5936, 0
  %v5945 = vsel %vm2464, %v5938, 0
  %v5947 = vsel %vm2464, %v5940, 0
  %5949 = vmatprep.subr.mxu0 0.0
  %5950 = vmatpush1.xpose.msra.mxu0 %v5945
  %5951 = vmatprep.subr.mxu0 0.0
  %5952 = vmatpush1.xpose.msra.mxu0 %v5947
  %5953 = vmatprep.subr.mxu0 0.0
  %5954 = vmatpush1.xpose.msra.mxu0 0.0
  %5955 = vmatprep.subr.mxu0 0.0
  %5956 = vmatpush1.xpose.msra.mxu0 0.0
  %5957 = vmatprep.subr.mxu0 0.0
  %5958 = vmatpush1.xpose.msra.mxu0 0.0
  %5959 = vmatprep.subr.mxu0 0.0
  %5960 = vmatpush1.xpose.msra.mxu0 0.0
  %5961 = vmatprep.subr.mxu0 0.0
  %5962 = vmatpush1.xpose.msra.mxu0 0.0
  %5963 = vmatprep.subr.mxu0 0.0
  %5964 = vmatpush1.xpose.msra.mxu0 0.0
  %5965 = vmatprep.subr.mxu0 0.0
  %5966 = vmatpush1.xpose.msra.mxu0 0.0
  %5967 = vmatprep.subr.mxu0 0.0
  %5968 = vmatpush1.xpose.msra.mxu0 0.0
  %5969 = vmatprep.subr.mxu0 0.0
  %5970 = vmatpush1.xpose.msra.mxu0 0.0
  %5971 = vmatprep.subr.mxu0 0.0
  %5972 = vmatpush1.xpose.msra.mxu0 0.0
  %5973 = vmatprep.subr.mxu0 0.0
  %5974 = vmatpush1.xpose.msra.mxu0 0.0
  %5975 = vmatprep.subr.mxu0 0.0
  %5976 = vmatpush1.xpose.msra.mxu0 0.0
  %5977 = vmatprep.subr.mxu0 0.0
  %5978 = vmatpush1.xpose.msra.mxu0 0.0
  %5979 = vmatprep.subr.mxu0 0.0
  %5980 = vmatpush1.xpose.msra.mxu0 0.0
  %5981 = vmatprep.subr.mxu0 0.0
  %5982 = vmatpush1.xpose.msra.mxu0 0.0
  %5983 = vmatprep.subr.mxu0 0.0
  %5984 = vmatpush1.xpose.msra.mxu0 0.0
  %5985 = vmatprep.subr.mxu0 0.0
  %5986 = vmatpush1.xpose.msra.mxu0 0.0
  %5987 = vmatprep.subr.mxu0 0.0
  %5988 = vmatpush1.xpose.msra.mxu0 0.0
  %5989 = vmatprep.subr.mxu0 0.0
  %5990 = vmatpush1.xpose.msra.mxu0 0.0
  %5991 = vmatprep.subr.mxu0 0.0
  %5992 = vmatpush1.xpose.msra.mxu0 0.0
  %5993 = vmatprep.subr.mxu0 0.0
  %5994 = vmatpush1.xpose.msra.mxu0 0.0
  %5995 = vmatprep.subr.mxu0 0.0
  %5996 = vmatpush1.xpose.msra.mxu0 0.0
  %5997 = vmatprep.subr.mxu0 0.0
  %5998 = vmatpush1.xpose.msra.mxu0 0.0
  %5999 = vmatprep.subr.mxu0 0.0
  %6000 = vmatpush1.xpose.msra.mxu0 0.0
  %6001 = vmatprep.subr.mxu0 0.0
  %6002 = vmatpush1.xpose.msra.mxu0 0.0
  %6003 = vmatprep.subr.mxu0 0.0
  %6004 = vmatpush1.xpose.msra.mxu0 0.0
  %6005 = vmatprep.subr.mxu0 0.0
  %6006 = vmatpush1.xpose.msra.mxu0 0.0
  %6007 = vmatprep.subr.mxu0 0.0
  %6008 = vmatpush1.xpose.msra.mxu0 0.0
  %6009 = vmatprep.subr.mxu0 0.0
  %6010 = vmatpush1.xpose.msra.mxu0 0.0
  %6011 = vmatprep.subr.mxu0 0.0
  %6012 = vmatpush1.xpose.msra.mxu0 0.0
  %6013 = vmatprep.mubr.f32.mxu0 0.0
  %6014 = vmatmul.mubr.f32.gmra.mrb[0].mxu0 %v5941
  %v6015 = vpop.f32.mrb[0].mxu0
  %v6016 = vadd.f32 0.0, %v6015
  %v6017 = vpop.f32.mrb[0].mxu0
  %6018 = vmatprep.mubr.f32.mxu0 0.0
  %6019 = vmatmul.mubr.f32.gmra.mrb[0].mxu0 %v5943
  %v6020 = vpop.f32.mrb[0].mxu0
  %v6021 = vadd.f32 0.0, %v6020
  %v6022 = vpop.f32.mrb[0].mxu0
  %6023 = vdwg.mxu0
  %v6024 = vmul.f32 %v5379, 0.25
  %v6025 = vmul.f32 %v5384, 0.25
  %v6026 = vmul.f32 %v5470, 0.25
  %v6027 = vmul.f32 %v5475, 0.25
  %v6028 = vmul.f32 %v5561, 0.25
  %v6029 = vmul.f32 %v5566, 0.25
  %v6030 = vmul.f32 %v5652, 0.25
  %v6031 = vmul.f32 %v5657, 0.25
  %v6032 = vmul.f32 %v5743, 0.25
  %v6033 = vmul.f32 %v5748, 0.25
  %v6034 = vmul.f32 %v5834, 0.25
  %v6035 = vmul.f32 %v5839, 0.25
  %v6036 = vmul.f32 %v5925, 0.25
  %v6037 = vmul.f32 %v5930, 0.25
  %v6038 = vmul.f32 %v6016, 0.25
  %v6039 = vmul.f32 %v6021, 0.25
  %v6040 = vsel %vm2464, %v6024, -inf
  %6041 = vmax.xlane.f32.xlu0 %v6040
  %v6042 = vpop.xlane.xlu0 %6041
  %v6043 = vsel %vm2464, %v6025, -inf
  %6044 = vmax.xlane.f32.xlu0 %v6043
  %v6045 = vpop.xlane.xlu0 %6044
  %v6046 = vsel %vm2464, %v6026, -inf
  %6047 = vmax.xlane.f32.xlu0 %v6046
  %v6048 = vpop.xlane.xlu0 %6047
  %v6049 = vsel %vm2464, %v6027, -inf
  %6050 = vmax.xlane.f32.xlu0 %v6049
  %v6051 = vpop.xlane.xlu0 %6050
  %v6052 = vsel %vm2464, %v6028, -inf
  %6053 = vmax.xlane.f32.xlu0 %v6052
  %v6054 = vpop.xlane.xlu0 %6053
  %v6055 = vsel %vm2464, %v6029, -inf
  %6056 = vmax.xlane.f32.xlu0 %v6055
  %v6057 = vpop.xlane.xlu0 %6056
  %v6058 = vsel %vm2464, %v6030, -inf
  %6059 = vmax.xlane.f32.xlu0 %v6058
  %v6060 = vpop.xlane.xlu0 %6059
  %v6061 = vsel %vm2464, %v6031, -inf
  %6062 = vmax.xlane.f32.xlu0 %v6061
  %v6063 = vpop.xlane.xlu0 %6062
  %v6064 = vsel %vm2464, %v6032, -inf
  %6065 = vmax.xlane.f32.xlu0 %v6064
  %v6066 = vpop.xlane.xlu0 %6065
  %v6067 = vsel %vm2464, %v6033, -inf
  %6068 = vmax.xlane.f32.xlu0 %v6067
  %v6069 = vpop.xlane.xlu0 %6068
  %v6070 = vsel %vm2464, %v6034, -inf
  %6071 = vmax.xlane.f32.xlu0 %v6070
  %v6072 = vpop.xlane.xlu0 %6071
  %v6073 = vsel %vm2464, %v6035, -inf
  %6074 = vmax.xlane.f32.xlu0 %v6073
  %v6075 = vpop.xlane.xlu0 %6074
  %v6076 = vsel %vm2464, %v6036, -inf
  %6077 = vmax.xlane.f32.xlu0 %v6076
  %v6078 = vpop.xlane.xlu0 %6077
  %v6079 = vsel %vm2464, %v6037, -inf
  %6080 = vmax.xlane.f32.xlu0 %v6079
  %v6081 = vpop.xlane.xlu0 %6080
  %v6082 = vsel %vm2464, %v6038, -inf
  %6083 = vmax.xlane.f32.xlu0 %v6082
  %v6084 = vpop.xlane.xlu0 %6083
  %v6085 = vsel %vm2464, %v6039, -inf
  %6086 = vmax.xlane.f32.xlu0 %v6085
  %v6087 = vpop.xlane.xlu0 %6086
  %v6088 = vsub.f32 %v6024, %v6042
  %v6089 = vsub.f32 %v6025, %v6045
  %v6090 = vsub.f32 %v6026, %v6048
  %v6091 = vsub.f32 %v6027, %v6051
  %v6092 = vsub.f32 %v6028, %v6054
  %v6093 = vsub.f32 %v6029, %v6057
  %v6094 = vsub.f32 %v6030, %v6060
  %v6095 = vsub.f32 %v6031, %v6063
  %v6096 = vsub.f32 %v6032, %v6066
  %v6097 = vsub.f32 %v6033, %v6069
  %v6098 = vsub.f32 %v6034, %v6072
  %v6099 = vsub.f32 %v6035, %v6075
  %v6100 = vsub.f32 %v6036, %v6078
  %v6101 = vsub.f32 %v6037, %v6081
  %v6102 = vsub.f32 %v6038, %v6084
  %v6103 = vsub.f32 %v6039, %v6087
  %v6104 = vmul.f32 %v6088, 1.442695
  %v6105 = vpow.pop %v6104
  %v6106 = vmul.f32 %v6089, 1.442695
  %v6107 = vpow.pop %v6106
  %v6108 = vmul.f32 %v6090, 1.442695
  %v6109 = vpow.pop %v6108
  %v6110 = vmul.f32 %v6091, 1.442695
  %v6111 = vpow.pop %v6110
  %v6112 = vmul.f32 %v6092, 1.442695
  %v6113 = vpow.pop %v6112
  %v6114 = vmul.f32 %v6093, 1.442695
  %v6115 = vpow.pop %v6114
  %v6116 = vmul.f32 %v6094, 1.442695
  %v6117 = vpow.pop %v6116
  %v6118 = vmul.f32 %v6095, 1.442695
  %v6119 = vpow.pop %v6118
  %v6120 = vmul.f32 %v6096, 1.442695
  %v6121 = vpow.pop %v6120
  %v6122 = vmul.f32 %v6097, 1.442695
  %v6123 = vpow.pop %v6122
  %v6124 = vmul.f32 %v6098, 1.442695
  %v6125 = vpow.pop %v6124
  %v6126 = vmul.f32 %v6099, 1.442695
  %v6127 = vpow.pop %v6126
  %v6128 = vmul.f32 %v6100, 1.442695
  %v6129 = vpow.pop %v6128
  %v6130 = vmul.f32 %v6101, 1.442695
  %v6131 = vpow.pop %v6130
  %v6132 = vmul.f32 %v6102, 1.442695
  %v6133 = vpow.pop %v6132
  %v6134 = vmul.f32 %v6103, 1.442695
  %v6135 = vpow.pop %v6134
  %v6136 = vsel %vm2464, %v6105, 0.0
  %6137 = vadd.xlane.f32.xlu0 %v6136
  %v6138 = vpop.xlane.xlu0 %6137
  %v6139 = vsel %vm2464, %v6107, 0.0
  %6140 = vadd.xlane.f32.xlu0 %v6139
  %v6141 = vpop.xlane.xlu0 %6140
  %v6142 = vsel %vm2464, %v6109, 0.0
  %6143 = vadd.xlane.f32.xlu0 %v6142
  %v6144 = vpop.xlane.xlu0 %6143
  %v6145 = vsel %vm2464, %v6111, 0.0
  %6146 = vadd.xlane.f32.xlu0 %v6145
  %v6147 = vpop.xlane.xlu0 %6146
  %v6148 = vsel %vm2464, %v6113, 0.0
  %6149 = vadd.xlane.f32.xlu0 %v6148
  %v6150 = vpop.xlane.xlu0 %6149
  %v6151 = vsel %vm2464, %v6115, 0.0
  %6152 = vadd.xlane.f32.xlu0 %v6151
  %v6153 = vpop.xlane.xlu0 %6152
  %v6154 = vsel %vm2464, %v6117, 0.0
  %6155 = vadd.xlane.f32.xlu0 %v6154
  %v6156 = vpop.xlane.xlu0 %6155
  %v6157 = vsel %vm2464, %v6119, 0.0
  %6158 = vadd.xlane.f32.xlu0 %v6157
  %v6159 = vpop.xlane.xlu0 %6158
  %v6160 = vsel %vm2464, %v6121, 0.0
  %6161 = vadd.xlane.f32.xlu0 %v6160
  %v6162 = vpop.xlane.xlu0 %6161
  %v6163 = vsel %vm2464, %v6123, 0.0
  %6164 = vadd.xlane.f32.xlu0 %v6163
  %v6165 = vpop.xlane.xlu0 %6164
  %v6166 = vsel %vm2464, %v6125, 0.0
  %6167 = vadd.xlane.f32.xlu0 %v6166
  %v6168 = vpop.xlane.xlu0 %6167
  %v6169 = vsel %vm2464, %v6127, 0.0
  %6170 = vadd.xlane.f32.xlu0 %v6169
  %v6171 = vpop.xlane.xlu0 %6170
  %v6172 = vsel %vm2464, %v6129, 0.0
  %6173 = vadd.xlane.f32.xlu0 %v6172
  %v6174 = vpop.xlane.xlu0 %6173
  %v6175 = vsel %vm2464, %v6131, 0.0
  %6176 = vadd.xlane.f32.xlu0 %v6175
  %v6177 = vpop.xlane.xlu0 %6176
  %v6178 = vsel %vm2464, %v6133, 0.0
  %6179 = vadd.xlane.f32.xlu0 %v6178
  %v6180 = vpop.xlane.xlu0 %6179
  %v6181 = vsel %vm2464, %v6135, 0.0
  %6182 = vadd.xlane.f32.xlu0 %v6181
  %v6183 = vpop.xlane.xlu0 %6182
  %v6184 = vrcp.pop %v6138
  %v6185 = vrcp.pop %v6141
  %v6186 = vrcp.pop %v6144
  %v6187 = vrcp.pop %v6147
  %v6188 = vrcp.pop %v6150
  %v6189 = vrcp.pop %v6153
  %v6190 = vrcp.pop %v6156
  %v6191 = vrcp.pop %v6159
  %v6192 = vrcp.pop %v6162
  %v6193 = vrcp.pop %v6165
  %v6194 = vrcp.pop %v6168
  %v6195 = vrcp.pop %v6171
  %v6196 = vrcp.pop %v6174
  %v6197 = vrcp.pop %v6177
  %v6198 = vrcp.pop %v6180
  %v6199 = vrcp.pop %v6183
  %v6200 = vmul.f32 %v6105, %v6184
  %v6201 = vmul.f32 %v6107, %v6185
  %v6202 = vmul.f32 %v6109, %v6186
  %v6203 = vmul.f32 %v6111, %v6187
  %v6204 = vmul.f32 %v6113, %v6188
  %v6205 = vmul.f32 %v6115, %v6189
  %v6206 = vmul.f32 %v6117, %v6190
  %v6207 = vmul.f32 %v6119, %v6191
  %v6208 = vmul.f32 %v6121, %v6192
  %v6209 = vmul.f32 %v6123, %v6193
  %v6210 = vmul.f32 %v6125, %v6194
  %v6211 = vmul.f32 %v6127, %v6195
  %v6212 = vmul.f32 %v6129, %v6196
  %v6213 = vmul.f32 %v6131, %v6197
  %v6214 = vmul.f32 %v6133, %v6198
  %v6215 = vmul.f32 %v6135, %v6199
  %6218 = vrot.lane.b32.xlu0 %v3650, 112
  %v6219 = vpop.permute.xlu0 %6218
  %6220 = vrot.lane.b32.xlu0 %v3656, 112
  %v6221 = vpop.permute.xlu0 %6220
  %v6225 = vsel %vm2464, %v6200, 0
  %v6228 = vsel %vm2464, %v6201, 0
  %6230 = vmatprep.subr.mxu0 0.0
  %6231 = vmatpush1.msra.mxu0 %v6219
  %6232 = vmatprep.subr.mxu0 0.0
  %6233 = vmatpush1.msra.mxu0 %v6221
  %6234 = vmatprep.subr.mxu0 0.0
  %6235 = vmatpush1.msra.mxu0 0.0
  %6236 = vmatprep.subr.mxu0 0.0
  %6237 = vmatpush1.msra.mxu0 0.0
  %6238 = vmatprep.subr.mxu0 0.0
  %6239 = vmatpush1.msra.mxu0 0.0
  %6240 = vmatprep.subr.mxu0 0.0
  %6241 = vmatpush1.msra.mxu0 0.0
  %6242 = vmatprep.subr.mxu0 0.0
  %6243 = vmatpush1.msra.mxu0 0.0
  %6244 = vmatprep.subr.mxu0 0.0
  %6245 = vmatpush1.msra.mxu0 0.0
  %6246 = vmatprep.subr.mxu0 0.0
  %6247 = vmatpush1.msra.mxu0 0.0
  %6248 = vmatprep.subr.mxu0 0.0
  %6249 = vmatpush1.msra.mxu0 0.0
  %6250 = vmatprep.subr.mxu0 0.0
  %6251 = vmatpush1.msra.mxu0 0.0
  %6252 = vmatprep.subr.mxu0 0.0
  %6253 = vmatpush1.msra.mxu0 0.0
  %6254 = vmatprep.subr.mxu0 0.0
  %6255 = vmatpush1.msra.mxu0 0.0
  %6256 = vmatprep.subr.mxu0 0.0
  %6257 = vmatpush1.msra.mxu0 0.0
  %6258 = vmatprep.subr.mxu0 0.0
  %6259 = vmatpush1.msra.mxu0 0.0
  %6260 = vmatprep.subr.mxu0 0.0
  %6261 = vmatpush1.msra.mxu0 0.0
  %6262 = vmatprep.subr.mxu0 0.0
  %6263 = vmatpush1.msra.mxu0 0.0
  %6264 = vmatprep.subr.mxu0 0.0
  %6265 = vmatpush1.msra.mxu0 0.0
  %6266 = vmatprep.subr.mxu0 0.0
  %6267 = vmatpush1.msra.mxu0 0.0
  %6268 = vmatprep.subr.mxu0 0.0
  %6269 = vmatpush1.msra.mxu0 0.0
  %6270 = vmatprep.subr.mxu0 0.0
  %6271 = vmatpush1.msra.mxu0 0.0
  %6272 = vmatprep.subr.mxu0 0.0
  %6273 = vmatpush1.msra.mxu0 0.0
  %6274 = vmatprep.subr.mxu0 0.0
  %6275 = vmatpush1.msra.mxu0 0.0
  %6276 = vmatprep.subr.mxu0 0.0
  %6277 = vmatpush1.msra.mxu0 0.0
  %6278 = vmatprep.subr.mxu0 0.0
  %6279 = vmatpush1.msra.mxu0 0.0
  %6280 = vmatprep.subr.mxu0 0.0
  %6281 = vmatpush1.msra.mxu0 0.0
  %6282 = vmatprep.subr.mxu0 0.0
  %6283 = vmatpush1.msra.mxu0 0.0
  %6284 = vmatprep.subr.mxu0 0.0
  %6285 = vmatpush1.msra.mxu0 0.0
  %6286 = vmatprep.subr.mxu0 0.0
  %6287 = vmatpush1.msra.mxu0 0.0
  %6288 = vmatprep.subr.mxu0 0.0
  %6289 = vmatpush1.msra.mxu0 0.0
  %6290 = vmatprep.subr.mxu0 0.0
  %6291 = vmatpush1.msra.mxu0 0.0
  %6292 = vmatprep.subr.mxu0 0.0
  %6293 = vmatpush1.msra.mxu0 0.0
  %6294 = vmatprep.mubr.f32.mxu0 0.0
  %6295 = vmatmul.mubr.f32.gmra.mrb[0].mxu0 %v6225
  %v6296 = vpop.f32.mrb[0].mxu0
  %v6297 = vadd.f32 0.0, %v6296
  %v6298 = vpop.f32.mrb[0].mxu0
  %6299 = vmatprep.mubr.f32.mxu0 0.0
  %6300 = vmatmul.mubr.f32.gmra.mrb[0].mxu0 %v6228
  %v6301 = vpop.f32.mrb[0].mxu0
  %v6302 = vadd.f32 0.0, %v6301
  %v6303 = vpop.f32.mrb[0].mxu0
  %6304 = vdwg.mxu0
  %6307 = vrot.lane.b32.xlu0 %v3662, 112
  %v6308 = vpop.permute.xlu0 %6307
  %6309 = vrot.lane.b32.xlu0 %v3668, 112
  %v6310 = vpop.permute.xlu0 %6309
  %v6314 = vsel %vm2464, %v6202, 0
  %v6317 = vsel %vm2464, %v6203, 0
  %6319 = vmatprep.subr.mxu0 0.0
  %6320 = vmatpush1.msra.mxu0 %v6308
  %6321 = vmatprep.subr.mxu0 0.0
  %6322 = vmatpush1.msra.mxu0 %v6310
  %6323 = vmatprep.subr.mxu0 0.0
  %6324 = vmatpush1.msra.mxu0 0.0
  %6325 = vmatprep.subr.mxu0 0.0
  %6326 = vmatpush1.msra.mxu0 0.0
  %6327 = vmatprep.subr.mxu0 0.0
  %6328 = vmatpush1.msra.mxu0 0.0
  %6329 = vmatprep.subr.mxu0 0.0
  %6330 = vmatpush1.msra.mxu0 0.0
  %6331 = vmatprep.subr.mxu0 0.0
  %6332 = vmatpush1.msra.mxu0 0.0
  %6333 = vmatprep.subr.mxu0 0.0
  %6334 = vmatpush1.msra.mxu0 0.0
  %6335 = vmatprep.subr.mxu0 0.0
  %6336 = vmatpush1.msra.mxu0 0.0
  %6337 = vmatprep.subr.mxu0 0.0
  %6338 = vmatpush1.msra.mxu0 0.0
  %6339 = vmatprep.subr.mxu0 0.0
  %6340 = vmatpush1.msra.mxu0 0.0
  %6341 = vmatprep.subr.mxu0 0.0
  %6342 = vmatpush1.msra.mxu0 0.0
  %6343 = vmatprep.subr.mxu0 0.0
  %6344 = vmatpush1.msra.mxu0 0.0
  %6345 = vmatprep.subr.mxu0 0.0
  %6346 = vmatpush1.msra.mxu0 0.0
  %6347 = vmatprep.subr.mxu0 0.0
  %6348 = vmatpush1.msra.mxu0 0.0
  %6349 = vmatprep.subr.mxu0 0.0
  %6350 = vmatpush1.msra.mxu0 0.0
  %6351 = vmatprep.subr.mxu0 0.0
  %6352 = vmatpush1.msra.mxu0 0.0
  %6353 = vmatprep.subr.mxu0 0.0
  %6354 = vmatpush1.msra.mxu0 0.0
  %6355 = vmatprep.subr.mxu0 0.0
  %6356 = vmatpush1.msra.mxu0 0.0
  %6357 = vmatprep.subr.mxu0 0.0
  %6358 = vmatpush1.msra.mxu0 0.0
  %6359 = vmatprep.subr.mxu0 0.0
  %6360 = vmatpush1.msra.mxu0 0.0
  %6361 = vmatprep.subr.mxu0 0.0
  %6362 = vmatpush1.msra.mxu0 0.0
  %6363 = vmatprep.subr.mxu0 0.0
  %6364 = vmatpush1.msra.mxu0 0.0
  %6365 = vmatprep.subr.mxu0 0.0
  %6366 = vmatpush1.msra.mxu0 0.0
  %6367 = vmatprep.subr.mxu0 0.0
  %6368 = vmatpush1.msra.mxu0 0.0
  %6369 = vmatprep.subr.mxu0 0.0
  %6370 = vmatpush1.msra.mxu0 0.0
  %6371 = vmatprep.subr.mxu0 0.0
  %6372 = vmatpush1.msra.mxu0 0.0
  %6373 = vmatprep.subr.mxu0 0.0
  %6374 = vmatpush1.msra.mxu0 0.0
  %6375 = vmatprep.subr.mxu0 0.0
  %6376 = vmatpush1.msra.mxu0 0.0
  %6377 = vmatprep.subr.mxu0 0.0
  %6378 = vmatpush1.msra.mxu0 0.0
  %6379 = vmatprep.subr.mxu0 0.0
  %6380 = vmatpush1.msra.mxu0 0.0
  %6381 = vmatprep.subr.mxu0 0.0
  %6382 = vmatpush1.msra.mxu0 0.0
  %6383 = vmatprep.mubr.f32.mxu0 0.0
  %6384 = vmatmul.mubr.f32.gmra.mrb[0].mxu0 %v6314
  %v6385 = vpop.f32.mrb[0].mxu0
  %v6386 = vadd.f32 0.0, %v6385
  %v6387 = vpop.f32.mrb[0].mxu0
  %6388 = vmatprep.mubr.f32.mxu0 0.0
  %6389 = vmatmul.mubr.f32.gmra.mrb[0].mxu0 %v6317
  %v6390 = vpop.f32.mrb[0].mxu0
  %v6391 = vadd.f32 0.0, %v6390
  %v6392 = vpop.f32.mrb[0].mxu0
  %6393 = vdwg.mxu0
  %6396 = vrot.lane.b32.xlu0 %v3674, 112
  %v6397 = vpop.permute.xlu0 %6396
  %6398 = vrot.lane.b32.xlu0 %v3680, 112
  %v6399 = vpop.permute.xlu0 %6398
  %v6403 = vsel %vm2464, %v6204, 0
  %v6406 = vsel %vm2464, %v6205, 0
  %6408 = vmatprep.subr.mxu0 0.0
  %6409 = vmatpush1.msra.mxu0 %v6397
  %6410 = vmatprep.subr.mxu0 0.0
  %6411 = vmatpush1.msra.mxu0 %v6399
  %6412 = vmatprep.subr.mxu0 0.0
  %6413 = vmatpush1.msra.mxu0 0.0
  %6414 = vmatprep.subr.mxu0 0.0
  %6415 = vmatpush1.msra.mxu0 0.0
  %6416 = vmatprep.subr.mxu0 0.0
  %6417 = vmatpush1.msra.mxu0 0.0
  %6418 = vmatprep.subr.mxu0 0.0
  %6419 = vmatpush1.msra.mxu0 0.0
  %6420 = vmatprep.subr.mxu0 0.0
  %6421 = vmatpush1.msra.mxu0 0.0
  %6422 = vmatprep.subr.mxu0 0.0
  %6423 = vmatpush1.msra.mxu0 0.0
  %6424 = vmatprep.subr.mxu0 0.0
  %6425 = vmatpush1.msra.mxu0 0.0
  %6426 = vmatprep.subr.mxu0 0.0
  %6427 = vmatpush1.msra.mxu0 0.0
  %6428 = vmatprep.subr.mxu0 0.0
  %6429 = vmatpush1.msra.mxu0 0.0
  %6430 = vmatprep.subr.mxu0 0.0
  %6431 = vmatpush1.msra.mxu0 0.0
  %6432 = vmatprep.subr.mxu0 0.0
  %6433 = vmatpush1.msra.mxu0 0.0
  %6434 = vmatprep.subr.mxu0 0.0
  %6435 = vmatpush1.msra.mxu0 0.0
  %6436 = vmatprep.subr.mxu0 0.0
  %6437 = vmatpush1.msra.mxu0 0.0
  %6438 = vmatprep.subr.mxu0 0.0
  %6439 = vmatpush1.msra.mxu0 0.0
  %6440 = vmatprep.subr.mxu0 0.0
  %6441 = vmatpush1.msra.mxu0 0.0
  %6442 = vmatprep.subr.mxu0 0.0
  %6443 = vmatpush1.msra.mxu0 0.0
  %6444 = vmatprep.subr.mxu0 0.0
  %6445 = vmatpush1.msra.mxu0 0.0
  %6446 = vmatprep.subr.mxu0 0.0
  %6447 = vmatpush1.msra.mxu0 0.0
  %6448 = vmatprep.subr.mxu0 0.0
  %6449 = vmatpush1.msra.mxu0 0.0
  %6450 = vmatprep.subr.mxu0 0.0
  %6451 = vmatpush1.msra.mxu0 0.0
  %6452 = vmatprep.subr.mxu0 0.0
  %6453 = vmatpush1.msra.mxu0 0.0
  %6454 = vmatprep.subr.mxu0 0.0
  %6455 = vmatpush1.msra.mxu0 0.0
  %6456 = vmatprep.subr.mxu0 0.0
  %6457 = vmatpush1.msra.mxu0 0.0
  %6458 = vmatprep.subr.mxu0 0.0
  %6459 = vmatpush1.msra.mxu0 0.0
  %6460 = vmatprep.subr.mxu0 0.0
  %6461 = vmatpush1.msra.mxu0 0.0
  %6462 = vmatprep.subr.mxu0 0.0
  %6463 = vmatpush1.msra.mxu0 0.0
  %6464 = vmatprep.subr.mxu0 0.0
  %6465 = vmatpush1.msra.mxu0 0.0
  %6466 = vmatprep.subr.mxu0 0.0
  %6467 = vmatpush1.msra.mxu0 0.0
  %6468 = vmatprep.subr.mxu0 0.0
  %6469 = vmatpush1.msra.mxu0 0.0
  %6470 = vmatprep.subr.mxu0 0.0
  %6471 = vmatpush1.msra.mxu0 0.0
  %6472 = vmatprep.mubr.f32.mxu0 0.0
  %6473 = vmatmul.mubr.f32.gmra.mrb[0].mxu0 %v6403
  %v6474 = vpop.f32.mrb[0].mxu0
  %v6475 = vadd.f32 0.0, %v6474
  %v6476 = vpop.f32.mrb[0].mxu0
  %6477 = vmatprep.mubr.f32.mxu0 0.0
  %6478 = vmatmul.mubr.f32.gmra.mrb[0].mxu0 %v6406
  %v6479 = vpop.f32.mrb[0].mxu0
  %v6480 = vadd.f32 0.0, %v6479
  %v6481 = vpop.f32.mrb[0].mxu0
  %6482 = vdwg.mxu0
  %6485 = vrot.lane.b32.xlu0 %v3686, 112
  %v6486 = vpop.permute.xlu0 %6485
  %6487 = vrot.lane.b32.xlu0 %v3692, 112
  %v6488 = vpop.permute.xlu0 %6487
  %v6492 = vsel %vm2464, %v6206, 0
  %v6495 = vsel %vm2464, %v6207, 0
  %6497 = vmatprep.subr.mxu0 0.0
  %6498 = vmatpush1.msra.mxu0 %v6486
  %6499 = vmatprep.subr.mxu0 0.0
  %6500 = vmatpush1.msra.mxu0 %v6488
  %6501 = vmatprep.subr.mxu0 0.0
  %6502 = vmatpush1.msra.mxu0 0.0
  %6503 = vmatprep.subr.mxu0 0.0
  %6504 = vmatpush1.msra.mxu0 0.0
  %6505 = vmatprep.subr.mxu0 0.0
  %6506 = vmatpush1.msra.mxu0 0.0
  %6507 = vmatprep.subr.mxu0 0.0
  %6508 = vmatpush1.msra.mxu0 0.0
  %6509 = vmatprep.subr.mxu0 0.0
  %6510 = vmatpush1.msra.mxu0 0.0
  %6511 = vmatprep.subr.mxu0 0.0
  %6512 = vmatpush1.msra.mxu0 0.0
  %6513 = vmatprep.subr.mxu0 0.0
  %6514 = vmatpush1.msra.mxu0 0.0
  %6515 = vmatprep.subr.mxu0 0.0
  %6516 = vmatpush1.msra.mxu0 0.0
  %6517 = vmatprep.subr.mxu0 0.0
  %6518 = vmatpush1.msra.mxu0 0.0
  %6519 = vmatprep.subr.mxu0 0.0
  %6520 = vmatpush1.msra.mxu0 0.0
  %6521 = vmatprep.subr.mxu0 0.0
  %6522 = vmatpush1.msra.mxu0 0.0
  %6523 = vmatprep.subr.mxu0 0.0
  %6524 = vmatpush1.msra.mxu0 0.0
  %6525 = vmatprep.subr.mxu0 0.0
  %6526 = vmatpush1.msra.mxu0 0.0
  %6527 = vmatprep.subr.mxu0 0.0
  %6528 = vmatpush1.msra.mxu0 0.0
  %6529 = vmatprep.subr.mxu0 0.0
  %6530 = vmatpush1.msra.mxu0 0.0
  %6531 = vmatprep.subr.mxu0 0.0
  %6532 = vmatpush1.msra.mxu0 0.0
  %6533 = vmatprep.subr.mxu0 0.0
  %6534 = vmatpush1.msra.mxu0 0.0
  %6535 = vmatprep.subr.mxu0 0.0
  %6536 = vmatpush1.msra.mxu0 0.0
  %6537 = vmatprep.subr.mxu0 0.0
  %6538 = vmatpush1.msra.mxu0 0.0
  %6539 = vmatprep.subr.mxu0 0.0
  %6540 = vmatpush1.msra.mxu0 0.0
  %6541 = vmatprep.subr.mxu0 0.0
  %6542 = vmatpush1.msra.mxu0 0.0
  %6543 = vmatprep.subr.mxu0 0.0
  %6544 = vmatpush1.msra.mxu0 0.0
  %6545 = vmatprep.subr.mxu0 0.0
  %6546 = vmatpush1.msra.mxu0 0.0
  %6547 = vmatprep.subr.mxu0 0.0
  %6548 = vmatpush1.msra.mxu0 0.0
  %6549 = vmatprep.subr.mxu0 0.0
  %6550 = vmatpush1.msra.mxu0 0.0
  %6551 = vmatprep.subr.mxu0 0.0
  %6552 = vmatpush1.msra.mxu0 0.0
  %6553 = vmatprep.subr.mxu0 0.0
  %6554 = vmatpush1.msra.mxu0 0.0
  %6555 = vmatprep.subr.mxu0 0.0
  %6556 = vmatpush1.msra.mxu0 0.0
  %6557 = vmatprep.subr.mxu0 0.0
  %6558 = vmatpush1.msra.mxu0 0.0
  %6559 = vmatprep.subr.mxu0 0.0
  %6560 = vmatpush1.msra.mxu0 0.0
  %6561 = vmatprep.mubr.f32.mxu0 0.0
  %6562 = vmatmul.mubr.f32.gmra.mrb[0].mxu0 %v6492
  %v6563 = vpop.f32.mrb[0].mxu0
  %v6564 = vadd.f32 0.0, %v6563
  %v6565 = vpop.f32.mrb[0].mxu0
  %6566 = vmatprep.mubr.f32.mxu0 0.0
  %6567 = vmatmul.mubr.f32.gmra.mrb[0].mxu0 %v6495
  %v6568 = vpop.f32.mrb[0].mxu0
  %v6569 = vadd.f32 0.0, %v6568
  %v6570 = vpop.f32.mrb[0].mxu0
  %6571 = vdwg.mxu0
  %6574 = vrot.lane.b32.xlu0 %v3698, 112
  %v6575 = vpop.permute.xlu0 %6574
  %6576 = vrot.lane.b32.xlu0 %v3704, 112
  %v6577 = vpop.permute.xlu0 %6576
  %v6581 = vsel %vm2464, %v6208, 0
  %v6584 = vsel %vm2464, %v6209, 0
  %6586 = vmatprep.subr.mxu0 0.0
  %6587 = vmatpush1.msra.mxu0 %v6575
  %6588 = vmatprep.subr.mxu0 0.0
  %6589 = vmatpush1.msra.mxu0 %v6577
  %6590 = vmatprep.subr.mxu0 0.0
  %6591 = vmatpush1.msra.mxu0 0.0
  %6592 = vmatprep.subr.mxu0 0.0
  %6593 = vmatpush1.msra.mxu0 0.0
  %6594 = vmatprep.subr.mxu0 0.0
  %6595 = vmatpush1.msra.mxu0 0.0
  %6596 = vmatprep.subr.mxu0 0.0
  %6597 = vmatpush1.msra.mxu0 0.0
  %6598 = vmatprep.subr.mxu0 0.0
  %6599 = vmatpush1.msra.mxu0 0.0
  %6600 = vmatprep.subr.mxu0 0.0
  %6601 = vmatpush1.msra.mxu0 0.0
  %6602 = vmatprep.subr.mxu0 0.0
  %6603 = vmatpush1.msra.mxu0 0.0
  %6604 = vmatprep.subr.mxu0 0.0
  %6605 = vmatpush1.msra.mxu0 0.0
  %6606 = vmatprep.subr.mxu0 0.0
  %6607 = vmatpush1.msra.mxu0 0.0
  %6608 = vmatprep.subr.mxu0 0.0
  %6609 = vmatpush1.msra.mxu0 0.0
  %6610 = vmatprep.subr.mxu0 0.0
  %6611 = vmatpush1.msra.mxu0 0.0
  %6612 = vmatprep.subr.mxu0 0.0
  %6613 = vmatpush1.msra.mxu0 0.0
  %6614 = vmatprep.subr.mxu0 0.0
  %6615 = vmatpush1.msra.mxu0 0.0
  %6616 = vmatprep.subr.mxu0 0.0
  %6617 = vmatpush1.msra.mxu0 0.0
  %6618 = vmatprep.subr.mxu0 0.0
  %6619 = vmatpush1.msra.mxu0 0.0
  %6620 = vmatprep.subr.mxu0 0.0
  %6621 = vmatpush1.msra.mxu0 0.0
  %6622 = vmatprep.subr.mxu0 0.0
  %6623 = vmatpush1.msra.mxu0 0.0
  %6624 = vmatprep.subr.mxu0 0.0
  %6625 = vmatpush1.msra.mxu0 0.0
  %6626 = vmatprep.subr.mxu0 0.0
  %6627 = vmatpush1.msra.mxu0 0.0
  %6628 = vmatprep.subr.mxu0 0.0
  %6629 = vmatpush1.msra.mxu0 0.0
  %6630 = vmatprep.subr.mxu0 0.0
  %6631 = vmatpush1.msra.mxu0 0.0
  %6632 = vmatprep.subr.mxu0 0.0
  %6633 = vmatpush1.msra.mxu0 0.0
  %6634 = vmatprep.subr.mxu0 0.0
  %6635 = vmatpush1.msra.mxu0 0.0
  %6636 = vmatprep.subr.mxu0 0.0
  %6637 = vmatpush1.msra.mxu0 0.0
  %6638 = vmatprep.subr.mxu0 0.0
  %6639 = vmatpush1.msra.mxu0 0.0
  %6640 = vmatprep.subr.mxu0 0.0
  %6641 = vmatpush1.msra.mxu0 0.0
  %6642 = vmatprep.subr.mxu0 0.0
  %6643 = vmatpush1.msra.mxu0 0.0
  %6644 = vmatprep.subr.mxu0 0.0
  %6645 = vmatpush1.msra.mxu0 0.0
  %6646 = vmatprep.subr.mxu0 0.0
  %6647 = vmatpush1.msra.mxu0 0.0
  %6648 = vmatprep.subr.mxu0 0.0
  %6649 = vmatpush1.msra.mxu0 0.0
  %6650 = vmatprep.mubr.f32.mxu0 0.0
  %6651 = vmatmul.mubr.f32.gmra.mrb[0].mxu0 %v6581
  %v6652 = vpop.f32.mrb[0].mxu0
  %v6653 = vadd.f32 0.0, %v6652
  %v6654 = vpop.f32.mrb[0].mxu0
  %6655 = vmatprep.mubr.f32.mxu0 0.0
  %6656 = vmatmul.mubr.f32.gmra.mrb[0].mxu0 %v6584
  %v6657 = vpop.f32.mrb[0].mxu0
  %v6658 = vadd.f32 0.0, %v6657
  %v6659 = vpop.f32.mrb[0].mxu0
  %6660 = vdwg.mxu0
  %6663 = vrot.lane.b32.xlu0 %v3710, 112
  %v6664 = vpop.permute.xlu0 %6663
  %6665 = vrot.lane.b32.xlu0 %v3716, 112
  %v6666 = vpop.permute.xlu0 %6665
  %v6670 = vsel %vm2464, %v6210, 0
  %v6673 = vsel %vm2464, %v6211, 0
  %6675 = vmatprep.subr.mxu0 0.0
  %6676 = vmatpush1.msra.mxu0 %v6664
  %6677 = vmatprep.subr.mxu0 0.0
  %6678 = vmatpush1.msra.mxu0 %v6666
  %6679 = vmatprep.subr.mxu0 0.0
  %6680 = vmatpush1.msra.mxu0 0.0
  %6681 = vmatprep.subr.mxu0 0.0
  %6682 = vmatpush1.msra.mxu0 0.0
  %6683 = vmatprep.subr.mxu0 0.0
  %6684 = vmatpush1.msra.mxu0 0.0
  %6685 = vmatprep.subr.mxu0 0.0
  %6686 = vmatpush1.msra.mxu0 0.0
  %6687 = vmatprep.subr.mxu0 0.0
  %6688 = vmatpush1.msra.mxu0 0.0
  %6689 = vmatprep.subr.mxu0 0.0
  %6690 = vmatpush1.msra.mxu0 0.0
  %6691 = vmatprep.subr.mxu0 0.0
  %6692 = vmatpush1.msra.mxu0 0.0
  %6693 = vmatprep.subr.mxu0 0.0
  %6694 = vmatpush1.msra.mxu0 0.0
  %6695 = vmatprep.subr.mxu0 0.0
  %6696 = vmatpush1.msra.mxu0 0.0
  %6697 = vmatprep.subr.mxu0 0.0
  %6698 = vmatpush1.msra.mxu0 0.0
  %6699 = vmatprep.subr.mxu0 0.0
  %6700 = vmatpush1.msra.mxu0 0.0
  %6701 = vmatprep.subr.mxu0 0.0
  %6702 = vmatpush1.msra.mxu0 0.0
  %6703 = vmatprep.subr.mxu0 0.0
  %6704 = vmatpush1.msra.mxu0 0.0
  %6705 = vmatprep.subr.mxu0 0.0
  %6706 = vmatpush1.msra.mxu0 0.0
  %6707 = vmatprep.subr.mxu0 0.0
  %6708 = vmatpush1.msra.mxu0 0.0
  %6709 = vmatprep.subr.mxu0 0.0
  %6710 = vmatpush1.msra.mxu0 0.0
  %6711 = vmatprep.subr.mxu0 0.0
  %6712 = vmatpush1.msra.mxu0 0.0
  %6713 = vmatprep.subr.mxu0 0.0
  %6714 = vmatpush1.msra.mxu0 0.0
  %6715 = vmatprep.subr.mxu0 0.0
  %6716 = vmatpush1.msra.mxu0 0.0
  %6717 = vmatprep.subr.mxu0 0.0
  %6718 = vmatpush1.msra.mxu0 0.0
  %6719 = vmatprep.subr.mxu0 0.0
  %6720 = vmatpush1.msra.mxu0 0.0
  %6721 = vmatprep.subr.mxu0 0.0
  %6722 = vmatpush1.msra.mxu0 0.0
  %6723 = vmatprep.subr.mxu0 0.0
  %6724 = vmatpush1.msra.mxu0 0.0
  %6725 = vmatprep.subr.mxu0 0.0
  %6726 = vmatpush1.msra.mxu0 0.0
  %6727 = vmatprep.subr.mxu0 0.0
  %6728 = vmatpush1.msra.mxu0 0.0
  %6729 = vmatprep.subr.mxu0 0.0
  %6730 = vmatpush1.msra.mxu0 0.0
  %6731 = vmatprep.subr.mxu0 0.0
  %6732 = vmatpush1.msra.mxu0 0.0
  %6733 = vmatprep.subr.mxu0 0.0
  %6734 = vmatpush1.msra.mxu0 0.0
  %6735 = vmatprep.subr.mxu0 0.0
  %6736 = vmatpush1.msra.mxu0 0.0
  %6737 = vmatprep.subr.mxu0 0.0
  %6738 = vmatpush1.msra.mxu0 0.0
  %6739 = vmatprep.mubr.f32.mxu0 0.0
  %6740 = vmatmul.mubr.f32.gmra.mrb[0].mxu0 %v6670
  %v6741 = vpop.f32.mrb[0].mxu0
  %v6742 = vadd.f32 0.0, %v6741
  %v6743 = vpop.f32.mrb[0].mxu0
  %6744 = vmatprep.mubr.f32.mxu0 0.0
  %6745 = vmatmul.mubr.f32.gmra.mrb[0].mxu0 %v6673
  %v6746 = vpop.f32.mrb[0].mxu0
  %v6747 = vadd.f32 0.0, %v6746
  %v6748 = vpop.f32.mrb[0].mxu0
  %6749 = vdwg.mxu0
  %6752 = vrot.lane.b32.xlu0 %v3722, 112
  %v6753 = vpop.permute.xlu0 %6752
  %6754 = vrot.lane.b32.xlu0 %v3728, 112
  %v6755 = vpop.permute.xlu0 %6754
  %v6759 = vsel %vm2464, %v6212, 0
  %v6762 = vsel %vm2464, %v6213, 0
  %6764 = vmatprep.subr.mxu0 0.0
  %6765 = vmatpush1.msra.mxu0 %v6753
  %6766 = vmatprep.subr.mxu0 0.0
  %6767 = vmatpush1.msra.mxu0 %v6755
  %6768 = vmatprep.subr.mxu0 0.0
  %6769 = vmatpush1.msra.mxu0 0.0
  %6770 = vmatprep.subr.mxu0 0.0
  %6771 = vmatpush1.msra.mxu0 0.0
  %6772 = vmatprep.subr.mxu0 0.0
  %6773 = vmatpush1.msra.mxu0 0.0
  %6774 = vmatprep.subr.mxu0 0.0
  %6775 = vmatpush1.msra.mxu0 0.0
  %6776 = vmatprep.subr.mxu0 0.0
  %6777 = vmatpush1.msra.mxu0 0.0
  %6778 = vmatprep.subr.mxu0 0.0
  %6779 = vmatpush1.msra.mxu0 0.0
  %6780 = vmatprep.subr.mxu0 0.0
  %6781 = vmatpush1.msra.mxu0 0.0
  %6782 = vmatprep.subr.mxu0 0.0
  %6783 = vmatpush1.msra.mxu0 0.0
  %6784 = vmatprep.subr.mxu0 0.0
  %6785 = vmatpush1.msra.mxu0 0.0
  %6786 = vmatprep.subr.mxu0 0.0
  %6787 = vmatpush1.msra.mxu0 0.0
  %6788 = vmatprep.subr.mxu0 0.0
  %6789 = vmatpush1.msra.mxu0 0.0
  %6790 = vmatprep.subr.mxu0 0.0
  %6791 = vmatpush1.msra.mxu0 0.0
  %6792 = vmatprep.subr.mxu0 0.0
  %6793 = vmatpush1.msra.mxu0 0.0
  %6794 = vmatprep.subr.mxu0 0.0
  %6795 = vmatpush1.msra.mxu0 0.0
  %6796 = vmatprep.subr.mxu0 0.0
  %6797 = vmatpush1.msra.mxu0 0.0
  %6798 = vmatprep.subr.mxu0 0.0
  %6799 = vmatpush1.msra.mxu0 0.0
  %6800 = vmatprep.subr.mxu0 0.0
  %6801 = vmatpush1.msra.mxu0 0.0
  %6802 = vmatprep.subr.mxu0 0.0
  %6803 = vmatpush1.msra.mxu0 0.0
  %6804 = vmatprep.subr.mxu0 0.0
  %6805 = vmatpush1.msra.mxu0 0.0
  %6806 = vmatprep.subr.mxu0 0.0
  %6807 = vmatpush1.msra.mxu0 0.0
  %6808 = vmatprep.subr.mxu0 0.0
  %6809 = vmatpush1.msra.mxu0 0.0
  %6810 = vmatprep.subr.mxu0 0.0
  %6811 = vmatpush1.msra.mxu0 0.0
  %6812 = vmatprep.subr.mxu0 0.0
  %6813 = vmatpush1.msra.mxu0 0.0
  %6814 = vmatprep.subr.mxu0 0.0
  %6815 = vmatpush1.msra.mxu0 0.0
  %6816 = vmatprep.subr.mxu0 0.0
  %6817 = vmatpush1.msra.mxu0 0.0
  %6818 = vmatprep.subr.mxu0 0.0
  %6819 = vmatpush1.msra.mxu0 0.0
  %6820 = vmatprep.subr.mxu0 0.0
  %6821 = vmatpush1.msra.mxu0 0.0
  %6822 = vmatprep.subr.mxu0 0.0
  %6823 = vmatpush1.msra.mxu0 0.0
  %6824 = vmatprep.subr.mxu0 0.0
  %6825 = vmatpush1.msra.mxu0 0.0
  %6826 = vmatprep.subr.mxu0 0.0
  %6827 = vmatpush1.msra.mxu0 0.0
  %6828 = vmatprep.mubr.f32.mxu0 0.0
  %6829 = vmatmul.mubr.f32.gmra.mrb[0].mxu0 %v6759
  %v6830 = vpop.f32.mrb[0].mxu0
  %v6831 = vadd.f32 0.0, %v6830
  %v6832 = vpop.f32.mrb[0].mxu0
  %6833 = vmatprep.mubr.f32.mxu0 0.0
  %6834 = vmatmul.mubr.f32.gmra.mrb[0].mxu0 %v6762
  %v6835 = vpop.f32.mrb[0].mxu0
  %v6836 = vadd.f32 0.0, %v6835
  %v6837 = vpop.f32.mrb[0].mxu0
  %6838 = vdwg.mxu0
  %6841 = vrot.lane.b32.xlu0 %v3734, 112
  %v6842 = vpop.permute.xlu0 %6841
  %6843 = vrot.lane.b32.xlu0 %v3740, 112
  %v6844 = vpop.permute.xlu0 %6843
  %v6848 = vsel %vm2464, %v6214, 0
  %v6851 = vsel %vm2464, %v6215, 0
  %6853 = vmatprep.subr.mxu0 0.0
  %6854 = vmatpush1.msra.mxu0 %v6842
  %6855 = vmatprep.subr.mxu0 0.0
  %6856 = vmatpush1.msra.mxu0 %v6844
  %6857 = vmatprep.subr.mxu0 0.0
  %6858 = vmatpush1.msra.mxu0 0.0
  %6859 = vmatprep.subr.mxu0 0.0
  %6860 = vmatpush1.msra.mxu0 0.0
  %6861 = vmatprep.subr.mxu0 0.0
  %6862 = vmatpush1.msra.mxu0 0.0
  %6863 = vmatprep.subr.mxu0 0.0
  %6864 = vmatpush1.msra.mxu0 0.0
  %6865 = vmatprep.subr.mxu0 0.0
  %6866 = vmatpush1.msra.mxu0 0.0
  %6867 = vmatprep.subr.mxu0 0.0
  %6868 = vmatpush1.msra.mxu0 0.0
  %6869 = vmatprep.subr.mxu0 0.0
  %6870 = vmatpush1.msra.mxu0 0.0
  %6871 = vmatprep.subr.mxu0 0.0
  %6872 = vmatpush1.msra.mxu0 0.0
  %6873 = vmatprep.subr.mxu0 0.0
  %6874 = vmatpush1.msra.mxu0 0.0
  %6875 = vmatprep.subr.mxu0 0.0
  %6876 = vmatpush1.msra.mxu0 0.0
  %6877 = vmatprep.subr.mxu0 0.0
  %6878 = vmatpush1.msra.mxu0 0.0
  %6879 = vmatprep.subr.mxu0 0.0
  %6880 = vmatpush1.msra.mxu0 0.0
  %6881 = vmatprep.subr.mxu0 0.0
  %6882 = vmatpush1.msra.mxu0 0.0
  %6883 = vmatprep.subr.mxu0 0.0
  %6884 = vmatpush1.msra.mxu0 0.0
  %6885 = vmatprep.subr.mxu0 0.0
  %6886 = vmatpush1.msra.mxu0 0.0
  %6887 = vmatprep.subr.mxu0 0.0
  %6888 = vmatpush1.msra.mxu0 0.0
  %6889 = vmatprep.subr.mxu0 0.0
  %6890 = vmatpush1.msra.mxu0 0.0
  %6891 = vmatprep.subr.mxu0 0.0
  %6892 = vmatpush1.msra.mxu0 0.0
  %6893 = vmatprep.subr.mxu0 0.0
  %6894 = vmatpush1.msra.mxu0 0.0
  %6895 = vmatprep.subr.mxu0 0.0
  %6896 = vmatpush1.msra.mxu0 0.0
  %6897 = vmatprep.subr.mxu0 0.0
  %6898 = vmatpush1.msra.mxu0 0.0
  %6899 = vmatprep.subr.mxu0 0.0
  %6900 = vmatpush1.msra.mxu0 0.0
  %6901 = vmatprep.subr.mxu0 0.0
  %6902 = vmatpush1.msra.mxu0 0.0
  %6903 = vmatprep.subr.mxu0 0.0
  %6904 = vmatpush1.msra.mxu0 0.0
  %6905 = vmatprep.subr.mxu0 0.0
  %6906 = vmatpush1.msra.mxu0 0.0
  %6907 = vmatprep.subr.mxu0 0.0
  %6908 = vmatpush1.msra.mxu0 0.0
  %6909 = vmatprep.subr.mxu0 0.0
  %6910 = vmatpush1.msra.mxu0 0.0
  %6911 = vmatprep.subr.mxu0 0.0
  %6912 = vmatpush1.msra.mxu0 0.0
  %6913 = vmatprep.subr.mxu0 0.0
  %6914 = vmatpush1.msra.mxu0 0.0
  %6915 = vmatprep.subr.mxu0 0.0
  %6916 = vmatpush1.msra.mxu0 0.0
  %6917 = vmatprep.mubr.f32.mxu0 0.0
  %6918 = vmatmul.mubr.f32.gmra.mrb[0].mxu0 %v6848
  %v6919 = vpop.f32.mrb[0].mxu0
  %v6920 = vadd.f32 0.0, %v6919
  %v6921 = vpop.f32.mrb[0].mxu0
  %6922 = vmatprep.mubr.f32.mxu0 0.0
  %6923 = vmatmul.mubr.f32.gmra.mrb[0].mxu0 %v6851
  %v6924 = vpop.f32.mrb[0].mxu0
  %v6925 = vadd.f32 0.0, %v6924
  %v6926 = vpop.f32.mrb[0].mxu0
  %6927 = vdwg.mxu0
  %v6928 = vld [vmem:[%s9 + $0x10] sm:$0xff]
  %v6929 = vld [vmem:[%s9 + $0x18] sm:$0xff]
  %v6931 = vsel %vm2464, %v6297, 0
  %v6934 = vsel %vm2464, %v6302, 0
  %v6937 = vsel %vm2464, %v6386, 0
  %v6940 = vsel %vm2464, %v6391, 0
  %v6943 = vsel %vm2464, %v6475, 0
  %v6946 = vsel %vm2464, %v6480, 0
  %v6949 = vsel %vm2464, %v6564, 0
  %v6952 = vsel %vm2464, %v6569, 0
  %v6955 = vsel %vm2464, %v6653, 0
  %v6958 = vsel %vm2464, %v6658, 0
  %v6961 = vsel %vm2464, %v6742, 0
  %v6964 = vsel %vm2464, %v6747, 0
  %v6967 = vsel %vm2464, %v6831, 0
  %v6970 = vsel %vm2464, %v6836, 0
  %v6973 = vsel %vm2464, %v6920, 0
  %v6976 = vsel %vm2464, %v6925, 0
  %6978 = vmatprep.subr.mxu0 0.0
  %6979 = vmatpush1.msra.mxu0 %v6928
  %6980 = vmatprep.subr.mxu0 0.0
  %6981 = vmatpush1.msra.mxu0 %v6929
  %6982 = vmatprep.subr.mxu0 0.0
  %6983 = vmatpush1.msra.mxu0 0.0
  %6984 = vmatprep.subr.mxu0 0.0
  %6985 = vmatpush1.msra.mxu0 0.0
  %6986 = vmatprep.subr.mxu0 0.0
  %6987 = vmatpush1.msra.mxu0 0.0
  %6988 = vmatprep.subr.mxu0 0.0
  %6989 = vmatpush1.msra.mxu0 0.0
  %6990 = vmatprep.subr.mxu0 0.0
  %6991 = vmatpush1.msra.mxu0 0.0
  %6992 = vmatprep.subr.mxu0 0.0
  %6993 = vmatpush1.msra.mxu0 0.0
  %6994 = vmatprep.subr.mxu0 0.0
  %6995 = vmatpush1.msra.mxu0 0.0
  %6996 = vmatprep.subr.mxu0 0.0
  %6997 = vmatpush1.msra.mxu0 0.0
  %6998 = vmatprep.subr.mxu0 0.0
  %6999 = vmatpush1.msra.mxu0 0.0
  %7000 = vmatprep.subr.mxu0 0.0
  %7001 = vmatpush1.msra.mxu0 0.0
  %7002 = vmatprep.subr.mxu0 0.0
  %7003 = vmatpush1.msra.mxu0 0.0
  %7004 = vmatprep.subr.mxu0 0.0
  %7005 = vmatpush1.msra.mxu0 0.0
  %7006 = vmatprep.subr.mxu0 0.0
  %7007 = vmatpush1.msra.mxu0 0.0
  %7008 = vmatprep.subr.mxu0 0.0
  %7009 = vmatpush1.msra.mxu0 0.0
  %7010 = vmatprep.subr.mxu0 0.0
  %7011 = vmatpush1.msra.mxu0 0.0
  %7012 = vmatprep.subr.mxu0 0.0
  %7013 = vmatpush1.msra.mxu0 0.0
  %7014 = vmatprep.subr.mxu0 0.0
  %7015 = vmatpush1.msra.mxu0 0.0
  %7016 = vmatprep.subr.mxu0 0.0
  %7017 = vmatpush1.msra.mxu0 0.0
  %7018 = vmatprep.subr.mxu0 0.0
  %7019 = vmatpush1.msra.mxu0 0.0
  %7020 = vmatprep.subr.mxu0 0.0
  %7021 = vmatpush1.msra.mxu0 0.0
  %7022 = vmatprep.subr.mxu0 0.0
  %7023 = vmatpush1.msra.mxu0 0.0
  %7024 = vmatprep.subr.mxu0 0.0
  %7025 = vmatpush1.msra.mxu0 0.0
  %7026 = vmatprep.subr.mxu0 0.0
  %7027 = vmatpush1.msra.mxu0 0.0
  %7028 = vmatprep.subr.mxu0 0.0
  %7029 = vmatpush1.msra.mxu0 0.0
  %7030 = vmatprep.subr.mxu0 0.0
  %7031 = vmatpush1.msra.mxu0 0.0
  %7032 = vmatprep.subr.mxu0 0.0
  %7033 = vmatpush1.msra.mxu0 0.0
  %7034 = vmatprep.subr.mxu0 0.0
  %7035 = vmatpush1.msra.mxu0 0.0
  %7036 = vmatprep.subr.mxu0 0.0
  %7037 = vmatpush1.msra.mxu0 0.0
  %7038 = vmatprep.subr.mxu0 0.0
  %7039 = vmatpush1.msra.mxu0 0.0
  %7040 = vmatprep.subr.mxu0 0.0
  %7041 = vmatpush1.msra.mxu0 0.0
  %7042 = vmatprep.mubr.f32.mxu0 0.0
  %7043 = vmatmul.mubr.f32.gmra.mrb[0].mxu0 %v6931
  %v7044 = vpop.f32.mrb[0].mxu0
  %v7045 = vadd.f32 0.0, %v7044
  %v7046 = vpop.f32.mrb[0].mxu0
  %7047 = vmatprep.mubr.f32.mxu0 0.0
  %7048 = vmatmul.mubr.f32.gmra.mrb[0].mxu0 %v6934
  %v7049 = vpop.f32.mrb[0].mxu0
  %v7050 = vadd.f32 0.0, %v7049
  %v7051 = vpop.f32.mrb[0].mxu0
  %7052 = vmatprep.mubr.f32.mxu0 0.0
  %7053 = vmatmul.mubr.f32.gmra.mrb[0].mxu0 %v6937
  %v7054 = vpop.f32.mrb[0].mxu0
  %v7055 = vadd.f32 0.0, %v7054
  %v7056 = vpop.f32.mrb[0].mxu0
  %7057 = vmatprep.mubr.f32.mxu0 0.0
  %7058 = vmatmul.mubr.f32.gmra.mrb[0].mxu0 %v6940
  %v7059 = vpop.f32.mrb[0].mxu0
  %v7060 = vadd.f32 0.0, %v7059
  %v7061 = vpop.f32.mrb[0].mxu0
  %7062 = vmatprep.mubr.f32.mxu0 0.0
  %7063 = vmatmul.mubr.f32.gmra.mrb[0].mxu0 %v6943
  %v7064 = vpop.f32.mrb[0].mxu0
  %v7065 = vadd.f32 0.0, %v7064
  %v7066 = vpop.f32.mrb[0].mxu0
  %7067 = vmatprep.mubr.f32.mxu0 0.0
  %7068 = vmatmul.mubr.f32.gmra.mrb[0].mxu0 %v6946
  %v7069 = vpop.f32.mrb[0].mxu0
  %v7070 = vadd.f32 0.0, %v7069
  %v7071 = vpop.f32.mrb[0].mxu0
  %7072 = vmatprep.mubr.f32.mxu0 0.0
  %7073 = vmatmul.mubr.f32.gmra.mrb[0].mxu0 %v6949
  %v7074 = vpop.f32.mrb[0].mxu0
  %v7075 = vadd.f32 0.0, %v7074
  %v7076 = vpop.f32.mrb[0].mxu0
  %7077 = vmatprep.mubr.f32.mxu0 0.0
  %7078 = vmatmul.mubr.f32.gmra.mrb[0].mxu0 %v6952
  %v7079 = vpop.f32.mrb[0].mxu0
  %v7080 = vadd.f32 0.0, %v7079
  %v7081 = vpop.f32.mrb[0].mxu0
  %7082 = vmatprep.mubr.f32.mxu0 0.0
  %7083 = vmatmul.mubr.f32.gmra.mrb[0].mxu0 %v6955
  %v7084 = vpop.f32.mrb[0].mxu0
  %v7085 = vadd.f32 0.0, %v7084
  %v7086 = vpop.f32.mrb[0].mxu0
  %7087 = vmatprep.mubr.f32.mxu0 0.0
  %7088 = vmatmul.mubr.f32.gmra.mrb[0].mxu0 %v6958
  %v7089 = vpop.f32.mrb[0].mxu0
  %v7090 = vadd.f32 0.0, %v7089
  %v7091 = vpop.f32.mrb[0].mxu0
  %7092 = vmatprep.mubr.f32.mxu0 0.0
  %7093 = vmatmul.mubr.f32.gmra.mrb[0].mxu0 %v6961
  %v7094 = vpop.f32.mrb[0].mxu0
  %v7095 = vadd.f32 0.0, %v7094
  %v7096 = vpop.f32.mrb[0].mxu0
  %7097 = vmatprep.mubr.f32.mxu0 0.0
  %7098 = vmatmul.mubr.f32.gmra.mrb[0].mxu0 %v6964
  %v7099 = vpop.f32.mrb[0].mxu0
  %v7100 = vadd.f32 0.0, %v7099
  %v7101 = vpop.f32.mrb[0].mxu0
  %7102 = vmatprep.mubr.f32.mxu0 0.0
  %7103 = vmatmul.mubr.f32.gmra.mrb[0].mxu0 %v6967
  %v7104 = vpop.f32.mrb[0].mxu0
  %v7105 = vadd.f32 0.0, %v7104
  %v7106 = vpop.f32.mrb[0].mxu0
  %7107 = vmatprep.mubr.f32.mxu0 0.0
  %7108 = vmatmul.mubr.f32.gmra.mrb[0].mxu0 %v6970
  %v7109 = vpop.f32.mrb[0].mxu0
  %v7110 = vadd.f32 0.0, %v7109
  %v7111 = vpop.f32.mrb[0].mxu0
  %7112 = vmatprep.mubr.f32.mxu0 0.0
  %7113 = vmatmul.mubr.f32.gmra.mrb[0].mxu0 %v6973
  %v7114 = vpop.f32.mrb[0].mxu0
  %v7115 = vadd.f32 0.0, %v7114
  %v7116 = vpop.f32.mrb[0].mxu0
  %7117 = vmatprep.mubr.f32.mxu0 0.0
  %7118 = vmatmul.mubr.f32.gmra.mrb[0].mxu0 %v6976
  %v7119 = vpop.f32.mrb[0].mxu0
  %v7120 = vadd.f32 0.0, %v7119
  %v7121 = vpop.f32.mrb[0].mxu0
  %7122 = vdwg.mxu0
  %v7124 = vsel %vm2464, %v4719, 0
  %v7127 = vsel %vm2464, %v4724, 0
  %v7130 = vsel %vm2464, %v4800, 0
  %v7133 = vsel %vm2464, %v4805, 0
  %v7136 = vsel %vm2464, %v4881, 0
  %v7139 = vsel %vm2464, %v4886, 0
  %v7142 = vsel %vm2464, %v4962, 0
  %v7145 = vsel %vm2464, %v4967, 0
  %v7148 = vsel %vm2464, %v5043, 0
  %v7151 = vsel %vm2464, %v5048, 0
  %v7154 = vsel %vm2464, %v5124, 0
  %v7157 = vsel %vm2464, %v5129, 0
  %v7160 = vsel %vm2464, %v5205, 0
  %v7163 = vsel %vm2464, %v5210, 0
  %v7166 = vsel %vm2464, %v5286, 0
  %v7169 = vsel %vm2464, %v5291, 0
  %7171 = vmatprep.subr.mxu0 0.0
  %7172 = vmatpush1.msra.mxu0 %v5294
  %7173 = vmatprep.subr.mxu0 0.0
  %7174 = vmatpush1.msra.mxu0 %v5295
  %7175 = vmatprep.subr.mxu0 0.0
  %7176 = vmatpush1.msra.mxu0 0.0
  %7177 = vmatprep.subr.mxu0 0.0
  %7178 = vmatpush1.msra.mxu0 0.0
  %7179 = vmatprep.subr.mxu0 0.0
  %7180 = vmatpush1.msra.mxu0 0.0
  %7181 = vmatprep.subr.mxu0 0.0
  %7182 = vmatpush1.msra.mxu0 0.0
  %7183 = vmatprep.subr.mxu0 0.0
  %7184 = vmatpush1.msra.mxu0 0.0
  %7185 = vmatprep.subr.mxu0 0.0
  %7186 = vmatpush1.msra.mxu0 0.0
  %7187 = vmatprep.subr.mxu0 0.0
  %7188 = vmatpush1.msra.mxu0 0.0
  %7189 = vmatprep.subr.mxu0 0.0
  %7190 = vmatpush1.msra.mxu0 0.0
  %7191 = vmatprep.subr.mxu0 0.0
  %7192 = vmatpush1.msra.mxu0 0.0
  %7193 = vmatprep.subr.mxu0 0.0
  %7194 = vmatpush1.msra.mxu0 0.0
  %7195 = vmatprep.subr.mxu0 0.0
  %7196 = vmatpush1.msra.mxu0 0.0
  %7197 = vmatprep.subr.mxu0 0.0
  %7198 = vmatpush1.msra.mxu0 0.0
  %7199 = vmatprep.subr.mxu0 0.0
  %7200 = vmatpush1.msra.mxu0 0.0
  %7201 = vmatprep.subr.mxu0 0.0
  %7202 = vmatpush1.msra.mxu0 0.0
  %7203 = vmatprep.subr.mxu0 0.0
  %7204 = vmatpush1.msra.mxu0 0.0
  %7205 = vmatprep.subr.mxu0 0.0
  %7206 = vmatpush1.msra.mxu0 0.0
  %7207 = vmatprep.subr.mxu0 0.0
  %7208 = vmatpush1.msra.mxu0 0.0
  %7209 = vmatprep.subr.mxu0 0.0
  %7210 = vmatpush1.msra.mxu0 0.0
  %7211 = vmatprep.subr.mxu0 0.0
  %7212 = vmatpush1.msra.mxu0 0.0
  %7213 = vmatprep.subr.mxu0 0.0
  %7214 = vmatpush1.msra.mxu0 0.0
  %7215 = vmatprep.subr.mxu0 0.0
  %7216 = vmatpush1.msra.mxu0 0.0
  %7217 = vmatprep.subr.mxu0 0.0
  %7218 = vmatpush1.msra.mxu0 0.0
  %7219 = vmatprep.subr.mxu0 0.0
  %7220 = vmatpush1.msra.mxu0 0.0
  %7221 = vmatprep.subr.mxu0 0.0
  %7222 = vmatpush1.msra.mxu0 0.0
  %7223 = vmatprep.subr.mxu0 0.0
  %7224 = vmatpush1.msra.mxu0 0.0
  %7225 = vmatprep.subr.mxu0 0.0
  %7226 = vmatpush1.msra.mxu0 0.0
  %7227 = vmatprep.subr.mxu0 0.0
  %7228 = vmatpush1.msra.mxu0 0.0
  %7229 = vmatprep.subr.mxu0 0.0
  %7230 = vmatpush1.msra.mxu0 0.0
  %7231 = vmatprep.subr.mxu0 0.0
  %7232 = vmatpush1.msra.mxu0 0.0
  %7233 = vmatprep.subr.mxu0 0.0
  %7234 = vmatpush1.msra.mxu0 0.0
  %7235 = vmatprep.mubr.f32.mxu0 0.0
  %7236 = vmatmul.mubr.f32.gmra.mrb[0].mxu0 %v7124
  %v7237 = vpop.f32.mrb[0].mxu0
  %v7238 = vadd.f32 %v7045, %v7237
  %v7239 = vpop.f32.mrb[0].mxu0
  %7240 = vmatprep.mubr.f32.mxu0 0.0
  %7241 = vmatmul.mubr.f32.gmra.mrb[0].mxu0 %v7127
  %v7242 = vpop.f32.mrb[0].mxu0
  %v7243 = vadd.f32 %v7050, %v7242
  %v7244 = vpop.f32.mrb[0].mxu0
  %7245 = vmatprep.mubr.f32.mxu0 0.0
  %7246 = vmatmul.mubr.f32.gmra.mrb[0].mxu0 %v7130
  %v7247 = vpop.f32.mrb[0].mxu0
  %v7248 = vadd.f32 %v7055, %v7247
  %v7249 = vpop.f32.mrb[0].mxu0
  %7250 = vmatprep.mubr.f32.mxu0 0.0
  %7251 = vmatmul.mubr.f32.gmra.mrb[0].mxu0 %v7133
  %v7252 = vpop.f32.mrb[0].mxu0
  %v7253 = vadd.f32 %v7060, %v7252
  %v7254 = vpop.f32.mrb[0].mxu0
  %7255 = vmatprep.mubr.f32.mxu0 0.0
  %7256 = vmatmul.mubr.f32.gmra.mrb[0].mxu0 %v7136
  %v7257 = vpop.f32.mrb[0].mxu0
  %v7258 = vadd.f32 %v7065, %v7257
  %v7259 = vpop.f32.mrb[0].mxu0
  %7260 = vmatprep.mubr.f32.mxu0 0.0
  %7261 = vmatmul.mubr.f32.gmra.mrb[0].mxu0 %v7139
  %v7262 = vpop.f32.mrb[0].mxu0
  %v7263 = vadd.f32 %v7070, %v7262
  %v7264 = vpop.f32.mrb[0].mxu0
  %7265 = vmatprep.mubr.f32.mxu0 0.0
  %7266 = vmatmul.mubr.f32.gmra.mrb[0].mxu0 %v7142
  %v7267 = vpop.f32.mrb[0].mxu0
  %v7268 = vadd.f32 %v7075, %v7267
  %v7269 = vpop.f32.mrb[0].mxu0
  %7270 = vmatprep.mubr.f32.mxu0 0.0
  %7271 = vmatmul.mubr.f32.gmra.mrb[0].mxu0 %v7145
  %v7272 = vpop.f32.mrb[0].mxu0
  %v7273 = vadd.f32 %v7080, %v7272
  %v7274 = vpop.f32.mrb[0].mxu0
  %7275 = vmatprep.mubr.f32.mxu0 0.0
  %7276 = vmatmul.mubr.f32.gmra.mrb[0].mxu0 %v7148
  %v7277 = vpop.f32.mrb[0].mxu0
  %v7278 = vadd.f32 %v7085, %v7277
  %v7279 = vpop.f32.mrb[0].mxu0
  %7280 = vmatprep.mubr.f32.mxu0 0.0
  %7281 = vmatmul.mubr.f32.gmra.mrb[0].mxu0 %v7151
  %v7282 = vpop.f32.mrb[0].mxu0
  %v7283 = vadd.f32 %v7090, %v7282
  %v7284 = vpop.f32.mrb[0].mxu0
  %7285 = vmatprep.mubr.f32.mxu0 0.0
  %7286 = vmatmul.mubr.f32.gmra.mrb[0].mxu0 %v7154
  %v7287 = vpop.f32.mrb[0].mxu0
  %v7288 = vadd.f32 %v7095, %v7287
  %v7289 = vpop.f32.mrb[0].mxu0
  %7290 = vmatprep.mubr.f32.mxu0 0.0
  %7291 = vmatmul.mubr.f32.gmra.mrb[0].mxu0 %v7157
  %v7292 = vpop.f32.mrb[0].mxu0
  %v7293 = vadd.f32 %v7100, %v7292
  %v7294 = vpop.f32.mrb[0].mxu0
  %7295 = vmatprep.mubr.f32.mxu0 0.0
  %7296 = vmatmul.mubr.f32.gmra.mrb[0].mxu0 %v7160
  %v7297 = vpop.f32.mrb[0].mxu0
  %v7298 = vadd.f32 %v7105, %v7297
  %v7299 = vpop.f32.mrb[0].mxu0
  %7300 = vmatprep.mubr.f32.mxu0 0.0
  %7301 = vmatmul.mubr.f32.gmra.mrb[0].mxu0 %v7163
  %v7302 = vpop.f32.mrb[0].mxu0
  %v7303 = vadd.f32 %v7110, %v7302
  %v7304 = vpop.f32.mrb[0].mxu0
  %7305 = vmatprep.mubr.f32.mxu0 0.0
  %7306 = vmatmul.mubr.f32.gmra.mrb[0].mxu0 %v7166
  %v7307 = vpop.f32.mrb[0].mxu0
  %v7308 = vadd.f32 %v7115, %v7307
  %v7309 = vpop.f32.mrb[0].mxu0
  %7310 = vmatprep.mubr.f32.mxu0 0.0
  %7311 = vmatmul.mubr.f32.gmra.mrb[0].mxu0 %v7169
  %v7312 = vpop.f32.mrb[0].mxu0
  %v7313 = vadd.f32 %v7120, %v7312
  %v7314 = vpop.f32.mrb[0].mxu0
  %7315 = vdwg.mxu0
  %7316 = vrot.lane.b32.xlu0 %v3648, 96
  %v7317 = vpop.permute.xlu0 %7316
  %7318 = vrot.lane.b32.xlu0 %v3654, 96
  %v7319 = vpop.permute.xlu0 %7318
  %7320 = vrot.lane.b32.xlu0 %v3648, 32
  %v7321 = vpop.permute.xlu0 %7320
  %7322 = vrot.lane.b32.xlu0 %v3654, 32
  %v7323 = vpop.permute.xlu0 %7322
  %v7324 = vsel %vm2464, %v7317, 0
  %v7326 = vsel %vm2464, %v7319, 0
  %v7328 = vsel %vm2464, %v7321, 0
  %v7330 = vsel %vm2464, %v7323, 0
  %7332 = vmatprep.subr.mxu0 0.0
  %7333 = vmatpush1.xpose.msra.mxu0 %v7328
  %7334 = vmatprep.subr.mxu0 0.0
  %7335 = vmatpush1.xpose.msra.mxu0 %v7330
  %7336 = vmatprep.subr.mxu0 0.0
  %7337 = vmatpush1.xpose.msra.mxu0 0.0
  %7338 = vmatprep.subr.mxu0 0.0
  %7339 = vmatpush1.xpose.msra.mxu0 0.0
  %7340 = vmatprep.subr.mxu0 0.0
  %7341 = vmatpush1.xpose.msra.mxu0 0.0
  %7342 = vmatprep.subr.mxu0 0.0
  %7343 = vmatpush1.xpose.msra.mxu0 0.0
  %7344 = vmatprep.subr.mxu0 0.0
  %7345 = vmatpush1.xpose.msra.mxu0 0.0
  %7346 = vmatprep.subr.mxu0 0.0
  %7347 = vmatpush1.xpose.msra.mxu0 0.0
  %7348 = vmatprep.subr.mxu0 0.0
  %7349 = vmatpush1.xpose.msra.mxu0 0.0
  %7350 = vmatprep.subr.mxu0 0.0
  %7351 = vmatpush1.xpose.msra.mxu0 0.0
  %7352 = vmatprep.subr.mxu0 0.0
  %7353 = vmatpush1.xpose.msra.mxu0 0.0
  %7354 = vmatprep.subr.mxu0 0.0
  %7355 = vmatpush1.xpose.msra.mxu0 0.0
  %7356 = vmatprep.subr.mxu0 0.0
  %7357 = vmatpush1.xpose.msra.mxu0 0.0
  %7358 = vmatprep.subr.mxu0 0.0
  %7359 = vmatpush1.xpose.msra.mxu0 0.0
  %7360 = vmatprep.subr.mxu0 0.0
  %7361 = vmatpush1.xpose.msra.mxu0 0.0
  %7362 = vmatprep.subr.mxu0 0.0
  %7363 = vmatpush1.xpose.msra.mxu0 0.0
  %7364 = vmatprep.subr.mxu0 0.0
  %7365 = vmatpush1.xpose.msra.mxu0 0.0
  %7366 = vmatprep.subr.mxu0 0.0
  %7367 = vmatpush1.xpose.msra.mxu0 0.0
  %7368 = vmatprep.subr.mxu0 0.0
  %7369 = vmatpush1.xpose.msra.mxu0 0.0
  %7370 = vmatprep.subr.mxu0 0.0
  %7371 = vmatpush1.xpose.msra.mxu0 0.0
  %7372 = vmatprep.subr.mxu0 0.0
  %7373 = vmatpush1.xpose.msra.mxu0 0.0
  %7374 = vmatprep.subr.mxu0 0.0
  %7375 = vmatpush1.xpose.msra.mxu0 0.0
  %7376 = vmatprep.subr.mxu0 0.0
  %7377 = vmatpush1.xpose.msra.mxu0 0.0
  %7378 = vmatprep.subr.mxu0 0.0
  %7379 = vmatpush1.xpose.msra.mxu0 0.0
  %7380 = vmatprep.subr.mxu0 0.0
  %7381 = vmatpush1.xpose.msra.mxu0 0.0
  %7382 = vmatprep.subr.mxu0 0.0
  %7383 = vmatpush1.xpose.msra.mxu0 0.0
  %7384 = vmatprep.subr.mxu0 0.0
  %7385 = vmatpush1.xpose.msra.mxu0 0.0
  %7386 = vmatprep.subr.mxu0 0.0
  %7387 = vmatpush1.xpose.msra.mxu0 0.0
  %7388 = vmatprep.subr.mxu0 0.0
  %7389 = vmatpush1.xpose.msra.mxu0 0.0
  %7390 = vmatprep.subr.mxu0 0.0
  %7391 = vmatpush1.xpose.msra.mxu0 0.0
  %7392 = vmatprep.subr.mxu0 0.0
  %7393 = vmatpush1.xpose.msra.mxu0 0.0
  %7394 = vmatprep.subr.mxu0 0.0
  %7395 = vmatpush1.xpose.msra.mxu0 0.0
  %7396 = vmatprep.mubr.f32.mxu0 0.0
  %7397 = vmatmul.mubr.f32.gmra.mrb[0].mxu0 %v7324
  %v7398 = vpop.f32.mrb[0].mxu0
  %v7399 = vadd.f32 0.0, %v7398
  %v7400 = vpop.f32.mrb[0].mxu0
  %7401 = vmatprep.mubr.f32.mxu0 0.0
  %7402 = vmatmul.mubr.f32.gmra.mrb[0].mxu0 %v7326
  %v7403 = vpop.f32.mrb[0].mxu0
  %v7404 = vadd.f32 0.0, %v7403
  %v7405 = vpop.f32.mrb[0].mxu0
  %7406 = vdwg.mxu0
  %7407 = vrot.lane.b32.xlu0 %v3660, 96
  %v7408 = vpop.permute.xlu0 %7407
  %7409 = vrot.lane.b32.xlu0 %v3666, 96
  %v7410 = vpop.permute.xlu0 %7409
  %7411 = vrot.lane.b32.xlu0 %v3660, 32
  %v7412 = vpop.permute.xlu0 %7411
  %7413 = vrot.lane.b32.xlu0 %v3666, 32
  %v7414 = vpop.permute.xlu0 %7413
  %v7415 = vsel %vm2464, %v7408, 0
  %v7417 = vsel %vm2464, %v7410, 0
  %v7419 = vsel %vm2464, %v7412, 0
  %v7421 = vsel %vm2464, %v7414, 0
  %7423 = vmatprep.subr.mxu0 0.0
  %7424 = vmatpush1.xpose.msra.mxu0 %v7419
  %7425 = vmatprep.subr.mxu0 0.0
  %7426 = vmatpush1.xpose.msra.mxu0 %v7421
  %7427 = vmatprep.subr.mxu0 0.0
  %7428 = vmatpush1.xpose.msra.mxu0 0.0
  %7429 = vmatprep.subr.mxu0 0.0
  %7430 = vmatpush1.xpose.msra.mxu0 0.0
  %7431 = vmatprep.subr.mxu0 0.0
  %7432 = vmatpush1.xpose.msra.mxu0 0.0
  %7433 = vmatprep.subr.mxu0 0.0
  %7434 = vmatpush1.xpose.msra.mxu0 0.0
  %7435 = vmatprep.subr.mxu0 0.0
  %7436 = vmatpush1.xpose.msra.mxu0 0.0
  %7437 = vmatprep.subr.mxu0 0.0
  %7438 = vmatpush1.xpose.msra.mxu0 0.0
  %7439 = vmatprep.subr.mxu0 0.0
  %7440 = vmatpush1.xpose.msra.mxu0 0.0
  %7441 = vmatprep.subr.mxu0 0.0
  %7442 = vmatpush1.xpose.msra.mxu0 0.0
  %7443 = vmatprep.subr.mxu0 0.0
  %7444 = vmatpush1.xpose.msra.mxu0 0.0
  %7445 = vmatprep.subr.mxu0 0.0
  %7446 = vmatpush1.xpose.msra.mxu0 0.0
  %7447 = vmatprep.subr.mxu0 0.0
  %7448 = vmatpush1.xpose.msra.mxu0 0.0
  %7449 = vmatprep.subr.mxu0 0.0
  %7450 = vmatpush1.xpose.msra.mxu0 0.0
  %7451 = vmatprep.subr.mxu0 0.0
  %7452 = vmatpush1.xpose.msra.mxu0 0.0
  %7453 = vmatprep.subr.mxu0 0.0
  %7454 = vmatpush1.xpose.msra.mxu0 0.0
  %7455 = vmatprep.subr.mxu0 0.0
  %7456 = vmatpush1.xpose.msra.mxu0 0.0
  %7457 = vmatprep.subr.mxu0 0.0
  %7458 = vmatpush1.xpose.msra.mxu0 0.0
  %7459 = vmatprep.subr.mxu0 0.0
  %7460 = vmatpush1.xpose.msra.mxu0 0.0
  %7461 = vmatprep.subr.mxu0 0.0
  %7462 = vmatpush1.xpose.msra.mxu0 0.0
  %7463 = vmatprep.subr.mxu0 0.0
  %7464 = vmatpush1.xpose.msra.mxu0 0.0
  %7465 = vmatprep.subr.mxu0 0.0
  %7466 = vmatpush1.xpose.msra.mxu0 0.0
  %7467 = vmatprep.subr.mxu0 0.0
  %7468 = vmatpush1.xpose.msra.mxu0 0.0
  %7469 = vmatprep.subr.mxu0 0.0
  %7470 = vmatpush1.xpose.msra.mxu0 0.0
  %7471 = vmatprep.subr.mxu0 0.0
  %7472 = vmatpush1.xpose.msra.mxu0 0.0
  %7473 = vmatprep.subr.mxu0 0.0
  %7474 = vmatpush1.xpose.msra.mxu0 0.0
  %7475 = vmatprep.subr.mxu0 0.0
  %7476 = vmatpush1.xpose.msra.mxu0 0.0
  %7477 = vmatprep.subr.mxu0 0.0
  %7478 = vmatpush1.xpose.msra.mxu0 0.0
  %7479 = vmatprep.subr.mxu0 0.0
  %7480 = vmatpush1.xpose.msra.mxu0 0.0
  %7481 = vmatprep.subr.mxu0 0.0
  %7482 = vmatpush1.xpose.msra.mxu0 0.0
  %7483 = vmatprep.subr.mxu0 0.0
  %7484 = vmatpush1.xpose.msra.mxu0 0.0
  %7485 = vmatprep.subr.mxu0 0.0
  %7486 = vmatpush1.xpose.msra.mxu0 0.0
  %7487 = vmatprep.mubr.f32.mxu0 0.0
  %7488 = vmatmul.mubr.f32.gmra.mrb[0].mxu0 %v7415
  %v7489 = vpop.f32.mrb[0].mxu0
  %v7490 = vadd.f32 0.0, %v7489
  %v7491 = vpop.f32.mrb[0].mxu0
  %7492 = vmatprep.mubr.f32.mxu0 0.0
  %7493 = vmatmul.mubr.f32.gmra.mrb[0].mxu0 %v7417
  %v7494 = vpop.f32.mrb[0].mxu0
  %v7495 = vadd.f32 0.0, %v7494
  %v7496 = vpop.f32.mrb[0].mxu0
  %7497 = vdwg.mxu0
  %7498 = vrot.lane.b32.xlu0 %v3672, 96
  %v7499 = vpop.permute.xlu0 %7498
  %7500 = vrot.lane.b32.xlu0 %v3678, 96
  %v7501 = vpop.permute.xlu0 %7500
  %7502 = vrot.lane.b32.xlu0 %v3672, 32
  %v7503 = vpop.permute.xlu0 %7502
  %7504 = vrot.lane.b32.xlu0 %v3678, 32
  %v7505 = vpop.permute.xlu0 %7504
  %v7506 = vsel %vm2464, %v7499, 0
  %v7508 = vsel %vm2464, %v7501, 0
  %v7510 = vsel %vm2464, %v7503, 0
  %v7512 = vsel %vm2464, %v7505, 0
  %7514 = vmatprep.subr.mxu0 0.0
  %7515 = vmatpush1.xpose.msra.mxu0 %v7510
  %7516 = vmatprep.subr.mxu0 0.0
  %7517 = vmatpush1.xpose.msra.mxu0 %v7512
  %7518 = vmatprep.subr.mxu0 0.0
  %7519 = vmatpush1.xpose.msra.mxu0 0.0
  %7520 = vmatprep.subr.mxu0 0.0
  %7521 = vmatpush1.xpose.msra.mxu0 0.0
  %7522 = vmatprep.subr.mxu0 0.0
  %7523 = vmatpush1.xpose.msra.mxu0 0.0
  %7524 = vmatprep.subr.mxu0 0.0
  %7525 = vmatpush1.xpose.msra.mxu0 0.0
  %7526 = vmatprep.subr.mxu0 0.0
  %7527 = vmatpush1.xpose.msra.mxu0 0.0
  %7528 = vmatprep.subr.mxu0 0.0
  %7529 = vmatpush1.xpose.msra.mxu0 0.0
  %7530 = vmatprep.subr.mxu0 0.0
  %7531 = vmatpush1.xpose.msra.mxu0 0.0
  %7532 = vmatprep.subr.mxu0 0.0
  %7533 = vmatpush1.xpose.msra.mxu0 0.0
  %7534 = vmatprep.subr.mxu0 0.0
  %7535 = vmatpush1.xpose.msra.mxu0 0.0
  %7536 = vmatprep.subr.mxu0 0.0
  %7537 = vmatpush1.xpose.msra.mxu0 0.0
  %7538 = vmatprep.subr.mxu0 0.0
  %7539 = vmatpush1.xpose.msra.mxu0 0.0
  %7540 = vmatprep.subr.mxu0 0.0
  %7541 = vmatpush1.xpose.msra.mxu0 0.0
  %7542 = vmatprep.subr.mxu0 0.0
  %7543 = vmatpush1.xpose.msra.mxu0 0.0
  %7544 = vmatprep.subr.mxu0 0.0
  %7545 = vmatpush1.xpose.msra.mxu0 0.0
  %7546 = vmatprep.subr.mxu0 0.0
  %7547 = vmatpush1.xpose.msra.mxu0 0.0
  %7548 = vmatprep.subr.mxu0 0.0
  %7549 = vmatpush1.xpose.msra.mxu0 0.0
  %7550 = vmatprep.subr.mxu0 0.0
  %7551 = vmatpush1.xpose.msra.mxu0 0.0
  %7552 = vmatprep.subr.mxu0 0.0
  %7553 = vmatpush1.xpose.msra.mxu0 0.0
  %7554 = vmatprep.subr.mxu0 0.0
  %7555 = vmatpush1.xpose.msra.mxu0 0.0
  %7556 = vmatprep.subr.mxu0 0.0
  %7557 = vmatpush1.xpose.msra.mxu0 0.0
  %7558 = vmatprep.subr.mxu0 0.0
  %7559 = vmatpush1.xpose.msra.mxu0 0.0
  %7560 = vmatprep.subr.mxu0 0.0
  %7561 = vmatpush1.xpose.msra.mxu0 0.0
  %7562 = vmatprep.subr.mxu0 0.0
  %7563 = vmatpush1.xpose.msra.mxu0 0.0
  %7564 = vmatprep.subr.mxu0 0.0
  %7565 = vmatpush1.xpose.msra.mxu0 0.0
  %7566 = vmatprep.subr.mxu0 0.0
  %7567 = vmatpush1.xpose.msra.mxu0 0.0
  %7568 = vmatprep.subr.mxu0 0.0
  %7569 = vmatpush1.xpose.msra.mxu0 0.0
  %7570 = vmatprep.subr.mxu0 0.0
  %7571 = vmatpush1.xpose.msra.mxu0 0.0
  %7572 = vmatprep.subr.mxu0 0.0
  %7573 = vmatpush1.xpose.msra.mxu0 0.0
  %7574 = vmatprep.subr.mxu0 0.0
  %7575 = vmatpush1.xpose.msra.mxu0 0.0
  %7576 = vmatprep.subr.mxu0 0.0
  %7577 = vmatpush1.xpose.msra.mxu0 0.0
  %7578 = vmatprep.mubr.f32.mxu0 0.0
  %7579 = vmatmul.mubr.f32.gmra.mrb[0].mxu0 %v7506
  %v7580 = vpop.f32.mrb[0].mxu0
  %v7581 = vadd.f32 0.0, %v7580
  %v7582 = vpop.f32.mrb[0].mxu0
  %7583 = vmatprep.mubr.f32.mxu0 0.0
  %7584 = vmatmul.mubr.f32.gmra.mrb[0].mxu0 %v7508
  %v7585 = vpop.f32.mrb[0].mxu0
  %v7586 = vadd.f32 0.0, %v7585
  %v7587 = vpop.f32.mrb[0].mxu0
  %7588 = vdwg.mxu0
  %7589 = vrot.lane.b32.xlu0 %v3684, 96
  %v7590 = vpop.permute.xlu0 %7589
  %7591 = vrot.lane.b32.xlu0 %v3690, 96
  %v7592 = vpop.permute.xlu0 %7591
  %7593 = vrot.lane.b32.xlu0 %v3684, 32
  %v7594 = vpop.permute.xlu0 %7593
  %7595 = vrot.lane.b32.xlu0 %v3690, 32
  %v7596 = vpop.permute.xlu0 %7595
  %v7597 = vsel %vm2464, %v7590, 0
  %v7599 = vsel %vm2464, %v7592, 0
  %v7601 = vsel %vm2464, %v7594, 0
  %v7603 = vsel %vm2464, %v7596, 0
  %7605 = vmatprep.subr.mxu0 0.0
  %7606 = vmatpush1.xpose.msra.mxu0 %v7601
  %7607 = vmatprep.subr.mxu0 0.0
  %7608 = vmatpush1.xpose.msra.mxu0 %v7603
  %7609 = vmatprep.subr.mxu0 0.0
  %7610 = vmatpush1.xpose.msra.mxu0 0.0
  %7611 = vmatprep.subr.mxu0 0.0
  %7612 = vmatpush1.xpose.msra.mxu0 0.0
  %7613 = vmatprep.subr.mxu0 0.0
  %7614 = vmatpush1.xpose.msra.mxu0 0.0
  %7615 = vmatprep.subr.mxu0 0.0
  %7616 = vmatpush1.xpose.msra.mxu0 0.0
  %7617 = vmatprep.subr.mxu0 0.0
  %7618 = vmatpush1.xpose.msra.mxu0 0.0
  %7619 = vmatprep.subr.mxu0 0.0
  %7620 = vmatpush1.xpose.msra.mxu0 0.0
  %7621 = vmatprep.subr.mxu0 0.0
  %7622 = vmatpush1.xpose.msra.mxu0 0.0
  %7623 = vmatprep.subr.mxu0 0.0
  %7624 = vmatpush1.xpose.msra.mxu0 0.0
  %7625 = vmatprep.subr.mxu0 0.0
  %7626 = vmatpush1.xpose.msra.mxu0 0.0
  %7627 = vmatprep.subr.mxu0 0.0
  %7628 = vmatpush1.xpose.msra.mxu0 0.0
  %7629 = vmatprep.subr.mxu0 0.0
  %7630 = vmatpush1.xpose.msra.mxu0 0.0
  %7631 = vmatprep.subr.mxu0 0.0
  %7632 = vmatpush1.xpose.msra.mxu0 0.0
  %7633 = vmatprep.subr.mxu0 0.0
  %7634 = vmatpush1.xpose.msra.mxu0 0.0
  %7635 = vmatprep.subr.mxu0 0.0
  %7636 = vmatpush1.xpose.msra.mxu0 0.0
  %7637 = vmatprep.subr.mxu0 0.0
  %7638 = vmatpush1.xpose.msra.mxu0 0.0
  %7639 = vmatprep.subr.mxu0 0.0
  %7640 = vmatpush1.xpose.msra.mxu0 0.0
  %7641 = vmatprep.subr.mxu0 0.0
  %7642 = vmatpush1.xpose.msra.mxu0 0.0
  %7643 = vmatprep.subr.mxu0 0.0
  %7644 = vmatpush1.xpose.msra.mxu0 0.0
  %7645 = vmatprep.subr.mxu0 0.0
  %7646 = vmatpush1.xpose.msra.mxu0 0.0
  %7647 = vmatprep.subr.mxu0 0.0
  %7648 = vmatpush1.xpose.msra.mxu0 0.0
  %7649 = vmatprep.subr.mxu0 0.0
  %7650 = vmatpush1.xpose.msra.mxu0 0.0
  %7651 = vmatprep.subr.mxu0 0.0
  %7652 = vmatpush1.xpose.msra.mxu0 0.0
  %7653 = vmatprep.subr.mxu0 0.0
  %7654 = vmatpush1.xpose.msra.mxu0 0.0
  %7655 = vmatprep.subr.mxu0 0.0
  %7656 = vmatpush1.xpose.msra.mxu0 0.0
  %7657 = vmatprep.subr.mxu0 0.0
  %7658 = vmatpush1.xpose.msra.mxu0 0.0
  %7659 = vmatprep.subr.mxu0 0.0
  %7660 = vmatpush1.xpose.msra.mxu0 0.0
  %7661 = vmatprep.subr.mxu0 0.0
  %7662 = vmatpush1.xpose.msra.mxu0 0.0
  %7663 = vmatprep.subr.mxu0 0.0
  %7664 = vmatpush1.xpose.msra.mxu0 0.0
  %7665 = vmatprep.subr.mxu0 0.0
  %7666 = vmatpush1.xpose.msra.mxu0 0.0
  %7667 = vmatprep.subr.mxu0 0.0
  %7668 = vmatpush1.xpose.msra.mxu0 0.0
  %7669 = vmatprep.mubr.f32.mxu0 0.0
  %7670 = vmatmul.mubr.f32.gmra.mrb[0].mxu0 %v7597
  %v7671 = vpop.f32.mrb[0].mxu0
  %v7672 = vadd.f32 0.0, %v7671
  %v7673 = vpop.f32.mrb[0].mxu0
  %7674 = vmatprep.mubr.f32.mxu0 0.0
  %7675 = vmatmul.mubr.f32.gmra.mrb[0].mxu0 %v7599
  %v7676 = vpop.f32.mrb[0].mxu0
  %v7677 = vadd.f32 0.0, %v7676
  %v7678 = vpop.f32.mrb[0].mxu0
  %7679 = vdwg.mxu0
  %7680 = vrot.lane.b32.xlu0 %v3696, 96
  %v7681 = vpop.permute.xlu0 %7680
  %7682 = vrot.lane.b32.xlu0 %v3702, 96
  %v7683 = vpop.permute.xlu0 %7682
  %7684 = vrot.lane.b32.xlu0 %v3696, 32
  %v7685 = vpop.permute.xlu0 %7684
  %7686 = vrot.lane.b32.xlu0 %v3702, 32
  %v7687 = vpop.permute.xlu0 %7686
  %v7688 = vsel %vm2464, %v7681, 0
  %v7690 = vsel %vm2464, %v7683, 0
  %v7692 = vsel %vm2464, %v7685, 0
  %v7694 = vsel %vm2464, %v7687, 0
  %7696 = vmatprep.subr.mxu0 0.0
  %7697 = vmatpush1.xpose.msra.mxu0 %v7692
  %7698 = vmatprep.subr.mxu0 0.0
  %7699 = vmatpush1.xpose.msra.mxu0 %v7694
  %7700 = vmatprep.subr.mxu0 0.0
  %7701 = vmatpush1.xpose.msra.mxu0 0.0
  %7702 = vmatprep.subr.mxu0 0.0
  %7703 = vmatpush1.xpose.msra.mxu0 0.0
  %7704 = vmatprep.subr.mxu0 0.0
  %7705 = vmatpush1.xpose.msra.mxu0 0.0
  %7706 = vmatprep.subr.mxu0 0.0
  %7707 = vmatpush1.xpose.msra.mxu0 0.0
  %7708 = vmatprep.subr.mxu0 0.0
  %7709 = vmatpush1.xpose.msra.mxu0 0.0
  %7710 = vmatprep.subr.mxu0 0.0
  %7711 = vmatpush1.xpose.msra.mxu0 0.0
  %7712 = vmatprep.subr.mxu0 0.0
  %7713 = vmatpush1.xpose.msra.mxu0 0.0
  %7714 = vmatprep.subr.mxu0 0.0
  %7715 = vmatpush1.xpose.msra.mxu0 0.0
  %7716 = vmatprep.subr.mxu0 0.0
  %7717 = vmatpush1.xpose.msra.mxu0 0.0
  %7718 = vmatprep.subr.mxu0 0.0
  %7719 = vmatpush1.xpose.msra.mxu0 0.0
  %7720 = vmatprep.subr.mxu0 0.0
  %7721 = vmatpush1.xpose.msra.mxu0 0.0
  %7722 = vmatprep.subr.mxu0 0.0
  %7723 = vmatpush1.xpose.msra.mxu0 0.0
  %7724 = vmatprep.subr.mxu0 0.0
  %7725 = vmatpush1.xpose.msra.mxu0 0.0
  %7726 = vmatprep.subr.mxu0 0.0
  %7727 = vmatpush1.xpose.msra.mxu0 0.0
  %7728 = vmatprep.subr.mxu0 0.0
  %7729 = vmatpush1.xpose.msra.mxu0 0.0
  %7730 = vmatprep.subr.mxu0 0.0
  %7731 = vmatpush1.xpose.msra.mxu0 0.0
  %7732 = vmatprep.subr.mxu0 0.0
  %7733 = vmatpush1.xpose.msra.mxu0 0.0
  %7734 = vmatprep.subr.mxu0 0.0
  %7735 = vmatpush1.xpose.msra.mxu0 0.0
  %7736 = vmatprep.subr.mxu0 0.0
  %7737 = vmatpush1.xpose.msra.mxu0 0.0
  %7738 = vmatprep.subr.mxu0 0.0
  %7739 = vmatpush1.xpose.msra.mxu0 0.0
  %7740 = vmatprep.subr.mxu0 0.0
  %7741 = vmatpush1.xpose.msra.mxu0 0.0
  %7742 = vmatprep.subr.mxu0 0.0
  %7743 = vmatpush1.xpose.msra.mxu0 0.0
  %7744 = vmatprep.subr.mxu0 0.0
  %7745 = vmatpush1.xpose.msra.mxu0 0.0
  %7746 = vmatprep.subr.mxu0 0.0
  %7747 = vmatpush1.xpose.msra.mxu0 0.0
  %7748 = vmatprep.subr.mxu0 0.0
  %7749 = vmatpush1.xpose.msra.mxu0 0.0
  %7750 = vmatprep.subr.mxu0 0.0
  %7751 = vmatpush1.xpose.msra.mxu0 0.0
  %7752 = vmatprep.subr.mxu0 0.0
  %7753 = vmatpush1.xpose.msra.mxu0 0.0
  %7754 = vmatprep.subr.mxu0 0.0
  %7755 = vmatpush1.xpose.msra.mxu0 0.0
  %7756 = vmatprep.subr.mxu0 0.0
  %7757 = vmatpush1.xpose.msra.mxu0 0.0
  %7758 = vmatprep.subr.mxu0 0.0
  %7759 = vmatpush1.xpose.msra.mxu0 0.0
  %7760 = vmatprep.mubr.f32.mxu0 0.0
  %7761 = vmatmul.mubr.f32.gmra.mrb[0].mxu0 %v7688
  %v7762 = vpop.f32.mrb[0].mxu0
  %v7763 = vadd.f32 0.0, %v7762
  %v7764 = vpop.f32.mrb[0].mxu0
  %7765 = vmatprep.mubr.f32.mxu0 0.0
  %7766 = vmatmul.mubr.f32.gmra.mrb[0].mxu0 %v7690
  %v7767 = vpop.f32.mrb[0].mxu0
  %v7768 = vadd.f32 0.0, %v7767
  %v7769 = vpop.f32.mrb[0].mxu0
  %7770 = vdwg.mxu0
  %7771 = vrot.lane.b32.xlu0 %v3708, 96
  %v7772 = vpop.permute.xlu0 %7771
  %7773 = vrot.lane.b32.xlu0 %v3714, 96
  %v7774 = vpop.permute.xlu0 %7773
  %7775 = vrot.lane.b32.xlu0 %v3708, 32
  %v7776 = vpop.permute.xlu0 %7775
  %7777 = vrot.lane.b32.xlu0 %v3714, 32
  %v7778 = vpop.permute.xlu0 %7777
  %v7779 = vsel %vm2464, %v7772, 0
  %v7781 = vsel %vm2464, %v7774, 0
  %v7783 = vsel %vm2464, %v7776, 0
  %v7785 = vsel %vm2464, %v7778, 0
  %7787 = vmatprep.subr.mxu0 0.0
  %7788 = vmatpush1.xpose.msra.mxu0 %v7783
  %7789 = vmatprep.subr.mxu0 0.0
  %7790 = vmatpush1.xpose.msra.mxu0 %v7785
  %7791 = vmatprep.subr.mxu0 0.0
  %7792 = vmatpush1.xpose.msra.mxu0 0.0
  %7793 = vmatprep.subr.mxu0 0.0
  %7794 = vmatpush1.xpose.msra.mxu0 0.0
  %7795 = vmatprep.subr.mxu0 0.0
  %7796 = vmatpush1.xpose.msra.mxu0 0.0
  %7797 = vmatprep.subr.mxu0 0.0
  %7798 = vmatpush1.xpose.msra.mxu0 0.0
  %7799 = vmatprep.subr.mxu0 0.0
  %7800 = vmatpush1.xpose.msra.mxu0 0.0
  %7801 = vmatprep.subr.mxu0 0.0
  %7802 = vmatpush1.xpose.msra.mxu0 0.0
  %7803 = vmatprep.subr.mxu0 0.0
  %7804 = vmatpush1.xpose.msra.mxu0 0.0
  %7805 = vmatprep.subr.mxu0 0.0
  %7806 = vmatpush1.xpose.msra.mxu0 0.0
  %7807 = vmatprep.subr.mxu0 0.0
  %7808 = vmatpush1.xpose.msra.mxu0 0.0
  %7809 = vmatprep.subr.mxu0 0.0
  %7810 = vmatpush1.xpose.msra.mxu0 0.0
  %7811 = vmatprep.subr.mxu0 0.0
  %7812 = vmatpush1.xpose.msra.mxu0 0.0
  %7813 = vmatprep.subr.mxu0 0.0
  %7814 = vmatpush1.xpose.msra.mxu0 0.0
  %7815 = vmatprep.subr.mxu0 0.0
  %7816 = vmatpush1.xpose.msra.mxu0 0.0
  %7817 = vmatprep.subr.mxu0 0.0
  %7818 = vmatpush1.xpose.msra.mxu0 0.0
  %7819 = vmatprep.subr.mxu0 0.0
  %7820 = vmatpush1.xpose.msra.mxu0 0.0
  %7821 = vmatprep.subr.mxu0 0.0
  %7822 = vmatpush1.xpose.msra.mxu0 0.0
  %7823 = vmatprep.subr.mxu0 0.0
  %7824 = vmatpush1.xpose.msra.mxu0 0.0
  %7825 = vmatprep.subr.mxu0 0.0
  %7826 = vmatpush1.xpose.msra.mxu0 0.0
  %7827 = vmatprep.subr.mxu0 0.0
  %7828 = vmatpush1.xpose.msra.mxu0 0.0
  %7829 = vmatprep.subr.mxu0 0.0
  %7830 = vmatpush1.xpose.msra.mxu0 0.0
  %7831 = vmatprep.subr.mxu0 0.0
  %7832 = vmatpush1.xpose.msra.mxu0 0.0
  %7833 = vmatprep.subr.mxu0 0.0
  %7834 = vmatpush1.xpose.msra.mxu0 0.0
  %7835 = vmatprep.subr.mxu0 0.0
  %7836 = vmatpush1.xpose.msra.mxu0 0.0
  %7837 = vmatprep.subr.mxu0 0.0
  %7838 = vmatpush1.xpose.msra.mxu0 0.0
  %7839 = vmatprep.subr.mxu0 0.0
  %7840 = vmatpush1.xpose.msra.mxu0 0.0
  %7841 = vmatprep.subr.mxu0 0.0
  %7842 = vmatpush1.xpose.msra.mxu0 0.0
  %7843 = vmatprep.subr.mxu0 0.0
  %7844 = vmatpush1.xpose.msra.mxu0 0.0
  %7845 = vmatprep.subr.mxu0 0.0
  %7846 = vmatpush1.xpose.msra.mxu0 0.0
  %7847 = vmatprep.subr.mxu0 0.0
  %7848 = vmatpush1.xpose.msra.mxu0 0.0
  %7849 = vmatprep.subr.mxu0 0.0
  %7850 = vmatpush1.xpose.msra.mxu0 0.0
  %7851 = vmatprep.mubr.f32.mxu0 0.0
  %7852 = vmatmul.mubr.f32.gmra.mrb[0].mxu0 %v7779
  %v7853 = vpop.f32.mrb[0].mxu0
  %v7854 = vadd.f32 0.0, %v7853
  %v7855 = vpop.f32.mrb[0].mxu0
  %7856 = vmatprep.mubr.f32.mxu0 0.0
  %7857 = vmatmul.mubr.f32.gmra.mrb[0].mxu0 %v7781
  %v7858 = vpop.f32.mrb[0].mxu0
  %v7859 = vadd.f32 0.0, %v7858
  %v7860 = vpop.f32.mrb[0].mxu0
  %7861 = vdwg.mxu0
  %7862 = vrot.lane.b32.xlu0 %v3720, 96
  %v7863 = vpop.permute.xlu0 %7862
  %7864 = vrot.lane.b32.xlu0 %v3726, 96
  %v7865 = vpop.permute.xlu0 %7864
  %7866 = vrot.lane.b32.xlu0 %v3720, 32
  %v7867 = vpop.permute.xlu0 %7866
  %7868 = vrot.lane.b32.xlu0 %v3726, 32
  %v7869 = vpop.permute.xlu0 %7868
  %v7870 = vsel %vm2464, %v7863, 0
  %v7872 = vsel %vm2464, %v7865, 0
  %v7874 = vsel %vm2464, %v7867, 0
  %v7876 = vsel %vm2464, %v7869, 0
  %7878 = vmatprep.subr.mxu0 0.0
  %7879 = vmatpush1.xpose.msra.mxu0 %v7874
  %7880 = vmatprep.subr.mxu0 0.0
  %7881 = vmatpush1.xpose.msra.mxu0 %v7876
  %7882 = vmatprep.subr.mxu0 0.0
  %7883 = vmatpush1.xpose.msra.mxu0 0.0
  %7884 = vmatprep.subr.mxu0 0.0
  %7885 = vmatpush1.xpose.msra.mxu0 0.0
  %7886 = vmatprep.subr.mxu0 0.0
  %7887 = vmatpush1.xpose.msra.mxu0 0.0
  %7888 = vmatprep.subr.mxu0 0.0
  %7889 = vmatpush1.xpose.msra.mxu0 0.0
  %7890 = vmatprep.subr.mxu0 0.0
  %7891 = vmatpush1.xpose.msra.mxu0 0.0
  %7892 = vmatprep.subr.mxu0 0.0
  %7893 = vmatpush1.xpose.msra.mxu0 0.0
  %7894 = vmatprep.subr.mxu0 0.0
  %7895 = vmatpush1.xpose.msra.mxu0 0.0
  %7896 = vmatprep.subr.mxu0 0.0
  %7897 = vmatpush1.xpose.msra.mxu0 0.0
  %7898 = vmatprep.subr.mxu0 0.0
  %7899 = vmatpush1.xpose.msra.mxu0 0.0
  %7900 = vmatprep.subr.mxu0 0.0
  %7901 = vmatpush1.xpose.msra.mxu0 0.0
  %7902 = vmatprep.subr.mxu0 0.0
  %7903 = vmatpush1.xpose.msra.mxu0 0.0
  %7904 = vmatprep.subr.mxu0 0.0
  %7905 = vmatpush1.xpose.msra.mxu0 0.0
  %7906 = vmatprep.subr.mxu0 0.0
  %7907 = vmatpush1.xpose.msra.mxu0 0.0
  %7908 = vmatprep.subr.mxu0 0.0
  %7909 = vmatpush1.xpose.msra.mxu0 0.0
  %7910 = vmatprep.subr.mxu0 0.0
  %7911 = vmatpush1.xpose.msra.mxu0 0.0
  %7912 = vmatprep.subr.mxu0 0.0
  %7913 = vmatpush1.xpose.msra.mxu0 0.0
  %7914 = vmatprep.subr.mxu0 0.0
  %7915 = vmatpush1.xpose.msra.mxu0 0.0
  %7916 = vmatprep.subr.mxu0 0.0
  %7917 = vmatpush1.xpose.msra.mxu0 0.0
  %7918 = vmatprep.subr.mxu0 0.0
  %7919 = vmatpush1.xpose.msra.mxu0 0.0
  %7920 = vmatprep.subr.mxu0 0.0
  %7921 = vmatpush1.xpose.msra.mxu0 0.0
  %7922 = vmatprep.subr.mxu0 0.0
  %7923 = vmatpush1.xpose.msra.mxu0 0.0
  %7924 = vmatprep.subr.mxu0 0.0
  %7925 = vmatpush1.xpose.msra.mxu0 0.0
  %7926 = vmatprep.subr.mxu0 0.0
  %7927 = vmatpush1.xpose.msra.mxu0 0.0
  %7928 = vmatprep.subr.mxu0 0.0
  %7929 = vmatpush1.xpose.msra.mxu0 0.0
  %7930 = vmatprep.subr.mxu0 0.0
  %7931 = vmatpush1.xpose.msra.mxu0 0.0
  %7932 = vmatprep.subr.mxu0 0.0
  %7933 = vmatpush1.xpose.msra.mxu0 0.0
  %7934 = vmatprep.subr.mxu0 0.0
  %7935 = vmatpush1.xpose.msra.mxu0 0.0
  %7936 = vmatprep.subr.mxu0 0.0
  %7937 = vmatpush1.xpose.msra.mxu0 0.0
  %7938 = vmatprep.subr.mxu0 0.0
  %7939 = vmatpush1.xpose.msra.mxu0 0.0
  %7940 = vmatprep.subr.mxu0 0.0
  %7941 = vmatpush1.xpose.msra.mxu0 0.0
  %7942 = vmatprep.mubr.f32.mxu0 0.0
  %7943 = vmatmul.mubr.f32.gmra.mrb[0].mxu0 %v7870
  %v7944 = vpop.f32.mrb[0].mxu0
  %v7945 = vadd.f32 0.0, %v7944
  %v7946 = vpop.f32.mrb[0].mxu0
  %7947 = vmatprep.mubr.f32.mxu0 0.0
  %7948 = vmatmul.mubr.f32.gmra.mrb[0].mxu0 %v7872
  %v7949 = vpop.f32.mrb[0].mxu0
  %v7950 = vadd.f32 0.0, %v7949
  %v7951 = vpop.f32.mrb[0].mxu0
  %7952 = vdwg.mxu0
  %7953 = vrot.lane.b32.xlu0 %v3732, 96
  %v7954 = vpop.permute.xlu0 %7953
  %7955 = vrot.lane.b32.xlu0 %v3738, 96
  %v7956 = vpop.permute.xlu0 %7955
  %7957 = vrot.lane.b32.xlu0 %v3732, 32
  %v7958 = vpop.permute.xlu0 %7957
  %7959 = vrot.lane.b32.xlu0 %v3738, 32
  %v7960 = vpop.permute.xlu0 %7959
  %v7961 = vsel %vm2464, %v7954, 0
  %v7963 = vsel %vm2464, %v7956, 0
  %v7965 = vsel %vm2464, %v7958, 0
  %v7967 = vsel %vm2464, %v7960, 0
  %7969 = vmatprep.subr.mxu0 0.0
  %7970 = vmatpush1.xpose.msra.mxu0 %v7965
  %7971 = vmatprep.subr.mxu0 0.0
  %7972 = vmatpush1.xpose.msra.mxu0 %v7967
  %7973 = vmatprep.subr.mxu0 0.0
  %7974 = vmatpush1.xpose.msra.mxu0 0.0
  %7975 = vmatprep.subr.mxu0 0.0
  %7976 = vmatpush1.xpose.msra.mxu0 0.0
  %7977 = vmatprep.subr.mxu0 0.0
  %7978 = vmatpush1.xpose.msra.mxu0 0.0
  %7979 = vmatprep.subr.mxu0 0.0
  %7980 = vmatpush1.xpose.msra.mxu0 0.0
  %7981 = vmatprep.subr.mxu0 0.0
  %7982 = vmatpush1.xpose.msra.mxu0 0.0
  %7983 = vmatprep.subr.mxu0 0.0
  %7984 = vmatpush1.xpose.msra.mxu0 0.0
  %7985 = vmatprep.subr.mxu0 0.0
  %7986 = vmatpush1.xpose.msra.mxu0 0.0
  %7987 = vmatprep.subr.mxu0 0.0
  %7988 = vmatpush1.xpose.msra.mxu0 0.0
  %7989 = vmatprep.subr.mxu0 0.0
  %7990 = vmatpush1.xpose.msra.mxu0 0.0
  %7991 = vmatprep.subr.mxu0 0.0
  %7992 = vmatpush1.xpose.msra.mxu0 0.0
  %7993 = vmatprep.subr.mxu0 0.0
  %7994 = vmatpush1.xpose.msra.mxu0 0.0
  %7995 = vmatprep.subr.mxu0 0.0
  %7996 = vmatpush1.xpose.msra.mxu0 0.0
  %7997 = vmatprep.subr.mxu0 0.0
  %7998 = vmatpush1.xpose.msra.mxu0 0.0
  %7999 = vmatprep.subr.mxu0 0.0
  %8000 = vmatpush1.xpose.msra.mxu0 0.0
  %8001 = vmatprep.subr.mxu0 0.0
  %8002 = vmatpush1.xpose.msra.mxu0 0.0
  %8003 = vmatprep.subr.mxu0 0.0
  %8004 = vmatpush1.xpose.msra.mxu0 0.0
  %8005 = vmatprep.subr.mxu0 0.0
  %8006 = vmatpush1.xpose.msra.mxu0 0.0
  %8007 = vmatprep.subr.mxu0 0.0
  %8008 = vmatpush1.xpose.msra.mxu0 0.0
  %8009 = vmatprep.subr.mxu0 0.0
  %8010 = vmatpush1.xpose.msra.mxu0 0.0
  %8011 = vmatprep.subr.mxu0 0.0
  %8012 = vmatpush1.xpose.msra.mxu0 0.0
  %8013 = vmatprep.subr.mxu0 0.0
  %8014 = vmatpush1.xpose.msra.mxu0 0.0
  %8015 = vmatprep.subr.mxu0 0.0
  %8016 = vmatpush1.xpose.msra.mxu0 0.0
  %8017 = vmatprep.subr.mxu0 0.0
  %8018 = vmatpush1.xpose.msra.mxu0 0.0
  %8019 = vmatprep.subr.mxu0 0.0
  %8020 = vmatpush1.xpose.msra.mxu0 0.0
  %8021 = vmatprep.subr.mxu0 0.0
  %8022 = vmatpush1.xpose.msra.mxu0 0.0
  %8023 = vmatprep.subr.mxu0 0.0
  %8024 = vmatpush1.xpose.msra.mxu0 0.0
  %8025 = vmatprep.subr.mxu0 0.0
  %8026 = vmatpush1.xpose.msra.mxu0 0.0
  %8027 = vmatprep.subr.mxu0 0.0
  %8028 = vmatpush1.xpose.msra.mxu0 0.0
  %8029 = vmatprep.subr.mxu0 0.0
  %8030 = vmatpush1.xpose.msra.mxu0 0.0
  %8031 = vmatprep.subr.mxu0 0.0
  %8032 = vmatpush1.xpose.msra.mxu0 0.0
  %8033 = vmatprep.mubr.f32.mxu0 0.0
  %8034 = vmatmul.mubr.f32.gmra.mrb[0].mxu0 %v7961
  %v8035 = vpop.f32.mrb[0].mxu0
  %v8036 = vadd.f32 0.0, %v8035
  %v8037 = vpop.f32.mrb[0].mxu0
  %8038 = vmatprep.mubr.f32.mxu0 0.0
  %8039 = vmatmul.mubr.f32.gmra.mrb[0].mxu0 %v7963
  %v8040 = vpop.f32.mrb[0].mxu0
  %v8041 = vadd.f32 0.0, %v8040
  %v8042 = vpop.f32.mrb[0].mxu0
  %8043 = vdwg.mxu0
  %v8044 = vmul.f32 %v7399, 0.25
  %v8045 = vmul.f32 %v7404, 0.25
  %v8046 = vmul.f32 %v7490, 0.25
  %v8047 = vmul.f32 %v7495, 0.25
  %v8048 = vmul.f32 %v7581, 0.25
  %v8049 = vmul.f32 %v7586, 0.25
  %v8050 = vmul.f32 %v7672, 0.25
  %v8051 = vmul.f32 %v7677, 0.25
  %v8052 = vmul.f32 %v7763, 0.25
  %v8053 = vmul.f32 %v7768, 0.25
  %v8054 = vmul.f32 %v7854, 0.25
  %v8055 = vmul.f32 %v7859, 0.25
  %v8056 = vmul.f32 %v7945, 0.25
  %v8057 = vmul.f32 %v7950, 0.25
  %v8058 = vmul.f32 %v8036, 0.25
  %v8059 = vmul.f32 %v8041, 0.25
  %v8060 = vsel %vm2464, %v8044, -inf
  %8061 = vmax.xlane.f32.xlu0 %v8060
  %v8062 = vpop.xlane.xlu0 %8061
  %v8063 = vsel %vm2464, %v8045, -inf
  %8064 = vmax.xlane.f32.xlu0 %v8063
  %v8065 = vpop.xlane.xlu0 %8064
  %v8066 = vsel %vm2464, %v8046, -inf
  %8067 = vmax.xlane.f32.xlu0 %v8066
  %v8068 = vpop.xlane.xlu0 %8067
  %v8069 = vsel %vm2464, %v8047, -inf
  %8070 = vmax.xlane.f32.xlu0 %v8069
  %v8071 = vpop.xlane.xlu0 %8070
  %v8072 = vsel %vm2464, %v8048, -inf
  %8073 = vmax.xlane.f32.xlu0 %v8072
  %v8074 = vpop.xlane.xlu0 %8073
  %v8075 = vsel %vm2464, %v8049, -inf
  %8076 = vmax.xlane.f32.xlu0 %v8075
  %v8077 = vpop.xlane.xlu0 %8076
  %v8078 = vsel %vm2464, %v8050, -inf
  %8079 = vmax.xlane.f32.xlu0 %v8078
  %v8080 = vpop.xlane.xlu0 %8079
  %v8081 = vsel %vm2464, %v8051, -inf
  %8082 = vmax.xlane.f32.xlu0 %v8081
  %v8083 = vpop.xlane.xlu0 %8082
  %v8084 = vsel %vm2464, %v8052, -inf
  %8085 = vmax.xlane.f32.xlu0 %v8084
  %v8086 = vpop.xlane.xlu0 %8085
  %v8087 = vsel %vm2464, %v8053, -inf
  %8088 = vmax.xlane.f32.xlu0 %v8087
  %v8089 = vpop.xlane.xlu0 %8088
  %v8090 = vsel %vm2464, %v8054, -inf
  %8091 = vmax.xlane.f32.xlu0 %v8090
  %v8092 = vpop.xlane.xlu0 %8091
  %v8093 = vsel %vm2464, %v8055, -inf
  %8094 = vmax.xlane.f32.xlu0 %v8093
  %v8095 = vpop.xlane.xlu0 %8094
  %v8096 = vsel %vm2464, %v8056, -inf
  %8097 = vmax.xlane.f32.xlu0 %v8096
  %v8098 = vpop.xlane.xlu0 %8097
  %v8099 = vsel %vm2464, %v8057, -inf
  %8100 = vmax.xlane.f32.xlu0 %v8099
  %v8101 = vpop.xlane.xlu0 %8100
  %v8102 = vsel %vm2464, %v8058, -inf
  %8103 = vmax.xlane.f32.xlu0 %v8102
  %v8104 = vpop.xlane.xlu0 %8103
  %v8105 = vsel %vm2464, %v8059, -inf
  %8106 = vmax.xlane.f32.xlu0 %v8105
  %v8107 = vpop.xlane.xlu0 %8106
  %v8108 = vsub.f32 %v8044, %v8062
  %v8109 = vsub.f32 %v8045, %v8065
  %v8110 = vsub.f32 %v8046, %v8068
  %v8111 = vsub.f32 %v8047, %v8071
  %v8112 = vsub.f32 %v8048, %v8074
  %v8113 = vsub.f32 %v8049, %v8077
  %v8114 = vsub.f32 %v8050, %v8080
  %v8115 = vsub.f32 %v8051, %v8083
  %v8116 = vsub.f32 %v8052, %v8086
  %v8117 = vsub.f32 %v8053, %v8089
  %v8118 = vsub.f32 %v8054, %v8092
  %v8119 = vsub.f32 %v8055, %v8095
  %v8120 = vsub.f32 %v8056, %v8098
  %v8121 = vsub.f32 %v8057, %v8101
  %v8122 = vsub.f32 %v8058, %v8104
  %v8123 = vsub.f32 %v8059, %v8107
  %v8124 = vmul.f32 %v8108, 1.442695
  %v8125 = vpow.pop %v8124
  %v8126 = vmul.f32 %v8109, 1.442695
  %v8127 = vpow.pop %v8126
  %v8128 = vmul.f32 %v8110, 1.442695
  %v8129 = vpow.pop %v8128
  %v8130 = vmul.f32 %v8111, 1.442695
  %v8131 = vpow.pop %v8130
  %v8132 = vmul.f32 %v8112, 1.442695
  %v8133 = vpow.pop %v8132
  %v8134 = vmul.f32 %v8113, 1.442695
  %v8135 = vpow.pop %v8134
  %v8136 = vmul.f32 %v8114, 1.442695
  %v8137 = vpow.pop %v8136
  %v8138 = vmul.f32 %v8115, 1.442695
  %v8139 = vpow.pop %v8138
  %v8140 = vmul.f32 %v8116, 1.442695
  %v8141 = vpow.pop %v8140
  %v8142 = vmul.f32 %v8117, 1.442695
  %v8143 = vpow.pop %v8142
  %v8144 = vmul.f32 %v8118, 1.442695
  %v8145 = vpow.pop %v8144
  %v8146 = vmul.f32 %v8119, 1.442695
  %v8147 = vpow.pop %v8146
  %v8148 = vmul.f32 %v8120, 1.442695
  %v8149 = vpow.pop %v8148
  %v8150 = vmul.f32 %v8121, 1.442695
  %v8151 = vpow.pop %v8150
  %v8152 = vmul.f32 %v8122, 1.442695
  %v8153 = vpow.pop %v8152
  %v8154 = vmul.f32 %v8123, 1.442695
  %v8155 = vpow.pop %v8154
  %v8156 = vsel %vm2464, %v8125, 0.0
  %8157 = vadd.xlane.f32.xlu0 %v8156
  %v8158 = vpop.xlane.xlu0 %8157
  %v8159 = vsel %vm2464, %v8127, 0.0
  %8160 = vadd.xlane.f32.xlu0 %v8159
  %v8161 = vpop.xlane.xlu0 %8160
  %v8162 = vsel %vm2464, %v8129, 0.0
  %8163 = vadd.xlane.f32.xlu0 %v8162
  %v8164 = vpop.xlane.xlu0 %8163
  %v8165 = vsel %vm2464, %v8131, 0.0
  %8166 = vadd.xlane.f32.xlu0 %v8165
  %v8167 = vpop.xlane.xlu0 %8166
  %v8168 = vsel %vm2464, %v8133, 0.0
  %8169 = vadd.xlane.f32.xlu0 %v8168
  %v8170 = vpop.xlane.xlu0 %8169
  %v8171 = vsel %vm2464, %v8135, 0.0
  %8172 = vadd.xlane.f32.xlu0 %v8171
  %v8173 = vpop.xlane.xlu0 %8172
  %v8174 = vsel %vm2464, %v8137, 0.0
  %8175 = vadd.xlane.f32.xlu0 %v8174
  %v8176 = vpop.xlane.xlu0 %8175
  %v8177 = vsel %vm2464, %v8139, 0.0
  %8178 = vadd.xlane.f32.xlu0 %v8177
  %v8179 = vpop.xlane.xlu0 %8178
  %v8180 = vsel %vm2464, %v8141, 0.0
  %8181 = vadd.xlane.f32.xlu0 %v8180
  %v8182 = vpop.xlane.xlu0 %8181
  %v8183 = vsel %vm2464, %v8143, 0.0
  %8184 = vadd.xlane.f32.xlu0 %v8183
  %v8185 = vpop.xlane.xlu0 %8184
  %v8186 = vsel %vm2464, %v8145, 0.0
  %8187 = vadd.xlane.f32.xlu0 %v8186
  %v8188 = vpop.xlane.xlu0 %8187
  %v8189 = vsel %vm2464, %v8147, 0.0
  %8190 = vadd.xlane.f32.xlu0 %v8189
  %v8191 = vpop.xlane.xlu0 %8190
  %v8192 = vsel %vm2464, %v8149, 0.0
  %8193 = vadd.xlane.f32.xlu0 %v8192
  %v8194 = vpop.xlane.xlu0 %8193
  %v8195 = vsel %vm2464, %v8151, 0.0
  %8196 = vadd.xlane.f32.xlu0 %v8195
  %v8197 = vpop.xlane.xlu0 %8196
  %v8198 = vsel %vm2464, %v8153, 0.0
  %8199 = vadd.xlane.f32.xlu0 %v8198
  %v8200 = vpop.xlane.xlu0 %8199
  %v8201 = vsel %vm2464, %v8155, 0.0
  %8202 = vadd.xlane.f32.xlu0 %v8201
  %v8203 = vpop.xlane.xlu0 %8202
  %v8204 = vrcp.pop %v8158
  %v8205 = vrcp.pop %v8161
  %v8206 = vrcp.pop %v8164
  %v8207 = vrcp.pop %v8167
  %v8208 = vrcp.pop %v8170
  %v8209 = vrcp.pop %v8173
  %v8210 = vrcp.pop %v8176
  %v8211 = vrcp.pop %v8179
  %v8212 = vrcp.pop %v8182
  %v8213 = vrcp.pop %v8185
  %v8214 = vrcp.pop %v8188
  %v8215 = vrcp.pop %v8191
  %v8216 = vrcp.pop %v8194
  %v8217 = vrcp.pop %v8197
  %v8218 = vrcp.pop %v8200
  %v8219 = vrcp.pop %v8203
  %v8220 = vmul.f32 %v8125, %v8204
  %v8221 = vmul.f32 %v8127, %v8205
  %v8222 = vmul.f32 %v8129, %v8206
  %v8223 = vmul.f32 %v8131, %v8207
  %v8224 = vmul.f32 %v8133, %v8208
  %v8225 = vmul.f32 %v8135, %v8209
  %v8226 = vmul.f32 %v8137, %v8210
  %v8227 = vmul.f32 %v8139, %v8211
  %v8228 = vmul.f32 %v8141, %v8212
  %v8229 = vmul.f32 %v8143, %v8213
  %v8230 = vmul.f32 %v8145, %v8214
  %v8231 = vmul.f32 %v8147, %v8215
  %v8232 = vmul.f32 %v8149, %v8216
  %v8233 = vmul.f32 %v8151, %v8217
  %v8234 = vmul.f32 %v8153, %v8218
  %v8235 = vmul.f32 %v8155, %v8219
  %8236 = vrot.lane.b32.xlu0 %v3650, 96
  %v8237 = vpop.permute.xlu0 %8236
  %8238 = vrot.lane.b32.xlu0 %v3656, 96
  %v8239 = vpop.permute.xlu0 %8238
  %v8243 = vsel %vm2464, %v8220, 0
  %v8246 = vsel %vm2464, %v8221, 0
  %8248 = vmatprep.subr.mxu0 0.0
  %8249 = vmatpush1.msra.mxu0 %v8237
  %8250 = vmatprep.subr.mxu0 0.0
  %8251 = vmatpush1.msra.mxu0 %v8239
  %8252 = vmatprep.subr.mxu0 0.0
  %8253 = vmatpush1.msra.mxu0 0.0
  %8254 = vmatprep.subr.mxu0 0.0
  %8255 = vmatpush1.msra.mxu0 0.0
  %8256 = vmatprep.subr.mxu0 0.0
  %8257 = vmatpush1.msra.mxu0 0.0
  %8258 = vmatprep.subr.mxu0 0.0
  %8259 = vmatpush1.msra.mxu0 0.0
  %8260 = vmatprep.subr.mxu0 0.0
  %8261 = vmatpush1.msra.mxu0 0.0
  %8262 = vmatprep.subr.mxu0 0.0
  %8263 = vmatpush1.msra.mxu0 0.0
  %8264 = vmatprep.subr.mxu0 0.0
  %8265 = vmatpush1.msra.mxu0 0.0
  %8266 = vmatprep.subr.mxu0 0.0
  %8267 = vmatpush1.msra.mxu0 0.0
  %8268 = vmatprep.subr.mxu0 0.0
  %8269 = vmatpush1.msra.mxu0 0.0
  %8270 = vmatprep.subr.mxu0 0.0
  %8271 = vmatpush1.msra.mxu0 0.0
  %8272 = vmatprep.subr.mxu0 0.0
  %8273 = vmatpush1.msra.mxu0 0.0
  %8274 = vmatprep.subr.mxu0 0.0
  %8275 = vmatpush1.msra.mxu0 0.0
  %8276 = vmatprep.subr.mxu0 0.0
  %8277 = vmatpush1.msra.mxu0 0.0
  %8278 = vmatprep.subr.mxu0 0.0
  %8279 = vmatpush1.msra.mxu0 0.0
  %8280 = vmatprep.subr.mxu0 0.0
  %8281 = vmatpush1.msra.mxu0 0.0
  %8282 = vmatprep.subr.mxu0 0.0
  %8283 = vmatpush1.msra.mxu0 0.0
  %8284 = vmatprep.subr.mxu0 0.0
  %8285 = vmatpush1.msra.mxu0 0.0
  %8286 = vmatprep.subr.mxu0 0.0
  %8287 = vmatpush1.msra.mxu0 0.0
  %8288 = vmatprep.subr.mxu0 0.0
  %8289 = vmatpush1.msra.mxu0 0.0
  %8290 = vmatprep.subr.mxu0 0.0
  %8291 = vmatpush1.msra.mxu0 0.0
  %8292 = vmatprep.subr.mxu0 0.0
  %8293 = vmatpush1.msra.mxu0 0.0
  %8294 = vmatprep.subr.mxu0 0.0
  %8295 = vmatpush1.msra.mxu0 0.0
  %8296 = vmatprep.subr.mxu0 0.0
  %8297 = vmatpush1.msra.mxu0 0.0
  %8298 = vmatprep.subr.mxu0 0.0
  %8299 = vmatpush1.msra.mxu0 0.0
  %8300 = vmatprep.subr.mxu0 0.0
  %8301 = vmatpush1.msra.mxu0 0.0
  %8302 = vmatprep.subr.mxu0 0.0
  %8303 = vmatpush1.msra.mxu0 0.0
  %8304 = vmatprep.subr.mxu0 0.0
  %8305 = vmatpush1.msra.mxu0 0.0
  %8306 = vmatprep.subr.mxu0 0.0
  %8307 = vmatpush1.msra.mxu0 0.0
  %8308 = vmatprep.subr.mxu0 0.0
  %8309 = vmatpush1.msra.mxu0 0.0
  %8310 = vmatprep.subr.mxu0 0.0
  %8311 = vmatpush1.msra.mxu0 0.0
  %8312 = vmatprep.mubr.f32.mxu0 0.0
  %8313 = vmatmul.mubr.f32.gmra.mrb[0].mxu0 %v8243
  %v8314 = vpop.f32.mrb[0].mxu0
  %v8315 = vadd.f32 0.0, %v8314
  %v8316 = vpop.f32.mrb[0].mxu0
  %8317 = vmatprep.mubr.f32.mxu0 0.0
  %8318 = vmatmul.mubr.f32.gmra.mrb[0].mxu0 %v8246
  %v8319 = vpop.f32.mrb[0].mxu0
  %v8320 = vadd.f32 0.0, %v8319
  %v8321 = vpop.f32.mrb[0].mxu0
  %8322 = vdwg.mxu0
  %8323 = vrot.lane.b32.xlu0 %v3662, 96
  %v8324 = vpop.permute.xlu0 %8323
  %8325 = vrot.lane.b32.xlu0 %v3668, 96
  %v8326 = vpop.permute.xlu0 %8325
  %v8330 = vsel %vm2464, %v8222, 0
  %v8333 = vsel %vm2464, %v8223, 0
  %8335 = vmatprep.subr.mxu0 0.0
  %8336 = vmatpush1.msra.mxu0 %v8324
  %8337 = vmatprep.subr.mxu0 0.0
  %8338 = vmatpush1.msra.mxu0 %v8326
  %8339 = vmatprep.subr.mxu0 0.0
  %8340 = vmatpush1.msra.mxu0 0.0
  %8341 = vmatprep.subr.mxu0 0.0
  %8342 = vmatpush1.msra.mxu0 0.0
  %8343 = vmatprep.subr.mxu0 0.0
  %8344 = vmatpush1.msra.mxu0 0.0
  %8345 = vmatprep.subr.mxu0 0.0
  %8346 = vmatpush1.msra.mxu0 0.0
  %8347 = vmatprep.subr.mxu0 0.0
  %8348 = vmatpush1.msra.mxu0 0.0
  %8349 = vmatprep.subr.mxu0 0.0
  %8350 = vmatpush1.msra.mxu0 0.0
  %8351 = vmatprep.subr.mxu0 0.0
  %8352 = vmatpush1.msra.mxu0 0.0
  %8353 = vmatprep.subr.mxu0 0.0
  %8354 = vmatpush1.msra.mxu0 0.0
  %8355 = vmatprep.subr.mxu0 0.0
  %8356 = vmatpush1.msra.mxu0 0.0
  %8357 = vmatprep.subr.mxu0 0.0
  %8358 = vmatpush1.msra.mxu0 0.0
  %8359 = vmatprep.subr.mxu0 0.0
  %8360 = vmatpush1.msra.mxu0 0.0
  %8361 = vmatprep.subr.mxu0 0.0
  %8362 = vmatpush1.msra.mxu0 0.0
  %8363 = vmatprep.subr.mxu0 0.0
  %8364 = vmatpush1.msra.mxu0 0.0
  %8365 = vmatprep.subr.mxu0 0.0
  %8366 = vmatpush1.msra.mxu0 0.0
  %8367 = vmatprep.subr.mxu0 0.0
  %8368 = vmatpush1.msra.mxu0 0.0
  %8369 = vmatprep.subr.mxu0 0.0
  %8370 = vmatpush1.msra.mxu0 0.0
  %8371 = vmatprep.subr.mxu0 0.0
  %8372 = vmatpush1.msra.mxu0 0.0
  %8373 = vmatprep.subr.mxu0 0.0
  %8374 = vmatpush1.msra.mxu0 0.0
  %8375 = vmatprep.subr.mxu0 0.0
  %8376 = vmatpush1.msra.mxu0 0.0
  %8377 = vmatprep.subr.mxu0 0.0
  %8378 = vmatpush1.msra.mxu0 0.0
  %8379 = vmatprep.subr.mxu0 0.0
  %8380 = vmatpush1.msra.mxu0 0.0
  %8381 = vmatprep.subr.mxu0 0.0
  %8382 = vmatpush1.msra.mxu0 0.0
  %8383 = vmatprep.subr.mxu0 0.0
  %8384 = vmatpush1.msra.mxu0 0.0
  %8385 = vmatprep.subr.mxu0 0.0
  %8386 = vmatpush1.msra.mxu0 0.0
  %8387 = vmatprep.subr.mxu0 0.0
  %8388 = vmatpush1.msra.mxu0 0.0
  %8389 = vmatprep.subr.mxu0 0.0
  %8390 = vmatpush1.msra.mxu0 0.0
  %8391 = vmatprep.subr.mxu0 0.0
  %8392 = vmatpush1.msra.mxu0 0.0
  %8393 = vmatprep.subr.mxu0 0.0
  %8394 = vmatpush1.msra.mxu0 0.0
  %8395 = vmatprep.subr.mxu0 0.0
  %8396 = vmatpush1.msra.mxu0 0.0
  %8397 = vmatprep.subr.mxu0 0.0
  %8398 = vmatpush1.msra.mxu0 0.0
  %8399 = vmatprep.mubr.f32.mxu0 0.0
  %8400 = vmatmul.mubr.f32.gmra.mrb[0].mxu0 %v8330
  %v8401 = vpop.f32.mrb[0].mxu0
  %v8402 = vadd.f32 0.0, %v8401
  %v8403 = vpop.f32.mrb[0].mxu0
  %8404 = vmatprep.mubr.f32.mxu0 0.0
  %8405 = vmatmul.mubr.f32.gmra.mrb[0].mxu0 %v8333
  %v8406 = vpop.f32.mrb[0].mxu0
  %v8407 = vadd.f32 0.0, %v8406
  %v8408 = vpop.f32.mrb[0].mxu0
  %8409 = vdwg.mxu0
  %8410 = vrot.lane.b32.xlu0 %v3674, 96
  %v8411 = vpop.permute.xlu0 %8410
  %8412 = vrot.lane.b32.xlu0 %v3680, 96
  %v8413 = vpop.permute.xlu0 %8412
  %v8417 = vsel %vm2464, %v8224, 0
  %v8420 = vsel %vm2464, %v8225, 0
  %8422 = vmatprep.subr.mxu0 0.0
  %8423 = vmatpush1.msra.mxu0 %v8411
  %8424 = vmatprep.subr.mxu0 0.0
  %8425 = vmatpush1.msra.mxu0 %v8413
  %8426 = vmatprep.subr.mxu0 0.0
  %8427 = vmatpush1.msra.mxu0 0.0
  %8428 = vmatprep.subr.mxu0 0.0
  %8429 = vmatpush1.msra.mxu0 0.0
  %8430 = vmatprep.subr.mxu0 0.0
  %8431 = vmatpush1.msra.mxu0 0.0
  %8432 = vmatprep.subr.mxu0 0.0
  %8433 = vmatpush1.msra.mxu0 0.0
  %8434 = vmatprep.subr.mxu0 0.0
  %8435 = vmatpush1.msra.mxu0 0.0
  %8436 = vmatprep.subr.mxu0 0.0
  %8437 = vmatpush1.msra.mxu0 0.0
  %8438 = vmatprep.subr.mxu0 0.0
  %8439 = vmatpush1.msra.mxu0 0.0
  %8440 = vmatprep.subr.mxu0 0.0
  %8441 = vmatpush1.msra.mxu0 0.0
  %8442 = vmatprep.subr.mxu0 0.0
  %8443 = vmatpush1.msra.mxu0 0.0
  %8444 = vmatprep.subr.mxu0 0.0
  %8445 = vmatpush1.msra.mxu0 0.0
  %8446 = vmatprep.subr.mxu0 0.0
  %8447 = vmatpush1.msra.mxu0 0.0
  %8448 = vmatprep.subr.mxu0 0.0
  %8449 = vmatpush1.msra.mxu0 0.0
  %8450 = vmatprep.subr.mxu0 0.0
  %8451 = vmatpush1.msra.mxu0 0.0
  %8452 = vmatprep.subr.mxu0 0.0
  %8453 = vmatpush1.msra.mxu0 0.0
  %8454 = vmatprep.subr.mxu0 0.0
  %8455 = vmatpush1.msra.mxu0 0.0
  %8456 = vmatprep.subr.mxu0 0.0
  %8457 = vmatpush1.msra.mxu0 0.0
  %8458 = vmatprep.subr.mxu0 0.0
  %8459 = vmatpush1.msra.mxu0 0.0
  %8460 = vmatprep.subr.mxu0 0.0
  %8461 = vmatpush1.msra.mxu0 0.0
  %8462 = vmatprep.subr.mxu0 0.0
  %8463 = vmatpush1.msra.mxu0 0.0
  %8464 = vmatprep.subr.mxu0 0.0
  %8465 = vmatpush1.msra.mxu0 0.0
  %8466 = vmatprep.subr.mxu0 0.0
  %8467 = vmatpush1.msra.mxu0 0.0
  %8468 = vmatprep.subr.mxu0 0.0
  %8469 = vmatpush1.msra.mxu0 0.0
  %8470 = vmatprep.subr.mxu0 0.0
  %8471 = vmatpush1.msra.mxu0 0.0
  %8472 = vmatprep.subr.mxu0 0.0
  %8473 = vmatpush1.msra.mxu0 0.0
  %8474 = vmatprep.subr.mxu0 0.0
  %8475 = vmatpush1.msra.mxu0 0.0
  %8476 = vmatprep.subr.mxu0 0.0
  %8477 = vmatpush1.msra.mxu0 0.0
  %8478 = vmatprep.subr.mxu0 0.0
  %8479 = vmatpush1.msra.mxu0 0.0
  %8480 = vmatprep.subr.mxu0 0.0
  %8481 = vmatpush1.msra.mxu0 0.0
  %8482 = vmatprep.subr.mxu0 0.0
  %8483 = vmatpush1.msra.mxu0 0.0
  %8484 = vmatprep.subr.mxu0 0.0
  %8485 = vmatpush1.msra.mxu0 0.0
  %8486 = vmatprep.mubr.f32.mxu0 0.0
  %8487 = vmatmul.mubr.f32.gmra.mrb[0].mxu0 %v8417
  %v8488 = vpop.f32.mrb[0].mxu0
  %v8489 = vadd.f32 0.0, %v8488
  %v8490 = vpop.f32.mrb[0].mxu0
  %8491 = vmatprep.mubr.f32.mxu0 0.0
  %8492 = vmatmul.mubr.f32.gmra.mrb[0].mxu0 %v8420
  %v8493 = vpop.f32.mrb[0].mxu0
  %v8494 = vadd.f32 0.0, %v8493
  %v8495 = vpop.f32.mrb[0].mxu0
  %8496 = vdwg.mxu0
  %8497 = vrot.lane.b32.xlu0 %v3686, 96
  %v8498 = vpop.permute.xlu0 %8497
  %8499 = vrot.lane.b32.xlu0 %v3692, 96
  %v8500 = vpop.permute.xlu0 %8499
  %v8504 = vsel %vm2464, %v8226, 0
  %v8507 = vsel %vm2464, %v8227, 0
  %8509 = vmatprep.subr.mxu0 0.0
  %8510 = vmatpush1.msra.mxu0 %v8498
  %8511 = vmatprep.subr.mxu0 0.0
  %8512 = vmatpush1.msra.mxu0 %v8500
  %8513 = vmatprep.subr.mxu0 0.0
  %8514 = vmatpush1.msra.mxu0 0.0
  %8515 = vmatprep.subr.mxu0 0.0
  %8516 = vmatpush1.msra.mxu0 0.0
  %8517 = vmatprep.subr.mxu0 0.0
  %8518 = vmatpush1.msra.mxu0 0.0
  %8519 = vmatprep.subr.mxu0 0.0
  %8520 = vmatpush1.msra.mxu0 0.0
  %8521 = vmatprep.subr.mxu0 0.0
  %8522 = vmatpush1.msra.mxu0 0.0
  %8523 = vmatprep.subr.mxu0 0.0
  %8524 = vmatpush1.msra.mxu0 0.0
  %8525 = vmatprep.subr.mxu0 0.0
  %8526 = vmatpush1.msra.mxu0 0.0
  %8527 = vmatprep.subr.mxu0 0.0
  %8528 = vmatpush1.msra.mxu0 0.0
  %8529 = vmatprep.subr.mxu0 0.0
  %8530 = vmatpush1.msra.mxu0 0.0
  %8531 = vmatprep.subr.mxu0 0.0
  %8532 = vmatpush1.msra.mxu0 0.0
  %8533 = vmatprep.subr.mxu0 0.0
  %8534 = vmatpush1.msra.mxu0 0.0
  %8535 = vmatprep.subr.mxu0 0.0
  %8536 = vmatpush1.msra.mxu0 0.0
  %8537 = vmatprep.subr.mxu0 0.0
  %8538 = vmatpush1.msra.mxu0 0.0
  %8539 = vmatprep.subr.mxu0 0.0
  %8540 = vmatpush1.msra.mxu0 0.0
  %8541 = vmatprep.subr.mxu0 0.0
  %8542 = vmatpush1.msra.mxu0 0.0
  %8543 = vmatprep.subr.mxu0 0.0
  %8544 = vmatpush1.msra.mxu0 0.0
  %8545 = vmatprep.subr.mxu0 0.0
  %8546 = vmatpush1.msra.mxu0 0.0
  %8547 = vmatprep.subr.mxu0 0.0
  %8548 = vmatpush1.msra.mxu0 0.0
  %8549 = vmatprep.subr.mxu0 0.0
  %8550 = vmatpush1.msra.mxu0 0.0
  %8551 = vmatprep.subr.mxu0 0.0
  %8552 = vmatpush1.msra.mxu0 0.0
  %8553 = vmatprep.subr.mxu0 0.0
  %8554 = vmatpush1.msra.mxu0 0.0
  %8555 = vmatprep.subr.mxu0 0.0
  %8556 = vmatpush1.msra.mxu0 0.0
  %8557 = vmatprep.subr.mxu0 0.0
  %8558 = vmatpush1.msra.mxu0 0.0
  %8559 = vmatprep.subr.mxu0 0.0
  %8560 = vmatpush1.msra.mxu0 0.0
  %8561 = vmatprep.subr.mxu0 0.0
  %8562 = vmatpush1.msra.mxu0 0.0
  %8563 = vmatprep.subr.mxu0 0.0
  %8564 = vmatpush1.msra.mxu0 0.0
  %8565 = vmatprep.subr.mxu0 0.0
  %8566 = vmatpush1.msra.mxu0 0.0
  %8567 = vmatprep.subr.mxu0 0.0
  %8568 = vmatpush1.msra.mxu0 0.0
  %8569 = vmatprep.subr.mxu0 0.0
  %8570 = vmatpush1.msra.mxu0 0.0
  %8571 = vmatprep.subr.mxu0 0.0
  %8572 = vmatpush1.msra.mxu0 0.0
  %8573 = vmatprep.mubr.f32.mxu0 0.0
  %8574 = vmatmul.mubr.f32.gmra.mrb[0].mxu0 %v8504
  %v8575 = vpop.f32.mrb[0].mxu0
  %v8576 = vadd.f32 0.0, %v8575
  %v8577 = vpop.f32.mrb[0].mxu0
  %8578 = vmatprep.mubr.f32.mxu0 0.0
  %8579 = vmatmul.mubr.f32.gmra.mrb[0].mxu0 %v8507
  %v8580 = vpop.f32.mrb[0].mxu0
  %v8581 = vadd.f32 0.0, %v8580
  %v8582 = vpop.f32.mrb[0].mxu0
  %8583 = vdwg.mxu0
  %8584 = vrot.lane.b32.xlu0 %v3698, 96
  %v8585 = vpop.permute.xlu0 %8584
  %8586 = vrot.lane.b32.xlu0 %v3704, 96
  %v8587 = vpop.permute.xlu0 %8586
  %v8591 = vsel %vm2464, %v8228, 0
  %v8594 = vsel %vm2464, %v8229, 0
  %8596 = vmatprep.subr.mxu0 0.0
  %8597 = vmatpush1.msra.mxu0 %v8585
  %8598 = vmatprep.subr.mxu0 0.0
  %8599 = vmatpush1.msra.mxu0 %v8587
  %8600 = vmatprep.subr.mxu0 0.0
  %8601 = vmatpush1.msra.mxu0 0.0
  %8602 = vmatprep.subr.mxu0 0.0
  %8603 = vmatpush1.msra.mxu0 0.0
  %8604 = vmatprep.subr.mxu0 0.0
  %8605 = vmatpush1.msra.mxu0 0.0
  %8606 = vmatprep.subr.mxu0 0.0
  %8607 = vmatpush1.msra.mxu0 0.0
  %8608 = vmatprep.subr.mxu0 0.0
  %8609 = vmatpush1.msra.mxu0 0.0
  %8610 = vmatprep.subr.mxu0 0.0
  %8611 = vmatpush1.msra.mxu0 0.0
  %8612 = vmatprep.subr.mxu0 0.0
  %8613 = vmatpush1.msra.mxu0 0.0
  %8614 = vmatprep.subr.mxu0 0.0
  %8615 = vmatpush1.msra.mxu0 0.0
  %8616 = vmatprep.subr.mxu0 0.0
  %8617 = vmatpush1.msra.mxu0 0.0
  %8618 = vmatprep.subr.mxu0 0.0
  %8619 = vmatpush1.msra.mxu0 0.0
  %8620 = vmatprep.subr.mxu0 0.0
  %8621 = vmatpush1.msra.mxu0 0.0
  %8622 = vmatprep.subr.mxu0 0.0
  %8623 = vmatpush1.msra.mxu0 0.0
  %8624 = vmatprep.subr.mxu0 0.0
  %8625 = vmatpush1.msra.mxu0 0.0
  %8626 = vmatprep.subr.mxu0 0.0
  %8627 = vmatpush1.msra.mxu0 0.0
  %8628 = vmatprep.subr.mxu0 0.0
  %8629 = vmatpush1.msra.mxu0 0.0
  %8630 = vmatprep.subr.mxu0 0.0
  %8631 = vmatpush1.msra.mxu0 0.0
  %8632 = vmatprep.subr.mxu0 0.0
  %8633 = vmatpush1.msra.mxu0 0.0
  %8634 = vmatprep.subr.mxu0 0.0
  %8635 = vmatpush1.msra.mxu0 0.0
  %8636 = vmatprep.subr.mxu0 0.0
  %8637 = vmatpush1.msra.mxu0 0.0
  %8638 = vmatprep.subr.mxu0 0.0
  %8639 = vmatpush1.msra.mxu0 0.0
  %8640 = vmatprep.subr.mxu0 0.0
  %8641 = vmatpush1.msra.mxu0 0.0
  %8642 = vmatprep.subr.mxu0 0.0
  %8643 = vmatpush1.msra.mxu0 0.0
  %8644 = vmatprep.subr.mxu0 0.0
  %8645 = vmatpush1.msra.mxu0 0.0
  %8646 = vmatprep.subr.mxu0 0.0
  %8647 = vmatpush1.msra.mxu0 0.0
  %8648 = vmatprep.subr.mxu0 0.0
  %8649 = vmatpush1.msra.mxu0 0.0
  %8650 = vmatprep.subr.mxu0 0.0
  %8651 = vmatpush1.msra.mxu0 0.0
  %8652 = vmatprep.subr.mxu0 0.0
  %8653 = vmatpush1.msra.mxu0 0.0
  %8654 = vmatprep.subr.mxu0 0.0
  %8655 = vmatpush1.msra.mxu0 0.0
  %8656 = vmatprep.subr.mxu0 0.0
  %8657 = vmatpush1.msra.mxu0 0.0
  %8658 = vmatprep.subr.mxu0 0.0
  %8659 = vmatpush1.msra.mxu0 0.0
  %8660 = vmatprep.mubr.f32.mxu0 0.0
  %8661 = vmatmul.mubr.f32.gmra.mrb[0].mxu0 %v8591
  %v8662 = vpop.f32.mrb[0].mxu0
  %v8663 = vadd.f32 0.0, %v8662
  %v8664 = vpop.f32.mrb[0].mxu0
  %8665 = vmatprep.mubr.f32.mxu0 0.0
  %8666 = vmatmul.mubr.f32.gmra.mrb[0].mxu0 %v8594
  %v8667 = vpop.f32.mrb[0].mxu0
  %v8668 = vadd.f32 0.0, %v8667
  %v8669 = vpop.f32.mrb[0].mxu0
  %8670 = vdwg.mxu0
  %8671 = vrot.lane.b32.xlu0 %v3710, 96
  %v8672 = vpop.permute.xlu0 %8671
  %8673 = vrot.lane.b32.xlu0 %v3716, 96
  %v8674 = vpop.permute.xlu0 %8673
  %v8678 = vsel %vm2464, %v8230, 0
  %v8681 = vsel %vm2464, %v8231, 0
  %8683 = vmatprep.subr.mxu0 0.0
  %8684 = vmatpush1.msra.mxu0 %v8672
  %8685 = vmatprep.subr.mxu0 0.0
  %8686 = vmatpush1.msra.mxu0 %v8674
  %8687 = vmatprep.subr.mxu0 0.0
  %8688 = vmatpush1.msra.mxu0 0.0
  %8689 = vmatprep.subr.mxu0 0.0
  %8690 = vmatpush1.msra.mxu0 0.0
  %8691 = vmatprep.subr.mxu0 0.0
  %8692 = vmatpush1.msra.mxu0 0.0
  %8693 = vmatprep.subr.mxu0 0.0
  %8694 = vmatpush1.msra.mxu0 0.0
  %8695 = vmatprep.subr.mxu0 0.0
  %8696 = vmatpush1.msra.mxu0 0.0
  %8697 = vmatprep.subr.mxu0 0.0
  %8698 = vmatpush1.msra.mxu0 0.0
  %8699 = vmatprep.subr.mxu0 0.0
  %8700 = vmatpush1.msra.mxu0 0.0
  %8701 = vmatprep.subr.mxu0 0.0
  %8702 = vmatpush1.msra.mxu0 0.0
  %8703 = vmatprep.subr.mxu0 0.0
  %8704 = vmatpush1.msra.mxu0 0.0
  %8705 = vmatprep.subr.mxu0 0.0
  %8706 = vmatpush1.msra.mxu0 0.0
  %8707 = vmatprep.subr.mxu0 0.0
  %8708 = vmatpush1.msra.mxu0 0.0
  %8709 = vmatprep.subr.mxu0 0.0
  %8710 = vmatpush1.msra.mxu0 0.0
  %8711 = vmatprep.subr.mxu0 0.0
  %8712 = vmatpush1.msra.mxu0 0.0
  %8713 = vmatprep.subr.mxu0 0.0
  %8714 = vmatpush1.msra.mxu0 0.0
  %8715 = vmatprep.subr.mxu0 0.0
  %8716 = vmatpush1.msra.mxu0 0.0
  %8717 = vmatprep.subr.mxu0 0.0
  %8718 = vmatpush1.msra.mxu0 0.0
  %8719 = vmatprep.subr.mxu0 0.0
  %8720 = vmatpush1.msra.mxu0 0.0
  %8721 = vmatprep.subr.mxu0 0.0
  %8722 = vmatpush1.msra.mxu0 0.0
  %8723 = vmatprep.subr.mxu0 0.0
  %8724 = vmatpush1.msra.mxu0 0.0
  %8725 = vmatprep.subr.mxu0 0.0
  %8726 = vmatpush1.msra.mxu0 0.0
  %8727 = vmatprep.subr.mxu0 0.0
  %8728 = vmatpush1.msra.mxu0 0.0
  %8729 = vmatprep.subr.mxu0 0.0
  %8730 = vmatpush1.msra.mxu0 0.0
  %8731 = vmatprep.subr.mxu0 0.0
  %8732 = vmatpush1.msra.mxu0 0.0
  %8733 = vmatprep.subr.mxu0 0.0
  %8734 = vmatpush1.msra.mxu0 0.0
  %8735 = vmatprep.subr.mxu0 0.0
  %8736 = vmatpush1.msra.mxu0 0.0
  %8737 = vmatprep.subr.mxu0 0.0
  %8738 = vmatpush1.msra.mxu0 0.0
  %8739 = vmatprep.subr.mxu0 0.0
  %8740 = vmatpush1.msra.mxu0 0.0
  %8741 = vmatprep.subr.mxu0 0.0
  %8742 = vmatpush1.msra.mxu0 0.0
  %8743 = vmatprep.subr.mxu0 0.0
  %8744 = vmatpush1.msra.mxu0 0.0
  %8745 = vmatprep.subr.mxu0 0.0
  %8746 = vmatpush1.msra.mxu0 0.0
  %8747 = vmatprep.mubr.f32.mxu0 0.0
  %8748 = vmatmul.mubr.f32.gmra.mrb[0].mxu0 %v8678
  %v8749 = vpop.f32.mrb[0].mxu0
  %v8750 = vadd.f32 0.0, %v8749
  %v8751 = vpop.f32.mrb[0].mxu0
  %8752 = vmatprep.mubr.f32.mxu0 0.0
  %8753 = vmatmul.mubr.f32.gmra.mrb[0].mxu0 %v8681
  %v8754 = vpop.f32.mrb[0].mxu0
  %v8755 = vadd.f32 0.0, %v8754
  %v8756 = vpop.f32.mrb[0].mxu0
  %8757 = vdwg.mxu0
  %8758 = vrot.lane.b32.xlu0 %v3722, 96
  %v8759 = vpop.permute.xlu0 %8758
  %8760 = vrot.lane.b32.xlu0 %v3728, 96
  %v8761 = vpop.permute.xlu0 %8760
  %v8765 = vsel %vm2464, %v8232, 0
  %v8768 = vsel %vm2464, %v8233, 0
  %8770 = vmatprep.subr.mxu0 0.0
  %8771 = vmatpush1.msra.mxu0 %v8759
  %8772 = vmatprep.subr.mxu0 0.0
  %8773 = vmatpush1.msra.mxu0 %v8761
  %8774 = vmatprep.subr.mxu0 0.0
  %8775 = vmatpush1.msra.mxu0 0.0
  %8776 = vmatprep.subr.mxu0 0.0
  %8777 = vmatpush1.msra.mxu0 0.0
  %8778 = vmatprep.subr.mxu0 0.0
  %8779 = vmatpush1.msra.mxu0 0.0
  %8780 = vmatprep.subr.mxu0 0.0
  %8781 = vmatpush1.msra.mxu0 0.0
  %8782 = vmatprep.subr.mxu0 0.0
  %8783 = vmatpush1.msra.mxu0 0.0
  %8784 = vmatprep.subr.mxu0 0.0
  %8785 = vmatpush1.msra.mxu0 0.0
  %8786 = vmatprep.subr.mxu0 0.0
  %8787 = vmatpush1.msra.mxu0 0.0
  %8788 = vmatprep.subr.mxu0 0.0
  %8789 = vmatpush1.msra.mxu0 0.0
  %8790 = vmatprep.subr.mxu0 0.0
  %8791 = vmatpush1.msra.mxu0 0.0
  %8792 = vmatprep.subr.mxu0 0.0
  %8793 = vmatpush1.msra.mxu0 0.0
  %8794 = vmatprep.subr.mxu0 0.0
  %8795 = vmatpush1.msra.mxu0 0.0
  %8796 = vmatprep.subr.mxu0 0.0
  %8797 = vmatpush1.msra.mxu0 0.0
  %8798 = vmatprep.subr.mxu0 0.0
  %8799 = vmatpush1.msra.mxu0 0.0
  %8800 = vmatprep.subr.mxu0 0.0
  %8801 = vmatpush1.msra.mxu0 0.0
  %8802 = vmatprep.subr.mxu0 0.0
  %8803 = vmatpush1.msra.mxu0 0.0
  %8804 = vmatprep.subr.mxu0 0.0
  %8805 = vmatpush1.msra.mxu0 0.0
  %8806 = vmatprep.subr.mxu0 0.0
  %8807 = vmatpush1.msra.mxu0 0.0
  %8808 = vmatprep.subr.mxu0 0.0
  %8809 = vmatpush1.msra.mxu0 0.0
  %8810 = vmatprep.subr.mxu0 0.0
  %8811 = vmatpush1.msra.mxu0 0.0
  %8812 = vmatprep.subr.mxu0 0.0
  %8813 = vmatpush1.msra.mxu0 0.0
  %8814 = vmatprep.subr.mxu0 0.0
  %8815 = vmatpush1.msra.mxu0 0.0
  %8816 = vmatprep.subr.mxu0 0.0
  %8817 = vmatpush1.msra.mxu0 0.0
  %8818 = vmatprep.subr.mxu0 0.0
  %8819 = vmatpush1.msra.mxu0 0.0
  %8820 = vmatprep.subr.mxu0 0.0
  %8821 = vmatpush1.msra.mxu0 0.0
  %8822 = vmatprep.subr.mxu0 0.0
  %8823 = vmatpush1.msra.mxu0 0.0
  %8824 = vmatprep.subr.mxu0 0.0
  %8825 = vmatpush1.msra.mxu0 0.0
  %8826 = vmatprep.subr.mxu0 0.0
  %8827 = vmatpush1.msra.mxu0 0.0
  %8828 = vmatprep.subr.mxu0 0.0
  %8829 = vmatpush1.msra.mxu0 0.0
  %8830 = vmatprep.subr.mxu0 0.0
  %8831 = vmatpush1.msra.mxu0 0.0
  %8832 = vmatprep.subr.mxu0 0.0
  %8833 = vmatpush1.msra.mxu0 0.0
  %8834 = vmatprep.mubr.f32.mxu0 0.0
  %8835 = vmatmul.mubr.f32.gmra.mrb[0].mxu0 %v8765
  %v8836 = vpop.f32.mrb[0].mxu0
  %v8837 = vadd.f32 0.0, %v8836
  %v8838 = vpop.f32.mrb[0].mxu0
  %8839 = vmatprep.mubr.f32.mxu0 0.0
  %8840 = vmatmul.mubr.f32.gmra.mrb[0].mxu0 %v8768
  %v8841 = vpop.f32.mrb[0].mxu0
  %v8842 = vadd.f32 0.0, %v8841
  %v8843 = vpop.f32.mrb[0].mxu0
  %8844 = vdwg.mxu0
  %8845 = vrot.lane.b32.xlu0 %v3734, 96
  %v8846 = vpop.permute.xlu0 %8845
  %8847 = vrot.lane.b32.xlu0 %v3740, 96
  %v8848 = vpop.permute.xlu0 %8847
  %v8852 = vsel %vm2464, %v8234, 0
  %v8855 = vsel %vm2464, %v8235, 0
  %8857 = vmatprep.subr.mxu0 0.0
  %8858 = vmatpush1.msra.mxu0 %v8846
  %8859 = vmatprep.subr.mxu0 0.0
  %8860 = vmatpush1.msra.mxu0 %v8848
  %8861 = vmatprep.subr.mxu0 0.0
  %8862 = vmatpush1.msra.mxu0 0.0
  %8863 = vmatprep.subr.mxu0 0.0
  %8864 = vmatpush1.msra.mxu0 0.0
  %8865 = vmatprep.subr.mxu0 0.0
  %8866 = vmatpush1.msra.mxu0 0.0
  %8867 = vmatprep.subr.mxu0 0.0
  %8868 = vmatpush1.msra.mxu0 0.0
  %8869 = vmatprep.subr.mxu0 0.0
  %8870 = vmatpush1.msra.mxu0 0.0
  %8871 = vmatprep.subr.mxu0 0.0
  %8872 = vmatpush1.msra.mxu0 0.0
  %8873 = vmatprep.subr.mxu0 0.0
  %8874 = vmatpush1.msra.mxu0 0.0
  %8875 = vmatprep.subr.mxu0 0.0
  %8876 = vmatpush1.msra.mxu0 0.0
  %8877 = vmatprep.subr.mxu0 0.0
  %8878 = vmatpush1.msra.mxu0 0.0
  %8879 = vmatprep.subr.mxu0 0.0
  %8880 = vmatpush1.msra.mxu0 0.0
  %8881 = vmatprep.subr.mxu0 0.0
  %8882 = vmatpush1.msra.mxu0 0.0
  %8883 = vmatprep.subr.mxu0 0.0
  %8884 = vmatpush1.msra.mxu0 0.0
  %8885 = vmatprep.subr.mxu0 0.0
  %8886 = vmatpush1.msra.mxu0 0.0
  %8887 = vmatprep.subr.mxu0 0.0
  %8888 = vmatpush1.msra.mxu0 0.0
  %8889 = vmatprep.subr.mxu0 0.0
  %8890 = vmatpush1.msra.mxu0 0.0
  %8891 = vmatprep.subr.mxu0 0.0
  %8892 = vmatpush1.msra.mxu0 0.0
  %8893 = vmatprep.subr.mxu0 0.0
  %8894 = vmatpush1.msra.mxu0 0.0
  %8895 = vmatprep.subr.mxu0 0.0
  %8896 = vmatpush1.msra.mxu0 0.0
  %8897 = vmatprep.subr.mxu0 0.0
  %8898 = vmatpush1.msra.mxu0 0.0
  %8899 = vmatprep.subr.mxu0 0.0
  %8900 = vmatpush1.msra.mxu0 0.0
  %8901 = vmatprep.subr.mxu0 0.0
  %8902 = vmatpush1.msra.mxu0 0.0
  %8903 = vmatprep.subr.mxu0 0.0
  %8904 = vmatpush1.msra.mxu0 0.0
  %8905 = vmatprep.subr.mxu0 0.0
  %8906 = vmatpush1.msra.mxu0 0.0
  %8907 = vmatprep.subr.mxu0 0.0
  %8908 = vmatpush1.msra.mxu0 0.0
  %8909 = vmatprep.subr.mxu0 0.0
  %8910 = vmatpush1.msra.mxu0 0.0
  %8911 = vmatprep.subr.mxu0 0.0
  %8912 = vmatpush1.msra.mxu0 0.0
  %8913 = vmatprep.subr.mxu0 0.0
  %8914 = vmatpush1.msra.mxu0 0.0
  %8915 = vmatprep.subr.mxu0 0.0
  %8916 = vmatpush1.msra.mxu0 0.0
  %8917 = vmatprep.subr.mxu0 0.0
  %8918 = vmatpush1.msra.mxu0 0.0
  %8919 = vmatprep.subr.mxu0 0.0
  %8920 = vmatpush1.msra.mxu0 0.0
  %8921 = vmatprep.mubr.f32.mxu0 0.0
  %8922 = vmatmul.mubr.f32.gmra.mrb[0].mxu0 %v8852
  %v8923 = vpop.f32.mrb[0].mxu0
  %v8924 = vadd.f32 0.0, %v8923
  %v8925 = vpop.f32.mrb[0].mxu0
  %8926 = vmatprep.mubr.f32.mxu0 0.0
  %8927 = vmatmul.mubr.f32.gmra.mrb[0].mxu0 %v8855
  %v8928 = vpop.f32.mrb[0].mxu0
  %v8929 = vadd.f32 0.0, %v8928
  %v8930 = vpop.f32.mrb[0].mxu0
  %8931 = vdwg.mxu0
  %v8932 = vld [vmem:[%s9 + $0x20] sm:$0xff]
  %v8933 = vld [vmem:[%s9 + $0x28] sm:$0xff]
  %v8935 = vsel %vm2464, %v8315, 0
  %v8938 = vsel %vm2464, %v8320, 0
  %v8941 = vsel %vm2464, %v8402, 0
  %v8944 = vsel %vm2464, %v8407, 0
  %v8947 = vsel %vm2464, %v8489, 0
  %v8950 = vsel %vm2464, %v8494, 0
  %v8953 = vsel %vm2464, %v8576, 0
  %v8956 = vsel %vm2464, %v8581, 0
  %v8959 = vsel %vm2464, %v8663, 0
  %v8962 = vsel %vm2464, %v8668, 0
  %v8965 = vsel %vm2464, %v8750, 0
  %v8968 = vsel %vm2464, %v8755, 0
  %v8971 = vsel %vm2464, %v8837, 0
  %v8974 = vsel %vm2464, %v8842, 0
  %v8977 = vsel %vm2464, %v8924, 0
  %v8980 = vsel %vm2464, %v8929, 0
  %8982 = vmatprep.subr.mxu0 0.0
  %8983 = vmatpush1.msra.mxu0 %v8932
  %8984 = vmatprep.subr.mxu0 0.0
  %8985 = vmatpush1.msra.mxu0 %v8933
  %8986 = vmatprep.subr.mxu0 0.0
  %8987 = vmatpush1.msra.mxu0 0.0
  %8988 = vmatprep.subr.mxu0 0.0
  %8989 = vmatpush1.msra.mxu0 0.0
  %8990 = vmatprep.subr.mxu0 0.0
  %8991 = vmatpush1.msra.mxu0 0.0
  %8992 = vmatprep.subr.mxu0 0.0
  %8993 = vmatpush1.msra.mxu0 0.0
  %8994 = vmatprep.subr.mxu0 0.0
  %8995 = vmatpush1.msra.mxu0 0.0
  %8996 = vmatprep.subr.mxu0 0.0
  %8997 = vmatpush1.msra.mxu0 0.0
  %8998 = vmatprep.subr.mxu0 0.0
  %8999 = vmatpush1.msra.mxu0 0.0
  %9000 = vmatprep.subr.mxu0 0.0
  %9001 = vmatpush1.msra.mxu0 0.0
  %9002 = vmatprep.subr.mxu0 0.0
  %9003 = vmatpush1.msra.mxu0 0.0
  %9004 = vmatprep.subr.mxu0 0.0
  %9005 = vmatpush1.msra.mxu0 0.0
  %9006 = vmatprep.subr.mxu0 0.0
  %9007 = vmatpush1.msra.mxu0 0.0
  %9008 = vmatprep.subr.mxu0 0.0
  %9009 = vmatpush1.msra.mxu0 0.0
  %9010 = vmatprep.subr.mxu0 0.0
  %9011 = vmatpush1.msra.mxu0 0.0
  %9012 = vmatprep.subr.mxu0 0.0
  %9013 = vmatpush1.msra.mxu0 0.0
  %9014 = vmatprep.subr.mxu0 0.0
  %9015 = vmatpush1.msra.mxu0 0.0
  %9016 = vmatprep.subr.mxu0 0.0
  %9017 = vmatpush1.msra.mxu0 0.0
  %9018 = vmatprep.subr.mxu0 0.0
  %9019 = vmatpush1.msra.mxu0 0.0
  %9020 = vmatprep.subr.mxu0 0.0
  %9021 = vmatpush1.msra.mxu0 0.0
  %9022 = vmatprep.subr.mxu0 0.0
  %9023 = vmatpush1.msra.mxu0 0.0
  %9024 = vmatprep.subr.mxu0 0.0
  %9025 = vmatpush1.msra.mxu0 0.0
  %9026 = vmatprep.subr.mxu0 0.0
  %9027 = vmatpush1.msra.mxu0 0.0
  %9028 = vmatprep.subr.mxu0 0.0
  %9029 = vmatpush1.msra.mxu0 0.0
  %9030 = vmatprep.subr.mxu0 0.0
  %9031 = vmatpush1.msra.mxu0 0.0
  %9032 = vmatprep.subr.mxu0 0.0
  %9033 = vmatpush1.msra.mxu0 0.0
  %9034 = vmatprep.subr.mxu0 0.0
  %9035 = vmatpush1.msra.mxu0 0.0
  %9036 = vmatprep.subr.mxu0 0.0
  %9037 = vmatpush1.msra.mxu0 0.0
  %9038 = vmatprep.subr.mxu0 0.0
  %9039 = vmatpush1.msra.mxu0 0.0
  %9040 = vmatprep.subr.mxu0 0.0
  %9041 = vmatpush1.msra.mxu0 0.0
  %9042 = vmatprep.subr.mxu0 0.0
  %9043 = vmatpush1.msra.mxu0 0.0
  %9044 = vmatprep.subr.mxu0 0.0
  %9045 = vmatpush1.msra.mxu0 0.0
  %9046 = vmatprep.mubr.f32.mxu0 0.0
  %9047 = vmatmul.mubr.f32.gmra.mrb[0].mxu0 %v8935
  %v9048 = vpop.f32.mrb[0].mxu0
  %v9049 = vadd.f32 0.0, %v9048
  %v9050 = vpop.f32.mrb[0].mxu0
  %9051 = vmatprep.mubr.f32.mxu0 0.0
  %9052 = vmatmul.mubr.f32.gmra.mrb[0].mxu0 %v8938
  %v9053 = vpop.f32.mrb[0].mxu0
  %v9054 = vadd.f32 0.0, %v9053
  %v9055 = vpop.f32.mrb[0].mxu0
  %9056 = vmatprep.mubr.f32.mxu0 0.0
  %9057 = vmatmul.mubr.f32.gmra.mrb[0].mxu0 %v8941
  %v9058 = vpop.f32.mrb[0].mxu0
  %v9059 = vadd.f32 0.0, %v9058
  %v9060 = vpop.f32.mrb[0].mxu0
  %9061 = vmatprep.mubr.f32.mxu0 0.0
  %9062 = vmatmul.mubr.f32.gmra.mrb[0].mxu0 %v8944
  %v9063 = vpop.f32.mrb[0].mxu0
  %v9064 = vadd.f32 0.0, %v9063
  %v9065 = vpop.f32.mrb[0].mxu0
  %9066 = vmatprep.mubr.f32.mxu0 0.0
  %9067 = vmatmul.mubr.f32.gmra.mrb[0].mxu0 %v8947
  %v9068 = vpop.f32.mrb[0].mxu0
  %v9069 = vadd.f32 0.0, %v9068
  %v9070 = vpop.f32.mrb[0].mxu0
  %9071 = vmatprep.mubr.f32.mxu0 0.0
  %9072 = vmatmul.mubr.f32.gmra.mrb[0].mxu0 %v8950
  %v9073 = vpop.f32.mrb[0].mxu0
  %v9074 = vadd.f32 0.0, %v9073
  %v9075 = vpop.f32.mrb[0].mxu0
  %9076 = vmatprep.mubr.f32.mxu0 0.0
  %9077 = vmatmul.mubr.f32.gmra.mrb[0].mxu0 %v8953
  %v9078 = vpop.f32.mrb[0].mxu0
  %v9079 = vadd.f32 0.0, %v9078
  %v9080 = vpop.f32.mrb[0].mxu0
  %9081 = vmatprep.mubr.f32.mxu0 0.0
  %9082 = vmatmul.mubr.f32.gmra.mrb[0].mxu0 %v8956
  %v9083 = vpop.f32.mrb[0].mxu0
  %v9084 = vadd.f32 0.0, %v9083
  %v9085 = vpop.f32.mrb[0].mxu0
  %9086 = vmatprep.mubr.f32.mxu0 0.0
  %9087 = vmatmul.mubr.f32.gmra.mrb[0].mxu0 %v8959
  %v9088 = vpop.f32.mrb[0].mxu0
  %v9089 = vadd.f32 0.0, %v9088
  %v9090 = vpop.f32.mrb[0].mxu0
  %9091 = vmatprep.mubr.f32.mxu0 0.0
  %9092 = vmatmul.mubr.f32.gmra.mrb[0].mxu0 %v8962
  %v9093 = vpop.f32.mrb[0].mxu0
  %v9094 = vadd.f32 0.0, %v9093
  %v9095 = vpop.f32.mrb[0].mxu0
  %9096 = vmatprep.mubr.f32.mxu0 0.0
  %9097 = vmatmul.mubr.f32.gmra.mrb[0].mxu0 %v8965
  %v9098 = vpop.f32.mrb[0].mxu0
  %v9099 = vadd.f32 0.0, %v9098
  %v9100 = vpop.f32.mrb[0].mxu0
  %9101 = vmatprep.mubr.f32.mxu0 0.0
  %9102 = vmatmul.mubr.f32.gmra.mrb[0].mxu0 %v8968
  %v9103 = vpop.f32.mrb[0].mxu0
  %v9104 = vadd.f32 0.0, %v9103
  %v9105 = vpop.f32.mrb[0].mxu0
  %9106 = vmatprep.mubr.f32.mxu0 0.0
  %9107 = vmatmul.mubr.f32.gmra.mrb[0].mxu0 %v8971
  %v9108 = vpop.f32.mrb[0].mxu0
  %v9109 = vadd.f32 0.0, %v9108
  %v9110 = vpop.f32.mrb[0].mxu0
  %9111 = vmatprep.mubr.f32.mxu0 0.0
  %9112 = vmatmul.mubr.f32.gmra.mrb[0].mxu0 %v8974
  %v9113 = vpop.f32.mrb[0].mxu0
  %v9114 = vadd.f32 0.0, %v9113
  %v9115 = vpop.f32.mrb[0].mxu0
  %9116 = vmatprep.mubr.f32.mxu0 0.0
  %9117 = vmatmul.mubr.f32.gmra.mrb[0].mxu0 %v8977
  %v9118 = vpop.f32.mrb[0].mxu0
  %v9119 = vadd.f32 0.0, %v9118
  %v9120 = vpop.f32.mrb[0].mxu0
  %9121 = vmatprep.mubr.f32.mxu0 0.0
  %9122 = vmatmul.mubr.f32.gmra.mrb[0].mxu0 %v8980
  %v9123 = vpop.f32.mrb[0].mxu0
  %v9124 = vadd.f32 0.0, %v9123
  %v9125 = vpop.f32.mrb[0].mxu0
  %9126 = vdwg.mxu0
  %v9127 = vadd.f32 %v7238, %v9049
  %v9128 = vadd.f32 %v7243, %v9054
  %v9129 = vadd.f32 %v7248, %v9059
  %v9130 = vadd.f32 %v7253, %v9064
  %v9131 = vadd.f32 %v7258, %v9069
  %v9132 = vadd.f32 %v7263, %v9074
  %v9133 = vadd.f32 %v7268, %v9079
  %v9134 = vadd.f32 %v7273, %v9084
  %v9135 = vadd.f32 %v7278, %v9089
  %v9136 = vadd.f32 %v7283, %v9094
  %v9137 = vadd.f32 %v7288, %v9099
  %v9138 = vadd.f32 %v7293, %v9104
  %v9139 = vadd.f32 %v7298, %v9109
  %v9140 = vadd.f32 %v7303, %v9114
  %v9141 = vadd.f32 %v7308, %v9119
  %v9142 = vadd.f32 %v7313, %v9124
  %9143 = vrot.lane.b32.xlu0 %v3648, 80
  %v9144 = vpop.permute.xlu0 %9143
  %9145 = vrot.lane.b32.xlu0 %v3654, 80
  %v9146 = vpop.permute.xlu0 %9145
  %9147 = vrot.lane.b32.xlu0 %v3648, 16
  %v9148 = vpop.permute.xlu0 %9147
  %9149 = vrot.lane.b32.xlu0 %v3654, 16
  %v9150 = vpop.permute.xlu0 %9149
  %v9151 = vsel %vm2464, %v9144, 0
  %v9153 = vsel %vm2464, %v9146, 0
  %v9155 = vsel %vm2464, %v9148, 0
  %v9157 = vsel %vm2464, %v9150, 0
  %9159 = vmatprep.subr.mxu0 0.0
  %9160 = vmatpush1.xpose.msra.mxu0 %v9155
  %9161 = vmatprep.subr.mxu0 0.0
  %9162 = vmatpush1.xpose.msra.mxu0 %v9157
  %9163 = vmatprep.subr.mxu0 0.0
  %9164 = vmatpush1.xpose.msra.mxu0 0.0
  %9165 = vmatprep.subr.mxu0 0.0
  %9166 = vmatpush1.xpose.msra.mxu0 0.0
  %9167 = vmatprep.subr.mxu0 0.0
  %9168 = vmatpush1.xpose.msra.mxu0 0.0
  %9169 = vmatprep.subr.mxu0 0.0
  %9170 = vmatpush1.xpose.msra.mxu0 0.0
  %9171 = vmatprep.subr.mxu0 0.0
  %9172 = vmatpush1.xpose.msra.mxu0 0.0
  %9173 = vmatprep.subr.mxu0 0.0
  %9174 = vmatpush1.xpose.msra.mxu0 0.0
  %9175 = vmatprep.subr.mxu0 0.0
  %9176 = vmatpush1.xpose.msra.mxu0 0.0
  %9177 = vmatprep.subr.mxu0 0.0
  %9178 = vmatpush1.xpose.msra.mxu0 0.0
  %9179 = vmatprep.subr.mxu0 0.0
  %9180 = vmatpush1.xpose.msra.mxu0 0.0
  %9181 = vmatprep.subr.mxu0 0.0
  %9182 = vmatpush1.xpose.msra.mxu0 0.0
  %9183 = vmatprep.subr.mxu0 0.0
  %9184 = vmatpush1.xpose.msra.mxu0 0.0
  %9185 = vmatprep.subr.mxu0 0.0
  %9186 = vmatpush1.xpose.msra.mxu0 0.0
  %9187 = vmatprep.subr.mxu0 0.0
  %9188 = vmatpush1.xpose.msra.mxu0 0.0
  %9189 = vmatprep.subr.mxu0 0.0
  %9190 = vmatpush1.xpose.msra.mxu0 0.0
  %9191 = vmatprep.subr.mxu0 0.0
  %9192 = vmatpush1.xpose.msra.mxu0 0.0
  %9193 = vmatprep.subr.mxu0 0.0
  %9194 = vmatpush1.xpose.msra.mxu0 0.0
  %9195 = vmatprep.subr.mxu0 0.0
  %9196 = vmatpush1.xpose.msra.mxu0 0.0
  %9197 = vmatprep.subr.mxu0 0.0
  %9198 = vmatpush1.xpose.msra.mxu0 0.0
  %9199 = vmatprep.subr.mxu0 0.0
  %9200 = vmatpush1.xpose.msra.mxu0 0.0
  %9201 = vmatprep.subr.mxu0 0.0
  %9202 = vmatpush1.xpose.msra.mxu0 0.0
  %9203 = vmatprep.subr.mxu0 0.0
  %9204 = vmatpush1.xpose.msra.mxu0 0.0
  %9205 = vmatprep.subr.mxu0 0.0
  %9206 = vmatpush1.xpose.msra.mxu0 0.0
  %9207 = vmatprep.subr.mxu0 0.0
  %9208 = vmatpush1.xpose.msra.mxu0 0.0
  %9209 = vmatprep.subr.mxu0 0.0
  %9210 = vmatpush1.xpose.msra.mxu0 0.0
  %9211 = vmatprep.subr.mxu0 0.0
  %9212 = vmatpush1.xpose.msra.mxu0 0.0
  %9213 = vmatprep.subr.mxu0 0.0
  %9214 = vmatpush1.xpose.msra.mxu0 0.0
  %9215 = vmatprep.subr.mxu0 0.0
  %9216 = vmatpush1.xpose.msra.mxu0 0.0
  %9217 = vmatprep.subr.mxu0 0.0
  %9218 = vmatpush1.xpose.msra.mxu0 0.0
  %9219 = vmatprep.subr.mxu0 0.0
  %9220 = vmatpush1.xpose.msra.mxu0 0.0
  %9221 = vmatprep.subr.mxu0 0.0
  %9222 = vmatpush1.xpose.msra.mxu0 0.0
  %9223 = vmatprep.mubr.f32.mxu0 0.0
  %9224 = vmatmul.mubr.f32.gmra.mrb[0].mxu0 %v9151
  %v9225 = vpop.f32.mrb[0].mxu0
  %v9226 = vadd.f32 0.0, %v9225
  %v9227 = vpop.f32.mrb[0].mxu0
  %9228 = vmatprep.mubr.f32.mxu0 0.0
  %9229 = vmatmul.mubr.f32.gmra.mrb[0].mxu0 %v9153
  %v9230 = vpop.f32.mrb[0].mxu0
  %v9231 = vadd.f32 0.0, %v9230
  %v9232 = vpop.f32.mrb[0].mxu0
  %9233 = vdwg.mxu0
  %9234 = vrot.lane.b32.xlu0 %v3660, 80
  %v9235 = vpop.permute.xlu0 %9234
  %9236 = vrot.lane.b32.xlu0 %v3666, 80
  %v9237 = vpop.permute.xlu0 %9236
  %9238 = vrot.lane.b32.xlu0 %v3660, 16
  %v9239 = vpop.permute.xlu0 %9238
  %9240 = vrot.lane.b32.xlu0 %v3666, 16
  %v9241 = vpop.permute.xlu0 %9240
  %v9242 = vsel %vm2464, %v9235, 0
  %v9244 = vsel %vm2464, %v9237, 0
  %v9246 = vsel %vm2464, %v9239, 0
  %v9248 = vsel %vm2464, %v9241, 0
  %9250 = vmatprep.subr.mxu0 0.0
  %9251 = vmatpush1.xpose.msra.mxu0 %v9246
  %9252 = vmatprep.subr.mxu0 0.0
  %9253 = vmatpush1.xpose.msra.mxu0 %v9248
  %9254 = vmatprep.subr.mxu0 0.0
  %9255 = vmatpush1.xpose.msra.mxu0 0.0
  %9256 = vmatprep.subr.mxu0 0.0
  %9257 = vmatpush1.xpose.msra.mxu0 0.0
  %9258 = vmatprep.subr.mxu0 0.0
  %9259 = vmatpush1.xpose.msra.mxu0 0.0
  %9260 = vmatprep.subr.mxu0 0.0
  %9261 = vmatpush1.xpose.msra.mxu0 0.0
  %9262 = vmatprep.subr.mxu0 0.0
  %9263 = vmatpush1.xpose.msra.mxu0 0.0
  %9264 = vmatprep.subr.mxu0 0.0
  %9265 = vmatpush1.xpose.msra.mxu0 0.0
  %9266 = vmatprep.subr.mxu0 0.0
  %9267 = vmatpush1.xpose.msra.mxu0 0.0
  %9268 = vmatprep.subr.mxu0 0.0
  %9269 = vmatpush1.xpose.msra.mxu0 0.0
  %9270 = vmatprep.subr.mxu0 0.0
  %9271 = vmatpush1.xpose.msra.mxu0 0.0
  %9272 = vmatprep.subr.mxu0 0.0
  %9273 = vmatpush1.xpose.msra.mxu0 0.0
  %9274 = vmatprep.subr.mxu0 0.0
  %9275 = vmatpush1.xpose.msra.mxu0 0.0
  %9276 = vmatprep.subr.mxu0 0.0
  %9277 = vmatpush1.xpose.msra.mxu0 0.0
  %9278 = vmatprep.subr.mxu0 0.0
  %9279 = vmatpush1.xpose.msra.mxu0 0.0
  %9280 = vmatprep.subr.mxu0 0.0
  %9281 = vmatpush1.xpose.msra.mxu0 0.0
  %9282 = vmatprep.subr.mxu0 0.0
  %9283 = vmatpush1.xpose.msra.mxu0 0.0
  %9284 = vmatprep.subr.mxu0 0.0
  %9285 = vmatpush1.xpose.msra.mxu0 0.0
  %9286 = vmatprep.subr.mxu0 0.0
  %9287 = vmatpush1.xpose.msra.mxu0 0.0
  %9288 = vmatprep.subr.mxu0 0.0
  %9289 = vmatpush1.xpose.msra.mxu0 0.0
  %9290 = vmatprep.subr.mxu0 0.0
  %9291 = vmatpush1.xpose.msra.mxu0 0.0
  %9292 = vmatprep.subr.mxu0 0.0
  %9293 = vmatpush1.xpose.msra.mxu0 0.0
  %9294 = vmatprep.subr.mxu0 0.0
  %9295 = vmatpush1.xpose.msra.mxu0 0.0
  %9296 = vmatprep.subr.mxu0 0.0
  %9297 = vmatpush1.xpose.msra.mxu0 0.0
  %9298 = vmatprep.subr.mxu0 0.0
  %9299 = vmatpush1.xpose.msra.mxu0 0.0
  %9300 = vmatprep.subr.mxu0 0.0
  %9301 = vmatpush1.xpose.msra.mxu0 0.0
  %9302 = vmatprep.subr.mxu0 0.0
  %9303 = vmatpush1.xpose.msra.mxu0 0.0
  %9304 = vmatprep.subr.mxu0 0.0
  %9305 = vmatpush1.xpose.msra.mxu0 0.0
  %9306 = vmatprep.subr.mxu0 0.0
  %9307 = vmatpush1.xpose.msra.mxu0 0.0
  %9308 = vmatprep.subr.mxu0 0.0
  %9309 = vmatpush1.xpose.msra.mxu0 0.0
  %9310 = vmatprep.subr.mxu0 0.0
  %9311 = vmatpush1.xpose.msra.mxu0 0.0
  %9312 = vmatprep.subr.mxu0 0.0
  %9313 = vmatpush1.xpose.msra.mxu0 0.0
  %9314 = vmatprep.mubr.f32.mxu0 0.0
  %9315 = vmatmul.mubr.f32.gmra.mrb[0].mxu0 %v9242
  %v9316 = vpop.f32.mrb[0].mxu0
  %v9317 = vadd.f32 0.0, %v9316
  %v9318 = vpop.f32.mrb[0].mxu0
  %9319 = vmatprep.mubr.f32.mxu0 0.0
  %9320 = vmatmul.mubr.f32.gmra.mrb[0].mxu0 %v9244
  %v9321 = vpop.f32.mrb[0].mxu0
  %v9322 = vadd.f32 0.0, %v9321
  %v9323 = vpop.f32.mrb[0].mxu0
  %9324 = vdwg.mxu0
  %9325 = vrot.lane.b32.xlu0 %v3672, 80
  %v9326 = vpop.permute.xlu0 %9325
  %9327 = vrot.lane.b32.xlu0 %v3678, 80
  %v9328 = vpop.permute.xlu0 %9327
  %9329 = vrot.lane.b32.xlu0 %v3672, 16
  %v9330 = vpop.permute.xlu0 %9329
  %9331 = vrot.lane.b32.xlu0 %v3678, 16
  %v9332 = vpop.permute.xlu0 %9331
  %v9333 = vsel %vm2464, %v9326, 0
  %v9335 = vsel %vm2464, %v9328, 0
  %v9337 = vsel %vm2464, %v9330, 0
  %v9339 = vsel %vm2464, %v9332, 0
  %9341 = vmatprep.subr.mxu0 0.0
  %9342 = vmatpush1.xpose.msra.mxu0 %v9337
  %9343 = vmatprep.subr.mxu0 0.0
  %9344 = vmatpush1.xpose.msra.mxu0 %v9339
  %9345 = vmatprep.subr.mxu0 0.0
  %9346 = vmatpush1.xpose.msra.mxu0 0.0
  %9347 = vmatprep.subr.mxu0 0.0
  %9348 = vmatpush1.xpose.msra.mxu0 0.0
  %9349 = vmatprep.subr.mxu0 0.0
  %9350 = vmatpush1.xpose.msra.mxu0 0.0
  %9351 = vmatprep.subr.mxu0 0.0
  %9352 = vmatpush1.xpose.msra.mxu0 0.0
  %9353 = vmatprep.subr.mxu0 0.0
  %9354 = vmatpush1.xpose.msra.mxu0 0.0
  %9355 = vmatprep.subr.mxu0 0.0
  %9356 = vmatpush1.xpose.msra.mxu0 0.0
  %9357 = vmatprep.subr.mxu0 0.0
  %9358 = vmatpush1.xpose.msra.mxu0 0.0
  %9359 = vmatprep.subr.mxu0 0.0
  %9360 = vmatpush1.xpose.msra.mxu0 0.0
  %9361 = vmatprep.subr.mxu0 0.0
  %9362 = vmatpush1.xpose.msra.mxu0 0.0
  %9363 = vmatprep.subr.mxu0 0.0
  %9364 = vmatpush1.xpose.msra.mxu0 0.0
  %9365 = vmatprep.subr.mxu0 0.0
  %9366 = vmatpush1.xpose.msra.mxu0 0.0
  %9367 = vmatprep.subr.mxu0 0.0
  %9368 = vmatpush1.xpose.msra.mxu0 0.0
  %9369 = vmatprep.subr.mxu0 0.0
  %9370 = vmatpush1.xpose.msra.mxu0 0.0
  %9371 = vmatprep.subr.mxu0 0.0
  %9372 = vmatpush1.xpose.msra.mxu0 0.0
  %9373 = vmatprep.subr.mxu0 0.0
  %9374 = vmatpush1.xpose.msra.mxu0 0.0
  %9375 = vmatprep.subr.mxu0 0.0
  %9376 = vmatpush1.xpose.msra.mxu0 0.0
  %9377 = vmatprep.subr.mxu0 0.0
  %9378 = vmatpush1.xpose.msra.mxu0 0.0
  %9379 = vmatprep.subr.mxu0 0.0
  %9380 = vmatpush1.xpose.msra.mxu0 0.0
  %9381 = vmatprep.subr.mxu0 0.0
  %9382 = vmatpush1.xpose.msra.mxu0 0.0
  %9383 = vmatprep.subr.mxu0 0.0
  %9384 = vmatpush1.xpose.msra.mxu0 0.0
  %9385 = vmatprep.subr.mxu0 0.0
  %9386 = vmatpush1.xpose.msra.mxu0 0.0
  %9387 = vmatprep.subr.mxu0 0.0
  %9388 = vmatpush1.xpose.msra.mxu0 0.0
  %9389 = vmatprep.subr.mxu0 0.0
  %9390 = vmatpush1.xpose.msra.mxu0 0.0
  %9391 = vmatprep.subr.mxu0 0.0
  %9392 = vmatpush1.xpose.msra.mxu0 0.0
  %9393 = vmatprep.subr.mxu0 0.0
  %9394 = vmatpush1.xpose.msra.mxu0 0.0
  %9395 = vmatprep.subr.mxu0 0.0
  %9396 = vmatpush1.xpose.msra.mxu0 0.0
  %9397 = vmatprep.subr.mxu0 0.0
  %9398 = vmatpush1.xpose.msra.mxu0 0.0
  %9399 = vmatprep.subr.mxu0 0.0
  %9400 = vmatpush1.xpose.msra.mxu0 0.0
  %9401 = vmatprep.subr.mxu0 0.0
  %9402 = vmatpush1.xpose.msra.mxu0 0.0
  %9403 = vmatprep.subr.mxu0 0.0
  %9404 = vmatpush1.xpose.msra.mxu0 0.0
  %9405 = vmatprep.mubr.f32.mxu0 0.0
  %9406 = vmatmul.mubr.f32.gmra.mrb[0].mxu0 %v9333
  %v9407 = vpop.f32.mrb[0].mxu0
  %v9408 = vadd.f32 0.0, %v9407
  %v9409 = vpop.f32.mrb[0].mxu0
  %9410 = vmatprep.mubr.f32.mxu0 0.0
  %9411 = vmatmul.mubr.f32.gmra.mrb[0].mxu0 %v9335
  %v9412 = vpop.f32.mrb[0].mxu0
  %v9413 = vadd.f32 0.0, %v9412
  %v9414 = vpop.f32.mrb[0].mxu0
  %9415 = vdwg.mxu0
  %9416 = vrot.lane.b32.xlu0 %v3684, 80
  %v9417 = vpop.permute.xlu0 %9416
  %9418 = vrot.lane.b32.xlu0 %v3690, 80
  %v9419 = vpop.permute.xlu0 %9418
  %9420 = vrot.lane.b32.xlu0 %v3684, 16
  %v9421 = vpop.permute.xlu0 %9420
  %9422 = vrot.lane.b32.xlu0 %v3690, 16
  %v9423 = vpop.permute.xlu0 %9422
  %v9424 = vsel %vm2464, %v9417, 0
  %v9426 = vsel %vm2464, %v9419, 0
  %v9428 = vsel %vm2464, %v9421, 0
  %v9430 = vsel %vm2464, %v9423, 0
  %9432 = vmatprep.subr.mxu0 0.0
  %9433 = vmatpush1.xpose.msra.mxu0 %v9428
  %9434 = vmatprep.subr.mxu0 0.0
  %9435 = vmatpush1.xpose.msra.mxu0 %v9430
  %9436 = vmatprep.subr.mxu0 0.0
  %9437 = vmatpush1.xpose.msra.mxu0 0.0
  %9438 = vmatprep.subr.mxu0 0.0
  %9439 = vmatpush1.xpose.msra.mxu0 0.0
  %9440 = vmatprep.subr.mxu0 0.0
  %9441 = vmatpush1.xpose.msra.mxu0 0.0
  %9442 = vmatprep.subr.mxu0 0.0
  %9443 = vmatpush1.xpose.msra.mxu0 0.0
  %9444 = vmatprep.subr.mxu0 0.0
  %9445 = vmatpush1.xpose.msra.mxu0 0.0
  %9446 = vmatprep.subr.mxu0 0.0
  %9447 = vmatpush1.xpose.msra.mxu0 0.0
  %9448 = vmatprep.subr.mxu0 0.0
  %9449 = vmatpush1.xpose.msra.mxu0 0.0
  %9450 = vmatprep.subr.mxu0 0.0
  %9451 = vmatpush1.xpose.msra.mxu0 0.0
  %9452 = vmatprep.subr.mxu0 0.0
  %9453 = vmatpush1.xpose.msra.mxu0 0.0
  %9454 = vmatprep.subr.mxu0 0.0
  %9455 = vmatpush1.xpose.msra.mxu0 0.0
  %9456 = vmatprep.subr.mxu0 0.0
  %9457 = vmatpush1.xpose.msra.mxu0 0.0
  %9458 = vmatprep.subr.mxu0 0.0
  %9459 = vmatpush1.xpose.msra.mxu0 0.0
  %9460 = vmatprep.subr.mxu0 0.0
  %9461 = vmatpush1.xpose.msra.mxu0 0.0
  %9462 = vmatprep.subr.mxu0 0.0
  %9463 = vmatpush1.xpose.msra.mxu0 0.0
  %9464 = vmatprep.subr.mxu0 0.0
  %9465 = vmatpush1.xpose.msra.mxu0 0.0
  %9466 = vmatprep.subr.mxu0 0.0
  %9467 = vmatpush1.xpose.msra.mxu0 0.0
  %9468 = vmatprep.subr.mxu0 0.0
  %9469 = vmatpush1.xpose.msra.mxu0 0.0
  %9470 = vmatprep.subr.mxu0 0.0
  %9471 = vmatpush1.xpose.msra.mxu0 0.0
  %9472 = vmatprep.subr.mxu0 0.0
  %9473 = vmatpush1.xpose.msra.mxu0 0.0
  %9474 = vmatprep.subr.mxu0 0.0
  %9475 = vmatpush1.xpose.msra.mxu0 0.0
  %9476 = vmatprep.subr.mxu0 0.0
  %9477 = vmatpush1.xpose.msra.mxu0 0.0
  %9478 = vmatprep.subr.mxu0 0.0
  %9479 = vmatpush1.xpose.msra.mxu0 0.0
  %9480 = vmatprep.subr.mxu0 0.0
  %9481 = vmatpush1.xpose.msra.mxu0 0.0
  %9482 = vmatprep.subr.mxu0 0.0
  %9483 = vmatpush1.xpose.msra.mxu0 0.0
  %9484 = vmatprep.subr.mxu0 0.0
  %9485 = vmatpush1.xpose.msra.mxu0 0.0
  %9486 = vmatprep.subr.mxu0 0.0
  %9487 = vmatpush1.xpose.msra.mxu0 0.0
  %9488 = vmatprep.subr.mxu0 0.0
  %9489 = vmatpush1.xpose.msra.mxu0 0.0
  %9490 = vmatprep.subr.mxu0 0.0
  %9491 = vmatpush1.xpose.msra.mxu0 0.0
  %9492 = vmatprep.subr.mxu0 0.0
  %9493 = vmatpush1.xpose.msra.mxu0 0.0
  %9494 = vmatprep.subr.mxu0 0.0
  %9495 = vmatpush1.xpose.msra.mxu0 0.0
  %9496 = vmatprep.mubr.f32.mxu0 0.0
  %9497 = vmatmul.mubr.f32.gmra.mrb[0].mxu0 %v9424
  %v9498 = vpop.f32.mrb[0].mxu0
  %v9499 = vadd.f32 0.0, %v9498
  %v9500 = vpop.f32.mrb[0].mxu0
  %9501 = vmatprep.mubr.f32.mxu0 0.0
  %9502 = vmatmul.mubr.f32.gmra.mrb[0].mxu0 %v9426
  %v9503 = vpop.f32.mrb[0].mxu0
  %v9504 = vadd.f32 0.0, %v9503
  %v9505 = vpop.f32.mrb[0].mxu0
  %9506 = vdwg.mxu0
  %9507 = vrot.lane.b32.xlu0 %v3696, 80
  %v9508 = vpop.permute.xlu0 %9507
  %9509 = vrot.lane.b32.xlu0 %v3702, 80
  %v9510 = vpop.permute.xlu0 %9509
  %9511 = vrot.lane.b32.xlu0 %v3696, 16
  %v9512 = vpop.permute.xlu0 %9511
  %9513 = vrot.lane.b32.xlu0 %v3702, 16
  %v9514 = vpop.permute.xlu0 %9513
  %v9515 = vsel %vm2464, %v9508, 0
  %v9517 = vsel %vm2464, %v9510, 0
  %v9519 = vsel %vm2464, %v9512, 0
  %v9521 = vsel %vm2464, %v9514, 0
  %9523 = vmatprep.subr.mxu0 0.0
  %9524 = vmatpush1.xpose.msra.mxu0 %v9519
  %9525 = vmatprep.subr.mxu0 0.0
  %9526 = vmatpush1.xpose.msra.mxu0 %v9521
  %9527 = vmatprep.subr.mxu0 0.0
  %9528 = vmatpush1.xpose.msra.mxu0 0.0
  %9529 = vmatprep.subr.mxu0 0.0
  %9530 = vmatpush1.xpose.msra.mxu0 0.0
  %9531 = vmatprep.subr.mxu0 0.0
  %9532 = vmatpush1.xpose.msra.mxu0 0.0
  %9533 = vmatprep.subr.mxu0 0.0
  %9534 = vmatpush1.xpose.msra.mxu0 0.0
  %9535 = vmatprep.subr.mxu0 0.0
  %9536 = vmatpush1.xpose.msra.mxu0 0.0
  %9537 = vmatprep.subr.mxu0 0.0
  %9538 = vmatpush1.xpose.msra.mxu0 0.0
  %9539 = vmatprep.subr.mxu0 0.0
  %9540 = vmatpush1.xpose.msra.mxu0 0.0
  %9541 = vmatprep.subr.mxu0 0.0
  %9542 = vmatpush1.xpose.msra.mxu0 0.0
  %9543 = vmatprep.subr.mxu0 0.0
  %9544 = vmatpush1.xpose.msra.mxu0 0.0
  %9545 = vmatprep.subr.mxu0 0.0
  %9546 = vmatpush1.xpose.msra.mxu0 0.0
  %9547 = vmatprep.subr.mxu0 0.0
  %9548 = vmatpush1.xpose.msra.mxu0 0.0
  %9549 = vmatprep.subr.mxu0 0.0
  %9550 = vmatpush1.xpose.msra.mxu0 0.0
  %9551 = vmatprep.subr.mxu0 0.0
  %9552 = vmatpush1.xpose.msra.mxu0 0.0
  %9553 = vmatprep.subr.mxu0 0.0
  %9554 = vmatpush1.xpose.msra.mxu0 0.0
  %9555 = vmatprep.subr.mxu0 0.0
  %9556 = vmatpush1.xpose.msra.mxu0 0.0
  %9557 = vmatprep.subr.mxu0 0.0
  %9558 = vmatpush1.xpose.msra.mxu0 0.0
  %9559 = vmatprep.subr.mxu0 0.0
  %9560 = vmatpush1.xpose.msra.mxu0 0.0
  %9561 = vmatprep.subr.mxu0 0.0
  %9562 = vmatpush1.xpose.msra.mxu0 0.0
  %9563 = vmatprep.subr.mxu0 0.0
  %9564 = vmatpush1.xpose.msra.mxu0 0.0
  %9565 = vmatprep.subr.mxu0 0.0
  %9566 = vmatpush1.xpose.msra.mxu0 0.0
  %9567 = vmatprep.subr.mxu0 0.0
  %9568 = vmatpush1.xpose.msra.mxu0 0.0
  %9569 = vmatprep.subr.mxu0 0.0
  %9570 = vmatpush1.xpose.msra.mxu0 0.0
  %9571 = vmatprep.subr.mxu0 0.0
  %9572 = vmatpush1.xpose.msra.mxu0 0.0
  %9573 = vmatprep.subr.mxu0 0.0
  %9574 = vmatpush1.xpose.msra.mxu0 0.0
  %9575 = vmatprep.subr.mxu0 0.0
  %9576 = vmatpush1.xpose.msra.mxu0 0.0
  %9577 = vmatprep.subr.mxu0 0.0
  %9578 = vmatpush1.xpose.msra.mxu0 0.0
  %9579 = vmatprep.subr.mxu0 0.0
  %9580 = vmatpush1.xpose.msra.mxu0 0.0
  %9581 = vmatprep.subr.mxu0 0.0
  %9582 = vmatpush1.xpose.msra.mxu0 0.0
  %9583 = vmatprep.subr.mxu0 0.0
  %9584 = vmatpush1.xpose.msra.mxu0 0.0
  %9585 = vmatprep.subr.mxu0 0.0
  %9586 = vmatpush1.xpose.msra.mxu0 0.0
  %9587 = vmatprep.mubr.f32.mxu0 0.0
  %9588 = vmatmul.mubr.f32.gmra.mrb[0].mxu0 %v9515
  %v9589 = vpop.f32.mrb[0].mxu0
  %v9590 = vadd.f32 0.0, %v9589
  %v9591 = vpop.f32.mrb[0].mxu0
  %9592 = vmatprep.mubr.f32.mxu0 0.0
  %9593 = vmatmul.mubr.f32.gmra.mrb[0].mxu0 %v9517
  %v9594 = vpop.f32.mrb[0].mxu0
  %v9595 = vadd.f32 0.0, %v9594
  %v9596 = vpop.f32.mrb[0].mxu0
  %9597 = vdwg.mxu0
  %9598 = vrot.lane.b32.xlu0 %v3708, 80
  %v9599 = vpop.permute.xlu0 %9598
  %9600 = vrot.lane.b32.xlu0 %v3714, 80
  %v9601 = vpop.permute.xlu0 %9600
  %9602 = vrot.lane.b32.xlu0 %v3708, 16
  %v9603 = vpop.permute.xlu0 %9602
  %9604 = vrot.lane.b32.xlu0 %v3714, 16
  %v9605 = vpop.permute.xlu0 %9604
  %v9606 = vsel %vm2464, %v9599, 0
  %v9608 = vsel %vm2464, %v9601, 0
  %v9610 = vsel %vm2464, %v9603, 0
  %v9612 = vsel %vm2464, %v9605, 0
  %9614 = vmatprep.subr.mxu0 0.0
  %9615 = vmatpush1.xpose.msra.mxu0 %v9610
  %9616 = vmatprep.subr.mxu0 0.0
  %9617 = vmatpush1.xpose.msra.mxu0 %v9612
  %9618 = vmatprep.subr.mxu0 0.0
  %9619 = vmatpush1.xpose.msra.mxu0 0.0
  %9620 = vmatprep.subr.mxu0 0.0
  %9621 = vmatpush1.xpose.msra.mxu0 0.0
  %9622 = vmatprep.subr.mxu0 0.0
  %9623 = vmatpush1.xpose.msra.mxu0 0.0
  %9624 = vmatprep.subr.mxu0 0.0
  %9625 = vmatpush1.xpose.msra.mxu0 0.0
  %9626 = vmatprep.subr.mxu0 0.0
  %9627 = vmatpush1.xpose.msra.mxu0 0.0
  %9628 = vmatprep.subr.mxu0 0.0
  %9629 = vmatpush1.xpose.msra.mxu0 0.0
  %9630 = vmatprep.subr.mxu0 0.0
  %9631 = vmatpush1.xpose.msra.mxu0 0.0
  %9632 = vmatprep.subr.mxu0 0.0
  %9633 = vmatpush1.xpose.msra.mxu0 0.0
  %9634 = vmatprep.subr.mxu0 0.0
  %9635 = vmatpush1.xpose.msra.mxu0 0.0
  %9636 = vmatprep.subr.mxu0 0.0
  %9637 = vmatpush1.xpose.msra.mxu0 0.0
  %9638 = vmatprep.subr.mxu0 0.0
  %9639 = vmatpush1.xpose.msra.mxu0 0.0
  %9640 = vmatprep.subr.mxu0 0.0
  %9641 = vmatpush1.xpose.msra.mxu0 0.0
  %9642 = vmatprep.subr.mxu0 0.0
  %9643 = vmatpush1.xpose.msra.mxu0 0.0
  %9644 = vmatprep.subr.mxu0 0.0
  %9645 = vmatpush1.xpose.msra.mxu0 0.0
  %9646 = vmatprep.subr.mxu0 0.0
  %9647 = vmatpush1.xpose.msra.mxu0 0.0
  %9648 = vmatprep.subr.mxu0 0.0
  %9649 = vmatpush1.xpose.msra.mxu0 0.0
  %9650 = vmatprep.subr.mxu0 0.0
  %9651 = vmatpush1.xpose.msra.mxu0 0.0
  %9652 = vmatprep.subr.mxu0 0.0
  %9653 = vmatpush1.xpose.msra.mxu0 0.0
  %9654 = vmatprep.subr.mxu0 0.0
  %9655 = vmatpush1.xpose.msra.mxu0 0.0
  %9656 = vmatprep.subr.mxu0 0.0
  %9657 = vmatpush1.xpose.msra.mxu0 0.0
  %9658 = vmatprep.subr.mxu0 0.0
  %9659 = vmatpush1.xpose.msra.mxu0 0.0
  %9660 = vmatprep.subr.mxu0 0.0
  %9661 = vmatpush1.xpose.msra.mxu0 0.0
  %9662 = vmatprep.subr.mxu0 0.0
  %9663 = vmatpush1.xpose.msra.mxu0 0.0
  %9664 = vmatprep.subr.mxu0 0.0
  %9665 = vmatpush1.xpose.msra.mxu0 0.0
  %9666 = vmatprep.subr.mxu0 0.0
  %9667 = vmatpush1.xpose.msra.mxu0 0.0
  %9668 = vmatprep.subr.mxu0 0.0
  %9669 = vmatpush1.xpose.msra.mxu0 0.0
  %9670 = vmatprep.subr.mxu0 0.0
  %9671 = vmatpush1.xpose.msra.mxu0 0.0
  %9672 = vmatprep.subr.mxu0 0.0
  %9673 = vmatpush1.xpose.msra.mxu0 0.0
  %9674 = vmatprep.subr.mxu0 0.0
  %9675 = vmatpush1.xpose.msra.mxu0 0.0
  %9676 = vmatprep.subr.mxu0 0.0
  %9677 = vmatpush1.xpose.msra.mxu0 0.0
  %9678 = vmatprep.mubr.f32.mxu0 0.0
  %9679 = vmatmul.mubr.f32.gmra.mrb[0].mxu0 %v9606
  %v9680 = vpop.f32.mrb[0].mxu0
  %v9681 = vadd.f32 0.0, %v9680
  %v9682 = vpop.f32.mrb[0].mxu0
  %9683 = vmatprep.mubr.f32.mxu0 0.0
  %9684 = vmatmul.mubr.f32.gmra.mrb[0].mxu0 %v9608
  %v9685 = vpop.f32.mrb[0].mxu0
  %v9686 = vadd.f32 0.0, %v9685
  %v9687 = vpop.f32.mrb[0].mxu0
  %9688 = vdwg.mxu0
  %9689 = vrot.lane.b32.xlu0 %v3720, 80
  %v9690 = vpop.permute.xlu0 %9689
  %9691 = vrot.lane.b32.xlu0 %v3726, 80
  %v9692 = vpop.permute.xlu0 %9691
  %9693 = vrot.lane.b32.xlu0 %v3720, 16
  %v9694 = vpop.permute.xlu0 %9693
  %9695 = vrot.lane.b32.xlu0 %v3726, 16
  %v9696 = vpop.permute.xlu0 %9695
  %v9697 = vsel %vm2464, %v9690, 0
  %v9699 = vsel %vm2464, %v9692, 0
  %v9701 = vsel %vm2464, %v9694, 0
  %v9703 = vsel %vm2464, %v9696, 0
  %9705 = vmatprep.subr.mxu0 0.0
  %9706 = vmatpush1.xpose.msra.mxu0 %v9701
  %9707 = vmatprep.subr.mxu0 0.0
  %9708 = vmatpush1.xpose.msra.mxu0 %v9703
  %9709 = vmatprep.subr.mxu0 0.0
  %9710 = vmatpush1.xpose.msra.mxu0 0.0
  %9711 = vmatprep.subr.mxu0 0.0
  %9712 = vmatpush1.xpose.msra.mxu0 0.0
  %9713 = vmatprep.subr.mxu0 0.0
  %9714 = vmatpush1.xpose.msra.mxu0 0.0
  %9715 = vmatprep.subr.mxu0 0.0
  %9716 = vmatpush1.xpose.msra.mxu0 0.0
  %9717 = vmatprep.subr.mxu0 0.0
  %9718 = vmatpush1.xpose.msra.mxu0 0.0
  %9719 = vmatprep.subr.mxu0 0.0
  %9720 = vmatpush1.xpose.msra.mxu0 0.0
  %9721 = vmatprep.subr.mxu0 0.0
  %9722 = vmatpush1.xpose.msra.mxu0 0.0
  %9723 = vmatprep.subr.mxu0 0.0
  %9724 = vmatpush1.xpose.msra.mxu0 0.0
  %9725 = vmatprep.subr.mxu0 0.0
  %9726 = vmatpush1.xpose.msra.mxu0 0.0
  %9727 = vmatprep.subr.mxu0 0.0
  %9728 = vmatpush1.xpose.msra.mxu0 0.0
  %9729 = vmatprep.subr.mxu0 0.0
  %9730 = vmatpush1.xpose.msra.mxu0 0.0
  %9731 = vmatprep.subr.mxu0 0.0
  %9732 = vmatpush1.xpose.msra.mxu0 0.0
  %9733 = vmatprep.subr.mxu0 0.0
  %9734 = vmatpush1.xpose.msra.mxu0 0.0
  %9735 = vmatprep.subr.mxu0 0.0
  %9736 = vmatpush1.xpose.msra.mxu0 0.0
  %9737 = vmatprep.subr.mxu0 0.0
  %9738 = vmatpush1.xpose.msra.mxu0 0.0
  %9739 = vmatprep.subr.mxu0 0.0
  %9740 = vmatpush1.xpose.msra.mxu0 0.0
  %9741 = vmatprep.subr.mxu0 0.0
  %9742 = vmatpush1.xpose.msra.mxu0 0.0
  %9743 = vmatprep.subr.mxu0 0.0
  %9744 = vmatpush1.xpose.msra.mxu0 0.0
  %9745 = vmatprep.subr.mxu0 0.0
  %9746 = vmatpush1.xpose.msra.mxu0 0.0
  %9747 = vmatprep.subr.mxu0 0.0
  %9748 = vmatpush1.xpose.msra.mxu0 0.0
  %9749 = vmatprep.subr.mxu0 0.0
  %9750 = vmatpush1.xpose.msra.mxu0 0.0
  %9751 = vmatprep.subr.mxu0 0.0
  %9752 = vmatpush1.xpose.msra.mxu0 0.0
  %9753 = vmatprep.subr.mxu0 0.0
  %9754 = vmatpush1.xpose.msra.mxu0 0.0
  %9755 = vmatprep.subr.mxu0 0.0
  %9756 = vmatpush1.xpose.msra.mxu0 0.0
  %9757 = vmatprep.subr.mxu0 0.0
  %9758 = vmatpush1.xpose.msra.mxu0 0.0
  %9759 = vmatprep.subr.mxu0 0.0
  %9760 = vmatpush1.xpose.msra.mxu0 0.0
  %9761 = vmatprep.subr.mxu0 0.0
  %9762 = vmatpush1.xpose.msra.mxu0 0.0
  %9763 = vmatprep.subr.mxu0 0.0
  %9764 = vmatpush1.xpose.msra.mxu0 0.0
  %9765 = vmatprep.subr.mxu0 0.0
  %9766 = vmatpush1.xpose.msra.mxu0 0.0
  %9767 = vmatprep.subr.mxu0 0.0
  %9768 = vmatpush1.xpose.msra.mxu0 0.0
  %9769 = vmatprep.mubr.f32.mxu0 0.0
  %9770 = vmatmul.mubr.f32.gmra.mrb[0].mxu0 %v9697
  %v9771 = vpop.f32.mrb[0].mxu0
  %v9772 = vadd.f32 0.0, %v9771
  %v9773 = vpop.f32.mrb[0].mxu0
  %9774 = vmatprep.mubr.f32.mxu0 0.0
  %9775 = vmatmul.mubr.f32.gmra.mrb[0].mxu0 %v9699
  %v9776 = vpop.f32.mrb[0].mxu0
  %v9777 = vadd.f32 0.0, %v9776
  %v9778 = vpop.f32.mrb[0].mxu0
  %9779 = vdwg.mxu0
  %9780 = vrot.lane.b32.xlu0 %v3732, 80
  %v9781 = vpop.permute.xlu0 %9780
  %9782 = vrot.lane.b32.xlu0 %v3738, 80
  %v9783 = vpop.permute.xlu0 %9782
  %9784 = vrot.lane.b32.xlu0 %v3732, 16
  %v9785 = vpop.permute.xlu0 %9784
  %9786 = vrot.lane.b32.xlu0 %v3738, 16
  %v9787 = vpop.permute.xlu0 %9786
  %v9788 = vsel %vm2464, %v9781, 0
  %v9790 = vsel %vm2464, %v9783, 0
  %v9792 = vsel %vm2464, %v9785, 0
  %v9794 = vsel %vm2464, %v9787, 0
  %9796 = vmatprep.subr.mxu0 0.0
  %9797 = vmatpush1.xpose.msra.mxu0 %v9792
  %9798 = vmatprep.subr.mxu0 0.0
  %9799 = vmatpush1.xpose.msra.mxu0 %v9794
  %9800 = vmatprep.subr.mxu0 0.0
  %9801 = vmatpush1.xpose.msra.mxu0 0.0
  %9802 = vmatprep.subr.mxu0 0.0
  %9803 = vmatpush1.xpose.msra.mxu0 0.0
  %9804 = vmatprep.subr.mxu0 0.0
  %9805 = vmatpush1.xpose.msra.mxu0 0.0
  %9806 = vmatprep.subr.mxu0 0.0
  %9807 = vmatpush1.xpose.msra.mxu0 0.0
  %9808 = vmatprep.subr.mxu0 0.0
  %9809 = vmatpush1.xpose.msra.mxu0 0.0
  %9810 = vmatprep.subr.mxu0 0.0
  %9811 = vmatpush1.xpose.msra.mxu0 0.0
  %9812 = vmatprep.subr.mxu0 0.0
  %9813 = vmatpush1.xpose.msra.mxu0 0.0
  %9814 = vmatprep.subr.mxu0 0.0
  %9815 = vmatpush1.xpose.msra.mxu0 0.0
  %9816 = vmatprep.subr.mxu0 0.0
  %9817 = vmatpush1.xpose.msra.mxu0 0.0
  %9818 = vmatprep.subr.mxu0 0.0
  %9819 = vmatpush1.xpose.msra.mxu0 0.0
  %9820 = vmatprep.subr.mxu0 0.0
  %9821 = vmatpush1.xpose.msra.mxu0 0.0
  %9822 = vmatprep.subr.mxu0 0.0
  %9823 = vmatpush1.xpose.msra.mxu0 0.0
  %9824 = vmatprep.subr.mxu0 0.0
  %9825 = vmatpush1.xpose.msra.mxu0 0.0
  %9826 = vmatprep.subr.mxu0 0.0
  %9827 = vmatpush1.xpose.msra.mxu0 0.0
  %9828 = vmatprep.subr.mxu0 0.0
  %9829 = vmatpush1.xpose.msra.mxu0 0.0
  %9830 = vmatprep.subr.mxu0 0.0
  %9831 = vmatpush1.xpose.msra.mxu0 0.0
  %9832 = vmatprep.subr.mxu0 0.0
  %9833 = vmatpush1.xpose.msra.mxu0 0.0
  %9834 = vmatprep.subr.mxu0 0.0
  %9835 = vmatpush1.xpose.msra.mxu0 0.0
  %9836 = vmatprep.subr.mxu0 0.0
  %9837 = vmatpush1.xpose.msra.mxu0 0.0
  %9838 = vmatprep.subr.mxu0 0.0
  %9839 = vmatpush1.xpose.msra.mxu0 0.0
  %9840 = vmatprep.subr.mxu0 0.0
  %9841 = vmatpush1.xpose.msra.mxu0 0.0
  %9842 = vmatprep.subr.mxu0 0.0
  %9843 = vmatpush1.xpose.msra.mxu0 0.0
  %9844 = vmatprep.subr.mxu0 0.0
  %9845 = vmatpush1.xpose.msra.mxu0 0.0
  %9846 = vmatprep.subr.mxu0 0.0
  %9847 = vmatpush1.xpose.msra.mxu0 0.0
  %9848 = vmatprep.subr.mxu0 0.0
  %9849 = vmatpush1.xpose.msra.mxu0 0.0
  %9850 = vmatprep.subr.mxu0 0.0
  %9851 = vmatpush1.xpose.msra.mxu0 0.0
  %9852 = vmatprep.subr.mxu0 0.0
  %9853 = vmatpush1.xpose.msra.mxu0 0.0
  %9854 = vmatprep.subr.mxu0 0.0
  %9855 = vmatpush1.xpose.msra.mxu0 0.0
  %9856 = vmatprep.subr.mxu0 0.0
  %9857 = vmatpush1.xpose.msra.mxu0 0.0
  %9858 = vmatprep.subr.mxu0 0.0
  %9859 = vmatpush1.xpose.msra.mxu0 0.0
  %9860 = vmatprep.mubr.f32.mxu0 0.0
  %9861 = vmatmul.mubr.f32.gmra.mrb[0].mxu0 %v9788
  %v9862 = vpop.f32.mrb[0].mxu0
  %v9863 = vadd.f32 0.0, %v9862
  %v9864 = vpop.f32.mrb[0].mxu0
  %9865 = vmatprep.mubr.f32.mxu0 0.0
  %9866 = vmatmul.mubr.f32.gmra.mrb[0].mxu0 %v9790
  %v9867 = vpop.f32.mrb[0].mxu0
  %v9868 = vadd.f32 0.0, %v9867
  %v9869 = vpop.f32.mrb[0].mxu0
  %9870 = vdwg.mxu0
  %v9871 = vmul.f32 %v9226, 0.25
  %v9872 = vmul.f32 %v9231, 0.25
  %v9873 = vmul.f32 %v9317, 0.25
  %v9874 = vmul.f32 %v9322, 0.25
  %v9875 = vmul.f32 %v9408, 0.25
  %v9876 = vmul.f32 %v9413, 0.25
  %v9877 = vmul.f32 %v9499, 0.25
  %v9878 = vmul.f32 %v9504, 0.25
  %v9879 = vmul.f32 %v9590, 0.25
  %v9880 = vmul.f32 %v9595, 0.25
  %v9881 = vmul.f32 %v9681, 0.25
  %v9882 = vmul.f32 %v9686, 0.25
  %v9883 = vmul.f32 %v9772, 0.25
  %v9884 = vmul.f32 %v9777, 0.25
  %v9885 = vmul.f32 %v9863, 0.25
  %v9886 = vmul.f32 %v9868, 0.25
  %v9887 = vsel %vm2464, %v9871, -inf
  %9888 = vmax.xlane.f32.xlu0 %v9887
  %v9889 = vpop.xlane.xlu0 %9888
  %v9890 = vsel %vm2464, %v9872, -inf
  %9891 = vmax.xlane.f32.xlu0 %v9890
  %v9892 = vpop.xlane.xlu0 %9891
  %v9893 = vsel %vm2464, %v9873, -inf
  %9894 = vmax.xlane.f32.xlu0 %v9893
  %v9895 = vpop.xlane.xlu0 %9894
  %v9896 = vsel %vm2464, %v9874, -inf
  %9897 = vmax.xlane.f32.xlu0 %v9896
  %v9898 = vpop.xlane.xlu0 %9897
  %v9899 = vsel %vm2464, %v9875, -inf
  %9900 = vmax.xlane.f32.xlu0 %v9899
  %v9901 = vpop.xlane.xlu0 %9900
  %v9902 = vsel %vm2464, %v9876, -inf
  %9903 = vmax.xlane.f32.xlu0 %v9902
  %v9904 = vpop.xlane.xlu0 %9903
  %v9905 = vsel %vm2464, %v9877, -inf
  %9906 = vmax.xlane.f32.xlu0 %v9905
  %v9907 = vpop.xlane.xlu0 %9906
  %v9908 = vsel %vm2464, %v9878, -inf
  %9909 = vmax.xlane.f32.xlu0 %v9908
  %v9910 = vpop.xlane.xlu0 %9909
  %v9911 = vsel %vm2464, %v9879, -inf
  %9912 = vmax.xlane.f32.xlu0 %v9911
  %v9913 = vpop.xlane.xlu0 %9912
  %v9914 = vsel %vm2464, %v9880, -inf
  %9915 = vmax.xlane.f32.xlu0 %v9914
  %v9916 = vpop.xlane.xlu0 %9915
  %v9917 = vsel %vm2464, %v9881, -inf
  %9918 = vmax.xlane.f32.xlu0 %v9917
  %v9919 = vpop.xlane.xlu0 %9918
  %v9920 = vsel %vm2464, %v9882, -inf
  %9921 = vmax.xlane.f32.xlu0 %v9920
  %v9922 = vpop.xlane.xlu0 %9921
  %v9923 = vsel %vm2464, %v9883, -inf
  %9924 = vmax.xlane.f32.xlu0 %v9923
  %v9925 = vpop.xlane.xlu0 %9924
  %v9926 = vsel %vm2464, %v9884, -inf
  %9927 = vmax.xlane.f32.xlu0 %v9926
  %v9928 = vpop.xlane.xlu0 %9927
  %v9929 = vsel %vm2464, %v9885, -inf
  %9930 = vmax.xlane.f32.xlu0 %v9929
  %v9931 = vpop.xlane.xlu0 %9930
  %v9932 = vsel %vm2464, %v9886, -inf
  %9933 = vmax.xlane.f32.xlu0 %v9932
  %v9934 = vpop.xlane.xlu0 %9933
  %v9935 = vsub.f32 %v9871, %v9889
  %v9936 = vsub.f32 %v9872, %v9892
  %v9937 = vsub.f32 %v9873, %v9895
  %v9938 = vsub.f32 %v9874, %v9898
  %v9939 = vsub.f32 %v9875, %v9901
  %v9940 = vsub.f32 %v9876, %v9904
  %v9941 = vsub.f32 %v9877, %v9907
  %v9942 = vsub.f32 %v9878, %v9910
  %v9943 = vsub.f32 %v9879, %v9913
  %v9944 = vsub.f32 %v9880, %v9916
  %v9945 = vsub.f32 %v9881, %v9919
  %v9946 = vsub.f32 %v9882, %v9922
  %v9947 = vsub.f32 %v9883, %v9925
  %v9948 = vsub.f32 %v9884, %v9928
  %v9949 = vsub.f32 %v9885, %v9931
  %v9950 = vsub.f32 %v9886, %v9934
  %v9951 = vmul.f32 %v9935, 1.442695
  %v9952 = vpow.pop %v9951
  %v9953 = vmul.f32 %v9936, 1.442695
  %v9954 = vpow.pop %v9953
  %v9955 = vmul.f32 %v9937, 1.442695
  %v9956 = vpow.pop %v9955
  %v9957 = vmul.f32 %v9938, 1.442695
  %v9958 = vpow.pop %v9957
  %v9959 = vmul.f32 %v9939, 1.442695
  %v9960 = vpow.pop %v9959
  %v9961 = vmul.f32 %v9940, 1.442695
  %v9962 = vpow.pop %v9961
  %v9963 = vmul.f32 %v9941, 1.442695
  %v9964 = vpow.pop %v9963
  %v9965 = vmul.f32 %v9942, 1.442695
  %v9966 = vpow.pop %v9965
  %v9967 = vmul.f32 %v9943, 1.442695
  %v9968 = vpow.pop %v9967
  %v9969 = vmul.f32 %v9944, 1.442695
  %v9970 = vpow.pop %v9969
  %v9971 = vmul.f32 %v9945, 1.442695
  %v9972 = vpow.pop %v9971
  %v9973 = vmul.f32 %v9946, 1.442695
  %v9974 = vpow.pop %v9973
  %v9975 = vmul.f32 %v9947, 1.442695
  %v9976 = vpow.pop %v9975
  %v9977 = vmul.f32 %v9948, 1.442695
  %v9978 = vpow.pop %v9977
  %v9979 = vmul.f32 %v9949, 1.442695
  %v9980 = vpow.pop %v9979
  %v9981 = vmul.f32 %v9950, 1.442695
  %v9982 = vpow.pop %v9981
  %v9983 = vsel %vm2464, %v9952, 0.0
  %9984 = vadd.xlane.f32.xlu0 %v9983
  %v9985 = vpop.xlane.xlu0 %9984
  %v9986 = vsel %vm2464, %v9954, 0.0
  %9987 = vadd.xlane.f32.xlu0 %v9986
  %v9988 = vpop.xlane.xlu0 %9987
  %v9989 = vsel %vm2464, %v9956, 0.0
  %9990 = vadd.xlane.f32.xlu0 %v9989
  %v9991 = vpop.xlane.xlu0 %9990
  %v9992 = vsel %vm2464, %v9958, 0.0
  %9993 = vadd.xlane.f32.xlu0 %v9992
  %v9994 = vpop.xlane.xlu0 %9993
  %v9995 = vsel %vm2464, %v9960, 0.0
  %9996 = vadd.xlane.f32.xlu0 %v9995
  %v9997 = vpop.xlane.xlu0 %9996
  %v9998 = vsel %vm2464, %v9962, 0.0
  %9999 = vadd.xlane.f32.xlu0 %v9998
  %v10000 = vpop.xlane.xlu0 %9999
  %v10001 = vsel %vm2464, %v9964, 0.0
  %10002 = vadd.xlane.f32.xlu0 %v10001
  %v10003 = vpop.xlane.xlu0 %10002
  %v10004 = vsel %vm2464, %v9966, 0.0
  %10005 = vadd.xlane.f32.xlu0 %v10004
  %v10006 = vpop.xlane.xlu0 %10005
  %v10007 = vsel %vm2464, %v9968, 0.0
  %10008 = vadd.xlane.f32.xlu0 %v10007
  %v10009 = vpop.xlane.xlu0 %10008
  %v10010 = vsel %vm2464, %v9970, 0.0
  %10011 = vadd.xlane.f32.xlu0 %v10010
  %v10012 = vpop.xlane.xlu0 %10011
  %v10013 = vsel %vm2464, %v9972, 0.0
  %10014 = vadd.xlane.f32.xlu0 %v10013
  %v10015 = vpop.xlane.xlu0 %10014
  %v10016 = vsel %vm2464, %v9974, 0.0
  %10017 = vadd.xlane.f32.xlu0 %v10016
  %v10018 = vpop.xlane.xlu0 %10017
  %v10019 = vsel %vm2464, %v9976, 0.0
  %10020 = vadd.xlane.f32.xlu0 %v10019
  %v10021 = vpop.xlane.xlu0 %10020
  %v10022 = vsel %vm2464, %v9978, 0.0
  %10023 = vadd.xlane.f32.xlu0 %v10022
  %v10024 = vpop.xlane.xlu0 %10023
  %v10025 = vsel %vm2464, %v9980, 0.0
  %10026 = vadd.xlane.f32.xlu0 %v10025
  %v10027 = vpop.xlane.xlu0 %10026
  %v10028 = vsel %vm2464, %v9982, 0.0
  %10029 = vadd.xlane.f32.xlu0 %v10028
  %v10030 = vpop.xlane.xlu0 %10029
  %v10031 = vrcp.pop %v9985
  %v10032 = vrcp.pop %v9988
  %v10033 = vrcp.pop %v9991
  %v10034 = vrcp.pop %v9994
  %v10035 = vrcp.pop %v9997
  %v10036 = vrcp.pop %v10000
  %v10037 = vrcp.pop %v10003
  %v10038 = vrcp.pop %v10006
  %v10039 = vrcp.pop %v10009
  %v10040 = vrcp.pop %v10012
  %v10041 = vrcp.pop %v10015
  %v10042 = vrcp.pop %v10018
  %v10043 = vrcp.pop %v10021
  %v10044 = vrcp.pop %v10024
  %v10045 = vrcp.pop %v10027
  %v10046 = vrcp.pop %v10030
  %v10047 = vmul.f32 %v9952, %v10031
  %v10048 = vmul.f32 %v9954, %v10032
  %v10049 = vmul.f32 %v9956, %v10033
  %v10050 = vmul.f32 %v9958, %v10034
  %v10051 = vmul.f32 %v9960, %v10035
  %v10052 = vmul.f32 %v9962, %v10036
  %v10053 = vmul.f32 %v9964, %v10037
  %v10054 = vmul.f32 %v9966, %v10038
  %v10055 = vmul.f32 %v9968, %v10039
  %v10056 = vmul.f32 %v9970, %v10040
  %v10057 = vmul.f32 %v9972, %v10041
  %v10058 = vmul.f32 %v9974, %v10042
  %v10059 = vmul.f32 %v9976, %v10043
  %v10060 = vmul.f32 %v9978, %v10044
  %v10061 = vmul.f32 %v9980, %v10045
  %v10062 = vmul.f32 %v9982, %v10046
  %10063 = vrot.lane.b32.xlu0 %v3650, 80
  %v10064 = vpop.permute.xlu0 %10063
  %10065 = vrot.lane.b32.xlu0 %v3656, 80
  %v10066 = vpop.permute.xlu0 %10065
  %v10070 = vsel %vm2464, %v10047, 0
  %v10073 = vsel %vm2464, %v10048, 0
  %10075 = vmatprep.subr.mxu0 0.0
  %10076 = vmatpush1.msra.mxu0 %v10064
  %10077 = vmatprep.subr.mxu0 0.0
  %10078 = vmatpush1.msra.mxu0 %v10066
  %10079 = vmatprep.subr.mxu0 0.0
  %10080 = vmatpush1.msra.mxu0 0.0
  %10081 = vmatprep.subr.mxu0 0.0
  %10082 = vmatpush1.msra.mxu0 0.0
  %10083 = vmatprep.subr.mxu0 0.0
  %10084 = vmatpush1.msra.mxu0 0.0
  %10085 = vmatprep.subr.mxu0 0.0
  %10086 = vmatpush1.msra.mxu0 0.0
  %10087 = vmatprep.subr.mxu0 0.0
  %10088 = vmatpush1.msra.mxu0 0.0
  %10089 = vmatprep.subr.mxu0 0.0
  %10090 = vmatpush1.msra.mxu0 0.0
  %10091 = vmatprep.subr.mxu0 0.0
  %10092 = vmatpush1.msra.mxu0 0.0
  %10093 = vmatprep.subr.mxu0 0.0
  %10094 = vmatpush1.msra.mxu0 0.0
  %10095 = vmatprep.subr.mxu0 0.0
  %10096 = vmatpush1.msra.mxu0 0.0
  %10097 = vmatprep.subr.mxu0 0.0
  %10098 = vmatpush1.msra.mxu0 0.0
  %10099 = vmatprep.subr.mxu0 0.0
  %10100 = vmatpush1.msra.mxu0 0.0
  %10101 = vmatprep.subr.mxu0 0.0
  %10102 = vmatpush1.msra.mxu0 0.0
  %10103 = vmatprep.subr.mxu0 0.0
  %10104 = vmatpush1.msra.mxu0 0.0
  %10105 = vmatprep.subr.mxu0 0.0
  %10106 = vmatpush1.msra.mxu0 0.0
  %10107 = vmatprep.subr.mxu0 0.0
  %10108 = vmatpush1.msra.mxu0 0.0
  %10109 = vmatprep.subr.mxu0 0.0
  %10110 = vmatpush1.msra.mxu0 0.0
  %10111 = vmatprep.subr.mxu0 0.0
  %10112 = vmatpush1.msra.mxu0 0.0
  %10113 = vmatprep.subr.mxu0 0.0
  %10114 = vmatpush1.msra.mxu0 0.0
  %10115 = vmatprep.subr.mxu0 0.0
  %10116 = vmatpush1.msra.mxu0 0.0
  %10117 = vmatprep.subr.mxu0 0.0
  %10118 = vmatpush1.msra.mxu0 0.0
  %10119 = vmatprep.subr.mxu0 0.0
  %10120 = vmatpush1.msra.mxu0 0.0
  %10121 = vmatprep.subr.mxu0 0.0
  %10122 = vmatpush1.msra.mxu0 0.0
  %10123 = vmatprep.subr.mxu0 0.0
  %10124 = vmatpush1.msra.mxu0 0.0
  %10125 = vmatprep.subr.mxu0 0.0
  %10126 = vmatpush1.msra.mxu0 0.0
  %10127 = vmatprep.subr.mxu0 0.0
  %10128 = vmatpush1.msra.mxu0 0.0
  %10129 = vmatprep.subr.mxu0 0.0
  %10130 = vmatpush1.msra.mxu0 0.0
  %10131 = vmatprep.subr.mxu0 0.0
  %10132 = vmatpush1.msra.mxu0 0.0
  %10133 = vmatprep.subr.mxu0 0.0
  %10134 = vmatpush1.msra.mxu0 0.0
  %10135 = vmatprep.subr.mxu0 0.0
  %10136 = vmatpush1.msra.mxu0 0.0
  %10137 = vmatprep.subr.mxu0 0.0
  %10138 = vmatpush1.msra.mxu0 0.0
  %10139 = vmatprep.mubr.f32.mxu0 0.0
  %10140 = vmatmul.mubr.f32.gmra.mrb[0].mxu0 %v10070
  %v10141 = vpop.f32.mrb[0].mxu0
  %v10142 = vadd.f32 0.0, %v10141
  %v10143 = vpop.f32.mrb[0].mxu0
  %10144 = vmatprep.mubr.f32.mxu0 0.0
  %10145 = vmatmul.mubr.f32.gmra.mrb[0].mxu0 %v10073
  %v10146 = vpop.f32.mrb[0].mxu0
  %v10147 = vadd.f32 0.0, %v10146
  %v10148 = vpop.f32.mrb[0].mxu0
  %10149 = vdwg.mxu0
  %10150 = vrot.lane.b32.xlu0 %v3662, 80
  %v10151 = vpop.permute.xlu0 %10150
  %10152 = vrot.lane.b32.xlu0 %v3668, 80
  %v10153 = vpop.permute.xlu0 %10152
  %v10157 = vsel %vm2464, %v10049, 0
  %v10160 = vsel %vm2464, %v10050, 0
  %10162 = vmatprep.subr.mxu0 0.0
  %10163 = vmatpush1.msra.mxu0 %v10151
  %10164 = vmatprep.subr.mxu0 0.0
  %10165 = vmatpush1.msra.mxu0 %v10153
  %10166 = vmatprep.subr.mxu0 0.0
  %10167 = vmatpush1.msra.mxu0 0.0
  %10168 = vmatprep.subr.mxu0 0.0
  %10169 = vmatpush1.msra.mxu0 0.0
  %10170 = vmatprep.subr.mxu0 0.0
  %10171 = vmatpush1.msra.mxu0 0.0
  %10172 = vmatprep.subr.mxu0 0.0
  %10173 = vmatpush1.msra.mxu0 0.0
  %10174 = vmatprep.subr.mxu0 0.0
  %10175 = vmatpush1.msra.mxu0 0.0
  %10176 = vmatprep.subr.mxu0 0.0
  %10177 = vmatpush1.msra.mxu0 0.0
  %10178 = vmatprep.subr.mxu0 0.0
  %10179 = vmatpush1.msra.mxu0 0.0
  %10180 = vmatprep.subr.mxu0 0.0
  %10181 = vmatpush1.msra.mxu0 0.0
  %10182 = vmatprep.subr.mxu0 0.0
  %10183 = vmatpush1.msra.mxu0 0.0
  %10184 = vmatprep.subr.mxu0 0.0
  %10185 = vmatpush1.msra.mxu0 0.0
  %10186 = vmatprep.subr.mxu0 0.0
  %10187 = vmatpush1.msra.mxu0 0.0
  %10188 = vmatprep.subr.mxu0 0.0
  %10189 = vmatpush1.msra.mxu0 0.0
  %10190 = vmatprep.subr.mxu0 0.0
  %10191 = vmatpush1.msra.mxu0 0.0
  %10192 = vmatprep.subr.mxu0 0.0
  %10193 = vmatpush1.msra.mxu0 0.0
  %10194 = vmatprep.subr.mxu0 0.0
  %10195 = vmatpush1.msra.mxu0 0.0
  %10196 = vmatprep.subr.mxu0 0.0
  %10197 = vmatpush1.msra.mxu0 0.0
  %10198 = vmatprep.subr.mxu0 0.0
  %10199 = vmatpush1.msra.mxu0 0.0
  %10200 = vmatprep.subr.mxu0 0.0
  %10201 = vmatpush1.msra.mxu0 0.0
  %10202 = vmatprep.subr.mxu0 0.0
  %10203 = vmatpush1.msra.mxu0 0.0
  %10204 = vmatprep.subr.mxu0 0.0
  %10205 = vmatpush1.msra.mxu0 0.0
  %10206 = vmatprep.subr.mxu0 0.0
  %10207 = vmatpush1.msra.mxu0 0.0
  %10208 = vmatprep.subr.mxu0 0.0
  %10209 = vmatpush1.msra.mxu0 0.0
  %10210 = vmatprep.subr.mxu0 0.0
  %10211 = vmatpush1.msra.mxu0 0.0
  %10212 = vmatprep.subr.mxu0 0.0
  %10213 = vmatpush1.msra.mxu0 0.0
  %10214 = vmatprep.subr.mxu0 0.0
  %10215 = vmatpush1.msra.mxu0 0.0
  %10216 = vmatprep.subr.mxu0 0.0
  %10217 = vmatpush1.msra.mxu0 0.0
  %10218 = vmatprep.subr.mxu0 0.0
  %10219 = vmatpush1.msra.mxu0 0.0
  %10220 = vmatprep.subr.mxu0 0.0
  %10221 = vmatpush1.msra.mxu0 0.0
  %10222 = vmatprep.subr.mxu0 0.0
  %10223 = vmatpush1.msra.mxu0 0.0
  %10224 = vmatprep.subr.mxu0 0.0
  %10225 = vmatpush1.msra.mxu0 0.0
  %10226 = vmatprep.mubr.f32.mxu0 0.0
  %10227 = vmatmul.mubr.f32.gmra.mrb[0].mxu0 %v10157
  %v10228 = vpop.f32.mrb[0].mxu0
  %v10229 = vadd.f32 0.0, %v10228
  %v10230 = vpop.f32.mrb[0].mxu0
  %10231 = vmatprep.mubr.f32.mxu0 0.0
  %10232 = vmatmul.mubr.f32.gmra.mrb[0].mxu0 %v10160
  %v10233 = vpop.f32.mrb[0].mxu0
  %v10234 = vadd.f32 0.0, %v10233
  %v10235 = vpop.f32.mrb[0].mxu0
  %10236 = vdwg.mxu0
  %10237 = vrot.lane.b32.xlu0 %v3674, 80
  %v10238 = vpop.permute.xlu0 %10237
  %10239 = vrot.lane.b32.xlu0 %v3680, 80
  %v10240 = vpop.permute.xlu0 %10239
  %v10244 = vsel %vm2464, %v10051, 0
  %v10247 = vsel %vm2464, %v10052, 0
  %10249 = vmatprep.subr.mxu0 0.0
  %10250 = vmatpush1.msra.mxu0 %v10238
  %10251 = vmatprep.subr.mxu0 0.0
  %10252 = vmatpush1.msra.mxu0 %v10240
  %10253 = vmatprep.subr.mxu0 0.0
  %10254 = vmatpush1.msra.mxu0 0.0
  %10255 = vmatprep.subr.mxu0 0.0
  %10256 = vmatpush1.msra.mxu0 0.0
  %10257 = vmatprep.subr.mxu0 0.0
  %10258 = vmatpush1.msra.mxu0 0.0
  %10259 = vmatprep.subr.mxu0 0.0
  %10260 = vmatpush1.msra.mxu0 0.0
  %10261 = vmatprep.subr.mxu0 0.0
  %10262 = vmatpush1.msra.mxu0 0.0
  %10263 = vmatprep.subr.mxu0 0.0
  %10264 = vmatpush1.msra.mxu0 0.0
  %10265 = vmatprep.subr.mxu0 0.0
  %10266 = vmatpush1.msra.mxu0 0.0
  %10267 = vmatprep.subr.mxu0 0.0
  %10268 = vmatpush1.msra.mxu0 0.0
  %10269 = vmatprep.subr.mxu0 0.0
  %10270 = vmatpush1.msra.mxu0 0.0
  %10271 = vmatprep.subr.mxu0 0.0
  %10272 = vmatpush1.msra.mxu0 0.0
  %10273 = vmatprep.subr.mxu0 0.0
  %10274 = vmatpush1.msra.mxu0 0.0
  %10275 = vmatprep.subr.mxu0 0.0
  %10276 = vmatpush1.msra.mxu0 0.0
  %10277 = vmatprep.subr.mxu0 0.0
  %10278 = vmatpush1.msra.mxu0 0.0
  %10279 = vmatprep.subr.mxu0 0.0
  %10280 = vmatpush1.msra.mxu0 0.0
  %10281 = vmatprep.subr.mxu0 0.0
  %10282 = vmatpush1.msra.mxu0 0.0
  %10283 = vmatprep.subr.mxu0 0.0
  %10284 = vmatpush1.msra.mxu0 0.0
  %10285 = vmatprep.subr.mxu0 0.0
  %10286 = vmatpush1.msra.mxu0 0.0
  %10287 = vmatprep.subr.mxu0 0.0
  %10288 = vmatpush1.msra.mxu0 0.0
  %10289 = vmatprep.subr.mxu0 0.0
  %10290 = vmatpush1.msra.mxu0 0.0
  %10291 = vmatprep.subr.mxu0 0.0
  %10292 = vmatpush1.msra.mxu0 0.0
  %10293 = vmatprep.subr.mxu0 0.0
  %10294 = vmatpush1.msra.mxu0 0.0
  %10295 = vmatprep.subr.mxu0 0.0
  %10296 = vmatpush1.msra.mxu0 0.0
  %10297 = vmatprep.subr.mxu0 0.0
  %10298 = vmatpush1.msra.mxu0 0.0
  %10299 = vmatprep.subr.mxu0 0.0
  %10300 = vmatpush1.msra.mxu0 0.0
  %10301 = vmatprep.subr.mxu0 0.0
  %10302 = vmatpush1.msra.mxu0 0.0
  %10303 = vmatprep.subr.mxu0 0.0
  %10304 = vmatpush1.msra.mxu0 0.0
  %10305 = vmatprep.subr.mxu0 0.0
  %10306 = vmatpush1.msra.mxu0 0.0
  %10307 = vmatprep.subr.mxu0 0.0
  %10308 = vmatpush1.msra.mxu0 0.0
  %10309 = vmatprep.subr.mxu0 0.0
  %10310 = vmatpush1.msra.mxu0 0.0
  %10311 = vmatprep.subr.mxu0 0.0
  %10312 = vmatpush1.msra.mxu0 0.0
  %10313 = vmatprep.mubr.f32.mxu0 0.0
  %10314 = vmatmul.mubr.f32.gmra.mrb[0].mxu0 %v10244
  %v10315 = vpop.f32.mrb[0].mxu0
  %v10316 = vadd.f32 0.0, %v10315
  %v10317 = vpop.f32.mrb[0].mxu0
  %10318 = vmatprep.mubr.f32.mxu0 0.0
  %10319 = vmatmul.mubr.f32.gmra.mrb[0].mxu0 %v10247
  %v10320 = vpop.f32.mrb[0].mxu0
  %v10321 = vadd.f32 0.0, %v10320
  %v10322 = vpop.f32.mrb[0].mxu0
  %10323 = vdwg.mxu0
  %10324 = vrot.lane.b32.xlu0 %v3686, 80
  %v10325 = vpop.permute.xlu0 %10324
  %10326 = vrot.lane.b32.xlu0 %v3692, 80
  %v10327 = vpop.permute.xlu0 %10326
  %v10331 = vsel %vm2464, %v10053, 0
  %v10334 = vsel %vm2464, %v10054, 0
  %10336 = vmatprep.subr.mxu0 0.0
  %10337 = vmatpush1.msra.mxu0 %v10325
  %10338 = vmatprep.subr.mxu0 0.0
  %10339 = vmatpush1.msra.mxu0 %v10327
  %10340 = vmatprep.subr.mxu0 0.0
  %10341 = vmatpush1.msra.mxu0 0.0
  %10342 = vmatprep.subr.mxu0 0.0
  %10343 = vmatpush1.msra.mxu0 0.0
  %10344 = vmatprep.subr.mxu0 0.0
  %10345 = vmatpush1.msra.mxu0 0.0
  %10346 = vmatprep.subr.mxu0 0.0
  %10347 = vmatpush1.msra.mxu0 0.0
  %10348 = vmatprep.subr.mxu0 0.0
  %10349 = vmatpush1.msra.mxu0 0.0
  %10350 = vmatprep.subr.mxu0 0.0
  %10351 = vmatpush1.msra.mxu0 0.0
  %10352 = vmatprep.subr.mxu0 0.0
  %10353 = vmatpush1.msra.mxu0 0.0
  %10354 = vmatprep.subr.mxu0 0.0
  %10355 = vmatpush1.msra.mxu0 0.0
  %10356 = vmatprep.subr.mxu0 0.0
  %10357 = vmatpush1.msra.mxu0 0.0
  %10358 = vmatprep.subr.mxu0 0.0
  %10359 = vmatpush1.msra.mxu0 0.0
  %10360 = vmatprep.subr.mxu0 0.0
  %10361 = vmatpush1.msra.mxu0 0.0
  %10362 = vmatprep.subr.mxu0 0.0
  %10363 = vmatpush1.msra.mxu0 0.0
  %10364 = vmatprep.subr.mxu0 0.0
  %10365 = vmatpush1.msra.mxu0 0.0
  %10366 = vmatprep.subr.mxu0 0.0
  %10367 = vmatpush1.msra.mxu0 0.0
  %10368 = vmatprep.subr.mxu0 0.0
  %10369 = vmatpush1.msra.mxu0 0.0
  %10370 = vmatprep.subr.mxu0 0.0
  %10371 = vmatpush1.msra.mxu0 0.0
  %10372 = vmatprep.subr.mxu0 0.0
  %10373 = vmatpush1.msra.mxu0 0.0
  %10374 = vmatprep.subr.mxu0 0.0
  %10375 = vmatpush1.msra.mxu0 0.0
  %10376 = vmatprep.subr.mxu0 0.0
  %10377 = vmatpush1.msra.mxu0 0.0
  %10378 = vmatprep.subr.mxu0 0.0
  %10379 = vmatpush1.msra.mxu0 0.0
  %10380 = vmatprep.subr.mxu0 0.0
  %10381 = vmatpush1.msra.mxu0 0.0
  %10382 = vmatprep.subr.mxu0 0.0
  %10383 = vmatpush1.msra.mxu0 0.0
  %10384 = vmatprep.subr.mxu0 0.0
  %10385 = vmatpush1.msra.mxu0 0.0
  %10386 = vmatprep.subr.mxu0 0.0
  %10387 = vmatpush1.msra.mxu0 0.0
  %10388 = vmatprep.subr.mxu0 0.0
  %10389 = vmatpush1.msra.mxu0 0.0
  %10390 = vmatprep.subr.mxu0 0.0
  %10391 = vmatpush1.msra.mxu0 0.0
  %10392 = vmatprep.subr.mxu0 0.0
  %10393 = vmatpush1.msra.mxu0 0.0
  %10394 = vmatprep.subr.mxu0 0.0
  %10395 = vmatpush1.msra.mxu0 0.0
  %10396 = vmatprep.subr.mxu0 0.0
  %10397 = vmatpush1.msra.mxu0 0.0
  %10398 = vmatprep.subr.mxu0 0.0
  %10399 = vmatpush1.msra.mxu0 0.0
  %10400 = vmatprep.mubr.f32.mxu0 0.0
  %10401 = vmatmul.mubr.f32.gmra.mrb[0].mxu0 %v10331
  %v10402 = vpop.f32.mrb[0].mxu0
  %v10403 = vadd.f32 0.0, %v10402
  %v10404 = vpop.f32.mrb[0].mxu0
  %10405 = vmatprep.mubr.f32.mxu0 0.0
  %10406 = vmatmul.mubr.f32.gmra.mrb[0].mxu0 %v10334
  %v10407 = vpop.f32.mrb[0].mxu0
  %v10408 = vadd.f32 0.0, %v10407
  %v10409 = vpop.f32.mrb[0].mxu0
  %10410 = vdwg.mxu0
  %10411 = vrot.lane.b32.xlu0 %v3698, 80
  %v10412 = vpop.permute.xlu0 %10411
  %10413 = vrot.lane.b32.xlu0 %v3704, 80
  %v10414 = vpop.permute.xlu0 %10413
  %v10418 = vsel %vm2464, %v10055, 0
  %v10421 = vsel %vm2464, %v10056, 0
  %10423 = vmatprep.subr.mxu0 0.0
  %10424 = vmatpush1.msra.mxu0 %v10412
  %10425 = vmatprep.subr.mxu0 0.0
  %10426 = vmatpush1.msra.mxu0 %v10414
  %10427 = vmatprep.subr.mxu0 0.0
  %10428 = vmatpush1.msra.mxu0 0.0
  %10429 = vmatprep.subr.mxu0 0.0
  %10430 = vmatpush1.msra.mxu0 0.0
  %10431 = vmatprep.subr.mxu0 0.0
  %10432 = vmatpush1.msra.mxu0 0.0
  %10433 = vmatprep.subr.mxu0 0.0
  %10434 = vmatpush1.msra.mxu0 0.0
  %10435 = vmatprep.subr.mxu0 0.0
  %10436 = vmatpush1.msra.mxu0 0.0
  %10437 = vmatprep.subr.mxu0 0.0
  %10438 = vmatpush1.msra.mxu0 0.0
  %10439 = vmatprep.subr.mxu0 0.0
  %10440 = vmatpush1.msra.mxu0 0.0
  %10441 = vmatprep.subr.mxu0 0.0
  %10442 = vmatpush1.msra.mxu0 0.0
  %10443 = vmatprep.subr.mxu0 0.0
  %10444 = vmatpush1.msra.mxu0 0.0
  %10445 = vmatprep.subr.mxu0 0.0
  %10446 = vmatpush1.msra.mxu0 0.0
  %10447 = vmatprep.subr.mxu0 0.0
  %10448 = vmatpush1.msra.mxu0 0.0
  %10449 = vmatprep.subr.mxu0 0.0
  %10450 = vmatpush1.msra.mxu0 0.0
  %10451 = vmatprep.subr.mxu0 0.0
  %10452 = vmatpush1.msra.mxu0 0.0
  %10453 = vmatprep.subr.mxu0 0.0
  %10454 = vmatpush1.msra.mxu0 0.0
  %10455 = vmatprep.subr.mxu0 0.0
  %10456 = vmatpush1.msra.mxu0 0.0
  %10457 = vmatprep.subr.mxu0 0.0
  %10458 = vmatpush1.msra.mxu0 0.0
  %10459 = vmatprep.subr.mxu0 0.0
  %10460 = vmatpush1.msra.mxu0 0.0
  %10461 = vmatprep.subr.mxu0 0.0
  %10462 = vmatpush1.msra.mxu0 0.0
  %10463 = vmatprep.subr.mxu0 0.0
  %10464 = vmatpush1.msra.mxu0 0.0
  %10465 = vmatprep.subr.mxu0 0.0
  %10466 = vmatpush1.msra.mxu0 0.0
  %10467 = vmatprep.subr.mxu0 0.0
  %10468 = vmatpush1.msra.mxu0 0.0
  %10469 = vmatprep.subr.mxu0 0.0
  %10470 = vmatpush1.msra.mxu0 0.0
  %10471 = vmatprep.subr.mxu0 0.0
  %10472 = vmatpush1.msra.mxu0 0.0
  %10473 = vmatprep.subr.mxu0 0.0
  %10474 = vmatpush1.msra.mxu0 0.0
  %10475 = vmatprep.subr.mxu0 0.0
  %10476 = vmatpush1.msra.mxu0 0.0
  %10477 = vmatprep.subr.mxu0 0.0
  %10478 = vmatpush1.msra.mxu0 0.0
  %10479 = vmatprep.subr.mxu0 0.0
  %10480 = vmatpush1.msra.mxu0 0.0
  %10481 = vmatprep.subr.mxu0 0.0
  %10482 = vmatpush1.msra.mxu0 0.0
  %10483 = vmatprep.subr.mxu0 0.0
  %10484 = vmatpush1.msra.mxu0 0.0
  %10485 = vmatprep.subr.mxu0 0.0
  %10486 = vmatpush1.msra.mxu0 0.0
  %10487 = vmatprep.mubr.f32.mxu0 0.0
  %10488 = vmatmul.mubr.f32.gmra.mrb[0].mxu0 %v10418
  %v10489 = vpop.f32.mrb[0].mxu0
  %v10490 = vadd.f32 0.0, %v10489
  %v10491 = vpop.f32.mrb[0].mxu0
  %10492 = vmatprep.mubr.f32.mxu0 0.0
  %10493 = vmatmul.mubr.f32.gmra.mrb[0].mxu0 %v10421
  %v10494 = vpop.f32.mrb[0].mxu0
  %v10495 = vadd.f32 0.0, %v10494
  %v10496 = vpop.f32.mrb[0].mxu0
  %10497 = vdwg.mxu0
  %10498 = vrot.lane.b32.xlu0 %v3710, 80
  %v10499 = vpop.permute.xlu0 %10498
  %10500 = vrot.lane.b32.xlu0 %v3716, 80
  %v10501 = vpop.permute.xlu0 %10500
  %v10505 = vsel %vm2464, %v10057, 0
  %v10508 = vsel %vm2464, %v10058, 0
  %10510 = vmatprep.subr.mxu0 0.0
  %10511 = vmatpush1.msra.mxu0 %v10499
  %10512 = vmatprep.subr.mxu0 0.0
  %10513 = vmatpush1.msra.mxu0 %v10501
  %10514 = vmatprep.subr.mxu0 0.0
  %10515 = vmatpush1.msra.mxu0 0.0
  %10516 = vmatprep.subr.mxu0 0.0
  %10517 = vmatpush1.msra.mxu0 0.0
  %10518 = vmatprep.subr.mxu0 0.0
  %10519 = vmatpush1.msra.mxu0 0.0
  %10520 = vmatprep.subr.mxu0 0.0
  %10521 = vmatpush1.msra.mxu0 0.0
  %10522 = vmatprep.subr.mxu0 0.0
  %10523 = vmatpush1.msra.mxu0 0.0
  %10524 = vmatprep.subr.mxu0 0.0
  %10525 = vmatpush1.msra.mxu0 0.0
  %10526 = vmatprep.subr.mxu0 0.0
  %10527 = vmatpush1.msra.mxu0 0.0
  %10528 = vmatprep.subr.mxu0 0.0
  %10529 = vmatpush1.msra.mxu0 0.0
  %10530 = vmatprep.subr.mxu0 0.0
  %10531 = vmatpush1.msra.mxu0 0.0
  %10532 = vmatprep.subr.mxu0 0.0
  %10533 = vmatpush1.msra.mxu0 0.0
  %10534 = vmatprep.subr.mxu0 0.0
  %10535 = vmatpush1.msra.mxu0 0.0
  %10536 = vmatprep.subr.mxu0 0.0
  %10537 = vmatpush1.msra.mxu0 0.0
  %10538 = vmatprep.subr.mxu0 0.0
  %10539 = vmatpush1.msra.mxu0 0.0
  %10540 = vmatprep.subr.mxu0 0.0
  %10541 = vmatpush1.msra.mxu0 0.0
  %10542 = vmatprep.subr.mxu0 0.0
  %10543 = vmatpush1.msra.mxu0 0.0
  %10544 = vmatprep.subr.mxu0 0.0
  %10545 = vmatpush1.msra.mxu0 0.0
  %10546 = vmatprep.subr.mxu0 0.0
  %10547 = vmatpush1.msra.mxu0 0.0
  %10548 = vmatprep.subr.mxu0 0.0
  %10549 = vmatpush1.msra.mxu0 0.0
  %10550 = vmatprep.subr.mxu0 0.0
  %10551 = vmatpush1.msra.mxu0 0.0
  %10552 = vmatprep.subr.mxu0 0.0
  %10553 = vmatpush1.msra.mxu0 0.0
  %10554 = vmatprep.subr.mxu0 0.0
  %10555 = vmatpush1.msra.mxu0 0.0
  %10556 = vmatprep.subr.mxu0 0.0
  %10557 = vmatpush1.msra.mxu0 0.0
  %10558 = vmatprep.subr.mxu0 0.0
  %10559 = vmatpush1.msra.mxu0 0.0
  %10560 = vmatprep.subr.mxu0 0.0
  %10561 = vmatpush1.msra.mxu0 0.0
  %10562 = vmatprep.subr.mxu0 0.0
  %10563 = vmatpush1.msra.mxu0 0.0
  %10564 = vmatprep.subr.mxu0 0.0
  %10565 = vmatpush1.msra.mxu0 0.0
  %10566 = vmatprep.subr.mxu0 0.0
  %10567 = vmatpush1.msra.mxu0 0.0
  %10568 = vmatprep.subr.mxu0 0.0
  %10569 = vmatpush1.msra.mxu0 0.0
  %10570 = vmatprep.subr.mxu0 0.0
  %10571 = vmatpush1.msra.mxu0 0.0
  %10572 = vmatprep.subr.mxu0 0.0
  %10573 = vmatpush1.msra.mxu0 0.0
  %10574 = vmatprep.mubr.f32.mxu0 0.0
  %10575 = vmatmul.mubr.f32.gmra.mrb[0].mxu0 %v10505
  %v10576 = vpop.f32.mrb[0].mxu0
  %v10577 = vadd.f32 0.0, %v10576
  %v10578 = vpop.f32.mrb[0].mxu0
  %10579 = vmatprep.mubr.f32.mxu0 0.0
  %10580 = vmatmul.mubr.f32.gmra.mrb[0].mxu0 %v10508
  %v10581 = vpop.f32.mrb[0].mxu0
  %v10582 = vadd.f32 0.0, %v10581
  %v10583 = vpop.f32.mrb[0].mxu0
  %10584 = vdwg.mxu0
  %10585 = vrot.lane.b32.xlu0 %v3722, 80
  %v10586 = vpop.permute.xlu0 %10585
  %10587 = vrot.lane.b32.xlu0 %v3728, 80
  %v10588 = vpop.permute.xlu0 %10587
  %v10592 = vsel %vm2464, %v10059, 0
  %v10595 = vsel %vm2464, %v10060, 0
  %10597 = vmatprep.subr.mxu0 0.0
  %10598 = vmatpush1.msra.mxu0 %v10586
  %10599 = vmatprep.subr.mxu0 0.0
  %10600 = vmatpush1.msra.mxu0 %v10588
  %10601 = vmatprep.subr.mxu0 0.0
  %10602 = vmatpush1.msra.mxu0 0.0
  %10603 = vmatprep.subr.mxu0 0.0
  %10604 = vmatpush1.msra.mxu0 0.0
  %10605 = vmatprep.subr.mxu0 0.0
  %10606 = vmatpush1.msra.mxu0 0.0
  %10607 = vmatprep.subr.mxu0 0.0
  %10608 = vmatpush1.msra.mxu0 0.0
  %10609 = vmatprep.subr.mxu0 0.0
  %10610 = vmatpush1.msra.mxu0 0.0
  %10611 = vmatprep.subr.mxu0 0.0
  %10612 = vmatpush1.msra.mxu0 0.0
  %10613 = vmatprep.subr.mxu0 0.0
  %10614 = vmatpush1.msra.mxu0 0.0
  %10615 = vmatprep.subr.mxu0 0.0
  %10616 = vmatpush1.msra.mxu0 0.0
  %10617 = vmatprep.subr.mxu0 0.0
  %10618 = vmatpush1.msra.mxu0 0.0
  %10619 = vmatprep.subr.mxu0 0.0
  %10620 = vmatpush1.msra.mxu0 0.0
  %10621 = vmatprep.subr.mxu0 0.0
  %10622 = vmatpush1.msra.mxu0 0.0
  %10623 = vmatprep.subr.mxu0 0.0
  %10624 = vmatpush1.msra.mxu0 0.0
  %10625 = vmatprep.subr.mxu0 0.0
  %10626 = vmatpush1.msra.mxu0 0.0
  %10627 = vmatprep.subr.mxu0 0.0
  %10628 = vmatpush1.msra.mxu0 0.0
  %10629 = vmatprep.subr.mxu0 0.0
  %10630 = vmatpush1.msra.mxu0 0.0
  %10631 = vmatprep.subr.mxu0 0.0
  %10632 = vmatpush1.msra.mxu0 0.0
  %10633 = vmatprep.subr.mxu0 0.0
  %10634 = vmatpush1.msra.mxu0 0.0
  %10635 = vmatprep.subr.mxu0 0.0
  %10636 = vmatpush1.msra.mxu0 0.0
  %10637 = vmatprep.subr.mxu0 0.0
  %10638 = vmatpush1.msra.mxu0 0.0
  %10639 = vmatprep.subr.mxu0 0.0
  %10640 = vmatpush1.msra.mxu0 0.0
  %10641 = vmatprep.subr.mxu0 0.0
  %10642 = vmatpush1.msra.mxu0 0.0
  %10643 = vmatprep.subr.mxu0 0.0
  %10644 = vmatpush1.msra.mxu0 0.0
  %10645 = vmatprep.subr.mxu0 0.0
  %10646 = vmatpush1.msra.mxu0 0.0
  %10647 = vmatprep.subr.mxu0 0.0
  %10648 = vmatpush1.msra.mxu0 0.0
  %10649 = vmatprep.subr.mxu0 0.0
  %10650 = vmatpush1.msra.mxu0 0.0
  %10651 = vmatprep.subr.mxu0 0.0
  %10652 = vmatpush1.msra.mxu0 0.0
  %10653 = vmatprep.subr.mxu0 0.0
  %10654 = vmatpush1.msra.mxu0 0.0
  %10655 = vmatprep.subr.mxu0 0.0
  %10656 = vmatpush1.msra.mxu0 0.0
  %10657 = vmatprep.subr.mxu0 0.0
  %10658 = vmatpush1.msra.mxu0 0.0
  %10659 = vmatprep.subr.mxu0 0.0
  %10660 = vmatpush1.msra.mxu0 0.0
  %10661 = vmatprep.mubr.f32.mxu0 0.0
  %10662 = vmatmul.mubr.f32.gmra.mrb[0].mxu0 %v10592
  %v10663 = vpop.f32.mrb[0].mxu0
  %v10664 = vadd.f32 0.0, %v10663
  %v10665 = vpop.f32.mrb[0].mxu0
  %10666 = vmatprep.mubr.f32.mxu0 0.0
  %10667 = vmatmul.mubr.f32.gmra.mrb[0].mxu0 %v10595
  %v10668 = vpop.f32.mrb[0].mxu0
  %v10669 = vadd.f32 0.0, %v10668
  %v10670 = vpop.f32.mrb[0].mxu0
  %10671 = vdwg.mxu0
  %10672 = vrot.lane.b32.xlu0 %v3734, 80
  %v10673 = vpop.permute.xlu0 %10672
  %10674 = vrot.lane.b32.xlu0 %v3740, 80
  %v10675 = vpop.permute.xlu0 %10674
  %v10679 = vsel %vm2464, %v10061, 0
  %v10682 = vsel %vm2464, %v10062, 0
  %10684 = vmatprep.subr.mxu0 0.0
  %10685 = vmatpush1.msra.mxu0 %v10673
  %10686 = vmatprep.subr.mxu0 0.0
  %10687 = vmatpush1.msra.mxu0 %v10675
  %10688 = vmatprep.subr.mxu0 0.0
  %10689 = vmatpush1.msra.mxu0 0.0
  %10690 = vmatprep.subr.mxu0 0.0
  %10691 = vmatpush1.msra.mxu0 0.0
  %10692 = vmatprep.subr.mxu0 0.0
  %10693 = vmatpush1.msra.mxu0 0.0
  %10694 = vmatprep.subr.mxu0 0.0
  %10695 = vmatpush1.msra.mxu0 0.0
  %10696 = vmatprep.subr.mxu0 0.0
  %10697 = vmatpush1.msra.mxu0 0.0
  %10698 = vmatprep.subr.mxu0 0.0
  %10699 = vmatpush1.msra.mxu0 0.0
  %10700 = vmatprep.subr.mxu0 0.0
  %10701 = vmatpush1.msra.mxu0 0.0
  %10702 = vmatprep.subr.mxu0 0.0
  %10703 = vmatpush1.msra.mxu0 0.0
  %10704 = vmatprep.subr.mxu0 0.0
  %10705 = vmatpush1.msra.mxu0 0.0
  %10706 = vmatprep.subr.mxu0 0.0
  %10707 = vmatpush1.msra.mxu0 0.0
  %10708 = vmatprep.subr.mxu0 0.0
  %10709 = vmatpush1.msra.mxu0 0.0
  %10710 = vmatprep.subr.mxu0 0.0
  %10711 = vmatpush1.msra.mxu0 0.0
  %10712 = vmatprep.subr.mxu0 0.0
  %10713 = vmatpush1.msra.mxu0 0.0
  %10714 = vmatprep.subr.mxu0 0.0
  %10715 = vmatpush1.msra.mxu0 0.0
  %10716 = vmatprep.subr.mxu0 0.0
  %10717 = vmatpush1.msra.mxu0 0.0
  %10718 = vmatprep.subr.mxu0 0.0
  %10719 = vmatpush1.msra.mxu0 0.0
  %10720 = vmatprep.subr.mxu0 0.0
  %10721 = vmatpush1.msra.mxu0 0.0
  %10722 = vmatprep.subr.mxu0 0.0
  %10723 = vmatpush1.msra.mxu0 0.0
  %10724 = vmatprep.subr.mxu0 0.0
  %10725 = vmatpush1.msra.mxu0 0.0
  %10726 = vmatprep.subr.mxu0 0.0
  %10727 = vmatpush1.msra.mxu0 0.0
  %10728 = vmatprep.subr.mxu0 0.0
  %10729 = vmatpush1.msra.mxu0 0.0
  %10730 = vmatprep.subr.mxu0 0.0
  %10731 = vmatpush1.msra.mxu0 0.0
  %10732 = vmatprep.subr.mxu0 0.0
  %10733 = vmatpush1.msra.mxu0 0.0
  %10734 = vmatprep.subr.mxu0 0.0
  %10735 = vmatpush1.msra.mxu0 0.0
  %10736 = vmatprep.subr.mxu0 0.0
  %10737 = vmatpush1.msra.mxu0 0.0
  %10738 = vmatprep.subr.mxu0 0.0
  %10739 = vmatpush1.msra.mxu0 0.0
  %10740 = vmatprep.subr.mxu0 0.0
  %10741 = vmatpush1.msra.mxu0 0.0
  %10742 = vmatprep.subr.mxu0 0.0
  %10743 = vmatpush1.msra.mxu0 0.0
  %10744 = vmatprep.subr.mxu0 0.0
  %10745 = vmatpush1.msra.mxu0 0.0
  %10746 = vmatprep.subr.mxu0 0.0
  %10747 = vmatpush1.msra.mxu0 0.0
  %10748 = vmatprep.mubr.f32.mxu0 0.0
  %10749 = vmatmul.mubr.f32.gmra.mrb[0].mxu0 %v10679
  %v10750 = vpop.f32.mrb[0].mxu0
  %v10751 = vadd.f32 0.0, %v10750
  %v10752 = vpop.f32.mrb[0].mxu0
  %10753 = vmatprep.mubr.f32.mxu0 0.0
  %10754 = vmatmul.mubr.f32.gmra.mrb[0].mxu0 %v10682
  %v10755 = vpop.f32.mrb[0].mxu0
  %v10756 = vadd.f32 0.0, %v10755
  %v10757 = vpop.f32.mrb[0].mxu0
  %10758 = vdwg.mxu0
  %v10759 = vld [vmem:[%s9 + $0x30] sm:$0xff]
  %v10760 = vld [vmem:[%s9 + $0x38] sm:$0xff]
  %v10762 = vsel %vm2464, %v10142, 0
  %v10765 = vsel %vm2464, %v10147, 0
  %v10768 = vsel %vm2464, %v10229, 0
  %v10771 = vsel %vm2464, %v10234, 0
  %v10774 = vsel %vm2464, %v10316, 0
  %v10777 = vsel %vm2464, %v10321, 0
  %v10780 = vsel %vm2464, %v10403, 0
  %v10783 = vsel %vm2464, %v10408, 0
  %v10786 = vsel %vm2464, %v10490, 0
  %v10789 = vsel %vm2464, %v10495, 0
  %v10792 = vsel %vm2464, %v10577, 0
  %v10795 = vsel %vm2464, %v10582, 0
  %v10798 = vsel %vm2464, %v10664, 0
  %v10801 = vsel %vm2464, %v10669, 0
  %v10804 = vsel %vm2464, %v10751, 0
  %v10807 = vsel %vm2464, %v10756, 0
  %10809 = vmatprep.subr.mxu0 0.0
  %10810 = vmatpush1.msra.mxu0 %v10759
  %10811 = vmatprep.subr.mxu0 0.0
  %10812 = vmatpush1.msra.mxu0 %v10760
  %10813 = vmatprep.subr.mxu0 0.0
  %10814 = vmatpush1.msra.mxu0 0.0
  %10815 = vmatprep.subr.mxu0 0.0
  %10816 = vmatpush1.msra.mxu0 0.0
  %10817 = vmatprep.subr.mxu0 0.0
  %10818 = vmatpush1.msra.mxu0 0.0
  %10819 = vmatprep.subr.mxu0 0.0
  %10820 = vmatpush1.msra.mxu0 0.0
  %10821 = vmatprep.subr.mxu0 0.0
  %10822 = vmatpush1.msra.mxu0 0.0
  %10823 = vmatprep.subr.mxu0 0.0
  %10824 = vmatpush1.msra.mxu0 0.0
  %10825 = vmatprep.subr.mxu0 0.0
  %10826 = vmatpush1.msra.mxu0 0.0
  %10827 = vmatprep.subr.mxu0 0.0
  %10828 = vmatpush1.msra.mxu0 0.0
  %10829 = vmatprep.subr.mxu0 0.0
  %10830 = vmatpush1.msra.mxu0 0.0
  %10831 = vmatprep.subr.mxu0 0.0
  %10832 = vmatpush1.msra.mxu0 0.0
  %10833 = vmatprep.subr.mxu0 0.0
  %10834 = vmatpush1.msra.mxu0 0.0
  %10835 = vmatprep.subr.mxu0 0.0
  %10836 = vmatpush1.msra.mxu0 0.0
  %10837 = vmatprep.subr.mxu0 0.0
  %10838 = vmatpush1.msra.mxu0 0.0
  %10839 = vmatprep.subr.mxu0 0.0
  %10840 = vmatpush1.msra.mxu0 0.0
  %10841 = vmatprep.subr.mxu0 0.0
  %10842 = vmatpush1.msra.mxu0 0.0
  %10843 = vmatprep.subr.mxu0 0.0
  %10844 = vmatpush1.msra.mxu0 0.0
  %10845 = vmatprep.subr.mxu0 0.0
  %10846 = vmatpush1.msra.mxu0 0.0
  %10847 = vmatprep.subr.mxu0 0.0
  %10848 = vmatpush1.msra.mxu0 0.0
  %10849 = vmatprep.subr.mxu0 0.0
  %10850 = vmatpush1.msra.mxu0 0.0
  %10851 = vmatprep.subr.mxu0 0.0
  %10852 = vmatpush1.msra.mxu0 0.0
  %10853 = vmatprep.subr.mxu0 0.0
  %10854 = vmatpush1.msra.mxu0 0.0
  %10855 = vmatprep.subr.mxu0 0.0
  %10856 = vmatpush1.msra.mxu0 0.0
  %10857 = vmatprep.subr.mxu0 0.0
  %10858 = vmatpush1.msra.mxu0 0.0
  %10859 = vmatprep.subr.mxu0 0.0
  %10860 = vmatpush1.msra.mxu0 0.0
  %10861 = vmatprep.subr.mxu0 0.0
  %10862 = vmatpush1.msra.mxu0 0.0
  %10863 = vmatprep.subr.mxu0 0.0
  %10864 = vmatpush1.msra.mxu0 0.0
  %10865 = vmatprep.subr.mxu0 0.0
  %10866 = vmatpush1.msra.mxu0 0.0
  %10867 = vmatprep.subr.mxu0 0.0
  %10868 = vmatpush1.msra.mxu0 0.0
  %10869 = vmatprep.subr.mxu0 0.0
  %10870 = vmatpush1.msra.mxu0 0.0
  %10871 = vmatprep.subr.mxu0 0.0
  %10872 = vmatpush1.msra.mxu0 0.0
  %10873 = vmatprep.mubr.f32.mxu0 0.0
  %10874 = vmatmul.mubr.f32.gmra.mrb[0].mxu0 %v10762
  %v10875 = vpop.f32.mrb[0].mxu0
  %v10876 = vadd.f32 0.0, %v10875
  %v10877 = vpop.f32.mrb[0].mxu0
  %10878 = vmatprep.mubr.f32.mxu0 0.0
  %10879 = vmatmul.mubr.f32.gmra.mrb[0].mxu0 %v10765
  %v10880 = vpop.f32.mrb[0].mxu0
  %v10881 = vadd.f32 0.0, %v10880
  %v10882 = vpop.f32.mrb[0].mxu0
  %10883 = vmatprep.mubr.f32.mxu0 0.0
  %10884 = vmatmul.mubr.f32.gmra.mrb[0].mxu0 %v10768
  %v10885 = vpop.f32.mrb[0].mxu0
  %v10886 = vadd.f32 0.0, %v10885
  %v10887 = vpop.f32.mrb[0].mxu0
  %10888 = vmatprep.mubr.f32.mxu0 0.0
  %10889 = vmatmul.mubr.f32.gmra.mrb[0].mxu0 %v10771
  %v10890 = vpop.f32.mrb[0].mxu0
  %v10891 = vadd.f32 0.0, %v10890
  %v10892 = vpop.f32.mrb[0].mxu0
  %10893 = vmatprep.mubr.f32.mxu0 0.0
  %10894 = vmatmul.mubr.f32.gmra.mrb[0].mxu0 %v10774
  %v10895 = vpop.f32.mrb[0].mxu0
  %v10896 = vadd.f32 0.0, %v10895
  %v10897 = vpop.f32.mrb[0].mxu0
  %10898 = vmatprep.mubr.f32.mxu0 0.0
  %10899 = vmatmul.mubr.f32.gmra.mrb[0].mxu0 %v10777
  %v10900 = vpop.f32.mrb[0].mxu0
  %v10901 = vadd.f32 0.0, %v10900
  %v10902 = vpop.f32.mrb[0].mxu0
  %10903 = vmatprep.mubr.f32.mxu0 0.0
  %10904 = vmatmul.mubr.f32.gmra.mrb[0].mxu0 %v10780
  %v10905 = vpop.f32.mrb[0].mxu0
  %v10906 = vadd.f32 0.0, %v10905
  %v10907 = vpop.f32.mrb[0].mxu0
  %10908 = vmatprep.mubr.f32.mxu0 0.0
  %10909 = vmatmul.mubr.f32.gmra.mrb[0].mxu0 %v10783
  %v10910 = vpop.f32.mrb[0].mxu0
  %v10911 = vadd.f32 0.0, %v10910
  %v10912 = vpop.f32.mrb[0].mxu0
  %10913 = vmatprep.mubr.f32.mxu0 0.0
  %10914 = vmatmul.mubr.f32.gmra.mrb[0].mxu0 %v10786
  %v10915 = vpop.f32.mrb[0].mxu0
  %v10916 = vadd.f32 0.0, %v10915
  %v10917 = vpop.f32.mrb[0].mxu0
  %10918 = vmatprep.mubr.f32.mxu0 0.0
  %10919 = vmatmul.mubr.f32.gmra.mrb[0].mxu0 %v10789
  %v10920 = vpop.f32.mrb[0].mxu0
  %v10921 = vadd.f32 0.0, %v10920
  %v10922 = vpop.f32.mrb[0].mxu0
  %10923 = vmatprep.mubr.f32.mxu0 0.0
  %10924 = vmatmul.mubr.f32.gmra.mrb[0].mxu0 %v10792
  %v10925 = vpop.f32.mrb[0].mxu0
  %v10926 = vadd.f32 0.0, %v10925
  %v10927 = vpop.f32.mrb[0].mxu0
  %10928 = vmatprep.mubr.f32.mxu0 0.0
  %10929 = vmatmul.mubr.f32.gmra.mrb[0].mxu0 %v10795
  %v10930 = vpop.f32.mrb[0].mxu0
  %v10931 = vadd.f32 0.0, %v10930
  %v10932 = vpop.f32.mrb[0].mxu0
  %10933 = vmatprep.mubr.f32.mxu0 0.0
  %10934 = vmatmul.mubr.f32.gmra.mrb[0].mxu0 %v10798
  %v10935 = vpop.f32.mrb[0].mxu0
  %v10936 = vadd.f32 0.0, %v10935
  %v10937 = vpop.f32.mrb[0].mxu0
  %10938 = vmatprep.mubr.f32.mxu0 0.0
  %10939 = vmatmul.mubr.f32.gmra.mrb[0].mxu0 %v10801
  %v10940 = vpop.f32.mrb[0].mxu0
  %v10941 = vadd.f32 0.0, %v10940
  %v10942 = vpop.f32.mrb[0].mxu0
  %10943 = vmatprep.mubr.f32.mxu0 0.0
  %10944 = vmatmul.mubr.f32.gmra.mrb[0].mxu0 %v10804
  %v10945 = vpop.f32.mrb[0].mxu0
  %v10946 = vadd.f32 0.0, %v10945
  %v10947 = vpop.f32.mrb[0].mxu0
  %10948 = vmatprep.mubr.f32.mxu0 0.0
  %10949 = vmatmul.mubr.f32.gmra.mrb[0].mxu0 %v10807
  %v10950 = vpop.f32.mrb[0].mxu0
  %v10951 = vadd.f32 0.0, %v10950
  %v10952 = vpop.f32.mrb[0].mxu0
  %10953 = vdwg.mxu0
  %v10954 = vadd.f32 %v9127, %v10876
  %v10955 = vadd.f32 %v9128, %v10881
  %v10956 = vadd.f32 %v9129, %v10886
  %v10957 = vadd.f32 %v9130, %v10891
  %v10958 = vadd.f32 %v9131, %v10896
  %v10959 = vadd.f32 %v9132, %v10901
  %v10960 = vadd.f32 %v9133, %v10906
  %v10961 = vadd.f32 %v9134, %v10911
  %v10962 = vadd.f32 %v9135, %v10916
  %v10963 = vadd.f32 %v9136, %v10921
  %v10964 = vadd.f32 %v9137, %v10926
  %v10965 = vadd.f32 %v9138, %v10931
  %v10966 = vadd.f32 %v9139, %v10936
  %v10967 = vadd.f32 %v9140, %v10941
  %v10968 = vadd.f32 %v9141, %v10946
  %v10969 = vadd.f32 %v9142, %v10951
  %v10970 = vadd.f32 %v3237, %v10954
  %v10971 = vadd.f32 %v3238, %v10955
  %v10972 = vadd.f32 %v3239, %v10956
  %v10973 = vadd.f32 %v3240, %v10957
  %v10974 = vadd.f32 %v3241, %v10958
  %v10975 = vadd.f32 %v3242, %v10959
  %v10976 = vadd.f32 %v3243, %v10960
  %v10977 = vadd.f32 %v3244, %v10961
  %v10978 = vadd.f32 %v3245, %v10962
  %v10979 = vadd.f32 %v3246, %v10963
  %v10980 = vadd.f32 %v3247, %v10964
  %v10981 = vadd.f32 %v3248, %v10965
  %v10982 = vadd.f32 %v3249, %v10966
  %v10983 = vadd.f32 %v3250, %v10967
  %v10984 = vadd.f32 %v3251, %v10968
  %v10985 = vadd.f32 %v3252, %v10969
  %v10986 = vld [vmem:[%s6 + $0x3] sm:$0x1]
  %v10987 = vlaneseq
  %v10988 = vshrl.u32 %v10987, 7
  %v10989 = vsub.s32 0, %v10988
  %v10990 = vrot.slane %v10986, %v10989
  %v10991 = vadd.f32 %v10970, %v10990
  %v10992 = vadd.f32 %v10971, %v10990
  %v10993 = vadd.f32 %v10972, %v10990
  %v10994 = vadd.f32 %v10973, %v10990
  %v10995 = vadd.f32 %v10974, %v10990
  %v10996 = vadd.f32 %v10975, %v10990
  %v10997 = vadd.f32 %v10976, %v10990
  %v10998 = vadd.f32 %v10977, %v10990
  %v10999 = vadd.f32 %v10978, %v10990
  %v11000 = vadd.f32 %v10979, %v10990
  %v11001 = vadd.f32 %v10980, %v10990
  %v11002 = vadd.f32 %v10981, %v10990
  %v11003 = vadd.f32 %v10982, %v10990
  %v11004 = vadd.f32 %v10983, %v10990
  %v11005 = vadd.f32 %v10984, %v10990
  %v11006 = vadd.f32 %v10985, %v10990
  %v11007 = vld [vmem:[%s6 + $0x4] sm:$0x1]
  %v11008 = vld [vmem:[%s6 + $0x5] sm:$0x1]
  %v11009 = vsel %vm3255, %v10991, 0.0
  %11010 = vadd.xlane.f32.xlu0 %v11009
  %v11011 = vpop.xlane.xlu0 %11010
  %v11012 = vsel %vm3255, %v10992, 0.0
  %11013 = vadd.xlane.f32.xlu0 %v11012
  %v11014 = vpop.xlane.xlu0 %11013
  %v11015 = vsel %vm3255, %v10993, 0.0
  %11016 = vadd.xlane.f32.xlu0 %v11015
  %v11017 = vpop.xlane.xlu0 %11016
  %v11018 = vsel %vm3255, %v10994, 0.0
  %11019 = vadd.xlane.f32.xlu0 %v11018
  %v11020 = vpop.xlane.xlu0 %11019
  %v11021 = vsel %vm3255, %v10995, 0.0
  %11022 = vadd.xlane.f32.xlu0 %v11021
  %v11023 = vpop.xlane.xlu0 %11022
  %v11024 = vsel %vm3255, %v10996, 0.0
  %11025 = vadd.xlane.f32.xlu0 %v11024
  %v11026 = vpop.xlane.xlu0 %11025
  %v11027 = vsel %vm3255, %v10997, 0.0
  %11028 = vadd.xlane.f32.xlu0 %v11027
  %v11029 = vpop.xlane.xlu0 %11028
  %v11030 = vsel %vm3255, %v10998, 0.0
  %11031 = vadd.xlane.f32.xlu0 %v11030
  %v11032 = vpop.xlane.xlu0 %11031
  %v11033 = vsel %vm3255, %v10999, 0.0
  %11034 = vadd.xlane.f32.xlu0 %v11033
  %v11035 = vpop.xlane.xlu0 %11034
  %v11036 = vsel %vm3255, %v11000, 0.0
  %11037 = vadd.xlane.f32.xlu0 %v11036
  %v11038 = vpop.xlane.xlu0 %11037
  %v11039 = vsel %vm3255, %v11001, 0.0
  %11040 = vadd.xlane.f32.xlu0 %v11039
  %v11041 = vpop.xlane.xlu0 %11040
  %v11042 = vsel %vm3255, %v11002, 0.0
  %11043 = vadd.xlane.f32.xlu0 %v11042
  %v11044 = vpop.xlane.xlu0 %11043
  %v11045 = vsel %vm3255, %v11003, 0.0
  %11046 = vadd.xlane.f32.xlu0 %v11045
  %v11047 = vpop.xlane.xlu0 %11046
  %v11048 = vsel %vm3255, %v11004, 0.0
  %11049 = vadd.xlane.f32.xlu0 %v11048
  %v11050 = vpop.xlane.xlu0 %11049
  %v11051 = vsel %vm3255, %v11005, 0.0
  %11052 = vadd.xlane.f32.xlu0 %v11051
  %v11053 = vpop.xlane.xlu0 %11052
  %v11054 = vsel %vm3255, %v11006, 0.0
  %11055 = vadd.xlane.f32.xlu0 %v11054
  %v11056 = vpop.xlane.xlu0 %11055
  %v11057 = vmul.f32 %v11011, %v3304
  %v11058 = vmul.f32 %v11014, %v3304
  %v11059 = vmul.f32 %v11017, %v3304
  %v11060 = vmul.f32 %v11020, %v3304
  %v11061 = vmul.f32 %v11023, %v3304
  %v11062 = vmul.f32 %v11026, %v3304
  %v11063 = vmul.f32 %v11029, %v3304
  %v11064 = vmul.f32 %v11032, %v3304
  %v11065 = vmul.f32 %v11035, %v3304
  %v11066 = vmul.f32 %v11038, %v3304
  %v11067 = vmul.f32 %v11041, %v3304
  %v11068 = vmul.f32 %v11044, %v3304
  %v11069 = vmul.f32 %v11047, %v3304
  %v11070 = vmul.f32 %v11050, %v3304
  %v11071 = vmul.f32 %v11053, %v3304
  %v11072 = vmul.f32 %v11056, %v3304
  %v11073 = vsub.f32 %v10991, %v11057
  %v11074 = vsub.f32 %v10992, %v11058
  %v11075 = vsub.f32 %v10993, %v11059
  %v11076 = vsub.f32 %v10994, %v11060
  %v11077 = vsub.f32 %v10995, %v11061
  %v11078 = vsub.f32 %v10996, %v11062
  %v11079 = vsub.f32 %v10997, %v11063
  %v11080 = vsub.f32 %v10998, %v11064
  %v11081 = vsub.f32 %v10999, %v11065
  %v11082 = vsub.f32 %v11000, %v11066
  %v11083 = vsub.f32 %v11001, %v11067
  %v11084 = vsub.f32 %v11002, %v11068
  %v11085 = vsub.f32 %v11003, %v11069
  %v11086 = vsub.f32 %v11004, %v11070
  %v11087 = vsub.f32 %v11005, %v11071
  %v11088 = vsub.f32 %v11006, %v11072
  %v11089 = vmul.f32 %v11073, %v11073
  %v11090 = vmul.f32 %v11074, %v11074
  %v11091 = vmul.f32 %v11075, %v11075
  %v11092 = vmul.f32 %v11076, %v11076
  %v11093 = vmul.f32 %v11077, %v11077
  %v11094 = vmul.f32 %v11078, %v11078
  %v11095 = vmul.f32 %v11079, %v11079
  %v11096 = vmul.f32 %v11080, %v11080
  %v11097 = vmul.f32 %v11081, %v11081
  %v11098 = vmul.f32 %v11082, %v11082
  %v11099 = vmul.f32 %v11083, %v11083
  %v11100 = vmul.f32 %v11084, %v11084
  %v11101 = vmul.f32 %v11085, %v11085
  %v11102 = vmul.f32 %v11086, %v11086
  %v11103 = vmul.f32 %v11087, %v11087
  %v11104 = vmul.f32 %v11088, %v11088
  %v11105 = vsel %vm3255, %v11089, 0.0
  %11106 = vadd.xlane.f32.xlu0 %v11105
  %v11107 = vpop.xlane.xlu0 %11106
  %v11108 = vsel %vm3255, %v11090, 0.0
  %11109 = vadd.xlane.f32.xlu0 %v11108
  %v11110 = vpop.xlane.xlu0 %11109
  %v11111 = vsel %vm3255, %v11091, 0.0
  %11112 = vadd.xlane.f32.xlu0 %v11111
  %v11113 = vpop.xlane.xlu0 %11112
  %v11114 = vsel %vm3255, %v11092, 0.0
  %11115 = vadd.xlane.f32.xlu0 %v11114
  %v11116 = vpop.xlane.xlu0 %11115
  %v11117 = vsel %vm3255, %v11093, 0.0
  %11118 = vadd.xlane.f32.xlu0 %v11117
  %v11119 = vpop.xlane.xlu0 %11118
  %v11120 = vsel %vm3255, %v11094, 0.0
  %11121 = vadd.xlane.f32.xlu0 %v11120
  %v11122 = vpop.xlane.xlu0 %11121
  %v11123 = vsel %vm3255, %v11095, 0.0
  %11124 = vadd.xlane.f32.xlu0 %v11123
  %v11125 = vpop.xlane.xlu0 %11124
  %v11126 = vsel %vm3255, %v11096, 0.0
  %11127 = vadd.xlane.f32.xlu0 %v11126
  %v11128 = vpop.xlane.xlu0 %11127
  %v11129 = vsel %vm3255, %v11097, 0.0
  %11130 = vadd.xlane.f32.xlu0 %v11129
  %v11131 = vpop.xlane.xlu0 %11130
  %v11132 = vsel %vm3255, %v11098, 0.0
  %11133 = vadd.xlane.f32.xlu0 %v11132
  %v11134 = vpop.xlane.xlu0 %11133
  %v11135 = vsel %vm3255, %v11099, 0.0
  %11136 = vadd.xlane.f32.xlu0 %v11135
  %v11137 = vpop.xlane.xlu0 %11136
  %v11138 = vsel %vm3255, %v11100, 0.0
  %11139 = vadd.xlane.f32.xlu0 %v11138
  %v11140 = vpop.xlane.xlu0 %11139
  %v11141 = vsel %vm3255, %v11101, 0.0
  %11142 = vadd.xlane.f32.xlu0 %v11141
  %v11143 = vpop.xlane.xlu0 %11142
  %v11144 = vsel %vm3255, %v11102, 0.0
  %11145 = vadd.xlane.f32.xlu0 %v11144
  %v11146 = vpop.xlane.xlu0 %11145
  %v11147 = vsel %vm3255, %v11103, 0.0
  %11148 = vadd.xlane.f32.xlu0 %v11147
  %v11149 = vpop.xlane.xlu0 %11148
  %v11150 = vsel %vm3255, %v11104, 0.0
  %11151 = vadd.xlane.f32.xlu0 %v11150
  %v11152 = vpop.xlane.xlu0 %11151
  %v11153 = vmul.f32 %v11107, %v3304
  %v11154 = vmul.f32 %v11110, %v3304
  %v11155 = vmul.f32 %v11113, %v3304
  %v11156 = vmul.f32 %v11116, %v3304
  %v11157 = vmul.f32 %v11119, %v3304
  %v11158 = vmul.f32 %v11122, %v3304
  %v11159 = vmul.f32 %v11125, %v3304
  %v11160 = vmul.f32 %v11128, %v3304
  %v11161 = vmul.f32 %v11131, %v3304
  %v11162 = vmul.f32 %v11134, %v3304
  %v11163 = vmul.f32 %v11137, %v3304
  %v11164 = vmul.f32 %v11140, %v3304
  %v11165 = vmul.f32 %v11143, %v3304
  %v11166 = vmul.f32 %v11146, %v3304
  %v11167 = vmul.f32 %v11149, %v3304
  %v11168 = vmul.f32 %v11152, %v3304
  %v11169 = vadd.f32 %v11153, 1e-05
  %v11170 = vadd.f32 %v11154, 1e-05
  %v11171 = vadd.f32 %v11155, 1e-05
  %v11172 = vadd.f32 %v11156, 1e-05
  %v11173 = vadd.f32 %v11157, 1e-05
  %v11174 = vadd.f32 %v11158, 1e-05
  %v11175 = vadd.f32 %v11159, 1e-05
  %v11176 = vadd.f32 %v11160, 1e-05
  %v11177 = vadd.f32 %v11161, 1e-05
  %v11178 = vadd.f32 %v11162, 1e-05
  %v11179 = vadd.f32 %v11163, 1e-05
  %v11180 = vadd.f32 %v11164, 1e-05
  %v11181 = vadd.f32 %v11165, 1e-05
  %v11182 = vadd.f32 %v11166, 1e-05
  %v11183 = vadd.f32 %v11167, 1e-05
  %v11184 = vadd.f32 %v11168, 1e-05
  %v11185 = vrsqrt.pop %v11169
  %v11186 = vrsqrt.pop %v11170
  %v11187 = vrsqrt.pop %v11171
  %v11188 = vrsqrt.pop %v11172
  %v11189 = vrsqrt.pop %v11173
  %v11190 = vrsqrt.pop %v11174
  %v11191 = vrsqrt.pop %v11175
  %v11192 = vrsqrt.pop %v11176
  %v11193 = vrsqrt.pop %v11177
  %v11194 = vrsqrt.pop %v11178
  %v11195 = vrsqrt.pop %v11179
  %v11196 = vrsqrt.pop %v11180
  %v11197 = vrsqrt.pop %v11181
  %v11198 = vrsqrt.pop %v11182
  %v11199 = vrsqrt.pop %v11183
  %v11200 = vrsqrt.pop %v11184
  %v11201 = vmul.f32 %v11073, %v11185
  %v11202 = vmul.f32 %v11074, %v11186
  %v11203 = vmul.f32 %v11075, %v11187
  %v11204 = vmul.f32 %v11076, %v11188
  %v11205 = vmul.f32 %v11077, %v11189
  %v11206 = vmul.f32 %v11078, %v11190
  %v11207 = vmul.f32 %v11079, %v11191
  %v11208 = vmul.f32 %v11080, %v11192
  %v11209 = vmul.f32 %v11081, %v11193
  %v11210 = vmul.f32 %v11082, %v11194
  %v11211 = vmul.f32 %v11083, %v11195
  %v11212 = vmul.f32 %v11084, %v11196
  %v11213 = vmul.f32 %v11085, %v11197
  %v11214 = vmul.f32 %v11086, %v11198
  %v11215 = vmul.f32 %v11087, %v11199
  %v11216 = vmul.f32 %v11088, %v11200
  %v11217 = vlaneseq
  %v11218 = vshrl.u32 %v11217, 7
  %v11219 = vsub.s32 0, %v11218
  %v11220 = vrot.slane %v11007, %v11219
  %v11221 = vmul.f32 %v11201, %v11220
  %v11222 = vmul.f32 %v11202, %v11220
  %v11223 = vmul.f32 %v11203, %v11220
  %v11224 = vmul.f32 %v11204, %v11220
  %v11225 = vmul.f32 %v11205, %v11220
  %v11226 = vmul.f32 %v11206, %v11220
  %v11227 = vmul.f32 %v11207, %v11220
  %v11228 = vmul.f32 %v11208, %v11220
  %v11229 = vmul.f32 %v11209, %v11220
  %v11230 = vmul.f32 %v11210, %v11220
  %v11231 = vmul.f32 %v11211, %v11220
  %v11232 = vmul.f32 %v11212, %v11220
  %v11233 = vmul.f32 %v11213, %v11220
  %v11234 = vmul.f32 %v11214, %v11220
  %v11235 = vmul.f32 %v11215, %v11220
  %v11236 = vmul.f32 %v11216, %v11220
  %v11237 = vlaneseq
  %v11238 = vshrl.u32 %v11237, 7
  %v11239 = vsub.s32 0, %v11238
  %v11240 = vrot.slane %v11008, %v11239
  %v11241 = vadd.f32 %v11221, %v11240
  %v11242 = vadd.f32 %v11222, %v11240
  %v11243 = vadd.f32 %v11223, %v11240
  %v11244 = vadd.f32 %v11224, %v11240
  %v11245 = vadd.f32 %v11225, %v11240
  %v11246 = vadd.f32 %v11226, %v11240
  %v11247 = vadd.f32 %v11227, %v11240
  %v11248 = vadd.f32 %v11228, %v11240
  %v11249 = vadd.f32 %v11229, %v11240
  %v11250 = vadd.f32 %v11230, %v11240
  %v11251 = vadd.f32 %v11231, %v11240
  %v11252 = vadd.f32 %v11232, %v11240
  %v11253 = vadd.f32 %v11233, %v11240
  %v11254 = vadd.f32 %v11234, %v11240
  %v11255 = vadd.f32 %v11235, %v11240
  %v11256 = vadd.f32 %v11236, %v11240
  %v11257 = vld [vmem:[%s10] sm:$0xff]
  %v11258 = vld [vmem:[%s10 + $0x8] sm:$0xff]
  %v11259 = vld [vmem:[%s10 + $0x10] sm:$0xff]
  %v11260 = vld [vmem:[%s10 + $0x18] sm:$0xff]
  %v11261 = vld [vmem:[%s10 + $0x20] sm:$0xff]
  %v11262 = vld [vmem:[%s10 + $0x28] sm:$0xff]
  %v11263 = vld [vmem:[%s10 + $0x30] sm:$0xff]
  %v11264 = vld [vmem:[%s10 + $0x38] sm:$0xff]
  %v11265 = vld [vmem:[%s11] sm:$0x1]
  %v11267 = vlaneseq
  %v11268 = vshrl.u32 %v11267, 7
  %v11269 = vsub.s32 0, %v11268
  %v11270 = vrot.slane %v11265, %v11269
  %v11273 = vsel %vm3255, %v11241, 0
  %v11276 = vsel %vm3255, %v11242, 0
  %v11279 = vsel %vm3255, %v11243, 0
  %v11282 = vsel %vm3255, %v11244, 0
  %v11285 = vsel %vm3255, %v11245, 0
  %v11288 = vsel %vm3255, %v11246, 0
  %v11291 = vsel %vm3255, %v11247, 0
  %v11294 = vsel %vm3255, %v11248, 0
  %v11297 = vsel %vm3255, %v11249, 0
  %v11300 = vsel %vm3255, %v11250, 0
  %v11303 = vsel %vm3255, %v11251, 0
  %v11306 = vsel %vm3255, %v11252, 0
  %v11309 = vsel %vm3255, %v11253, 0
  %v11312 = vsel %vm3255, %v11254, 0
  %v11315 = vsel %vm3255, %v11255, 0
  %v11318 = vsel %vm3255, %v11256, 0
  %11320 = vmatprep.subr.mxu0 0.0
  %11321 = vmatpush1.msra.mxu0 %v11257
  %11322 = vmatprep.subr.mxu0 0.0
  %11323 = vmatpush1.msra.mxu0 %v11258
  %11324 = vmatprep.subr.mxu0 0.0
  %11325 = vmatpush1.msra.mxu0 %v11259
  %11326 = vmatprep.subr.mxu0 0.0
  %11327 = vmatpush1.msra.mxu0 %v11260
  %11328 = vmatprep.subr.mxu0 0.0
  %11329 = vmatpush1.msra.mxu0 %v11261
  %11330 = vmatprep.subr.mxu0 0.0
  %11331 = vmatpush1.msra.mxu0 %v11262
  %11332 = vmatprep.subr.mxu0 0.0
  %11333 = vmatpush1.msra.mxu0 %v11263
  %11334 = vmatprep.subr.mxu0 0.0
  %11335 = vmatpush1.msra.mxu0 %v11264
  %11336 = vmatprep.subr.mxu0 0.0
  %11337 = vmatpush1.msra.mxu0 0.0
  %11338 = vmatprep.subr.mxu0 0.0
  %11339 = vmatpush1.msra.mxu0 0.0
  %11340 = vmatprep.subr.mxu0 0.0
  %11341 = vmatpush1.msra.mxu0 0.0
  %11342 = vmatprep.subr.mxu0 0.0
  %11343 = vmatpush1.msra.mxu0 0.0
  %11344 = vmatprep.subr.mxu0 0.0
  %11345 = vmatpush1.msra.mxu0 0.0
  %11346 = vmatprep.subr.mxu0 0.0
  %11347 = vmatpush1.msra.mxu0 0.0
  %11348 = vmatprep.subr.mxu0 0.0
  %11349 = vmatpush1.msra.mxu0 0.0
  %11350 = vmatprep.subr.mxu0 0.0
  %11351 = vmatpush1.msra.mxu0 0.0
  %11352 = vmatprep.subr.mxu0 0.0
  %11353 = vmatpush1.msra.mxu0 0.0
  %11354 = vmatprep.subr.mxu0 0.0
  %11355 = vmatpush1.msra.mxu0 0.0
  %11356 = vmatprep.subr.mxu0 0.0
  %11357 = vmatpush1.msra.mxu0 0.0
  %11358 = vmatprep.subr.mxu0 0.0
  %11359 = vmatpush1.msra.mxu0 0.0
  %11360 = vmatprep.subr.mxu0 0.0
  %11361 = vmatpush1.msra.mxu0 0.0
  %11362 = vmatprep.subr.mxu0 0.0
  %11363 = vmatpush1.msra.mxu0 0.0
  %11364 = vmatprep.subr.mxu0 0.0
  %11365 = vmatpush1.msra.mxu0 0.0
  %11366 = vmatprep.subr.mxu0 0.0
  %11367 = vmatpush1.msra.mxu0 0.0
  %11368 = vmatprep.subr.mxu0 0.0
  %11369 = vmatpush1.msra.mxu0 0.0
  %11370 = vmatprep.subr.mxu0 0.0
  %11371 = vmatpush1.msra.mxu0 0.0
  %11372 = vmatprep.subr.mxu0 0.0
  %11373 = vmatpush1.msra.mxu0 0.0
  %11374 = vmatprep.subr.mxu0 0.0
  %11375 = vmatpush1.msra.mxu0 0.0
  %11376 = vmatprep.subr.mxu0 0.0
  %11377 = vmatpush1.msra.mxu0 0.0
  %11378 = vmatprep.subr.mxu0 0.0
  %11379 = vmatpush1.msra.mxu0 0.0
  %11380 = vmatprep.subr.mxu0 0.0
  %11381 = vmatpush1.msra.mxu0 0.0
  %11382 = vmatprep.subr.mxu0 0.0
  %11383 = vmatpush1.msra.mxu0 0.0
  %11384 = vmatprep.mubr.f32.mxu0 0.0
  %11385 = vmatmul.mubr.f32.gmra.mrb[0].mxu0 %v11273
  %v11386 = vpop.f32.mrb[0].mxu0
  %v11387 = vadd.f32 %v11270, %v11386
  %v11388 = vpop.f32.mrb[0].mxu0
  %11389 = vmatprep.mubr.f32.mxu0 0.0
  %11390 = vmatmul.mubr.f32.gmra.mrb[0].mxu0 %v11276
  %v11391 = vpop.f32.mrb[0].mxu0
  %v11392 = vadd.f32 %v11270, %v11391
  %v11393 = vpop.f32.mrb[0].mxu0
  %11394 = vmatprep.mubr.f32.mxu0 0.0
  %11395 = vmatmul.mubr.f32.gmra.mrb[0].mxu0 %v11279
  %v11396 = vpop.f32.mrb[0].mxu0
  %v11397 = vadd.f32 %v11270, %v11396
  %v11398 = vpop.f32.mrb[0].mxu0
  %11399 = vmatprep.mubr.f32.mxu0 0.0
  %11400 = vmatmul.mubr.f32.gmra.mrb[0].mxu0 %v11282
  %v11401 = vpop.f32.mrb[0].mxu0
  %v11402 = vadd.f32 %v11270, %v11401
  %v11403 = vpop.f32.mrb[0].mxu0
  %11404 = vmatprep.mubr.f32.mxu0 0.0
  %11405 = vmatmul.mubr.f32.gmra.mrb[0].mxu0 %v11285
  %v11406 = vpop.f32.mrb[0].mxu0
  %v11407 = vadd.f32 %v11270, %v11406
  %v11408 = vpop.f32.mrb[0].mxu0
  %11409 = vmatprep.mubr.f32.mxu0 0.0
  %11410 = vmatmul.mubr.f32.gmra.mrb[0].mxu0 %v11288
  %v11411 = vpop.f32.mrb[0].mxu0
  %v11412 = vadd.f32 %v11270, %v11411
  %v11413 = vpop.f32.mrb[0].mxu0
  %11414 = vmatprep.mubr.f32.mxu0 0.0
  %11415 = vmatmul.mubr.f32.gmra.mrb[0].mxu0 %v11291
  %v11416 = vpop.f32.mrb[0].mxu0
  %v11417 = vadd.f32 %v11270, %v11416
  %v11418 = vpop.f32.mrb[0].mxu0
  %11419 = vmatprep.mubr.f32.mxu0 0.0
  %11420 = vmatmul.mubr.f32.gmra.mrb[0].mxu0 %v11294
  %v11421 = vpop.f32.mrb[0].mxu0
  %v11422 = vadd.f32 %v11270, %v11421
  %v11423 = vpop.f32.mrb[0].mxu0
  %11424 = vmatprep.mubr.f32.mxu0 0.0
  %11425 = vmatmul.mubr.f32.gmra.mrb[0].mxu0 %v11297
  %v11426 = vpop.f32.mrb[0].mxu0
  %v11427 = vadd.f32 %v11270, %v11426
  %v11428 = vpop.f32.mrb[0].mxu0
  %11429 = vmatprep.mubr.f32.mxu0 0.0
  %11430 = vmatmul.mubr.f32.gmra.mrb[0].mxu0 %v11300
  %v11431 = vpop.f32.mrb[0].mxu0
  %v11432 = vadd.f32 %v11270, %v11431
  %v11433 = vpop.f32.mrb[0].mxu0
  %11434 = vmatprep.mubr.f32.mxu0 0.0
  %11435 = vmatmul.mubr.f32.gmra.mrb[0].mxu0 %v11303
  %v11436 = vpop.f32.mrb[0].mxu0
  %v11437 = vadd.f32 %v11270, %v11436
  %v11438 = vpop.f32.mrb[0].mxu0
  %11439 = vmatprep.mubr.f32.mxu0 0.0
  %11440 = vmatmul.mubr.f32.gmra.mrb[0].mxu0 %v11306
  %v11441 = vpop.f32.mrb[0].mxu0
  %v11442 = vadd.f32 %v11270, %v11441
  %v11443 = vpop.f32.mrb[0].mxu0
  %11444 = vmatprep.mubr.f32.mxu0 0.0
  %11445 = vmatmul.mubr.f32.gmra.mrb[0].mxu0 %v11309
  %v11446 = vpop.f32.mrb[0].mxu0
  %v11447 = vadd.f32 %v11270, %v11446
  %v11448 = vpop.f32.mrb[0].mxu0
  %11449 = vmatprep.mubr.f32.mxu0 0.0
  %11450 = vmatmul.mubr.f32.gmra.mrb[0].mxu0 %v11312
  %v11451 = vpop.f32.mrb[0].mxu0
  %v11452 = vadd.f32 %v11270, %v11451
  %v11453 = vpop.f32.mrb[0].mxu0
  %11454 = vmatprep.mubr.f32.mxu0 0.0
  %11455 = vmatmul.mubr.f32.gmra.mrb[0].mxu0 %v11315
  %v11456 = vpop.f32.mrb[0].mxu0
  %v11457 = vadd.f32 %v11270, %v11456
  %v11458 = vpop.f32.mrb[0].mxu0
  %11459 = vmatprep.mubr.f32.mxu0 0.0
  %11460 = vmatmul.mubr.f32.gmra.mrb[0].mxu0 %v11318
  %v11461 = vpop.f32.mrb[0].mxu0
  %v11462 = vadd.f32 %v11270, %v11461
  %v11463 = vpop.f32.mrb[0].mxu0
  %11464 = vdwg.mxu0
  %v11465 = vmul.f32 %v11387, %v11387
  %v11466 = vmul.f32 %v11392, %v11392
  %v11467 = vmul.f32 %v11397, %v11397
  %v11468 = vmul.f32 %v11402, %v11402
  %v11469 = vmul.f32 %v11407, %v11407
  %v11470 = vmul.f32 %v11412, %v11412
  %v11471 = vmul.f32 %v11417, %v11417
  %v11472 = vmul.f32 %v11422, %v11422
  %v11473 = vmul.f32 %v11427, %v11427
  %v11474 = vmul.f32 %v11432, %v11432
  %v11475 = vmul.f32 %v11437, %v11437
  %v11476 = vmul.f32 %v11442, %v11442
  %v11477 = vmul.f32 %v11447, %v11447
  %v11478 = vmul.f32 %v11452, %v11452
  %v11479 = vmul.f32 %v11457, %v11457
  %v11480 = vmul.f32 %v11462, %v11462
  %v11481 = vmul.f32 %v11387, %v11465
  %v11482 = vmul.f32 %v11392, %v11466
  %v11483 = vmul.f32 %v11397, %v11467
  %v11484 = vmul.f32 %v11402, %v11468
  %v11485 = vmul.f32 %v11407, %v11469
  %v11486 = vmul.f32 %v11412, %v11470
  %v11487 = vmul.f32 %v11417, %v11471
  %v11488 = vmul.f32 %v11422, %v11472
  %v11489 = vmul.f32 %v11427, %v11473
  %v11490 = vmul.f32 %v11432, %v11474
  %v11491 = vmul.f32 %v11437, %v11475
  %v11492 = vmul.f32 %v11442, %v11476
  %v11493 = vmul.f32 %v11447, %v11477
  %v11494 = vmul.f32 %v11452, %v11478
  %v11495 = vmul.f32 %v11457, %v11479
  %v11496 = vmul.f32 %v11462, %v11480
  %v11497 = vmul.f32 %v11481, 0.044715
  %v11498 = vmul.f32 %v11482, 0.044715
  %v11499 = vmul.f32 %v11483, 0.044715
  %v11500 = vmul.f32 %v11484, 0.044715
  %v11501 = vmul.f32 %v11485, 0.044715
  %v11502 = vmul.f32 %v11486, 0.044715
  %v11503 = vmul.f32 %v11487, 0.044715
  %v11504 = vmul.f32 %v11488, 0.044715
  %v11505 = vmul.f32 %v11489, 0.044715
  %v11506 = vmul.f32 %v11490, 0.044715
  %v11507 = vmul.f32 %v11491, 0.044715
  %v11508 = vmul.f32 %v11492, 0.044715
  %v11509 = vmul.f32 %v11493, 0.044715
  %v11510 = vmul.f32 %v11494, 0.044715
  %v11511 = vmul.f32 %v11495, 0.044715
  %v11512 = vmul.f32 %v11496, 0.044715
  %v11513 = vadd.f32 %v11387, %v11497
  %v11514 = vadd.f32 %v11392, %v11498
  %v11515 = vadd.f32 %v11397, %v11499
  %v11516 = vadd.f32 %v11402, %v11500
  %v11517 = vadd.f32 %v11407, %v11501
  %v11518 = vadd.f32 %v11412, %v11502
  %v11519 = vadd.f32 %v11417, %v11503
  %v11520 = vadd.f32 %v11422, %v11504
  %v11521 = vadd.f32 %v11427, %v11505
  %v11522 = vadd.f32 %v11432, %v11506
  %v11523 = vadd.f32 %v11437, %v11507
  %v11524 = vadd.f32 %v11442, %v11508
  %v11525 = vadd.f32 %v11447, %v11509
  %v11526 = vadd.f32 %v11452, %v11510
  %v11527 = vadd.f32 %v11457, %v11511
  %v11528 = vadd.f32 %v11462, %v11512
  %v11529 = vmul.f32 %v11513, 0.7978846
  %v11530 = vmul.f32 %v11514, 0.7978846
  %v11531 = vmul.f32 %v11515, 0.7978846
  %v11532 = vmul.f32 %v11516, 0.7978846
  %v11533 = vmul.f32 %v11517, 0.7978846
  %v11534 = vmul.f32 %v11518, 0.7978846
  %v11535 = vmul.f32 %v11519, 0.7978846
  %v11536 = vmul.f32 %v11520, 0.7978846
  %v11537 = vmul.f32 %v11521, 0.7978846
  %v11538 = vmul.f32 %v11522, 0.7978846
  %v11539 = vmul.f32 %v11523, 0.7978846
  %v11540 = vmul.f32 %v11524, 0.7978846
  %v11541 = vmul.f32 %v11525, 0.7978846
  %v11542 = vmul.f32 %v11526, 0.7978846
  %v11543 = vmul.f32 %v11527, 0.7978846
  %v11544 = vmul.f32 %v11528, 0.7978846
  %v11545 = vtanh.pop %v11529
  %v11546 = vtanh.pop %v11530
  %v11547 = vtanh.pop %v11531
  %v11548 = vtanh.pop %v11532
  %v11549 = vtanh.pop %v11533
  %v11550 = vtanh.pop %v11534
  %v11551 = vtanh.pop %v11535
  %v11552 = vtanh.pop %v11536
  %v11553 = vtanh.pop %v11537
  %v11554 = vtanh.pop %v11538
  %v11555 = vtanh.pop %v11539
  %v11556 = vtanh.pop %v11540
  %v11557 = vtanh.pop %v11541
  %v11558 = vtanh.pop %v11542
  %v11559 = vtanh.pop %v11543
  %v11560 = vtanh.pop %v11544
  %v11561 = vadd.f32 %v11545, 1.0
  %v11562 = vadd.f32 %v11546, 1.0
  %v11563 = vadd.f32 %v11547, 1.0
  %v11564 = vadd.f32 %v11548, 1.0
  %v11565 = vadd.f32 %v11549, 1.0
  %v11566 = vadd.f32 %v11550, 1.0
  %v11567 = vadd.f32 %v11551, 1.0
  %v11568 = vadd.f32 %v11552, 1.0
  %v11569 = vadd.f32 %v11553, 1.0
  %v11570 = vadd.f32 %v11554, 1.0
  %v11571 = vadd.f32 %v11555, 1.0
  %v11572 = vadd.f32 %v11556, 1.0
  %v11573 = vadd.f32 %v11557, 1.0
  %v11574 = vadd.f32 %v11558, 1.0
  %v11575 = vadd.f32 %v11559, 1.0
  %v11576 = vadd.f32 %v11560, 1.0
  %v11577 = vmul.f32 %v11561, 0.5
  %v11578 = vmul.f32 %v11562, 0.5
  %v11579 = vmul.f32 %v11563, 0.5
  %v11580 = vmul.f32 %v11564, 0.5
  %v11581 = vmul.f32 %v11565, 0.5
  %v11582 = vmul.f32 %v11566, 0.5
  %v11583 = vmul.f32 %v11567, 0.5
  %v11584 = vmul.f32 %v11568, 0.5
  %v11585 = vmul.f32 %v11569, 0.5
  %v11586 = vmul.f32 %v11570, 0.5
  %v11587 = vmul.f32 %v11571, 0.5
  %v11588 = vmul.f32 %v11572, 0.5
  %v11589 = vmul.f32 %v11573, 0.5
  %v11590 = vmul.f32 %v11574, 0.5
  %v11591 = vmul.f32 %v11575, 0.5
  %v11592 = vmul.f32 %v11576, 0.5
  %v11593 = vmul.f32 %v11387, %v11577
  %v11594 = vmul.f32 %v11392, %v11578
  %v11595 = vmul.f32 %v11397, %v11579
  %v11596 = vmul.f32 %v11402, %v11580
  %v11597 = vmul.f32 %v11407, %v11581
  %v11598 = vmul.f32 %v11412, %v11582
  %v11599 = vmul.f32 %v11417, %v11583
  %v11600 = vmul.f32 %v11422, %v11584
  %v11601 = vmul.f32 %v11427, %v11585
  %v11602 = vmul.f32 %v11432, %v11586
  %v11603 = vmul.f32 %v11437, %v11587
  %v11604 = vmul.f32 %v11442, %v11588
  %v11605 = vmul.f32 %v11447, %v11589
  %v11606 = vmul.f32 %v11452, %v11590
  %v11607 = vmul.f32 %v11457, %v11591
  %v11608 = vmul.f32 %v11462, %v11592
  %v11609 = vld [vmem:[%s12] sm:$0xff]
  %v11610 = vld [vmem:[%s12 + $0x8] sm:$0xff]
  %v11611 = vld [vmem:[%s12 + $0x10] sm:$0xff]
  %v11612 = vld [vmem:[%s12 + $0x18] sm:$0xff]
  %v11613 = vld [vmem:[%s12 + $0x20] sm:$0xff]
  %v11614 = vld [vmem:[%s12 + $0x28] sm:$0xff]
  %v11615 = vld [vmem:[%s12 + $0x30] sm:$0xff]
  %v11616 = vld [vmem:[%s12 + $0x38] sm:$0xff]
  %v11617 = vld [vmem:[%s12 + $0x40] sm:$0xff]
  %v11618 = vld [vmem:[%s12 + $0x48] sm:$0xff]
  %v11619 = vld [vmem:[%s12 + $0x50] sm:$0xff]
  %v11620 = vld [vmem:[%s12 + $0x58] sm:$0xff]
  %v11621 = vld [vmem:[%s12 + $0x60] sm:$0xff]
  %v11622 = vld [vmem:[%s12 + $0x68] sm:$0xff]
  %v11623 = vld [vmem:[%s12 + $0x70] sm:$0xff]
  %v11624 = vld [vmem:[%s12 + $0x78] sm:$0xff]
  %11625 = vmatprep.subr.mxu0 0.0
  %11626 = vmatpush1.msra.mxu0 %v11609
  %11627 = vmatprep.subr.mxu0 0.0
  %11628 = vmatpush1.msra.mxu0 %v11610
  %11629 = vmatprep.subr.mxu0 0.0
  %11630 = vmatpush1.msra.mxu0 %v11611
  %11631 = vmatprep.subr.mxu0 0.0
  %11632 = vmatpush1.msra.mxu0 %v11612
  %11633 = vmatprep.subr.mxu0 0.0
  %11634 = vmatpush1.msra.mxu0 %v11613
  %11635 = vmatprep.subr.mxu0 0.0
  %11636 = vmatpush1.msra.mxu0 %v11614
  %11637 = vmatprep.subr.mxu0 0.0
  %11638 = vmatpush1.msra.mxu0 %v11615
  %11639 = vmatprep.subr.mxu0 0.0
  %11640 = vmatpush1.msra.mxu0 %v11616
  %11641 = vmatprep.subr.mxu0 0.0
  %11642 = vmatpush1.msra.mxu0 %v11617
  %11643 = vmatprep.subr.mxu0 0.0
  %11644 = vmatpush1.msra.mxu0 %v11618
  %11645 = vmatprep.subr.mxu0 0.0
  %11646 = vmatpush1.msra.mxu0 %v11619
  %11647 = vmatprep.subr.mxu0 0.0
  %11648 = vmatpush1.msra.mxu0 %v11620
  %11649 = vmatprep.subr.mxu0 0.0
  %11650 = vmatpush1.msra.mxu0 %v11621
  %11651 = vmatprep.subr.mxu0 0.0
  %11652 = vmatpush1.msra.mxu0 %v11622
  %11653 = vmatprep.subr.mxu0 0.0
  %11654 = vmatpush1.msra.mxu0 %v11623
  %11655 = vmatprep.subr.mxu0 0.0
  %11656 = vmatpush1.msra.mxu0 %v11624
  %11657 = vmatprep.subr.mxu0 0.0
  %11658 = vmatpush1.msra.mxu0 0.0
  %11659 = vmatprep.subr.mxu0 0.0
  %11660 = vmatpush1.msra.mxu0 0.0
  %11661 = vmatprep.subr.mxu0 0.0
  %11662 = vmatpush1.msra.mxu0 0.0
  %11663 = vmatprep.subr.mxu0 0.0
  %11664 = vmatpush1.msra.mxu0 0.0
  %11665 = vmatprep.subr.mxu0 0.0
  %11666 = vmatpush1.msra.mxu0 0.0
  %11667 = vmatprep.subr.mxu0 0.0
  %11668 = vmatpush1.msra.mxu0 0.0
  %11669 = vmatprep.subr.mxu0 0.0
  %11670 = vmatpush1.msra.mxu0 0.0
  %11671 = vmatprep.subr.mxu0 0.0
  %11672 = vmatpush1.msra.mxu0 0.0
  %11673 = vmatprep.subr.mxu0 0.0
  %11674 = vmatpush1.msra.mxu0 0.0
  %11675 = vmatprep.subr.mxu0 0.0
  %11676 = vmatpush1.msra.mxu0 0.0
  %11677 = vmatprep.subr.mxu0 0.0
  %11678 = vmatpush1.msra.mxu0 0.0
  %11679 = vmatprep.subr.mxu0 0.0
  %11680 = vmatpush1.msra.mxu0 0.0
  %11681 = vmatprep.subr.mxu0 0.0
  %11682 = vmatpush1.msra.mxu0 0.0
  %11683 = vmatprep.subr.mxu0 0.0
  %11684 = vmatpush1.msra.mxu0 0.0
  %11685 = vmatprep.subr.mxu0 0.0
  %11686 = vmatpush1.msra.mxu0 0.0
  %11687 = vmatprep.subr.mxu0 0.0
  %11688 = vmatpush1.msra.mxu0 0.0
  %11689 = vmatprep.mubr.f32.mxu0 0.0
  %11690 = vmatmul.mubr.f32.gmra.mrb[0].mxu0 %v11593
  %v11691 = vpop.f32.mrb[0].mxu0
  %v11692 = vadd.f32 0.0, %v11691
  %v11693 = vpop.f32.mrb[0].mxu0
  %11694 = vmatprep.mubr.f32.mxu0 0.0
  %11695 = vmatmul.mubr.f32.gmra.mrb[0].mxu0 %v11594
  %v11696 = vpop.f32.mrb[0].mxu0
  %v11697 = vadd.f32 0.0, %v11696
  %v11698 = vpop.f32.mrb[0].mxu0
  %11699 = vmatprep.mubr.f32.mxu0 0.0
  %11700 = vmatmul.mubr.f32.gmra.mrb[0].mxu0 %v11595
  %v11701 = vpop.f32.mrb[0].mxu0
  %v11702 = vadd.f32 0.0, %v11701
  %v11703 = vpop.f32.mrb[0].mxu0
  %11704 = vmatprep.mubr.f32.mxu0 0.0
  %11705 = vmatmul.mubr.f32.gmra.mrb[0].mxu0 %v11596
  %v11706 = vpop.f32.mrb[0].mxu0
  %v11707 = vadd.f32 0.0, %v11706
  %v11708 = vpop.f32.mrb[0].mxu0
  %11709 = vmatprep.mubr.f32.mxu0 0.0
  %11710 = vmatmul.mubr.f32.gmra.mrb[0].mxu0 %v11597
  %v11711 = vpop.f32.mrb[0].mxu0
  %v11712 = vadd.f32 0.0, %v11711
  %v11713 = vpop.f32.mrb[0].mxu0
  %11714 = vmatprep.mubr.f32.mxu0 0.0
  %11715 = vmatmul.mubr.f32.gmra.mrb[0].mxu0 %v11598
  %v11716 = vpop.f32.mrb[0].mxu0
  %v11717 = vadd.f32 0.0, %v11716
  %v11718 = vpop.f32.mrb[0].mxu0
  %11719 = vmatprep.mubr.f32.mxu0 0.0
  %11720 = vmatmul.mubr.f32.gmra.mrb[0].mxu0 %v11599
  %v11721 = vpop.f32.mrb[0].mxu0
  %v11722 = vadd.f32 0.0, %v11721
  %v11723 = vpop.f32.mrb[0].mxu0
  %11724 = vmatprep.mubr.f32.mxu0 0.0
  %11725 = vmatmul.mubr.f32.gmra.mrb[0].mxu0 %v11600
  %v11726 = vpop.f32.mrb[0].mxu0
  %v11727 = vadd.f32 0.0, %v11726
  %v11728 = vpop.f32.mrb[0].mxu0
  %11729 = vmatprep.mubr.f32.mxu0 0.0
  %11730 = vmatmul.mubr.f32.gmra.mrb[0].mxu0 %v11601
  %v11731 = vpop.f32.mrb[0].mxu0
  %v11732 = vadd.f32 0.0, %v11731
  %v11733 = vpop.f32.mrb[0].mxu0
  %11734 = vmatprep.mubr.f32.mxu0 0.0
  %11735 = vmatmul.mubr.f32.gmra.mrb[0].mxu0 %v11602
  %v11736 = vpop.f32.mrb[0].mxu0
  %v11737 = vadd.f32 0.0, %v11736
  %v11738 = vpop.f32.mrb[0].mxu0
  %11739 = vmatprep.mubr.f32.mxu0 0.0
  %11740 = vmatmul.mubr.f32.gmra.mrb[0].mxu0 %v11603
  %v11741 = vpop.f32.mrb[0].mxu0
  %v11742 = vadd.f32 0.0, %v11741
  %v11743 = vpop.f32.mrb[0].mxu0
  %11744 = vmatprep.mubr.f32.mxu0 0.0
  %11745 = vmatmul.mubr.f32.gmra.mrb[0].mxu0 %v11604
  %v11746 = vpop.f32.mrb[0].mxu0
  %v11747 = vadd.f32 0.0, %v11746
  %v11748 = vpop.f32.mrb[0].mxu0
  %11749 = vmatprep.mubr.f32.mxu0 0.0
  %11750 = vmatmul.mubr.f32.gmra.mrb[0].mxu0 %v11605
  %v11751 = vpop.f32.mrb[0].mxu0
  %v11752 = vadd.f32 0.0, %v11751
  %v11753 = vpop.f32.mrb[0].mxu0
  %11754 = vmatprep.mubr.f32.mxu0 0.0
  %11755 = vmatmul.mubr.f32.gmra.mrb[0].mxu0 %v11606
  %v11756 = vpop.f32.mrb[0].mxu0
  %v11757 = vadd.f32 0.0, %v11756
  %v11758 = vpop.f32.mrb[0].mxu0
  %11759 = vmatprep.mubr.f32.mxu0 0.0
  %11760 = vmatmul.mubr.f32.gmra.mrb[0].mxu0 %v11607
  %v11761 = vpop.f32.mrb[0].mxu0
  %v11762 = vadd.f32 0.0, %v11761
  %v11763 = vpop.f32.mrb[0].mxu0
  %11764 = vmatprep.mubr.f32.mxu0 0.0
  %11765 = vmatmul.mubr.f32.gmra.mrb[0].mxu0 %v11608
  %v11766 = vpop.f32.mrb[0].mxu0
  %v11767 = vadd.f32 0.0, %v11766
  %v11768 = vpop.f32.mrb[0].mxu0
  %11769 = vdwg.mxu0
  %v11770 = vadd.f32 %v10991, %v11692
  %v11771 = vadd.f32 %v10992, %v11697
  %v11772 = vadd.f32 %v10993, %v11702
  %v11773 = vadd.f32 %v10994, %v11707
  %v11774 = vadd.f32 %v10995, %v11712
  %v11775 = vadd.f32 %v10996, %v11717
  %v11776 = vadd.f32 %v10997, %v11722
  %v11777 = vadd.f32 %v10998, %v11727
  %v11778 = vadd.f32 %v10999, %v11732
  %v11779 = vadd.f32 %v11000, %v11737
  %v11780 = vadd.f32 %v11001, %v11742
  %v11781 = vadd.f32 %v11002, %v11747
  %v11782 = vadd.f32 %v11003, %v11752
  %v11783 = vadd.f32 %v11004, %v11757
  %v11784 = vadd.f32 %v11005, %v11762
  %v11785 = vadd.f32 %v11006, %v11767
  %v11786 = vld [vmem:[%s6 + $0x6] sm:$0x1]
  %v11787 = vlaneseq
  %v11788 = vshrl.u32 %v11787, 7
  %v11789 = vsub.s32 0, %v11788
  %v11790 = vrot.slane %v11786, %v11789
  %v11791 = vadd.f32 %v11770, %v11790
  %v11792 = vadd.f32 %v11771, %v11790
  %v11793 = vadd.f32 %v11772, %v11790
  %v11794 = vadd.f32 %v11773, %v11790
  %v11795 = vadd.f32 %v11774, %v11790
  %v11796 = vadd.f32 %v11775, %v11790
  %v11797 = vadd.f32 %v11776, %v11790
  %v11798 = vadd.f32 %v11777, %v11790
  %v11799 = vadd.f32 %v11778, %v11790
  %v11800 = vadd.f32 %v11779, %v11790
  %v11801 = vadd.f32 %v11780, %v11790
  %v11802 = vadd.f32 %v11781, %v11790
  %v11803 = vadd.f32 %v11782, %v11790
  %v11804 = vadd.f32 %v11783, %v11790
  %v11805 = vadd.f32 %v11784, %v11790
  %v11806 = vadd.f32 %v11785, %v11790
  %v11807 = vsel %vm3255, %v11791, 0.0
  %v11808 = vsel %vm3255, %v11792, 0.0
  %v11809 = vadd.f32 %v11807, %v11808
  %v11810 = vrot.slane %v11809, 4
  %v11811 = vadd.f32 %v11809, %v11810
  %v11812 = vrot.slane %v11811, 2
  %v11813 = vadd.f32 %v11811, %v11812
  %v11814 = vrot.slane %v11813, 1
  %v11815 = vadd.f32 %v11813, %v11814
  %v11816 = vsel %vm3255, %v11793, 0.0
  %v11817 = vsel %vm3255, %v11794, 0.0
  %v11818 = vadd.f32 %v11816, %v11817
  %v11819 = vrot.slane %v11818, 4
  %v11820 = vadd.f32 %v11818, %v11819
  %v11821 = vrot.slane %v11820, 2
  %v11822 = vadd.f32 %v11820, %v11821
  %v11823 = vrot.slane %v11822, 1
  %v11824 = vadd.f32 %v11822, %v11823
  %v11825 = vsel %vm3255, %v11795, 0.0
  %v11826 = vsel %vm3255, %v11796, 0.0
  %v11827 = vadd.f32 %v11825, %v11826
  %v11828 = vrot.slane %v11827, 4
  %v11829 = vadd.f32 %v11827, %v11828
  %v11830 = vrot.slane %v11829, 2
  %v11831 = vadd.f32 %v11829, %v11830
  %v11832 = vrot.slane %v11831, 1
  %v11833 = vadd.f32 %v11831, %v11832
  %v11834 = vsel %vm3255, %v11797, 0.0
  %v11835 = vsel %vm3255, %v11798, 0.0
  %v11836 = vadd.f32 %v11834, %v11835
  %v11837 = vrot.slane %v11836, 4
  %v11838 = vadd.f32 %v11836, %v11837
  %v11839 = vrot.slane %v11838, 2
  %v11840 = vadd.f32 %v11838, %v11839
  %v11841 = vrot.slane %v11840, 1
  %v11842 = vadd.f32 %v11840, %v11841
  %v11843 = vsel %vm3255, %v11799, 0.0
  %v11844 = vsel %vm3255, %v11800, 0.0
  %v11845 = vadd.f32 %v11843, %v11844
  %v11846 = vrot.slane %v11845, 4
  %v11847 = vadd.f32 %v11845, %v11846
  %v11848 = vrot.slane %v11847, 2
  %v11849 = vadd.f32 %v11847, %v11848
  %v11850 = vrot.slane %v11849, 1
  %v11851 = vadd.f32 %v11849, %v11850
  %v11852 = vsel %vm3255, %v11801, 0.0
  %v11853 = vsel %vm3255, %v11802, 0.0
  %v11854 = vadd.f32 %v11852, %v11853
  %v11855 = vrot.slane %v11854, 4
  %v11856 = vadd.f32 %v11854, %v11855
  %v11857 = vrot.slane %v11856, 2
  %v11858 = vadd.f32 %v11856, %v11857
  %v11859 = vrot.slane %v11858, 1
  %v11860 = vadd.f32 %v11858, %v11859
  %v11861 = vsel %vm3255, %v11803, 0.0
  %v11862 = vsel %vm3255, %v11804, 0.0
  %v11863 = vadd.f32 %v11861, %v11862
  %v11864 = vrot.slane %v11863, 4
  %v11865 = vadd.f32 %v11863, %v11864
  %v11866 = vrot.slane %v11865, 2
  %v11867 = vadd.f32 %v11865, %v11866
  %v11868 = vrot.slane %v11867, 1
  %v11869 = vadd.f32 %v11867, %v11868
  %v11870 = vsel %vm3255, %v11805, 0.0
  %v11871 = vsel %vm3255, %v11806, 0.0
  %v11872 = vadd.f32 %v11870, %v11871
  %v11873 = vrot.slane %v11872, 4
  %v11874 = vadd.f32 %v11872, %v11873
  %v11875 = vrot.slane %v11874, 2
  %v11876 = vadd.f32 %v11874, %v11875
  %v11877 = vrot.slane %v11876, 1
  %v11878 = vadd.f32 %v11876, %v11877
  %v11879 = vrcp.pop 16.0
  %v11880 = vmul.f32 %v11815, %v11879
  %v11881 = vmul.f32 %v11824, %v11879
  %v11882 = vmul.f32 %v11833, %v11879
  %v11883 = vmul.f32 %v11842, %v11879
  %v11884 = vmul.f32 %v11851, %v11879
  %v11885 = vmul.f32 %v11860, %v11879
  %v11886 = vmul.f32 %v11869, %v11879
  %v11887 = vmul.f32 %v11878, %v11879
  %v11888 = vld [vmem:[%s14] sm:$0xff]
  %v11889 = vld [vmem:[%s14 + $0x8] sm:$0xff]
  %v11890 = vld [vmem:[%s14 + $0x10] sm:$0xff]
  %v11891 = vld [vmem:[%s14 + $0x18] sm:$0xff]
  %v11892 = vld [vmem:[%s14 + $0x20] sm:$0xff]
  %v11893 = vld [vmem:[%s14 + $0x28] sm:$0xff]
  %v11894 = vld [vmem:[%s14 + $0x30] sm:$0xff]
  %v11895 = vld [vmem:[%s14 + $0x38] sm:$0xff]
  %vm11904 = vcmask 1041409
  %v11905 = vsel %vm11904, %v11881, %v11880
  %vm11906 = vcmask 1042434
  %v11907 = vsel %vm11906, %v11882, %v11905
  %vm11908 = vcmask 1043459
  %v11909 = vsel %vm11908, %v11883, %v11907
  %vm11910 = vcmask 1044484
  %v11911 = vsel %vm11910, %v11884, %v11909
  %vm11912 = vcmask 1045509
  %v11913 = vsel %vm11912, %v11885, %v11911
  %vm11914 = vcmask 1046534
  %v11915 = vsel %vm11914, %v11886, %v11913
  %vm11916 = vcmask 1047559
  %v11917 = vsel %vm11916, %v11887, %v11915
  %v11918 = vsel %vm3255, %v11917, 0
  %11920 = vmatprep.subr.mxu0 0.0
  %11921 = vmatpush1.msra.mxu0 %v11888
  %11922 = vmatprep.subr.mxu0 0.0
  %11923 = vmatpush1.msra.mxu0 %v11889
  %11924 = vmatprep.subr.mxu0 0.0
  %11925 = vmatpush1.msra.mxu0 %v11890
  %11926 = vmatprep.subr.mxu0 0.0
  %11927 = vmatpush1.msra.mxu0 %v11891
  %11928 = vmatprep.subr.mxu0 0.0
  %11929 = vmatpush1.msra.mxu0 %v11892
  %11930 = vmatprep.subr.mxu0 0.0
  %11931 = vmatpush1.msra.mxu0 %v11893
  %11932 = vmatprep.subr.mxu0 0.0
  %11933 = vmatpush1.msra.mxu0 %v11894
  %11934 = vmatprep.subr.mxu0 0.0
  %11935 = vmatpush1.msra.mxu0 %v11895
  %11936 = vmatprep.subr.mxu0 0.0
  %11937 = vmatpush1.msra.mxu0 0.0
  %11938 = vmatprep.subr.mxu0 0.0
  %11939 = vmatpush1.msra.mxu0 0.0
  %11940 = vmatprep.subr.mxu0 0.0
  %11941 = vmatpush1.msra.mxu0 0.0
  %11942 = vmatprep.subr.mxu0 0.0
  %11943 = vmatpush1.msra.mxu0 0.0
  %11944 = vmatprep.subr.mxu0 0.0
  %11945 = vmatpush1.msra.mxu0 0.0
  %11946 = vmatprep.subr.mxu0 0.0
  %11947 = vmatpush1.msra.mxu0 0.0
  %11948 = vmatprep.subr.mxu0 0.0
  %11949 = vmatpush1.msra.mxu0 0.0
  %11950 = vmatprep.subr.mxu0 0.0
  %11951 = vmatpush1.msra.mxu0 0.0
  %11952 = vmatprep.subr.mxu0 0.0
  %11953 = vmatpush1.msra.mxu0 0.0
  %11954 = vmatprep.subr.mxu0 0.0
  %11955 = vmatpush1.msra.mxu0 0.0
  %11956 = vmatprep.subr.mxu0 0.0
  %11957 = vmatpush1.msra.mxu0 0.0
  %11958 = vmatprep.subr.mxu0 0.0
  %11959 = vmatpush1.msra.mxu0 0.0
  %11960 = vmatprep.subr.mxu0 0.0
  %11961 = vmatpush1.msra.mxu0 0.0
  %11962 = vmatprep.subr.mxu0 0.0
  %11963 = vmatpush1.msra.mxu0 0.0
  %11964 = vmatprep.subr.mxu0 0.0
  %11965 = vmatpush1.msra.mxu0 0.0
  %11966 = vmatprep.subr.mxu0 0.0
  %11967 = vmatpush1.msra.mxu0 0.0
  %11968 = vmatprep.subr.mxu0 0.0
  %11969 = vmatpush1.msra.mxu0 0.0
  %11970 = vmatprep.subr.mxu0 0.0
  %11971 = vmatpush1.msra.mxu0 0.0
  %11972 = vmatprep.subr.mxu0 0.0
  %11973 = vmatpush1.msra.mxu0 0.0
  %11974 = vmatprep.subr.mxu0 0.0
  %11975 = vmatpush1.msra.mxu0 0.0
  %11976 = vmatprep.subr.mxu0 0.0
  %11977 = vmatpush1.msra.mxu0 0.0
  %11978 = vmatprep.subr.mxu0 0.0
  %11979 = vmatpush1.msra.mxu0 0.0
  %11980 = vmatprep.subr.mxu0 0.0
  %11981 = vmatpush1.msra.mxu0 0.0
  %11982 = vmatprep.subr.mxu0 0.0
  %11983 = vmatpush1.msra.mxu0 0.0
  %11984 = vmatprep.mubr.f32.mxu0 0.0
  %11985 = vmatmul.mubr.f32.gmra.mrb[0].mxu0 %v11918
  %v11986 = vpop.f32.mrb[0].mxu0
  %v11987 = vadd.f32 0.0, %v11986
  %v11988 = vpop.f32.mrb[0].mxu0
  %11989 = vdwg.mxu0
  %v11998 = vsel %vm11904, %v3019, %v3018
  %v11999 = vsel %vm11906, %v3020, %v11998
  %v12000 = vsel %vm11908, %v3021, %v11999
  %v12001 = vsel %vm11910, %v3022, %v12000
  %v12002 = vsel %vm11912, %v3023, %v12001
  %v12003 = vsel %vm11914, %v3024, %v12002
  %v12004 = vsel %vm11916, %v3025, %v12003
  %v12005 = vsel %vm2464, %v12004, 0
  %12007 = vmatprep.subr.mxu0 0.0
  %12008 = vmatpush1.msra.mxu0 %v3026
  %12009 = vmatprep.subr.mxu0 0.0
  %12010 = vmatpush1.msra.mxu0 %v3027
  %12011 = vmatprep.subr.mxu0 0.0
  %12012 = vmatpush1.msra.mxu0 0.0
  %12013 = vmatprep.subr.mxu0 0.0
  %12014 = vmatpush1.msra.mxu0 0.0
  %12015 = vmatprep.subr.mxu0 0.0
  %12016 = vmatpush1.msra.mxu0 0.0
  %12017 = vmatprep.subr.mxu0 0.0
  %12018 = vmatpush1.msra.mxu0 0.0
  %12019 = vmatprep.subr.mxu0 0.0
  %12020 = vmatpush1.msra.mxu0 0.0
  %12021 = vmatprep.subr.mxu0 0.0
  %12022 = vmatpush1.msra.mxu0 0.0
  %12023 = vmatprep.subr.mxu0 0.0
  %12024 = vmatpush1.msra.mxu0 0.0
  %12025 = vmatprep.subr.mxu0 0.0
  %12026 = vmatpush1.msra.mxu0 0.0
  %12027 = vmatprep.subr.mxu0 0.0
  %12028 = vmatpush1.msra.mxu0 0.0
  %12029 = vmatprep.subr.mxu0 0.0
  %12030 = vmatpush1.msra.mxu0 0.0
  %12031 = vmatprep.subr.mxu0 0.0
  %12032 = vmatpush1.msra.mxu0 0.0
  %12033 = vmatprep.subr.mxu0 0.0
  %12034 = vmatpush1.msra.mxu0 0.0
  %12035 = vmatprep.subr.mxu0 0.0
  %12036 = vmatpush1.msra.mxu0 0.0
  %12037 = vmatprep.subr.mxu0 0.0
  %12038 = vmatpush1.msra.mxu0 0.0
  %12039 = vmatprep.subr.mxu0 0.0
  %12040 = vmatpush1.msra.mxu0 0.0
  %12041 = vmatprep.subr.mxu0 0.0
  %12042 = vmatpush1.msra.mxu0 0.0
  %12043 = vmatprep.subr.mxu0 0.0
  %12044 = vmatpush1.msra.mxu0 0.0
  %12045 = vmatprep.subr.mxu0 0.0
  %12046 = vmatpush1.msra.mxu0 0.0
  %12047 = vmatprep.subr.mxu0 0.0
  %12048 = vmatpush1.msra.mxu0 0.0
  %12049 = vmatprep.subr.mxu0 0.0
  %12050 = vmatpush1.msra.mxu0 0.0
  %12051 = vmatprep.subr.mxu0 0.0
  %12052 = vmatpush1.msra.mxu0 0.0
  %12053 = vmatprep.subr.mxu0 0.0
  %12054 = vmatpush1.msra.mxu0 0.0
  %12055 = vmatprep.subr.mxu0 0.0
  %12056 = vmatpush1.msra.mxu0 0.0
  %12057 = vmatprep.subr.mxu0 0.0
  %12058 = vmatpush1.msra.mxu0 0.0
  %12059 = vmatprep.subr.mxu0 0.0
  %12060 = vmatpush1.msra.mxu0 0.0
  %12061 = vmatprep.subr.mxu0 0.0
  %12062 = vmatpush1.msra.mxu0 0.0
  %12063 = vmatprep.subr.mxu0 0.0
  %12064 = vmatpush1.msra.mxu0 0.0
  %12065 = vmatprep.subr.mxu0 0.0
  %12066 = vmatpush1.msra.mxu0 0.0
  %12067 = vmatprep.subr.mxu0 0.0
  %12068 = vmatpush1.msra.mxu0 0.0
  %12069 = vmatprep.subr.mxu0 0.0
  %12070 = vmatpush1.msra.mxu0 0.0
  %12071 = vmatprep.mubr.f32.mxu0 0.0
  %12072 = vmatmul.mubr.f32.gmra.mrb[0].mxu0 %v12005
  %v12073 = vpop.f32.mrb[0].mxu0
  %v12074 = vadd.f32 %v11987, %v12073
  %v12075 = vpop.f32.mrb[0].mxu0
  %12076 = vdwg.mxu0
  %v12077 = vld [vmem:[#allocation2] sm:$0x1]
  %v12079 = vlaneseq
  %v12080 = vshrl.u32 %v12079, 7
  %v12081 = vsub.s32 0, %v12080
  %v12082 = vrot.slane %v12077, %v12081
  %v12084 = vadd.f32 %v12074, %v12082
  %vm12085 = vcmask 7168
  %12086 = vst.msk [vmem:[%s16] sm:$0xff] %vm12085, %v12084
  // Predicated region
  $region66: #{watermarking_forward.1} parent=0 // pred_check
    _
  $region67: #{watermarking_forward.1} parent=0 // pred_check_branch
    %12088 = sbr.rel (0) target = $region69
  $region68: #{watermarking_forward.1} parent=0 // pred_region
    _
  $region69: #{watermarking_forward.1} parent=0 // pred_fallthru
    _
  // Predicated region
  $region70: #{watermarking_forward.1} parent=0 // pred_check
    _
  $region71: #{watermarking_forward.1} parent=0 // pred_check_branch
    %12090 = sbr.rel (0) target = $region73
  $region72: #{watermarking_forward.1} parent=0 // pred_region
    _
  $region73: #{watermarking_forward.1} parent=0 // pred_fallthru
    _

</llo_original>
